<compile_context>
chip_gen: v5e
topology: v5e:2x2
jax: 0.10.0
libtpu: 0.0.40
codegen_flags: <defaults>
</compile_context>

<pallas_src>
import functools

import numpy as np
import jax
import jax.numpy as jnp
from jax import lax
from jax.experimental import pallas as pl
from jax.experimental.pallas import tpu as pltpu


def _round_up(x, m):
    return ((x + m - 1) // m) * m


@functools.lru_cache(maxsize=None)
def _vmem_budget_bytes():
    """Per-generation VMEM budget (~75% of physical; fallback = v7x-sized)."""
    try:
        cap = int(pltpu.get_tpu_info().vmem_capacity_bytes)
    except Exception:
        cap = 64 * 1024 * 1024
    return max(32 * 1024 * 1024, (cap * 3) // 4)


# ----------------------------------------------------------------------------
# Kernel 1: row-tiled matmul + bias (the commuted 1x1 channel-matching conv)
# ----------------------------------------------------------------------------
def _matmul_bias_kernel(x_ref, w_ref, b_ref, o_ref):
    y = jnp.dot(x_ref[...], w_ref[...], preferred_element_type=jnp.float32)
    o_ref[...] = (y + b_ref[...]).astype(o_ref.dtype)


def matmul_bias(x, w, b):
    """out = x @ w + b; x:(M,K) bf16, w:(K,N) bf16, b:(1,N) f32 -> (M,N) bf16."""
    M, K = x.shape
    N = w.shape[-1]
    tm = 512 if M >= 512 else _round_up(M, 8)
    Mp = _round_up(M, tm)
    if Mp != M:                      # cdiv-style grid: never one giant block
        x = jnp.pad(x, ((0, Mp - M), (0, 0)))
    out = pl.pallas_call(
        _matmul_bias_kernel,
        out_shape=jax.ShapeDtypeStruct((Mp, N), jnp.bfloat16),
        grid=(Mp // tm,),
        in_specs=[pl.BlockSpec((tm, K), lambda i: (i, 0)),
                  pl.BlockSpec((K, N), lambda i: (0, 0)),
                  pl.BlockSpec((1, N), lambda i: (0, 0))],
        out_specs=pl.BlockSpec((tm, N), lambda i: (i, 0)),
        compiler_params=pltpu.CompilerParams(
            dimension_semantics=("parallel",),
            vmem_limit_bytes=_vmem_budget_bytes()),
    )(x, w, b)
    # TODO(synk): N < 128 still means masked stores here; this is the smallest
    # tensor in the module (pre-upsample resolution) so it is left unpadded.
    return out[:M] if Mp != M else out


# ----------------------------------------------------------------------------
# Kernel 2: per-batch, lane-tiled left matmul (one axis of the bilinear resize)
# ----------------------------------------------------------------------------
def _left_matmul_kernel(u_ref, x_ref, o_ref):
    o_ref[0] = jnp.dot(u_ref[...], x_ref[0],
                       preferred_element_type=jnp.float32).astype(o_ref.dtype)


def _pick_lane_tile(L, s_in, s_out, budget):
    cands = [d for d in range(L, 0, -1) if L % d == 0 and (d % 128 == 0 or d == L)]
    for tl in cands:
        need = 2 * 2 * (s_in + 2 * s_out) * tl + 2 * s_in * s_out
        if need <= budget // 2:
            return tl
    return cands[-1]


def upsample_axis(x, u):
    """x:(B, S_in, L) bf16, u:(S_out, S_in) bf16 -> (B, S_out, L) bf16."""
    B, S_in, L = x.shape
    S_out = u.shape[0]
    TL = _pick_lane_tile(L, S_in, S_out, _vmem_budget_bytes())
    nl = L // TL
    return pl.pallas_call(
        _left_matmul_kernel,
        out_shape=jax.ShapeDtypeStruct((B, S_out, L), jnp.bfloat16),
        grid=(B, nl),
        in_specs=[pl.BlockSpec((S_out, S_in), lambda b, l: (0, 0)),
                  pl.BlockSpec((1, S_in, TL), lambda b, l: (b, 0, l))],
        out_specs=pl.BlockSpec((1, S_out, TL), lambda b, l: (b, 0, l)),
        compiler_params=pltpu.CompilerParams(
            dimension_semantics=("parallel", "parallel"),
            vmem_limit_bytes=_vmem_budget_bytes()),
    )(u, x)


# ----------------------------------------------------------------------------
# Kernel 3: fused 3x3 conv (dx pre-packed, dy = leading-dim slice) + folded
#           BatchNorm + ReLU; row-tiled with halo; lane-dense (padded) Co.
# ----------------------------------------------------------------------------
def _conv3x3_bn_relu_kernel(x_ref, w_ref, scale_ref, shift_ref, o_ref, acc_ref,
                            *, tr, wo):
    # x_ref:(1, tr+2, wo, 3*Ci) bf16 ; w_ref:(3, 3*Ci, Co_p) bf16
    # acc_ref:(tr*wo, Co_p) f32 scratch ; o_ref:(tr*wo, Co_p) bf16
    for dy in range(3):
        # Leading-dim slice only -> no sublane/lane relayout per tap.
        patch = x_ref[0, dy:dy + tr].reshape(tr * wo, -1)
        contrib = jnp.dot(patch, w_ref[dy], preferred_element_type=jnp.float32)
        if dy == 0:
            acc_ref[...] = contrib
        else:
            acc_ref[...] += contrib
    y = acc_ref[...] * scale_ref[...] + shift_ref[...]   # folded BN (+ conv bias)
    o_ref[...] = jnp.maximum(y, 0.0).astype(o_ref.dtype)


def _pick_row_tile(Ho, Wo, kin, co_p, budget, min_tiles):
    divs = [d for d in range(Ho, 0, -1) if Ho % d == 0 and (d * Wo) % 8 == 0]
    if not divs:
        divs = [Ho]
    fitting = []
    for tr in divs:
        need = (2 * 2 * (tr + 2) * Wo * kin      # double-buffered bf16 input
                + 2 * 2 * tr * Wo * co_p         # double-buffered bf16 output
                + 4 * tr * Wo * co_p             # f32 scratch accumulator
                + 2 * 2 * 3 * kin * co_p)        # weights
        if need <= (budget * 3) // 5:
            fitting.append(tr)
    if not fitting:
        return divs[-1]
    for tr in fitting:                            # prefer >= min_tiles grid steps
        if Ho // tr >= min_tiles:
            return tr
    return fitting[0]


def conv3x3_bn_relu(x, w9, scale, shift):
    """Fused 3x3 'same' conv + folded BN + ReLU on an NHWC bf16 input.

    x:(B,Ho,Wo,Ci) bf16 ; w9:(3, 3*Ci, Co_p) bf16 (dy-major, dx packed into K);
    scale/shift:(1, Co_p) f32.  Returns (B,Ho,Wo,Co_p) bf16 (caller slices Co).
    """
    B, Ho, Wo, Ci = x.shape
    Co_p = w9.shape[-1]
    budget = _vmem_budget_bytes()

    # 1-pixel halo pad + dx-pack: (B, Ho+2, Wo, 3*Ci) so the kernel only ever
    # slices the leading (row) axis.
    xp = jnp.pad(x, ((0, 0), (1, 1), (1, 1), (0, 0)))
    xpk = jnp.concatenate(
        [xp[:, :, 0:Wo], xp[:, :, 1:Wo + 1], xp[:, :, 2:Wo + 2]], axis=-1)

    tr = _pick_row_tile(Ho, Wo, 3 * Ci, Co_p, budget, min_tiles=max(1, 4 // B))
    nt = Ho // tr
    if nt == 1:
        xt = xpk                                             # (B, Ho+2, Wo, 3Ci)
    else:                                  # duplicate the 1-row halo per tile
        xt = jnp.stack([xpk[:, r * tr:r * tr + tr + 2] for r in range(nt)], axis=1)
        xt = xt.reshape(B * nt, tr + 2, Wo, 3 * Ci)

    kernel = functools.partial(_conv3x3_bn_relu_kernel, tr=tr, wo=Wo)
    # TODO(synk): consider pipeline_mode=pl.Buffered(3) on v5e (HBM-BW starved).
    out = pl.pallas_call(
        kernel,
        out_shape=jax.ShapeDtypeStruct((B * Ho * Wo, Co_p), jnp.bfloat16),
        grid=(B * nt,),
        in_specs=[pl.BlockSpec((1, tr + 2, Wo, 3 * Ci), lambda i: (i, 0, 0, 0)),
                  pl.BlockSpec((3, 3 * Ci, Co_p), lambda i: (0, 0, 0)),
                  pl.BlockSpec((1, Co_p), lambda i: (0, 0)),
                  pl.BlockSpec((1, Co_p), lambda i: (0, 0))],
        out_specs=pl.BlockSpec((tr * Wo, Co_p), lambda i: (i, 0)),
        scratch_shapes=[pltpu.VMEM((tr * Wo, Co_p), jnp.float32)],
        compiler_params=pltpu.CompilerParams(
            dimension_semantics=("parallel",),
            vmem_limit_bytes=budget),
    )(xt, w9, scale, shift)
    return out.reshape(B, Ho, Wo, Co_p)


# ----------------------------------------------------------------------------
# Module forward (glue = boundary transposes / free reshapes / zero pads)
# ----------------------------------------------------------------------------
def up_forward(x1, x2, p):
    """Pallas implementation of Up.forward(x1, x2) (bilinear=True branch)."""
    B, C1, H, W = x1.shape
    Co = p["w_match"].shape[0]           # out_channels of the 1x1 matching conv
    mid = p["w1"].shape[0]               # DoubleConv mid channels
    Cout = p["w2"].shape[0]              # DoubleConv out channels
    H2, W2 = p["uh"].shape[0], p["uw"].shape[0]

    # 1x1 channel-matching conv, commuted ahead of the upsample (exact because
    # align_corners bilinear weights sum to 1 and both ops are linear+affine).
    x1_t = jnp.transpose(x1.astype(jnp.bfloat16), (0, 3, 2, 1))        # (B,W,H,C1)
    xc = matmul_bias(x1_t.reshape(B * W * H, C1), p["wm_t"], p["bm"])  # bf16
    xc = xc.reshape(B, W, H * Co)

    # Separable bilinear x2 upsample: W-pass, corner turn, H-pass (all bf16).
    xw = upsample_axis(xc, p["uw_b"])                                  # (B,W2,H*Co)
    xw = jnp.transpose(xw.reshape(B, W2, H, Co), (0, 2, 1, 3))         # corner turn
    x1u = upsample_axis(xw.reshape(B, H, W2 * Co), p["uh_b"])          # (B,H2,W2*Co)
    x1u = x1u.reshape(B, H2, W2, Co)                                   # NHWC

    # Zero-pad x1u to x2's spatial size and channel-concat (fuses into the conv
    # input dx-packing inside conv3x3_bn_relu).
    x2_nhwc = jnp.transpose(x2.astype(jnp.bfloat16), (0, 2, 3, 1))
    Ho, Wo = x2.shape[2], x2.shape[3]
    dY, dX = Ho - H2, Wo - W2
    x1p = jnp.pad(x1u, ((0, 0), (dY // 2, dY - dY // 2),
                        (dX // 2, dX - dX // 2), (0, 0)))
    xin = jnp.concatenate([x2_nhwc, x1p], axis=-1)                     # (B,Ho,Wo,C1)

    # DoubleConv: two fused conv3x3 + BN + ReLU kernels, lane-dense Co padding.
    y1 = conv3x3_bn_relu(xin, p["w1p"], p["scale1p"], p["shift1p"])[..., :mid]
    y2 = conv3x3_bn_relu(y1, p["w2p"], p["scale2p"], p["shift2p"])[..., :Cout]
    return jnp.transpose(y2.astype(jnp.float32), (0, 3, 1, 2))         # NCHW


# ----------------------------------------------------------------------------
# Deterministic parameter init + pure-JAX reference for validation
# ----------------------------------------------------------------------------
def _bilinear_matrix(n_in, n_out):
    """1D bilinear resize matrix (n_out, n_in), align_corners=True."""
    m = np.zeros((n_out, n_in), np.float32)
    if n_in == 1:
        m[:, 0] = 1.0
        return m
    scale = (n_in - 1) / (n_out - 1)
    for i in range(n_out):
        src = i * scale
        p0 = min(int(np.floor(src)), n_in - 1)
        p1 = min(p0 + 1, n_in - 1)
        frac = src - p0
        m[i, p0] += 1.0 - frac
        m[i, p1] += frac
    return m


def _pack_conv_weight(w, co_pad):
    """(Co, Ci, 3, 3) -> (3, 3*Ci, co_pad) bf16; K index = dx*Ci + ci (dy-major)."""
    co, ci = w.shape[0], w.shape[1]
    wp = jnp.transpose(w, (2, 3, 1, 0)).reshape(3, 3 * ci, co)
    return jnp.pad(wp, ((0, 0), (0, 0), (0, co_pad - co))).astype(jnp.bfloat16)


def _pad_row(v, n):
    return jnp.pad(v, (0, n - v.shape[0])).reshape(1, n).astype(jnp.float32)


def init_params(key, in_ch, out_ch, H, W, eps=1e-5):
    mid = in_ch // 2
    ks = jax.random.split(key, 10)
    p = {}
    # PyTorch-equivalent parameters (f32; BatchNorm uses running stats).
    p["w_match"] = 0.1 * jax.random.normal(ks[0], (out_ch, in_ch), jnp.float32)
    p["b_match"] = 0.1 * jax.random.normal(ks[1], (out_ch,), jnp.float32)
    p["w1"] = 0.1 * jax.random.normal(ks[2], (mid, in_ch, 3, 3), jnp.float32)
    p["b1"] = 0.1 * jax.random.normal(ks[3], (mid,), jnp.float32)
    p["g1"] = 1.0 + 0.1 * jax.random.normal(ks[4], (mid,), jnp.float32)
    p["beta1"] = 0.1 * jax.random.normal(ks[5], (mid,), jnp.float32)
    p["mean1"], p["var1"] = jnp.zeros((mid,)), jnp.ones((mid,))
    p["w2"] = 0.1 * jax.random.normal(ks[6], (out_ch, mid, 3, 3), jnp.float32)
    p["b2"] = 0.1 * jax.random.normal(ks[7], (out_ch,), jnp.float32)
    p["g2"] = 1.0 + 0.1 * jax.random.normal(ks[8], (out_ch,), jnp.float32)
    p["beta2"] = 0.1 * jax.random.normal(ks[9], (out_ch,), jnp.float32)
    p["mean2"], p["var2"] = jnp.zeros((out_ch,)), jnp.ones((out_ch,))

    # Kernel-side derived parameters (bf16 weights, folded BN, padded Co) ------
    mid_p, out_p = _round_up(mid, 128), _round_up(out_ch, 128)
    p["wm_t"] = p["w_match"].T.astype(jnp.bfloat16)                    # (C1, Co)
    p["bm"] = p["b_match"].reshape(1, -1).astype(jnp.float32)
    p["w1p"] = _pack_conv_weight(p["w1"], mid_p)
    p["w2p"] = _pack_conv_weight(p["w2"], out_p)
    s1 = p["g1"] / jnp.sqrt(p["var1"] + eps)
    p["scale1p"] = _pad_row(s1, mid_p)
    p["shift1p"] = _pad_row((p["b1"] - p["mean1"]) * s1 + p["beta1"], mid_p)
    s2 = p["g2"] / jnp.sqrt(p["var2"] + eps)
    p["scale2p"] = _pad_row(s2, out_p)
    p["shift2p"] = _pad_row((p["b2"] - p["mean2"]) * s2 + p["beta2"], out_p)

    p["uh"] = jnp.asarray(_bilinear_matrix(H, 2 * H))                  # (H2, H)
    p["uw"] = jnp.asarray(_bilinear_matrix(W, 2 * W))                  # (W2, W)
    p["uh_b"] = p["uh"].astype(jnp.bfloat16)
    p["uw_b"] = p["uw"].astype(jnp.bfloat16)
    return p


def reference_forward(x1, x2, p, eps=1e-5):
    dn = ("NCHW", "OIHW", "NCHW")
    t = jnp.einsum("bchw,vw->bchv", x1, p["uw"])
    x1u = jnp.einsum("bchv,uh->bcuv", t, p["uh"])
    x1u = lax.conv_general_dilated(x1u, p["w_match"][:, :, None, None],
                                   (1, 1), "VALID", dimension_numbers=dn)
    x1u = x1u + p["b_match"][None, :, None, None]
    diffY = x2.shape[2] - x1u.shape[2]
    diffX = x2.shape[3] - x1u.shape[3]
    x1u = jnp.pad(x1u, ((0, 0), (0, 0),
                        (diffY // 2, diffY - diffY // 2),
                        (diffX // 2, diffX - diffX // 2)))
    x = jnp.concatenate([x2, x1u], axis=1)

    def conv_bn_relu(x, w, b, g, beta, mean, var):
        y = lax.conv_general_dilated(x, w, (1, 1), ((1, 1), (1, 1)),
                                     dimension_numbers=dn)
        y = y + b[None, :, None, None]
        y = (y - mean[None, :, None, None]) / jnp.sqrt(var[None, :, None, None] + eps)
        y = y * g[None, :, None, None] + beta[None, :, None, None]
        return jnp.maximum(y, 0.0)

    y = conv_bn_relu(x, p["w1"], p["b1"], p["g1"], p["beta1"], p["mean1"], p["var1"])
    y = conv_bn_relu(y, p["w2"], p["b2"], p["g2"], p["beta2"], p["mean2"], p["var2"])
    return y


# ----------------------------------------------------------------------------
if __name__ == "__main__":
    key = jax.random.PRNGKey(0)
    B, in_ch, out_ch, H, W = 2, 8, 4, 16, 16
    k1, k2, kp = jax.random.split(key, 3)
    x1 = jax.random.normal(k1, (B, in_ch, H, W), jnp.float32)
    # skip-connection input: channels so cat([x2, x1_matched]) has in_ch channels
    x2 = jax.random.normal(k2, (B, in_ch - out_ch, 2 * H, 2 * W), jnp.float32)
    params = init_params(kp, in_ch, out_ch, H, W)

    up = jax.jit(up_forward)
    y = up(x1, x2, params)
    jax.block_until_ready(y)
    assert y.shape == (B, out_ch, 2 * H, 2 * W), y.shape

    y_ref = reference_forward(x1, x2, params)
    # Tolerance accounts for bf16 weights AND bf16 activations at every kernel
    # boundary (f32 MXU accumulation everywhere).
    np.testing.assert_allclose(np.asarray(y), np.asarray(y_ref), rtol=3e-2, atol=3e-2)

    print("KERNEL_OK")
</pallas_src>

<mosaic_0001>
module attributes {stable_mosaic.version = 11 : i64} {
  func.func @_left_matmul_kernel(%arg0: i32, %arg1: i32, %arg2: memref<32x16xbf16, #tpu.memory_space<vmem>>, %arg3: memref<1x16x64xbf16, #tpu.memory_space<vmem>>, %arg4: memref<1x32x64xbf16, #tpu.memory_space<vmem>>) attributes {dimension_semantics = [#tpu.dimension_semantics<parallel>, #tpu.dimension_semantics<parallel>], iteration_bounds = array<i64: 2, 1>, scalar_prefetch = 0 : i64, scratch_operands = 0 : i64, tpu.core_type = #tpu.core_type<tc>, window_params = [{pipeline_mode = #tpu.pipeline_mode<synchronous>, transform_indices = @transform_0, window_bounds = array<i64: 32, 16>}, {transform_indices = @transform_1, window_bounds = array<i64: 1, 16, 64>}, {transform_indices = @transform_2, window_bounds = array<i64: 1, 32, 64>}]} {
    %c0 = arith.constant 0 : index
    %c0_0 = arith.constant 0 : index
    %0 = vector.load %arg2[%c0, %c0_0] : memref<32x16xbf16, #tpu.memory_space<vmem>>, vector<32x16xbf16>
    %c0_1 = arith.constant 0 : index
    %c0_2 = arith.constant 0 : index
    %c0_3 = arith.constant 0 : index
    %1 = vector.load %arg3[%c0_1, %c0_2, %c0_3] : memref<1x16x64xbf16, #tpu.memory_space<vmem>>, vector<1x16x64xbf16>
    %2 = vector.shape_cast %1 : vector<1x16x64xbf16> to vector<16x64xbf16>
    %cst = arith.constant dense<0.000000e+00> : vector<32x64xf32>
    %3 = tpu.matmul %0, %2, %cst {dimension_numbers = #tpu.dot_dimension_numbers<[1], [0], [0], [1], [0, 0, 1, 1], [], []>} : vector<32x16xbf16>, vector<16x64xbf16>, vector<32x64xf32> -> vector<32x64xf32>
    %4 = arith.truncf %3 : vector<32x64xf32> to vector<32x64xbf16>
    %c0_4 = arith.constant 0 : index
    %c0_5 = arith.constant 0 : index
    %c0_6 = arith.constant 0 : index
    %5 = vector.load %arg4[%c0_4, %c0_5, %c0_6] : memref<1x32x64xbf16, #tpu.memory_space<vmem>>, vector<1x32x64xbf16>
    %6 = vector.shape_cast %5 : vector<1x32x64xbf16> to vector<32x64xbf16>
    %7 = vector.shape_cast %4 : vector<32x64xbf16> to vector<1x32x64xbf16>
    tpu.vector_store %arg4[%c0_4, %c0_5, %c0_6], %7 {strides = array<i32>} : memref<1x32x64xbf16, #tpu.memory_space<vmem>>, vector<1x32x64xbf16>,
    return
  }
  func.func @transform_0(%arg0: i32, %arg1: i32) -> (i32, i32) {
    %c0_i32 = arith.constant 0 : i32
    %c0_i32_0 = arith.constant 0 : i32
    %c0_i32_1 = arith.constant 0 : i32
    return %c0_i32, %c0_i32_0 : i32, i32
  }
  func.func @transform_1(%arg0: i32, %arg1: i32) -> (i32, i32, i32) {
    %c0_i32 = arith.constant 0 : i32
    %c0_i32_0 = arith.constant 0 : i32
    return %arg0, %c0_i32, %arg1 : i32, i32, i32
  }
  func.func @transform_2(%arg0: i32, %arg1: i32) -> (i32, i32, i32) {
    %c0_i32 = arith.constant 0 : i32
    %c0_i32_0 = arith.constant 0 : i32
    return %arg0, %c0_i32, %arg1 : i32, i32, i32
  }
}

module attributes {stable_mosaic.version = 11 : i64} {
  func.func @_matmul_bias_kernel(%arg0: i32, %arg1: memref<512x8xbf16, #tpu.memory_space<vmem>>, %arg2: memref<8x4xbf16, #tpu.memory_space<vmem>>, %arg3: memref<1x4xf32, #tpu.memory_space<vmem>>, %arg4: memref<512x4xbf16, #tpu.memory_space<vmem>>) attributes {dimension_semantics = [#tpu.dimension_semantics<parallel>], iteration_bounds = array<i64: 1>, scalar_prefetch = 0 : i64, scratch_operands = 0 : i64, tpu.core_type = #tpu.core_type<tc>, window_params = [{transform_indices = @transform_0, window_bounds = array<i64: 512, 8>}, {pipeline_mode = #tpu.pipeline_mode<synchronous>, transform_indices = @transform_1, window_bounds = array<i64: 8, 4>}, {pipeline_mode = #tpu.pipeline_mode<synchronous>, transform_indices = @transform_2, window_bounds = array<i64: 1, 4>}, {transform_indices = @transform_3, window_bounds = array<i64: 512, 4>}]} {
    %c0 = arith.constant 0 : index
    %c0_0 = arith.constant 0 : index
    %0 = vector.load %arg1[%c0, %c0_0] : memref<512x8xbf16, #tpu.memory_space<vmem>>, vector<512x8xbf16>
    %c0_1 = arith.constant 0 : index
    %c0_2 = arith.constant 0 : index
    %1 = vector.load %arg2[%c0_1, %c0_2] : memref<8x4xbf16, #tpu.memory_space<vmem>>, vector<8x4xbf16>
    %cst = arith.constant dense<0.000000e+00> : vector<512x4xf32>
    %2 = tpu.matmul %0, %1, %cst {dimension_numbers = #tpu.dot_dimension_numbers<[1], [0], [0], [1], [0, 0, 1, 1], [], []>} : vector<512x8xbf16>, vector<8x4xbf16>, vector<512x4xf32> -> vector<512x4xf32>
    %c0_3 = arith.constant 0 : index
    %c0_4 = arith.constant 0 : index
    %3 = vector.load %arg3[%c0_3, %c0_4] : memref<1x4xf32, #tpu.memory_space<vmem>>, vector<1x4xf32>
    %4 = vector.broadcast %3 : vector<1x4xf32> to vector<512x4xf32>
    %5 = arith.addf %2, %4 : vector<512x4xf32>
    %6 = arith.truncf %5 : vector<512x4xf32> to vector<512x4xbf16>
    %c0_5 = arith.constant 0 : index
    %c0_6 = arith.constant 0 : index
    %7 = vector.load %arg4[%c0_5, %c0_6] : memref<512x4xbf16, #tpu.memory_space<vmem>>, vector<512x4xbf16>
    tpu.vector_store %arg4[%c0_5, %c0_6], %6 {strides = array<i32>} : memref<512x4xbf16, #tpu.memory_space<vmem>>, vector<512x4xbf16>,
    return
  }
  func.func @transform_0(%arg0: i32) -> (i32, i32) {
    %c0_i32 = arith.constant 0 : i32
    %c0_i32_0 = arith.constant 0 : i32
    return %arg0, %c0_i32 : i32, i32
  }
  func.func @transform_1(%arg0: i32) -> (i32, i32) {
    %c0_i32 = arith.constant 0 : i32
    %c0_i32_0 = arith.constant 0 : i32
    %c0_i32_1 = arith.constant 0 : i32
    return %c0_i32, %c0_i32_0 : i32, i32
  }
  func.func @transform_2(%arg0: i32) -> (i32, i32) {
    %c0_i32 = arith.constant 0 : i32
    %c0_i32_0 = arith.constant 0 : i32
    %c0_i32_1 = arith.constant 0 : i32
    return %c0_i32, %c0_i32_0 : i32, i32
  }
  func.func @transform_3(%arg0: i32) -> (i32, i32) {
    %c0_i32 = arith.constant 0 : i32
    %c0_i32_0 = arith.constant 0 : i32
    return %arg0, %c0_i32 : i32, i32
  }
}

module attributes {stable_mosaic.version = 11 : i64} {
  func.func @_left_matmul_kernel(%arg0: i32, %arg1: i32, %arg2: memref<32x16xbf16, #tpu.memory_space<vmem>>, %arg3: memref<1x16x128xbf16, #tpu.memory_space<vmem>>, %arg4: memref<1x32x128xbf16, #tpu.memory_space<vmem>>) attributes {dimension_semantics = [#tpu.dimension_semantics<parallel>, #tpu.dimension_semantics<parallel>], iteration_bounds = array<i64: 2, 1>, scalar_prefetch = 0 : i64, scratch_operands = 0 : i64, tpu.core_type = #tpu.core_type<tc>, window_params = [{pipeline_mode = #tpu.pipeline_mode<synchronous>, transform_indices = @transform_0, window_bounds = array<i64: 32, 16>}, {transform_indices = @transform_1, window_bounds = array<i64: 1, 16, 128>}, {transform_indices = @transform_2, window_bounds = array<i64: 1, 32, 128>}]} {
    %c0 = arith.constant 0 : index
    %c0_0 = arith.constant 0 : index
    %0 = vector.load %arg2[%c0, %c0_0] : memref<32x16xbf16, #tpu.memory_space<vmem>>, vector<32x16xbf16>
    %c0_1 = arith.constant 0 : index
    %c0_2 = arith.constant 0 : index
    %c0_3 = arith.constant 0 : index
    %1 = vector.load %arg3[%c0_1, %c0_2, %c0_3] : memref<1x16x128xbf16, #tpu.memory_space<vmem>>, vector<1x16x128xbf16>
    %2 = vector.shape_cast %1 : vector<1x16x128xbf16> to vector<16x128xbf16>
    %cst = arith.constant dense<0.000000e+00> : vector<32x128xf32>
    %3 = tpu.matmul %0, %2, %cst {dimension_numbers = #tpu.dot_dimension_numbers<[1], [0], [0], [1], [0, 0, 1, 1], [], []>} : vector<32x16xbf16>, vector<16x128xbf16>, vector<32x128xf32> -> vector<32x128xf32>
    %4 = arith.truncf %3 : vector<32x128xf32> to vector<32x128xbf16>
    %c0_4 = arith.constant 0 : index
    %c0_5 = arith.constant 0 : index
    %c0_6 = arith.constant 0 : index
    %5 = vector.load %arg4[%c0_4, %c0_5, %c0_6] : memref<1x32x128xbf16, #tpu.memory_space<vmem>>, vector<1x32x128xbf16>
    %6 = vector.shape_cast %5 : vector<1x32x128xbf16> to vector<32x128xbf16>
    %7 = vector.shape_cast %4 : vector<32x128xbf16> to vector<1x32x128xbf16>
    tpu.vector_store %arg4[%c0_4, %c0_5, %c0_6], %7 {strides = array<i32>} : memref<1x32x128xbf16, #tpu.memory_space<vmem>>, vector<1x32x128xbf16>,
    return
  }
  func.func @transform_0(%arg0: i32, %arg1: i32) -> (i32, i32) {
    %c0_i32 = arith.constant 0 : i32
    %c0_i32_0 = arith.constant 0 : i32
    %c0_i32_1 = arith.constant 0 : i32
    return %c0_i32, %c0_i32_0 : i32, i32
  }
  func.func @transform_1(%arg0: i32, %arg1: i32) -> (i32, i32, i32) {
    %c0_i32 = arith.constant 0 : i32
    %c0_i32_0 = arith.constant 0 : i32
    return %arg0, %c0_i32, %arg1 : i32, i32, i32
  }
  func.func @transform_2(%arg0: i32, %arg1: i32) -> (i32, i32, i32) {
    %c0_i32 = arith.constant 0 : i32
    %c0_i32_0 = arith.constant 0 : i32
    return %arg0, %c0_i32, %arg1 : i32, i32, i32
  }
}

module attributes {stable_mosaic.version = 11 : i64} {
  func.func @_conv3x3_bn_relu_kernel(%arg0: i32, %arg1: memref<1x18x32x24xbf16, #tpu.memory_space<vmem>>, %arg2: memref<3x24x128xbf16, #tpu.memory_space<vmem>>, %arg3: memref<1x128xf32, #tpu.memory_space<vmem>>, %arg4: memref<1x128xf32, #tpu.memory_space<vmem>>, %arg5: memref<512x128xbf16, #tpu.memory_space<vmem>>, %arg6: memref<512x128xf32, #tpu.memory_space<vmem>>) attributes {dimension_semantics = [#tpu.dimension_semantics<parallel>], iteration_bounds = array<i64: 4>, scalar_prefetch = 0 : i64, scratch_operands = 1 : i64, tpu.core_type = #tpu.core_type<tc>, window_params = [{transform_indices = @transform_0, window_bounds = array<i64: 1, 18, 32, 24>}, {pipeline_mode = #tpu.pipeline_mode<synchronous>, transform_indices = @transform_1, window_bounds = array<i64: 3, 24, 128>}, {pipeline_mode = #tpu.pipeline_mode<synchronous>, transform_indices = @transform_2, window_bounds = array<i64: 1, 128>}, {pipeline_mode = #tpu.pipeline_mode<synchronous>, transform_indices = @transform_3, window_bounds = array<i64: 1, 128>}, {transform_indices = @transform_4, window_bounds = array<i64: 512, 128>}]} {
    %c0 = arith.constant 0 : index
    %c0_0 = arith.constant 0 : index
    %c0_1 = arith.constant 0 : index
    %c0_2 = arith.constant 0 : index
    %0 = vector.load %arg1[%c0, %c0_0, %c0_1, %c0_2] : memref<1x18x32x24xbf16, #tpu.memory_space<vmem>>, vector<1x16x32x24xbf16>
    %1 = vector.shape_cast %0 : vector<1x16x32x24xbf16> to vector<16x32x24xbf16>
    %2 = vector.shape_cast %1 : vector<16x32x24xbf16> to vector<512x24xbf16>
    %c0_3 = arith.constant 0 : index
    %c0_4 = arith.constant 0 : index
    %c0_5 = arith.constant 0 : index
    %3 = vector.load %arg2[%c0_3, %c0_4, %c0_5] : memref<3x24x128xbf16, #tpu.memory_space<vmem>>, vector<1x24x128xbf16>
    %4 = vector.shape_cast %3 : vector<1x24x128xbf16> to vector<24x128xbf16>
    %cst = arith.constant dense<0.000000e+00> : vector<512x128xf32>
    %5 = tpu.matmul %2, %4, %cst {dimension_numbers = #tpu.dot_dimension_numbers<[1], [0], [0], [1], [0, 0, 1, 1], [], []>} : vector<512x24xbf16>, vector<24x128xbf16>, vector<512x128xf32> -> vector<512x128xf32>
    %c0_6 = arith.constant 0 : index
    %c0_7 = arith.constant 0 : index
    %6 = vector.load %arg6[%c0_6, %c0_7] : memref<512x128xf32, #tpu.memory_space<vmem>>, vector<512x128xf32>
    tpu.vector_store %arg6[%c0_6, %c0_7], %5 {strides = array<i32>} : memref<512x128xf32, #tpu.memory_space<vmem>>, vector<512x128xf32>,
    %c0_8 = arith.constant 0 : index
    %c1 = arith.constant 1 : index
    %c0_9 = arith.constant 0 : index
    %c0_10 = arith.constant 0 : index
    %7 = vector.load %arg1[%c0_8, %c1, %c0_9, %c0_10] : memref<1x18x32x24xbf16, #tpu.memory_space<vmem>>, vector<1x16x32x24xbf16>
    %8 = vector.shape_cast %7 : vector<1x16x32x24xbf16> to vector<16x32x24xbf16>
    %9 = vector.shape_cast %8 : vector<16x32x24xbf16> to vector<512x24xbf16>
    %c1_11 = arith.constant 1 : index
    %c0_12 = arith.constant 0 : index
    %c0_13 = arith.constant 0 : index
    %10 = vector.load %arg2[%c1_11, %c0_12, %c0_13] : memref<3x24x128xbf16, #tpu.memory_space<vmem>>, vector<1x24x128xbf16>
    %11 = vector.shape_cast %10 : vector<1x24x128xbf16> to vector<24x128xbf16>
    %cst_14 = arith.constant dense<0.000000e+00> : vector<512x128xf32>
    %12 = tpu.matmul %9, %11, %cst_14 {dimension_numbers = #tpu.dot_dimension_numbers<[1], [0], [0], [1], [0, 0, 1, 1], [], []>} : vector<512x24xbf16>, vector<24x128xbf16>, vector<512x128xf32> -> vector<512x128xf32>
    %c0_15 = arith.constant 0 : index
    %c0_16 = arith.constant 0 : index
    %13 = vector.load %arg6[%c0_15, %c0_16] : memref<512x128xf32, #tpu.memory_space<vmem>>, vector<512x128xf32>
    %14 = arith.addf %13, %12 : vector<512x128xf32>
    %c0_17 = arith.constant 0 : index
    %c0_18 = arith.constant 0 : index
    %15 = vector.load %arg6[%c0_17, %c0_18] : memref<512x128xf32, #tpu.memory_space<vmem>>, vector<512x128xf32>
    tpu.vector_store %arg6[%c0_17, %c0_18], %14 {strides = array<i32>} : memref<512x128xf32, #tpu.memory_space<vmem>>, vector<512x128xf32>,
    %c0_19 = arith.constant 0 : index
    %c2 = arith.constant 2 : index
    %c0_20 = arith.constant 0 : index
    %c0_21 = arith.constant 0 : index
    %16 = vector.load %arg1[%c0_19, %c2, %c0_20, %c0_21] : memref<1x18x32x24xbf16, #tpu.memory_space<vmem>>, vector<1x16x32x24xbf16>
    %17 = vector.shape_cast %16 : vector<1x16x32x24xbf16> to vector<16x32x24xbf16>
    %18 = vector.shape_cast %17 : vector<16x32x24xbf16> to vector<512x24xbf16>
    %c2_22 = arith.constant 2 : index
    %c0_23 = arith.constant 0 : index
    %c0_24 = arith.constant 0 : index
    %19 = vector.load %arg2[%c2_22, %c0_23, %c0_24] : memref<3x24x128xbf16, #tpu.memory_space<vmem>>, vector<1x24x128xbf16>
    %20 = vector.shape_cast %19 : vector<1x24x128xbf16> to vector<24x128xbf16>
    %cst_25 = arith.constant dense<0.000000e+00> : vector<512x128xf32>
    %21 = tpu.matmul %18, %20, %cst_25 {dimension_numbers = #tpu.dot_dimension_numbers<[1], [0], [0], [1], [0, 0, 1, 1], [], []>} : vector<512x24xbf16>, vector<24x128xbf16>, vector<512x128xf32> -> vector<512x128xf32>
    %c0_26 = arith.constant 0 : index
    %c0_27 = arith.constant 0 : index
    %22 = vector.load %arg6[%c0_26, %c0_27] : memref<512x128xf32, #tpu.memory_space<vmem>>, vector<512x128xf32>
    %23 = arith.addf %22, %21 : vector<512x128xf32>
    %c0_28 = arith.constant 0 : index
    %c0_29 = arith.constant 0 : index
    %24 = vector.load %arg6[%c0_28, %c0_29] : memref<512x128xf32, #tpu.memory_space<vmem>>, vector<512x128xf32>
    tpu.vector_store %arg6[%c0_28, %c0_29], %23 {strides = array<i32>} : memref<512x128xf32, #tpu.memory_space<vmem>>, vector<512x128xf32>,
    %c0_30 = arith.constant 0 : index
    %c0_31 = arith.constant 0 : index
    %25 = vector.load %arg6[%c0_30, %c0_31] : memref<512x128xf32, #tpu.memory_space<vmem>>, vector<512x128xf32>
    %c0_32 = arith.constant 0 : index
    %c0_33 = arith.constant 0 : index
    %26 = vector.load %arg3[%c0_32, %c0_33] : memref<1x128xf32, #tpu.memory_space<vmem>>, vector<1x128xf32>
    %27 = vector.broadcast %26 : vector<1x128xf32> to vector<512x128xf32>
    %28 = arith.mulf %25, %27 : vector<512x128xf32>
    %c0_34 = arith.constant 0 : index
    %c0_35 = arith.constant 0 : index
    %29 = vector.load %arg4[%c0_34, %c0_35] : memref<1x128xf32, #tpu.memory_space<vmem>>, vector<1x128xf32>
    %30 = vector.broadcast %29 : vector<1x128xf32> to vector<512x128xf32>
    %31 = arith.addf %28, %30 : vector<512x128xf32>
    %cst_36 = arith.constant 0.000000e+00 : f32
    %32 = vector.broadcast %cst_36 : f32 to vector<512x128xf32>
    %33 = arith.maximumf %31, %32 : vector<512x128xf32>
    %34 = arith.truncf %33 : vector<512x128xf32> to vector<512x128xbf16>
    %c0_37 = arith.constant 0 : index
    %c0_38 = arith.constant 0 : index
    %35 = vector.load %arg5[%c0_37, %c0_38] : memref<512x128xbf16, #tpu.memory_space<vmem>>, vector<512x128xbf16>
    tpu.vector_store %arg5[%c0_37, %c0_38], %34 {strides = array<i32>} : memref<512x128xbf16, #tpu.memory_space<vmem>>, vector<512x128xbf16>,
    return
  }
  func.func @transform_0(%arg0: i32) -> (i32, i32, i32, i32) {
    %c0_i32 = arith.constant 0 : i32
    %c0_i32_0 = arith.constant 0 : i32
    %c0_i32_1 = arith.constant 0 : i32
    %c0_i32_2 = arith.constant 0 : i32
    return %arg0, %c0_i32, %c0_i32_0, %c0_i32_1 : i32, i32, i32, i32
  }
  func.func @transform_1(%arg0: i32) -> (i32, i32, i32) {
    %c0_i32 = arith.constant 0 : i32
    %c0_i32_0 = arith.constant 0 : i32
    %c0_i32_1 = arith.constant 0 : i32
    %c0_i32_2 = arith.constant 0 : i32
    return %c0_i32, %c0_i32_0, %c0_i32_1 : i32, i32, i32
  }
  func.func @transform_2(%arg0: i32) -> (i32, i32) {
    %c0_i32 = arith.constant 0 : i32
    %c0_i32_0 = arith.constant 0 : i32
    %c0_i32_1 = arith.constant 0 : i32
    return %c0_i32, %c0_i32_0 : i32, i32
  }
  func.func @transform_3(%arg0: i32) -> (i32, i32) {
    %c0_i32 = arith.constant 0 : i32
    %c0_i32_0 = arith.constant 0 : i32
    %c0_i32_1 = arith.constant 0 : i32
    return %c0_i32, %c0_i32_0 : i32, i32
  }
  func.func @transform_4(%arg0: i32) -> (i32, i32) {
    %c0_i32 = arith.constant 0 : i32
    %c0_i32_0 = arith.constant 0 : i32
    return %arg0, %c0_i32 : i32, i32
  }
}

module attributes {stable_mosaic.version = 11 : i64} {
  func.func @_conv3x3_bn_relu_kernel(%arg0: i32, %arg1: memref<1x18x32x12xbf16, #tpu.memory_space<vmem>>, %arg2: memref<3x12x128xbf16, #tpu.memory_space<vmem>>, %arg3: memref<1x128xf32, #tpu.memory_space<vmem>>, %arg4: memref<1x128xf32, #tpu.memory_space<vmem>>, %arg5: memref<512x128xbf16, #tpu.memory_space<vmem>>, %arg6: memref<512x128xf32, #tpu.memory_space<vmem>>) attributes {dimension_semantics = [#tpu.dimension_semantics<parallel>], iteration_bounds = array<i64: 4>, scalar_prefetch = 0 : i64, scratch_operands = 1 : i64, tpu.core_type = #tpu.core_type<tc>, window_params = [{transform_indices = @transform_0, window_bounds = array<i64: 1, 18, 32, 12>}, {pipeline_mode = #tpu.pipeline_mode<synchronous>, transform_indices = @transform_1, window_bounds = array<i64: 3, 12, 128>}, {pipeline_mode = #tpu.pipeline_mode<synchronous>, transform_indices = @transform_2, window_bounds = array<i64: 1, 128>}, {pipeline_mode = #tpu.pipeline_mode<synchronous>, transform_indices = @transform_3, window_bounds = array<i64: 1, 128>}, {transform_indices = @transform_4, window_bounds = array<i64: 512, 128>}]} {
    %c0 = arith.constant 0 : index
    %c0_0 = arith.constant 0 : index
    %c0_1 = arith.constant 0 : index
    %c0_2 = arith.constant 0 : index
    %0 = vector.load %arg1[%c0, %c0_0, %c0_1, %c0_2] : memref<1x18x32x12xbf16, #tpu.memory_space<vmem>>, vector<1x16x32x12xbf16>
    %1 = vector.shape_cast %0 : vector<1x16x32x12xbf16> to vector<16x32x12xbf16>
    %2 = vector.shape_cast %1 : vector<16x32x12xbf16> to vector<512x12xbf16>
    %c0_3 = arith.constant 0 : index
    %c0_4 = arith.constant 0 : index
    %c0_5 = arith.constant 0 : index
    %3 = vector.load %arg2[%c0_3, %c0_4, %c0_5] : memref<3x12x128xbf16, #tpu.memory_space<vmem>>, vector<1x12x128xbf16>
    %4 = vector.shape_cast %3 : vector<1x12x128xbf16> to vector<12x128xbf16>
    %cst = arith.constant dense<0.000000e+00> : vector<512x128xf32>
    %5 = tpu.matmul %2, %4, %cst {dimension_numbers = #tpu.dot_dimension_numbers<[1], [0], [0], [1], [0, 0, 1, 1], [], []>} : vector<512x12xbf16>, vector<12x128xbf16>, vector<512x128xf32> -> vector<512x128xf32>
    %c0_6 = arith.constant 0 : index
    %c0_7 = arith.constant 0 : index
    %6 = vector.load %arg6[%c0_6, %c0_7] : memref<512x128xf32, #tpu.memory_space<vmem>>, vector<512x128xf32>
    tpu.vector_store %arg6[%c0_6, %c0_7], %5 {strides = array<i32>} : memref<512x128xf32, #tpu.memory_space<vmem>>, vector<512x128xf32>,
    %c0_8 = arith.constant 0 : index
    %c1 = arith.constant 1 : index
    %c0_9 = arith.constant 0 : index
    %c0_10 = arith.constant 0 : index
    %7 = vector.load %arg1[%c0_8, %c1, %c0_9, %c0_10] : memref<1x18x32x12xbf16, #tpu.memory_space<vmem>>, vector<1x16x32x12xbf16>
    %8 = vector.shape_cast %7 : vector<1x16x32x12xbf16> to vector<16x32x12xbf16>
    %9 = vector.shape_cast %8 : vector<16x32x12xbf16> to vector<512x12xbf16>
    %c1_11 = arith.constant 1 : index
    %c0_12 = arith.constant 0 : index
    %c0_13 = arith.constant 0 : index
    %10 = vector.load %arg2[%c1_11, %c0_12, %c0_13] : memref<3x12x128xbf16, #tpu.memory_space<vmem>>, vector<1x12x128xbf16>
    %11 = vector.shape_cast %10 : vector<1x12x128xbf16> to vector<12x128xbf16>
    %cst_14 = arith.constant dense<0.000000e+00> : vector<512x128xf32>
    %12 = tpu.matmul %9, %11, %cst_14 {dimension_numbers = #tpu.dot_dimension_numbers<[1], [0], [0], [1], [0, 0, 1, 1], [], []>} : vector<512x12xbf16>, vector<12x128xbf16>, vector<512x128xf32> -> vector<512x128xf32>
    %c0_15 = arith.constant 0 : index
    %c0_16 = arith.constant 0 : index
    %13 = vector.load %arg6[%c0_15, %c0_16] : memref<512x128xf32, #tpu.memory_space<vmem>>, vector<512x128xf32>
    %14 = arith.addf %13, %12 : vector<512x128xf32>
    %c0_17 = arith.constant 0 : index
    %c0_18 = arith.constant 0 : index
    %15 = vector.load %arg6[%c0_17, %c0_18] : memref<512x128xf32, #tpu.memory_space<vmem>>, vector<512x128xf32>
    tpu.vector_store %arg6[%c0_17, %c0_18], %14 {strides = array<i32>} : memref<512x128xf32, #tpu.memory_space<vmem>>, vector<512x128xf32>,
    %c0_19 = arith.constant 0 : index
    %c2 = arith.constant 2 : index
    %c0_20 = arith.constant 0 : index
    %c0_21 = arith.constant 0 : index
    %16 = vector.load %arg1[%c0_19, %c2, %c0_20, %c0_21] : memref<1x18x32x12xbf16, #tpu.memory_space<vmem>>, vector<1x16x32x12xbf16>
    %17 = vector.shape_cast %16 : vector<1x16x32x12xbf16> to vector<16x32x12xbf16>
    %18 = vector.shape_cast %17 : vector<16x32x12xbf16> to vector<512x12xbf16>
    %c2_22 = arith.constant 2 : index
    %c0_23 = arith.constant 0 : index
    %c0_24 = arith.constant 0 : index
    %19 = vector.load %arg2[%c2_22, %c0_23, %c0_24] : memref<3x12x128xbf16, #tpu.memory_space<vmem>>, vector<1x12x128xbf16>
    %20 = vector.shape_cast %19 : vector<1x12x128xbf16> to vector<12x128xbf16>
    %cst_25 = arith.constant dense<0.000000e+00> : vector<512x128xf32>
    %21 = tpu.matmul %18, %20, %cst_25 {dimension_numbers = #tpu.dot_dimension_numbers<[1], [0], [0], [1], [0, 0, 1, 1], [], []>} : vector<512x12xbf16>, vector<12x128xbf16>, vector<512x128xf32> -> vector<512x128xf32>
    %c0_26 = arith.constant 0 : index
    %c0_27 = arith.constant 0 : index
    %22 = vector.load %arg6[%c0_26, %c0_27] : memref<512x128xf32, #tpu.memory_space<vmem>>, vector<512x128xf32>
    %23 = arith.addf %22, %21 : vector<512x128xf32>
    %c0_28 = arith.constant 0 : index
    %c0_29 = arith.constant 0 : index
    %24 = vector.load %arg6[%c0_28, %c0_29] : memref<512x128xf32, #tpu.memory_space<vmem>>, vector<512x128xf32>
    tpu.vector_store %arg6[%c0_28, %c0_29], %23 {strides = array<i32>} : memref<512x128xf32, #tpu.memory_space<vmem>>, vector<512x128xf32>,
    %c0_30 = arith.constant 0 : index
    %c0_31 = arith.constant 0 : index
    %25 = vector.load %arg6[%c0_30, %c0_31] : memref<512x128xf32, #tpu.memory_space<vmem>>, vector<512x128xf32>
    %c0_32 = arith.constant 0 : index
    %c0_33 = arith.constant 0 : index
    %26 = vector.load %arg3[%c0_32, %c0_33] : memref<1x128xf32, #tpu.memory_space<vmem>>, vector<1x128xf32>
    %27 = vector.broadcast %26 : vector<1x128xf32> to vector<512x128xf32>
    %28 = arith.mulf %25, %27 : vector<512x128xf32>
    %c0_34 = arith.constant 0 : index
    %c0_35 = arith.constant 0 : index
    %29 = vector.load %arg4[%c0_34, %c0_35] : memref<1x128xf32, #tpu.memory_space<vmem>>, vector<1x128xf32>
    %30 = vector.broadcast %29 : vector<1x128xf32> to vector<512x128xf32>
    %31 = arith.addf %28, %30 : vector<512x128xf32>
    %cst_36 = arith.constant 0.000000e+00 : f32
    %32 = vector.broadcast %cst_36 : f32 to vector<512x128xf32>
    %33 = arith.maximumf %31, %32 : vector<512x128xf32>
    %34 = arith.truncf %33 : vector<512x128xf32> to vector<512x128xbf16>
    %c0_37 = arith.constant 0 : index
    %c0_38 = arith.constant 0 : index
    %35 = vector.load %arg5[%c0_37, %c0_38] : memref<512x128xbf16, #tpu.memory_space<vmem>>, vector<512x128xbf16>
    tpu.vector_store %arg5[%c0_37, %c0_38], %34 {strides = array<i32>} : memref<512x128xbf16, #tpu.memory_space<vmem>>, vector<512x128xbf16>,
    return
  }
  func.func @transform_0(%arg0: i32) -> (i32, i32, i32, i32) {
    %c0_i32 = arith.constant 0 : i32
    %c0_i32_0 = arith.constant 0 : i32
    %c0_i32_1 = arith.constant 0 : i32
    %c0_i32_2 = arith.constant 0 : i32
    return %arg0, %c0_i32, %c0_i32_0, %c0_i32_1 : i32, i32, i32, i32
  }
  func.func @transform_1(%arg0: i32) -> (i32, i32, i32) {
    %c0_i32 = arith.constant 0 : i32
    %c0_i32_0 = arith.constant 0 : i32
    %c0_i32_1 = arith.constant 0 : i32
    %c0_i32_2 = arith.constant 0 : i32
    return %c0_i32, %c0_i32_0, %c0_i32_1 : i32, i32, i32
  }
  func.func @transform_2(%arg0: i32) -> (i32, i32) {
    %c0_i32 = arith.constant 0 : i32
    %c0_i32_0 = arith.constant 0 : i32
    %c0_i32_1 = arith.constant 0 : i32
    return %c0_i32, %c0_i32_0 : i32, i32
  }
  func.func @transform_3(%arg0: i32) -> (i32, i32) {
    %c0_i32 = arith.constant 0 : i32
    %c0_i32_0 = arith.constant 0 : i32
    %c0_i32_1 = arith.constant 0 : i32
    return %c0_i32, %c0_i32_0 : i32, i32
  }
  func.func @transform_4(%arg0: i32) -> (i32, i32) {
    %c0_i32 = arith.constant 0 : i32
    %c0_i32_0 = arith.constant 0 : i32
    return %arg0, %c0_i32 : i32, i32
  }
}

</mosaic_0001>

<llo_original>
// kernel: up_forward.6
$region0: #{up_forward.6}
  #allocation0 [shape = 'u32[]', space=smem, size = 0x4, offset = 0x4, fixed_abs, tag = 'smem constant byte address 0x4 - core index']
  #allocation1 [shape = 'u32[72,128]{1,0:T(1,128)}', space=vmem, size = 0x9000, scoped, tag = 'internal scratch']
  %s0 = inlined_call_operand.vmem [shape: bf16[32,16], index: 0, kind: input, shape index: {}]
  %s1 = inlined_call_operand.vmem [shape: bf16[2,16,64], index: 1, kind: input, shape index: {}]
  %s2 = inlined_call_operand.vmem [shape: bf16[2,32,64], index: 2, kind: output, shape index: {}]
  %s3 = sld [smem:[#allocation0]]
  $region41: #{up_forward.6} parent=0
    _
  %s5 = ssub.s32 1, %s3
  %s6 = scalar_select 0, %s5, %s3
  loop: start=0, step=1, limit=4
  $region2: #{up_forward.6} parent=0 // loop_pre_header
    _
  $region3: #{up_forward.6} parent=0 // loop_header
    %s8 = sphi 0, %s12
    %p9 = scmp.ge.s32.totalorder %s8, 4
    %s15 = sphi 0, %s27
    %s16 = sphi 0, %s23
    %s17 = sphi 0, %s15
    %s18 = sphi 0, %s16
    %s19 = sphi 0, %s17
    %s20 = sphi 0, %s18
    %s28 = sphi 0, %s28
    %s30 = sphi 0, %s28
    %s31 = sphi 0, %s30
    %s45 = sphi 0, %s31
    %s53 = sphi 0, %s55
    %s56 = sphi 0, %s53
    %s57 = sphi 0, %s56
    %s73 = sphi 0, %s57
    %s81 = sphi 0, %s83
    %s84 = sphi 0, %s81
    %s85 = sphi 0, %s84
    %s101 = sphi 0, %s85
  $region4: #{up_forward.6} parent=0 // loop_header_branch
    %11 = sbr.rel (%p9) target = $region8
  $region5: #{up_forward.6} parent=0 // loop_body
    %s13 = ssub.s32 %s8, 1
    %s14 = ssub.s32 %s8, 2
    %s21 = sadd.s32 1, %s16
    %p22 = scmp.ge.s32.totalorder %s21, 1
    %s23 = scalar_select %p22, 0, %s21
    %s24 = sadd.s32 1, %s15
    %s25 = scalar_select %p22, %s24, %s15
    %p26 = scmp.ge.s32.totalorder %s25, 2
    %s27 = scalar_select %p26, 0, %s25
    %s29 = sadd.s32 %s28, 1
    %p32 = scmp.eq.s32.totalorder %s8, 1
    %p33 = scmp.ne.s32.totalorder %s28, %s30
    %p34 = scmp.eq.s32.totalorder %s8, 0
    %p35 = por %p33, %p34
    %p36 = scmp.ne.s32.totalorder %s28, %s30
    %p37 = scmp.eq.s32.totalorder %s13, 1
    %p38 = por %p36, %p37
    %p39 = scmp.ne.s32.totalorder %s30, %s31
    %p40 = scmp.eq.s32.totalorder %s13, 0
    %p41 = por %p39, %p40
    %p42 = scmp.ne.s32.totalorder %s30, %s31
    %p43 = scmp.eq.s32.totalorder %s14, 1
    %p44 = por %p42, %p43
    %p46 = scmp.ne.s32.totalorder %s31, %s45
    %p47 = scmp.eq.s32.totalorder %s14, 0
    %p48 = por %p46, %p47
    %s49 = ssub.s32 %s15, %s27
    %s50 = ssub.s32 %s16, %s23
    %s51 = sor.u32 %s49, %s50
    %p52 = scmp.eq.s32.totalorder %s51, 0
    %s54 = sadd.s32 %s53, 1
    %s55 = scalar_select %p52, %s53, %s54
    %p58 = pneg %p52
    %p59 = scmp.eq.s32.totalorder %s8, 1
    %p60 = por %p58, %p59
    %p61 = scmp.ne.s32.totalorder %s53, %s56
    %p62 = scmp.eq.s32.totalorder %s8, 0
    %p63 = por %p61, %p62
    %p64 = scmp.ne.s32.totalorder %s53, %s56
    %p65 = scmp.eq.s32.totalorder %s13, 1
    %p66 = por %p64, %p65
    %p67 = scmp.ne.s32.totalorder %s56, %s57
    %p68 = scmp.eq.s32.totalorder %s13, 0
    %p69 = por %p67, %p68
    %p70 = scmp.ne.s32.totalorder %s56, %s57
    %p71 = scmp.eq.s32.totalorder %s14, 1
    %p72 = por %p70, %p71
    %p74 = scmp.ne.s32.totalorder %s57, %s73
    %p75 = scmp.eq.s32.totalorder %s14, 0
    %p76 = por %p74, %p75
    %s77 = ssub.s32 %s15, %s27
    %s78 = ssub.s32 %s16, %s23
    %s79 = sor.u32 %s77, %s78
    %p80 = scmp.eq.s32.totalorder %s79, 0
    %s82 = sadd.s32 %s81, 1
    %s83 = scalar_select %p80, %s81, %s82
    %p86 = pneg %p80
    %p87 = scmp.eq.s32.totalorder %s8, 1
    %p88 = por %p86, %p87
    %p89 = scmp.ne.s32.totalorder %s81, %s84
    %p90 = scmp.eq.s32.totalorder %s8, 0
    %p91 = por %p89, %p90
    %p92 = scmp.ne.s32.totalorder %s81, %s84
    %p93 = scmp.eq.s32.totalorder %s13, 1
    %p94 = por %p92, %p93
    %p95 = scmp.ne.s32.totalorder %s84, %s85
    %p96 = scmp.eq.s32.totalorder %s13, 0
    %p97 = por %p95, %p96
    %p98 = scmp.ne.s32.totalorder %s84, %s85
    %p99 = scmp.eq.s32.totalorder %s14, 1
    %p100 = por %p98, %p99
    %p102 = scmp.ne.s32.totalorder %s85, %s101
    %p103 = scmp.eq.s32.totalorder %s14, 0
    %p104 = por %p102, %p103
    %p105 = scmp.le.s32.totalorder 1, %s8
    %p106 = scmp.lt.s32.totalorder %s8, 3
    %p107 = pnand %p105, %p106
    %p108 = pneg %p107
    // Predicated region
    $region9: #{up_forward.6} parent=5 // pred_check
      _
    $region10: #{up_forward.6} parent=5 // pred_check_branch
      %110 = sbr.rel (%p107) target = $region12
    $region11: #{up_forward.6} parent=5 // pred_region
      %s111 = ssub.s32 %s8, 1
      // Predicated region
      $region13: #{up_forward.6} parent=11 // pred_check
        %p112 = pneg %p41
      $region14: #{up_forward.6} parent=11 // pred_check_branch
        %114 = sbr.rel (%p112) target = $region16
      $region15: #{up_forward.6} parent=11 // pred_region
        _
      $region16: #{up_forward.6} parent=11 // pred_fallthru
        _
    $region12: #{up_forward.6} parent=5 // pred_fallthru
      _
    %p115 = scmp.lt.s32.totalorder %s8, 2
    // Predicated region
    $region17: #{up_forward.6} parent=5 // pred_check
      %p116 = pneg %p115
    $region18: #{up_forward.6} parent=5 // pred_check_branch
      %118 = sbr.rel (%p116) target = $region20
    $region19: #{up_forward.6} parent=5 // pred_region
      // Predicated region
      $region21: #{up_forward.6} parent=19 // pred_check
        %p119 = pneg %p63
      $region22: #{up_forward.6} parent=19 // pred_check_branch
        %121 = sbr.rel (%p119) target = $region24
      $region23: #{up_forward.6} parent=19 // pred_region
        %p122 = scmp.lt.s32.totalorder %s15, 1
        %s123 = scalar_select %p122, %s15, 1
        %p124 = scmp.lt.s32.totalorder %s16, 0
        %s125 = scalar_select %p124, %s16, 0
        %s126 = smul.addr %s123, 2
        %s127 = sadd.s32 %s125, %s126
        %s128 = smul.addr %s127, 4
        %s129 = scalar_lea.vmem %s1, %s128
      $region24: #{up_forward.6} parent=19 // pred_fallthru
        _
    $region20: #{up_forward.6} parent=5 // pred_fallthru
      _
    %p130 = scmp.le.s32.totalorder 1, %s8
    %p131 = scmp.lt.s32.totalorder %s8, 3
    %p132 = pnand %p130, %p131
    %p133 = pneg %p132
    // Predicated region
    $region25: #{up_forward.6} parent=5 // pred_check
      _
    $region26: #{up_forward.6} parent=5 // pred_check_branch
      %135 = sbr.rel (%p132) target = $region28
    $region27: #{up_forward.6} parent=5 // pred_region
      %s136 = ssub.s32 %s8, 1
      %p137 = pneg %p41
      %p138 = pneg %p38
      %p139 = scmp.lt.s32.totalorder %s17, 1
      %s140 = scalar_select %p139, %s17, 1
      %p141 = scmp.lt.s32.totalorder %s18, 0
      %s142 = scalar_select %p141, %s18, 0
      %s143 = smul.addr %s140, 2
      %s144 = sadd.s32 %s142, %s143
      %s145 = smul.addr %s144, 4
      %s146 = scalar_lea.vmem %s1, %s145
      %p147 = pneg %p69
      %p148 = pneg %p66
      %p149 = pneg %p97
      %p150 = pneg %p94
      %p151 = scmp.lt.s32.totalorder %s17, 1
      %s152 = scalar_select %p151, %s17, 1
      %p153 = scmp.lt.s32.totalorder %s18, 0
      %s154 = scalar_select %p153, %s18, 0
      %s155 = smul.addr %s152, 4
      %s156 = sadd.s32 %s154, %s155
      %s157 = smul.addr %s156, 4
      %s158 = scalar_lea.vmem %s2, %s157
      %p159 = scmp.lt.s32.totalorder %s17, 1
      %s160 = scalar_select %p159, %s17, 1
      %p161 = scmp.lt.s32.totalorder %s18, 0
      %s162 = scalar_select %p161, %s18, 0
      %s163 = smul.addr %s160, 2
      %s164 = sadd.s32 %s162, %s163
      %s165 = smul.addr %s164, 4
      %s166 = scalar_lea.vmem %s1, %s165
      %p167 = scmp.lt.s32.totalorder %s17, 1
      %s168 = scalar_select %p167, %s17, 1
      %p169 = scmp.lt.s32.totalorder %s18, 0
      %s170 = scalar_select %p169, %s18, 0
      %s171 = smul.addr %s168, 4
      %s172 = sadd.s32 %s170, %s171
      %s173 = smul.addr %s172, 4
      %s174 = scalar_lea.vmem %s2, %s173
      %v176 = vld [vmem:[%s0] sm:$0xf]
      %v177 = vld [vmem:[%s0 + $0x4] sm:$0xf]
      %v178 = vld [vmem:[%s0 + $0x8] sm:$0xf]
      %v179 = vld [vmem:[%s0 + $0xc] sm:$0xf]
      %v180 = vld [vmem:[%s166] sm:$0xf]
      %v181 = vld [vmem:[%s166 + $0x4] sm:$0xf]
      %v186 = vunpack.c.l.b16 %v176
      %v187 = vunpack.c.l.b16 %v177
      %v188 = vunpack.c.l.b16 %v178
      %v189 = vunpack.c.l.b16 %v179
      %v190 = vpack.c.b16 %v187, %v186
      %v191 = vpack.c.b16 %v189, %v188
      %v194 = vunpack.c.l.b16 %v180
      %v195 = vunpack.c.l.b16 %v181
      %v196 = vpack.c.b16 %v195, %v194
      %vm198 = vcmask 130048
      %v200 = vsel %vm198, %v190, 0
      %v203 = vsel %vm198, %v191, 0
      %205 = vmatpush.bf16.msra.mxu0 0
      %206 = vmatpush.bf16.msra.mxu0 0
      %207 = vmatpush.bf16.msra.mxu0 0
      %208 = vmatpush.bf16.msra.mxu0 0
      %209 = vmatpush.bf16.msra.mxu0 0
      %210 = vmatpush.bf16.msra.mxu0 0
      %211 = vmatpush.bf16.msra.mxu0 0
      %212 = vmatpush.bf16.msra.mxu0 %v196
      %213 = vmatmul.bf16.gmra.mxu0 %v200
      %v214 = vpop.f32.mrf.mxu0
      %v215 = vadd.f32 0.0, %v214
      %v216 = vpop.f32.mrf.mxu0
      %v217 = vadd.f32 0.0, %v216
      %218 = vmatmul.bf16.gmra.mxu0 %v203
      %v219 = vpop.f32.mrf.mxu0
      %v220 = vadd.f32 0.0, %v219
      %v221 = vpop.f32.mrf.mxu0
      %v222 = vadd.f32 0.0, %v221
      %223 = vdwg.mxu0
      %v224 = vpack.c.bf16 %v215, %v215
      %v225 = vpack.c.bf16 %v217, %v217
      %v226 = vpack.c.bf16 %v220, %v220
      %v227 = vpack.c.bf16 %v222, %v222
      %vm228 = vcmask 519168
      %229 = vst.msk [vmem:[%s174] sm:$0xf] %vm228, %v224
      %230 = vst.msk [vmem:[%s174 + $0x4] sm:$0xf] %vm228, %v225
      %231 = vst.msk [vmem:[%s174 + $0x8] sm:$0xf] %vm228, %v226
      %232 = vst.msk [vmem:[%s174 + $0xc] sm:$0xf] %vm228, %v227
      %p233 = scmp.lt.s32.totalorder %s17, 1
      %s234 = scalar_select %p233, %s17, 1
      %p235 = scmp.lt.s32.totalorder %s18, 0
      %s236 = scalar_select %p235, %s18, 0
      %s237 = smul.addr %s234, 4
      %s238 = sadd.s32 %s236, %s237
      %s239 = smul.addr %s238, 4
      %s240 = scalar_lea.vmem %s2, %s239
      // Predicated region
      $region29: #{up_forward.6} parent=27 // pred_check
        %p241 = pneg %p94
      $region30: #{up_forward.6} parent=27 // pred_check_branch
        %243 = sbr.rel (%p241) target = $region32
      $region31: #{up_forward.6} parent=27 // pred_region
        _
      $region32: #{up_forward.6} parent=27 // pred_fallthru
        _
    $region28: #{up_forward.6} parent=5 // pred_fallthru
      _
    %p244 = scmp.le.s32.totalorder 2, %s8
    // Predicated region
    $region33: #{up_forward.6} parent=5 // pred_check
      %p245 = pneg %p244
    $region34: #{up_forward.6} parent=5 // pred_check_branch
      %247 = sbr.rel (%p245) target = $region36
    $region35: #{up_forward.6} parent=5 // pred_region
      %s248 = ssub.s32 %s8, 2
      // Predicated region
      $region37: #{up_forward.6} parent=35 // pred_check
        %p249 = pneg %p100
      $region38: #{up_forward.6} parent=35 // pred_check_branch
        %251 = sbr.rel (%p249) target = $region40
      $region39: #{up_forward.6} parent=35 // pred_region
        %p252 = scmp.lt.s32.totalorder %s19, 1
        %s253 = scalar_select %p252, %s19, 1
        %p254 = scmp.lt.s32.totalorder %s20, 0
        %s255 = scalar_select %p254, %s20, 0
        %s256 = smul.addr %s253, 4
        %s257 = sadd.s32 %s255, %s256
        %s258 = smul.addr %s257, 4
        %s259 = scalar_lea.vmem %s2, %s258
      $region40: #{up_forward.6} parent=35 // pred_fallthru
        _
    $region36: #{up_forward.6} parent=5 // pred_fallthru
      _
  $region6: #{up_forward.6} parent=0 // loop_footer
    %s12 = sadd.s32 1, %s8
  $region7: #{up_forward.6} parent=0 // loop_footer_branch
    %7 = sbr.rel target = $region3
  $region8: #{up_forward.6} parent=0 // loop_exit
    _

// kernel: up_forward.5
$region0: #{up_forward.5}
  #allocation0 [shape = 'u32[]', space=smem, size = 0x4, offset = 0x4, fixed_abs, tag = 'smem constant byte address 0x4 - core index']
  #allocation1 [shape = 'u32[72,128]{1,0:T(1,128)}', space=vmem, size = 0x9000, scoped, tag = 'internal scratch']
  %s0 = inlined_call_operand.vmem [shape: bf16[512,8], index: 0, kind: input, shape index: {}]
  %s1 = inlined_call_operand.vmem [shape: bf16[8,4], index: 1, kind: input, shape index: {}]
  %s2 = inlined_call_operand.vmem [shape: f32[1,4], index: 2, kind: input, shape index: {}]
  %s3 = inlined_call_operand.vmem [shape: bf16[512,4], index: 3, kind: output, shape index: {}]
  %s4 = sld [smem:[#allocation0]]
  $region22: #{up_forward.5} parent=0
    _
  %s6 = ssub.s32 1, %s4
  %s7 = scalar_select 0, %s6, %s4
  // Predicated region
  $region2: #{up_forward.5} parent=0 // pred_check
    _
  $region3: #{up_forward.5} parent=0 // pred_check_branch
    %9 = sbr.rel (0) target = $region5
  $region4: #{up_forward.5} parent=0 // pred_region
    _
  $region5: #{up_forward.5} parent=0 // pred_fallthru
    _
  // Predicated region
  $region6: #{up_forward.5} parent=0 // pred_check
    _
  $region7: #{up_forward.5} parent=0 // pred_check_branch
    %11 = sbr.rel (0) target = $region9
  $region8: #{up_forward.5} parent=0 // pred_region
    _
  $region9: #{up_forward.5} parent=0 // pred_fallthru
    _
  // Predicated region
  $region10: #{up_forward.5} parent=0 // pred_check
    _
  $region11: #{up_forward.5} parent=0 // pred_check_branch
    %13 = sbr.rel (0) target = $region13
  $region12: #{up_forward.5} parent=0 // pred_region
    _
  $region13: #{up_forward.5} parent=0 // pred_fallthru
    _
  %v15 = vld [vmem:[%s0] sm:$0xf]
  %v16 = vld [vmem:[%s0 + $0x4] sm:$0xf]
  %v17 = vld [vmem:[%s0 + $0x8] sm:$0xf]
  %v18 = vld [vmem:[%s0 + $0xc] sm:$0xf]
  %v19 = vld [vmem:[%s0 + $0x10] sm:$0xf]
  %v20 = vld [vmem:[%s0 + $0x14] sm:$0xf]
  %v21 = vld [vmem:[%s0 + $0x18] sm:$0xf]
  %v22 = vld [vmem:[%s0 + $0x1c] sm:$0xf]
  %v23 = vld [vmem:[%s0 + $0x20] sm:$0xf]
  %v24 = vld [vmem:[%s0 + $0x24] sm:$0xf]
  %v25 = vld [vmem:[%s0 + $0x28] sm:$0xf]
  %v26 = vld [vmem:[%s0 + $0x2c] sm:$0xf]
  %v27 = vld [vmem:[%s0 + $0x30] sm:$0xf]
  %v28 = vld [vmem:[%s0 + $0x34] sm:$0xf]
  %v29 = vld [vmem:[%s0 + $0x38] sm:$0xf]
  %v30 = vld [vmem:[%s0 + $0x3c] sm:$0xf]
  %v31 = vld [vmem:[%s0 + $0x40] sm:$0xf]
  %v32 = vld [vmem:[%s0 + $0x44] sm:$0xf]
  %v33 = vld [vmem:[%s0 + $0x48] sm:$0xf]
  %v34 = vld [vmem:[%s0 + $0x4c] sm:$0xf]
  %v35 = vld [vmem:[%s0 + $0x50] sm:$0xf]
  %v36 = vld [vmem:[%s0 + $0x54] sm:$0xf]
  %v37 = vld [vmem:[%s0 + $0x58] sm:$0xf]
  %v38 = vld [vmem:[%s0 + $0x5c] sm:$0xf]
  %v39 = vld [vmem:[%s0 + $0x60] sm:$0xf]
  %v40 = vld [vmem:[%s0 + $0x64] sm:$0xf]
  %v41 = vld [vmem:[%s0 + $0x68] sm:$0xf]
  %v42 = vld [vmem:[%s0 + $0x6c] sm:$0xf]
  %v43 = vld [vmem:[%s0 + $0x70] sm:$0xf]
  %v44 = vld [vmem:[%s0 + $0x74] sm:$0xf]
  %v45 = vld [vmem:[%s0 + $0x78] sm:$0xf]
  %v46 = vld [vmem:[%s0 + $0x7c] sm:$0xf]
  %v47 = vld [vmem:[%s0 + $0x80] sm:$0xf]
  %v48 = vld [vmem:[%s0 + $0x84] sm:$0xf]
  %v49 = vld [vmem:[%s0 + $0x88] sm:$0xf]
  %v50 = vld [vmem:[%s0 + $0x8c] sm:$0xf]
  %v51 = vld [vmem:[%s0 + $0x90] sm:$0xf]
  %v52 = vld [vmem:[%s0 + $0x94] sm:$0xf]
  %v53 = vld [vmem:[%s0 + $0x98] sm:$0xf]
  %v54 = vld [vmem:[%s0 + $0x9c] sm:$0xf]
  %v55 = vld [vmem:[%s0 + $0xa0] sm:$0xf]
  %v56 = vld [vmem:[%s0 + $0xa4] sm:$0xf]
  %v57 = vld [vmem:[%s0 + $0xa8] sm:$0xf]
  %v58 = vld [vmem:[%s0 + $0xac] sm:$0xf]
  %v59 = vld [vmem:[%s0 + $0xb0] sm:$0xf]
  %v60 = vld [vmem:[%s0 + $0xb4] sm:$0xf]
  %v61 = vld [vmem:[%s0 + $0xb8] sm:$0xf]
  %v62 = vld [vmem:[%s0 + $0xbc] sm:$0xf]
  %v63 = vld [vmem:[%s0 + $0xc0] sm:$0xf]
  %v64 = vld [vmem:[%s0 + $0xc4] sm:$0xf]
  %v65 = vld [vmem:[%s0 + $0xc8] sm:$0xf]
  %v66 = vld [vmem:[%s0 + $0xcc] sm:$0xf]
  %v67 = vld [vmem:[%s0 + $0xd0] sm:$0xf]
  %v68 = vld [vmem:[%s0 + $0xd4] sm:$0xf]
  %v69 = vld [vmem:[%s0 + $0xd8] sm:$0xf]
  %v70 = vld [vmem:[%s0 + $0xdc] sm:$0xf]
  %v71 = vld [vmem:[%s0 + $0xe0] sm:$0xf]
  %v72 = vld [vmem:[%s0 + $0xe4] sm:$0xf]
  %v73 = vld [vmem:[%s0 + $0xe8] sm:$0xf]
  %v74 = vld [vmem:[%s0 + $0xec] sm:$0xf]
  %v75 = vld [vmem:[%s0 + $0xf0] sm:$0xf]
  %v76 = vld [vmem:[%s0 + $0xf4] sm:$0xf]
  %v77 = vld [vmem:[%s0 + $0xf8] sm:$0xf]
  %v78 = vld [vmem:[%s0 + $0xfc] sm:$0xf]
  %v79 = vld [vmem:[%s1] sm:$0xf]
  %v80 = vld [vmem:[%s2] sm:$0x1]
  %v82 = vperm.slane %v80, 0
  %v148 = vunpack.c.l.b16 %v15
  %v149 = vunpack.c.l.b16 %v16
  %v150 = vunpack.c.l.b16 %v17
  %v151 = vunpack.c.l.b16 %v18
  %v152 = vunpack.c.l.b16 %v19
  %v153 = vunpack.c.l.b16 %v20
  %v154 = vunpack.c.l.b16 %v21
  %v155 = vunpack.c.l.b16 %v22
  %v156 = vunpack.c.l.b16 %v23
  %v157 = vunpack.c.l.b16 %v24
  %v158 = vunpack.c.l.b16 %v25
  %v159 = vunpack.c.l.b16 %v26
  %v160 = vunpack.c.l.b16 %v27
  %v161 = vunpack.c.l.b16 %v28
  %v162 = vunpack.c.l.b16 %v29
  %v163 = vunpack.c.l.b16 %v30
  %v164 = vunpack.c.l.b16 %v31
  %v165 = vunpack.c.l.b16 %v32
  %v166 = vunpack.c.l.b16 %v33
  %v167 = vunpack.c.l.b16 %v34
  %v168 = vunpack.c.l.b16 %v35
  %v169 = vunpack.c.l.b16 %v36
  %v170 = vunpack.c.l.b16 %v37
  %v171 = vunpack.c.l.b16 %v38
  %v172 = vunpack.c.l.b16 %v39
  %v173 = vunpack.c.l.b16 %v40
  %v174 = vunpack.c.l.b16 %v41
  %v175 = vunpack.c.l.b16 %v42
  %v176 = vunpack.c.l.b16 %v43
  %v177 = vunpack.c.l.b16 %v44
  %v178 = vunpack.c.l.b16 %v45
  %v179 = vunpack.c.l.b16 %v46
  %v180 = vunpack.c.l.b16 %v47
  %v181 = vunpack.c.l.b16 %v48
  %v182 = vunpack.c.l.b16 %v49
  %v183 = vunpack.c.l.b16 %v50
  %v184 = vunpack.c.l.b16 %v51
  %v185 = vunpack.c.l.b16 %v52
  %v186 = vunpack.c.l.b16 %v53
  %v187 = vunpack.c.l.b16 %v54
  %v188 = vunpack.c.l.b16 %v55
  %v189 = vunpack.c.l.b16 %v56
  %v190 = vunpack.c.l.b16 %v57
  %v191 = vunpack.c.l.b16 %v58
  %v192 = vunpack.c.l.b16 %v59
  %v193 = vunpack.c.l.b16 %v60
  %v194 = vunpack.c.l.b16 %v61
  %v195 = vunpack.c.l.b16 %v62
  %v196 = vunpack.c.l.b16 %v63
  %v197 = vunpack.c.l.b16 %v64
  %v198 = vunpack.c.l.b16 %v65
  %v199 = vunpack.c.l.b16 %v66
  %v200 = vunpack.c.l.b16 %v67
  %v201 = vunpack.c.l.b16 %v68
  %v202 = vunpack.c.l.b16 %v69
  %v203 = vunpack.c.l.b16 %v70
  %v204 = vunpack.c.l.b16 %v71
  %v205 = vunpack.c.l.b16 %v72
  %v206 = vunpack.c.l.b16 %v73
  %v207 = vunpack.c.l.b16 %v74
  %v208 = vunpack.c.l.b16 %v75
  %v209 = vunpack.c.l.b16 %v76
  %v210 = vunpack.c.l.b16 %v77
  %v211 = vunpack.c.l.b16 %v78
  %v212 = vpack.c.b16 %v149, %v148
  %v213 = vpack.c.b16 %v151, %v150
  %v214 = vpack.c.b16 %v153, %v152
  %v215 = vpack.c.b16 %v155, %v154
  %v216 = vpack.c.b16 %v157, %v156
  %v217 = vpack.c.b16 %v159, %v158
  %v218 = vpack.c.b16 %v161, %v160
  %v219 = vpack.c.b16 %v163, %v162
  %v220 = vpack.c.b16 %v165, %v164
  %v221 = vpack.c.b16 %v167, %v166
  %v222 = vpack.c.b16 %v169, %v168
  %v223 = vpack.c.b16 %v171, %v170
  %v224 = vpack.c.b16 %v173, %v172
  %v225 = vpack.c.b16 %v175, %v174
  %v226 = vpack.c.b16 %v177, %v176
  %v227 = vpack.c.b16 %v179, %v178
  %v228 = vpack.c.b16 %v181, %v180
  %v229 = vpack.c.b16 %v183, %v182
  %v230 = vpack.c.b16 %v185, %v184
  %v231 = vpack.c.b16 %v187, %v186
  %v232 = vpack.c.b16 %v189, %v188
  %v233 = vpack.c.b16 %v191, %v190
  %v234 = vpack.c.b16 %v193, %v192
  %v235 = vpack.c.b16 %v195, %v194
  %v236 = vpack.c.b16 %v197, %v196
  %v237 = vpack.c.b16 %v199, %v198
  %v238 = vpack.c.b16 %v201, %v200
  %v239 = vpack.c.b16 %v203, %v202
  %v240 = vpack.c.b16 %v205, %v204
  %v241 = vpack.c.b16 %v207, %v206
  %v242 = vpack.c.b16 %v209, %v208
  %v243 = vpack.c.b16 %v211, %v210
  %vm244 = vcmask 64512
  %v246 = vsel %vm244, %v212, 0
  %v249 = vsel %vm244, %v213, 0
  %v252 = vsel %vm244, %v214, 0
  %v255 = vsel %vm244, %v215, 0
  %v258 = vsel %vm244, %v216, 0
  %v261 = vsel %vm244, %v217, 0
  %v264 = vsel %vm244, %v218, 0
  %v267 = vsel %vm244, %v219, 0
  %v270 = vsel %vm244, %v220, 0
  %v273 = vsel %vm244, %v221, 0
  %v276 = vsel %vm244, %v222, 0
  %v279 = vsel %vm244, %v223, 0
  %v282 = vsel %vm244, %v224, 0
  %v285 = vsel %vm244, %v225, 0
  %v288 = vsel %vm244, %v226, 0
  %v291 = vsel %vm244, %v227, 0
  %v294 = vsel %vm244, %v228, 0
  %v297 = vsel %vm244, %v229, 0
  %v300 = vsel %vm244, %v230, 0
  %v303 = vsel %vm244, %v231, 0
  %v306 = vsel %vm244, %v232, 0
  %v309 = vsel %vm244, %v233, 0
  %v312 = vsel %vm244, %v234, 0
  %v315 = vsel %vm244, %v235, 0
  %v318 = vsel %vm244, %v236, 0
  %v321 = vsel %vm244, %v237, 0
  %v324 = vsel %vm244, %v238, 0
  %v327 = vsel %vm244, %v239, 0
  %v330 = vsel %vm244, %v240, 0
  %v333 = vsel %vm244, %v241, 0
  %v336 = vsel %vm244, %v242, 0
  %v339 = vsel %vm244, %v243, 0
  %vm341 = vcmask 1043456
  %v343 = vsel %vm341, %v79, 0
  %345 = vmatpush.bf16.msra.mxu0 0
  %346 = vmatpush.bf16.msra.mxu0 0
  %347 = vmatpush.bf16.msra.mxu0 0
  %348 = vmatpush.bf16.msra.mxu0 0
  %349 = vmatpush.bf16.msra.mxu0 0
  %350 = vmatpush.bf16.msra.mxu0 0
  %351 = vmatpush.bf16.msra.mxu0 0
  %352 = vmatpush.bf16.msra.mxu0 %v343
  %353 = vmatmul.bf16.gmra.mxu0 %v246
  %v354 = vpop.f32.mrf.mxu0
  %v355 = vadd.f32 %v82, %v354
  %v356 = vpop.f32.mrf.mxu0
  %v357 = vadd.f32 %v82, %v356
  %358 = vmatmul.bf16.gmra.mxu0 %v249
  %v359 = vpop.f32.mrf.mxu0
  %v360 = vadd.f32 %v82, %v359
  %v361 = vpop.f32.mrf.mxu0
  %v362 = vadd.f32 %v82, %v361
  %363 = vmatmul.bf16.gmra.mxu0 %v252
  %v364 = vpop.f32.mrf.mxu0
  %v365 = vadd.f32 %v82, %v364
  %v366 = vpop.f32.mrf.mxu0
  %v367 = vadd.f32 %v82, %v366
  %368 = vmatmul.bf16.gmra.mxu0 %v255
  %v369 = vpop.f32.mrf.mxu0
  %v370 = vadd.f32 %v82, %v369
  %v371 = vpop.f32.mrf.mxu0
  %v372 = vadd.f32 %v82, %v371
  %373 = vmatmul.bf16.gmra.mxu0 %v258
  %v374 = vpop.f32.mrf.mxu0
  %v375 = vadd.f32 %v82, %v374
  %v376 = vpop.f32.mrf.mxu0
  %v377 = vadd.f32 %v82, %v376
  %378 = vmatmul.bf16.gmra.mxu0 %v261
  %v379 = vpop.f32.mrf.mxu0
  %v380 = vadd.f32 %v82, %v379
  %v381 = vpop.f32.mrf.mxu0
  %v382 = vadd.f32 %v82, %v381
  %383 = vmatmul.bf16.gmra.mxu0 %v264
  %v384 = vpop.f32.mrf.mxu0
  %v385 = vadd.f32 %v82, %v384
  %v386 = vpop.f32.mrf.mxu0
  %v387 = vadd.f32 %v82, %v386
  %388 = vmatmul.bf16.gmra.mxu0 %v267
  %v389 = vpop.f32.mrf.mxu0
  %v390 = vadd.f32 %v82, %v389
  %v391 = vpop.f32.mrf.mxu0
  %v392 = vadd.f32 %v82, %v391
  %393 = vmatmul.bf16.gmra.mxu0 %v270
  %v394 = vpop.f32.mrf.mxu0
  %v395 = vadd.f32 %v82, %v394
  %v396 = vpop.f32.mrf.mxu0
  %v397 = vadd.f32 %v82, %v396
  %398 = vmatmul.bf16.gmra.mxu0 %v273
  %v399 = vpop.f32.mrf.mxu0
  %v400 = vadd.f32 %v82, %v399
  %v401 = vpop.f32.mrf.mxu0
  %v402 = vadd.f32 %v82, %v401
  %403 = vmatmul.bf16.gmra.mxu0 %v276
  %v404 = vpop.f32.mrf.mxu0
  %v405 = vadd.f32 %v82, %v404
  %v406 = vpop.f32.mrf.mxu0
  %v407 = vadd.f32 %v82, %v406
  %408 = vmatmul.bf16.gmra.mxu0 %v279
  %v409 = vpop.f32.mrf.mxu0
  %v410 = vadd.f32 %v82, %v409
  %v411 = vpop.f32.mrf.mxu0
  %v412 = vadd.f32 %v82, %v411
  %413 = vmatmul.bf16.gmra.mxu0 %v282
  %v414 = vpop.f32.mrf.mxu0
  %v415 = vadd.f32 %v82, %v414
  %v416 = vpop.f32.mrf.mxu0
  %v417 = vadd.f32 %v82, %v416
  %418 = vmatmul.bf16.gmra.mxu0 %v285
  %v419 = vpop.f32.mrf.mxu0
  %v420 = vadd.f32 %v82, %v419
  %v421 = vpop.f32.mrf.mxu0
  %v422 = vadd.f32 %v82, %v421
  %423 = vmatmul.bf16.gmra.mxu0 %v288
  %v424 = vpop.f32.mrf.mxu0
  %v425 = vadd.f32 %v82, %v424
  %v426 = vpop.f32.mrf.mxu0
  %v427 = vadd.f32 %v82, %v426
  %428 = vmatmul.bf16.gmra.mxu0 %v291
  %v429 = vpop.f32.mrf.mxu0
  %v430 = vadd.f32 %v82, %v429
  %v431 = vpop.f32.mrf.mxu0
  %v432 = vadd.f32 %v82, %v431
  %433 = vmatmul.bf16.gmra.mxu0 %v294
  %v434 = vpop.f32.mrf.mxu0
  %v435 = vadd.f32 %v82, %v434
  %v436 = vpop.f32.mrf.mxu0
  %v437 = vadd.f32 %v82, %v436
  %438 = vmatmul.bf16.gmra.mxu0 %v297
  %v439 = vpop.f32.mrf.mxu0
  %v440 = vadd.f32 %v82, %v439
  %v441 = vpop.f32.mrf.mxu0
  %v442 = vadd.f32 %v82, %v441
  %443 = vmatmul.bf16.gmra.mxu0 %v300
  %v444 = vpop.f32.mrf.mxu0
  %v445 = vadd.f32 %v82, %v444
  %v446 = vpop.f32.mrf.mxu0
  %v447 = vadd.f32 %v82, %v446
  %448 = vmatmul.bf16.gmra.mxu0 %v303
  %v449 = vpop.f32.mrf.mxu0
  %v450 = vadd.f32 %v82, %v449
  %v451 = vpop.f32.mrf.mxu0
  %v452 = vadd.f32 %v82, %v451
  %453 = vmatmul.bf16.gmra.mxu0 %v306
  %v454 = vpop.f32.mrf.mxu0
  %v455 = vadd.f32 %v82, %v454
  %v456 = vpop.f32.mrf.mxu0
  %v457 = vadd.f32 %v82, %v456
  %458 = vmatmul.bf16.gmra.mxu0 %v309
  %v459 = vpop.f32.mrf.mxu0
  %v460 = vadd.f32 %v82, %v459
  %v461 = vpop.f32.mrf.mxu0
  %v462 = vadd.f32 %v82, %v461
  %463 = vmatmul.bf16.gmra.mxu0 %v312
  %v464 = vpop.f32.mrf.mxu0
  %v465 = vadd.f32 %v82, %v464
  %v466 = vpop.f32.mrf.mxu0
  %v467 = vadd.f32 %v82, %v466
  %468 = vmatmul.bf16.gmra.mxu0 %v315
  %v469 = vpop.f32.mrf.mxu0
  %v470 = vadd.f32 %v82, %v469
  %v471 = vpop.f32.mrf.mxu0
  %v472 = vadd.f32 %v82, %v471
  %473 = vmatmul.bf16.gmra.mxu0 %v318
  %v474 = vpop.f32.mrf.mxu0
  %v475 = vadd.f32 %v82, %v474
  %v476 = vpop.f32.mrf.mxu0
  %v477 = vadd.f32 %v82, %v476
  %478 = vmatmul.bf16.gmra.mxu0 %v321
  %v479 = vpop.f32.mrf.mxu0
  %v480 = vadd.f32 %v82, %v479
  %v481 = vpop.f32.mrf.mxu0
  %v482 = vadd.f32 %v82, %v481
  %483 = vmatmul.bf16.gmra.mxu0 %v324
  %v484 = vpop.f32.mrf.mxu0
  %v485 = vadd.f32 %v82, %v484
  %v486 = vpop.f32.mrf.mxu0
  %v487 = vadd.f32 %v82, %v486
  %488 = vmatmul.bf16.gmra.mxu0 %v327
  %v489 = vpop.f32.mrf.mxu0
  %v490 = vadd.f32 %v82, %v489
  %v491 = vpop.f32.mrf.mxu0
  %v492 = vadd.f32 %v82, %v491
  %493 = vmatmul.bf16.gmra.mxu0 %v330
  %v494 = vpop.f32.mrf.mxu0
  %v495 = vadd.f32 %v82, %v494
  %v496 = vpop.f32.mrf.mxu0
  %v497 = vadd.f32 %v82, %v496
  %498 = vmatmul.bf16.gmra.mxu0 %v333
  %v499 = vpop.f32.mrf.mxu0
  %v500 = vadd.f32 %v82, %v499
  %v501 = vpop.f32.mrf.mxu0
  %v502 = vadd.f32 %v82, %v501
  %503 = vmatmul.bf16.gmra.mxu0 %v336
  %v504 = vpop.f32.mrf.mxu0
  %v505 = vadd.f32 %v82, %v504
  %v506 = vpop.f32.mrf.mxu0
  %v507 = vadd.f32 %v82, %v506
  %508 = vmatmul.bf16.gmra.mxu0 %v339
  %v509 = vpop.f32.mrf.mxu0
  %v510 = vadd.f32 %v82, %v509
  %v511 = vpop.f32.mrf.mxu0
  %v512 = vadd.f32 %v82, %v511
  %513 = vdwg.mxu0
  %v514 = vpack.c.bf16 %v355, %v355
  %v515 = vpack.c.bf16 %v357, %v357
  %v516 = vpack.c.bf16 %v360, %v360
  %v517 = vpack.c.bf16 %v362, %v362
  %v518 = vpack.c.bf16 %v365, %v365
  %v519 = vpack.c.bf16 %v367, %v367
  %v520 = vpack.c.bf16 %v370, %v370
  %v521 = vpack.c.bf16 %v372, %v372
  %v522 = vpack.c.bf16 %v375, %v375
  %v523 = vpack.c.bf16 %v377, %v377
  %v524 = vpack.c.bf16 %v380, %v380
  %v525 = vpack.c.bf16 %v382, %v382
  %v526 = vpack.c.bf16 %v385, %v385
  %v527 = vpack.c.bf16 %v387, %v387
  %v528 = vpack.c.bf16 %v390, %v390
  %v529 = vpack.c.bf16 %v392, %v392
  %v530 = vpack.c.bf16 %v395, %v395
  %v531 = vpack.c.bf16 %v397, %v397
  %v532 = vpack.c.bf16 %v400, %v400
  %v533 = vpack.c.bf16 %v402, %v402
  %v534 = vpack.c.bf16 %v405, %v405
  %v535 = vpack.c.bf16 %v407, %v407
  %v536 = vpack.c.bf16 %v410, %v410
  %v537 = vpack.c.bf16 %v412, %v412
  %v538 = vpack.c.bf16 %v415, %v415
  %v539 = vpack.c.bf16 %v417, %v417
  %v540 = vpack.c.bf16 %v420, %v420
  %v541 = vpack.c.bf16 %v422, %v422
  %v542 = vpack.c.bf16 %v425, %v425
  %v543 = vpack.c.bf16 %v427, %v427
  %v544 = vpack.c.bf16 %v430, %v430
  %v545 = vpack.c.bf16 %v432, %v432
  %v546 = vpack.c.bf16 %v435, %v435
  %v547 = vpack.c.bf16 %v437, %v437
  %v548 = vpack.c.bf16 %v440, %v440
  %v549 = vpack.c.bf16 %v442, %v442
  %v550 = vpack.c.bf16 %v445, %v445
  %v551 = vpack.c.bf16 %v447, %v447
  %v552 = vpack.c.bf16 %v450, %v450
  %v553 = vpack.c.bf16 %v452, %v452
  %v554 = vpack.c.bf16 %v455, %v455
  %v555 = vpack.c.bf16 %v457, %v457
  %v556 = vpack.c.bf16 %v460, %v460
  %v557 = vpack.c.bf16 %v462, %v462
  %v558 = vpack.c.bf16 %v465, %v465
  %v559 = vpack.c.bf16 %v467, %v467
  %v560 = vpack.c.bf16 %v470, %v470
  %v561 = vpack.c.bf16 %v472, %v472
  %v562 = vpack.c.bf16 %v475, %v475
  %v563 = vpack.c.bf16 %v477, %v477
  %v564 = vpack.c.bf16 %v480, %v480
  %v565 = vpack.c.bf16 %v482, %v482
  %v566 = vpack.c.bf16 %v485, %v485
  %v567 = vpack.c.bf16 %v487, %v487
  %v568 = vpack.c.bf16 %v490, %v490
  %v569 = vpack.c.bf16 %v492, %v492
  %v570 = vpack.c.bf16 %v495, %v495
  %v571 = vpack.c.bf16 %v497, %v497
  %v572 = vpack.c.bf16 %v500, %v500
  %v573 = vpack.c.bf16 %v502, %v502
  %v574 = vpack.c.bf16 %v505, %v505
  %v575 = vpack.c.bf16 %v507, %v507
  %v576 = vpack.c.bf16 %v510, %v510
  %v577 = vpack.c.bf16 %v512, %v512
  %vm578 = vcmask 27648
  %579 = vst.msk [vmem:[%s3] sm:$0xf] %vm578, %v514
  %580 = vst.msk [vmem:[%s3 + $0x4] sm:$0xf] %vm578, %v515
  %581 = vst.msk [vmem:[%s3 + $0x8] sm:$0xf] %vm578, %v516
  %582 = vst.msk [vmem:[%s3 + $0xc] sm:$0xf] %vm578, %v517
  %583 = vst.msk [vmem:[%s3 + $0x10] sm:$0xf] %vm578, %v518
  %584 = vst.msk [vmem:[%s3 + $0x14] sm:$0xf] %vm578, %v519
  %585 = vst.msk [vmem:[%s3 + $0x18] sm:$0xf] %vm578, %v520
  %586 = vst.msk [vmem:[%s3 + $0x1c] sm:$0xf] %vm578, %v521
  %587 = vst.msk [vmem:[%s3 + $0x20] sm:$0xf] %vm578, %v522
  %588 = vst.msk [vmem:[%s3 + $0x24] sm:$0xf] %vm578, %v523
  %589 = vst.msk [vmem:[%s3 + $0x28] sm:$0xf] %vm578, %v524
  %590 = vst.msk [vmem:[%s3 + $0x2c] sm:$0xf] %vm578, %v525
  %591 = vst.msk [vmem:[%s3 + $0x30] sm:$0xf] %vm578, %v526
  %592 = vst.msk [vmem:[%s3 + $0x34] sm:$0xf] %vm578, %v527
  %593 = vst.msk [vmem:[%s3 + $0x38] sm:$0xf] %vm578, %v528
  %594 = vst.msk [vmem:[%s3 + $0x3c] sm:$0xf] %vm578, %v529
  %595 = vst.msk [vmem:[%s3 + $0x40] sm:$0xf] %vm578, %v530
  %596 = vst.msk [vmem:[%s3 + $0x44] sm:$0xf] %vm578, %v531
  %597 = vst.msk [vmem:[%s3 + $0x48] sm:$0xf] %vm578, %v532
  %598 = vst.msk [vmem:[%s3 + $0x4c] sm:$0xf] %vm578, %v533
  %599 = vst.msk [vmem:[%s3 + $0x50] sm:$0xf] %vm578, %v534
  %600 = vst.msk [vmem:[%s3 + $0x54] sm:$0xf] %vm578, %v535
  %601 = vst.msk [vmem:[%s3 + $0x58] sm:$0xf] %vm578, %v536
  %602 = vst.msk [vmem:[%s3 + $0x5c] sm:$0xf] %vm578, %v537
  %603 = vst.msk [vmem:[%s3 + $0x60] sm:$0xf] %vm578, %v538
  %604 = vst.msk [vmem:[%s3 + $0x64] sm:$0xf] %vm578, %v539
  %605 = vst.msk [vmem:[%s3 + $0x68] sm:$0xf] %vm578, %v540
  %606 = vst.msk [vmem:[%s3 + $0x6c] sm:$0xf] %vm578, %v541
  %607 = vst.msk [vmem:[%s3 + $0x70] sm:$0xf] %vm578, %v542
  %608 = vst.msk [vmem:[%s3 + $0x74] sm:$0xf] %vm578, %v543
  %609 = vst.msk [vmem:[%s3 + $0x78] sm:$0xf] %vm578, %v544
  %610 = vst.msk [vmem:[%s3 + $0x7c] sm:$0xf] %vm578, %v545
  %611 = vst.msk [vmem:[%s3 + $0x80] sm:$0xf] %vm578, %v546
  %612 = vst.msk [vmem:[%s3 + $0x84] sm:$0xf] %vm578, %v547
  %613 = vst.msk [vmem:[%s3 + $0x88] sm:$0xf] %vm578, %v548
  %614 = vst.msk [vmem:[%s3 + $0x8c] sm:$0xf] %vm578, %v549
  %615 = vst.msk [vmem:[%s3 + $0x90] sm:$0xf] %vm578, %v550
  %616 = vst.msk [vmem:[%s3 + $0x94] sm:$0xf] %vm578, %v551
  %617 = vst.msk [vmem:[%s3 + $0x98] sm:$0xf] %vm578, %v552
  %618 = vst.msk [vmem:[%s3 + $0x9c] sm:$0xf] %vm578, %v553
  %619 = vst.msk [vmem:[%s3 + $0xa0] sm:$0xf] %vm578, %v554
  %620 = vst.msk [vmem:[%s3 + $0xa4] sm:$0xf] %vm578, %v555
  %621 = vst.msk [vmem:[%s3 + $0xa8] sm:$0xf] %vm578, %v556
  %622 = vst.msk [vmem:[%s3 + $0xac] sm:$0xf] %vm578, %v557
  %623 = vst.msk [vmem:[%s3 + $0xb0] sm:$0xf] %vm578, %v558
  %624 = vst.msk [vmem:[%s3 + $0xb4] sm:$0xf] %vm578, %v559
  %625 = vst.msk [vmem:[%s3 + $0xb8] sm:$0xf] %vm578, %v560
  %626 = vst.msk [vmem:[%s3 + $0xbc] sm:$0xf] %vm578, %v561
  %627 = vst.msk [vmem:[%s3 + $0xc0] sm:$0xf] %vm578, %v562
  %628 = vst.msk [vmem:[%s3 + $0xc4] sm:$0xf] %vm578, %v563
  %629 = vst.msk [vmem:[%s3 + $0xc8] sm:$0xf] %vm578, %v564
  %630 = vst.msk [vmem:[%s3 + $0xcc] sm:$0xf] %vm578, %v565
  %631 = vst.msk [vmem:[%s3 + $0xd0] sm:$0xf] %vm578, %v566
  %632 = vst.msk [vmem:[%s3 + $0xd4] sm:$0xf] %vm578, %v567
  %633 = vst.msk [vmem:[%s3 + $0xd8] sm:$0xf] %vm578, %v568
  %634 = vst.msk [vmem:[%s3 + $0xdc] sm:$0xf] %vm578, %v569
  %635 = vst.msk [vmem:[%s3 + $0xe0] sm:$0xf] %vm578, %v570
  %636 = vst.msk [vmem:[%s3 + $0xe4] sm:$0xf] %vm578, %v571
  %637 = vst.msk [vmem:[%s3 + $0xe8] sm:$0xf] %vm578, %v572
  %638 = vst.msk [vmem:[%s3 + $0xec] sm:$0xf] %vm578, %v573
  %639 = vst.msk [vmem:[%s3 + $0xf0] sm:$0xf] %vm578, %v574
  %640 = vst.msk [vmem:[%s3 + $0xf4] sm:$0xf] %vm578, %v575
  %641 = vst.msk [vmem:[%s3 + $0xf8] sm:$0xf] %vm578, %v576
  %642 = vst.msk [vmem:[%s3 + $0xfc] sm:$0xf] %vm578, %v577
  // Predicated region
  $region14: #{up_forward.5} parent=0 // pred_check
    _
  $region15: #{up_forward.5} parent=0 // pred_check_branch
    %644 = sbr.rel (0) target = $region17
  $region16: #{up_forward.5} parent=0 // pred_region
    _
  $region17: #{up_forward.5} parent=0 // pred_fallthru
    _
  // Predicated region
  $region18: #{up_forward.5} parent=0 // pred_check
    _
  $region19: #{up_forward.5} parent=0 // pred_check_branch
    %646 = sbr.rel (0) target = $region21
  $region20: #{up_forward.5} parent=0 // pred_region
    _
  $region21: #{up_forward.5} parent=0 // pred_fallthru
    _

// kernel: up_forward.7
$region0: #{up_forward.7}
  #allocation0 [shape = 'u32[]', space=smem, size = 0x4, offset = 0x4, fixed_abs, tag = 'smem constant byte address 0x4 - core index']
  #allocation1 [shape = 'u32[72,128]{1,0:T(1,128)}', space=vmem, size = 0x9000, scoped, tag = 'internal scratch']
  %s0 = inlined_call_operand.vmem [shape: bf16[32,16], index: 0, kind: input, shape index: {}]
  %s1 = inlined_call_operand.vmem [shape: bf16[2,16,128], index: 1, kind: input, shape index: {}]
  %s2 = inlined_call_operand.vmem [shape: bf16[2,32,128], index: 2, kind: output, shape index: {}]
  %s3 = sld [smem:[#allocation0]]
  $region41: #{up_forward.7} parent=0
    _
  %s5 = ssub.s32 1, %s3
  %s6 = scalar_select 0, %s5, %s3
  loop: start=0, step=1, limit=4
  $region2: #{up_forward.7} parent=0 // loop_pre_header
    _
  $region3: #{up_forward.7} parent=0 // loop_header
    %s8 = sphi 0, %s12
    %p9 = scmp.ge.s32.totalorder %s8, 4
    %s15 = sphi 0, %s27
    %s16 = sphi 0, %s23
    %s17 = sphi 0, %s15
    %s18 = sphi 0, %s16
    %s19 = sphi 0, %s17
    %s20 = sphi 0, %s18
    %s28 = sphi 0, %s28
    %s30 = sphi 0, %s28
    %s31 = sphi 0, %s30
    %s45 = sphi 0, %s31
    %s53 = sphi 0, %s55
    %s56 = sphi 0, %s53
    %s57 = sphi 0, %s56
    %s73 = sphi 0, %s57
    %s81 = sphi 0, %s83
    %s84 = sphi 0, %s81
    %s85 = sphi 0, %s84
    %s101 = sphi 0, %s85
  $region4: #{up_forward.7} parent=0 // loop_header_branch
    %11 = sbr.rel (%p9) target = $region8
  $region5: #{up_forward.7} parent=0 // loop_body
    %s13 = ssub.s32 %s8, 1
    %s14 = ssub.s32 %s8, 2
    %s21 = sadd.s32 1, %s16
    %p22 = scmp.ge.s32.totalorder %s21, 1
    %s23 = scalar_select %p22, 0, %s21
    %s24 = sadd.s32 1, %s15
    %s25 = scalar_select %p22, %s24, %s15
    %p26 = scmp.ge.s32.totalorder %s25, 2
    %s27 = scalar_select %p26, 0, %s25
    %s29 = sadd.s32 %s28, 1
    %p32 = scmp.eq.s32.totalorder %s8, 1
    %p33 = scmp.ne.s32.totalorder %s28, %s30
    %p34 = scmp.eq.s32.totalorder %s8, 0
    %p35 = por %p33, %p34
    %p36 = scmp.ne.s32.totalorder %s28, %s30
    %p37 = scmp.eq.s32.totalorder %s13, 1
    %p38 = por %p36, %p37
    %p39 = scmp.ne.s32.totalorder %s30, %s31
    %p40 = scmp.eq.s32.totalorder %s13, 0
    %p41 = por %p39, %p40
    %p42 = scmp.ne.s32.totalorder %s30, %s31
    %p43 = scmp.eq.s32.totalorder %s14, 1
    %p44 = por %p42, %p43
    %p46 = scmp.ne.s32.totalorder %s31, %s45
    %p47 = scmp.eq.s32.totalorder %s14, 0
    %p48 = por %p46, %p47
    %s49 = ssub.s32 %s15, %s27
    %s50 = ssub.s32 %s16, %s23
    %s51 = sor.u32 %s49, %s50
    %p52 = scmp.eq.s32.totalorder %s51, 0
    %s54 = sadd.s32 %s53, 1
    %s55 = scalar_select %p52, %s53, %s54
    %p58 = pneg %p52
    %p59 = scmp.eq.s32.totalorder %s8, 1
    %p60 = por %p58, %p59
    %p61 = scmp.ne.s32.totalorder %s53, %s56
    %p62 = scmp.eq.s32.totalorder %s8, 0
    %p63 = por %p61, %p62
    %p64 = scmp.ne.s32.totalorder %s53, %s56
    %p65 = scmp.eq.s32.totalorder %s13, 1
    %p66 = por %p64, %p65
    %p67 = scmp.ne.s32.totalorder %s56, %s57
    %p68 = scmp.eq.s32.totalorder %s13, 0
    %p69 = por %p67, %p68
    %p70 = scmp.ne.s32.totalorder %s56, %s57
    %p71 = scmp.eq.s32.totalorder %s14, 1
    %p72 = por %p70, %p71
    %p74 = scmp.ne.s32.totalorder %s57, %s73
    %p75 = scmp.eq.s32.totalorder %s14, 0
    %p76 = por %p74, %p75
    %s77 = ssub.s32 %s15, %s27
    %s78 = ssub.s32 %s16, %s23
    %s79 = sor.u32 %s77, %s78
    %p80 = scmp.eq.s32.totalorder %s79, 0
    %s82 = sadd.s32 %s81, 1
    %s83 = scalar_select %p80, %s81, %s82
    %p86 = pneg %p80
    %p87 = scmp.eq.s32.totalorder %s8, 1
    %p88 = por %p86, %p87
    %p89 = scmp.ne.s32.totalorder %s81, %s84
    %p90 = scmp.eq.s32.totalorder %s8, 0
    %p91 = por %p89, %p90
    %p92 = scmp.ne.s32.totalorder %s81, %s84
    %p93 = scmp.eq.s32.totalorder %s13, 1
    %p94 = por %p92, %p93
    %p95 = scmp.ne.s32.totalorder %s84, %s85
    %p96 = scmp.eq.s32.totalorder %s13, 0
    %p97 = por %p95, %p96
    %p98 = scmp.ne.s32.totalorder %s84, %s85
    %p99 = scmp.eq.s32.totalorder %s14, 1
    %p100 = por %p98, %p99
    %p102 = scmp.ne.s32.totalorder %s85, %s101
    %p103 = scmp.eq.s32.totalorder %s14, 0
    %p104 = por %p102, %p103
    %p105 = scmp.le.s32.totalorder 1, %s8
    %p106 = scmp.lt.s32.totalorder %s8, 3
    %p107 = pnand %p105, %p106
    %p108 = pneg %p107
    // Predicated region
    $region9: #{up_forward.7} parent=5 // pred_check
      _
    $region10: #{up_forward.7} parent=5 // pred_check_branch
      %110 = sbr.rel (%p107) target = $region12
    $region11: #{up_forward.7} parent=5 // pred_region
      %s111 = ssub.s32 %s8, 1
      // Predicated region
      $region13: #{up_forward.7} parent=11 // pred_check
        %p112 = pneg %p41
      $region14: #{up_forward.7} parent=11 // pred_check_branch
        %114 = sbr.rel (%p112) target = $region16
      $region15: #{up_forward.7} parent=11 // pred_region
        _
      $region16: #{up_forward.7} parent=11 // pred_fallthru
        _
    $region12: #{up_forward.7} parent=5 // pred_fallthru
      _
    %p115 = scmp.lt.s32.totalorder %s8, 2
    // Predicated region
    $region17: #{up_forward.7} parent=5 // pred_check
      %p116 = pneg %p115
    $region18: #{up_forward.7} parent=5 // pred_check_branch
      %118 = sbr.rel (%p116) target = $region20
    $region19: #{up_forward.7} parent=5 // pred_region
      // Predicated region
      $region21: #{up_forward.7} parent=19 // pred_check
        %p119 = pneg %p63
      $region22: #{up_forward.7} parent=19 // pred_check_branch
        %121 = sbr.rel (%p119) target = $region24
      $region23: #{up_forward.7} parent=19 // pred_region
        %p122 = scmp.lt.s32.totalorder %s15, 1
        %s123 = scalar_select %p122, %s15, 1
        %p124 = scmp.lt.s32.totalorder %s16, 0
        %s125 = scalar_select %p124, %s16, 0
        %s126 = smul.addr %s123, 2
        %s127 = sadd.s32 %s125, %s126
        %s128 = smul.addr %s127, 4
        %s129 = scalar_lea.vmem %s1, %s128
      $region24: #{up_forward.7} parent=19 // pred_fallthru
        _
    $region20: #{up_forward.7} parent=5 // pred_fallthru
      _
    %p130 = scmp.le.s32.totalorder 1, %s8
    %p131 = scmp.lt.s32.totalorder %s8, 3
    %p132 = pnand %p130, %p131
    %p133 = pneg %p132
    // Predicated region
    $region25: #{up_forward.7} parent=5 // pred_check
      _
    $region26: #{up_forward.7} parent=5 // pred_check_branch
      %135 = sbr.rel (%p132) target = $region28
    $region27: #{up_forward.7} parent=5 // pred_region
      %s136 = ssub.s32 %s8, 1
      %p137 = pneg %p41
      %p138 = pneg %p38
      %p139 = scmp.lt.s32.totalorder %s17, 1
      %s140 = scalar_select %p139, %s17, 1
      %p141 = scmp.lt.s32.totalorder %s18, 0
      %s142 = scalar_select %p141, %s18, 0
      %s143 = smul.addr %s140, 2
      %s144 = sadd.s32 %s142, %s143
      %s145 = smul.addr %s144, 4
      %s146 = scalar_lea.vmem %s1, %s145
      %p147 = pneg %p69
      %p148 = pneg %p66
      %p149 = pneg %p97
      %p150 = pneg %p94
      %p151 = scmp.lt.s32.totalorder %s17, 1
      %s152 = scalar_select %p151, %s17, 1
      %p153 = scmp.lt.s32.totalorder %s18, 0
      %s154 = scalar_select %p153, %s18, 0
      %s155 = smul.addr %s152, 4
      %s156 = sadd.s32 %s154, %s155
      %s157 = smul.addr %s156, 4
      %s158 = scalar_lea.vmem %s2, %s157
      %p159 = scmp.lt.s32.totalorder %s17, 1
      %s160 = scalar_select %p159, %s17, 1
      %p161 = scmp.lt.s32.totalorder %s18, 0
      %s162 = scalar_select %p161, %s18, 0
      %s163 = smul.addr %s160, 2
      %s164 = sadd.s32 %s162, %s163
      %s165 = smul.addr %s164, 4
      %s166 = scalar_lea.vmem %s1, %s165
      %p167 = scmp.lt.s32.totalorder %s17, 1
      %s168 = scalar_select %p167, %s17, 1
      %p169 = scmp.lt.s32.totalorder %s18, 0
      %s170 = scalar_select %p169, %s18, 0
      %s171 = smul.addr %s168, 4
      %s172 = sadd.s32 %s170, %s171
      %s173 = smul.addr %s172, 4
      %s174 = scalar_lea.vmem %s2, %s173
      %v176 = vld [vmem:[%s0] sm:$0xf]
      %v177 = vld [vmem:[%s0 + $0x4] sm:$0xf]
      %v178 = vld [vmem:[%s0 + $0x8] sm:$0xf]
      %v179 = vld [vmem:[%s0 + $0xc] sm:$0xf]
      %v180 = vld [vmem:[%s166] sm:$0xf]
      %v181 = vld [vmem:[%s166 + $0x4] sm:$0xf]
      %v186 = vunpack.c.l.b16 %v176
      %v187 = vunpack.c.l.b16 %v177
      %v188 = vunpack.c.l.b16 %v178
      %v189 = vunpack.c.l.b16 %v179
      %v190 = vpack.c.b16 %v187, %v186
      %v191 = vpack.c.b16 %v189, %v188
      %v194 = vunpack.c.l.b16 %v180
      %v195 = vunpack.c.l.b16 %v181
      %v196 = vpack.c.b16 %v195, %v194
      %vm198 = vcmask 130048
      %v200 = vsel %vm198, %v190, 0
      %v203 = vsel %vm198, %v191, 0
      %205 = vmatpush.bf16.msra.mxu0 0
      %206 = vmatpush.bf16.msra.mxu0 0
      %207 = vmatpush.bf16.msra.mxu0 0
      %208 = vmatpush.bf16.msra.mxu0 0
      %209 = vmatpush.bf16.msra.mxu0 0
      %210 = vmatpush.bf16.msra.mxu0 0
      %211 = vmatpush.bf16.msra.mxu0 0
      %212 = vmatpush.bf16.msra.mxu0 %v196
      %213 = vmatmul.bf16.gmra.mxu0 %v200
      %v214 = vpop.f32.mrf.mxu0
      %v215 = vadd.f32 0.0, %v214
      %v216 = vpop.f32.mrf.mxu0
      %v217 = vadd.f32 0.0, %v216
      %218 = vmatmul.bf16.gmra.mxu0 %v203
      %v219 = vpop.f32.mrf.mxu0
      %v220 = vadd.f32 0.0, %v219
      %v221 = vpop.f32.mrf.mxu0
      %v222 = vadd.f32 0.0, %v221
      %223 = vdwg.mxu0
      %v224 = vpack.c.bf16 %v215, %v215
      %v225 = vpack.c.bf16 %v217, %v217
      %v226 = vpack.c.bf16 %v220, %v220
      %v227 = vpack.c.bf16 %v222, %v222
      %228 = vst [vmem:[%s174] sm:$0xf] %v224
      %229 = vst [vmem:[%s174 + $0x4] sm:$0xf] %v225
      %230 = vst [vmem:[%s174 + $0x8] sm:$0xf] %v226
      %231 = vst [vmem:[%s174 + $0xc] sm:$0xf] %v227
      %p232 = scmp.lt.s32.totalorder %s17, 1
      %s233 = scalar_select %p232, %s17, 1
      %p234 = scmp.lt.s32.totalorder %s18, 0
      %s235 = scalar_select %p234, %s18, 0
      %s236 = smul.addr %s233, 4
      %s237 = sadd.s32 %s235, %s236
      %s238 = smul.addr %s237, 4
      %s239 = scalar_lea.vmem %s2, %s238
      // Predicated region
      $region29: #{up_forward.7} parent=27 // pred_check
        %p240 = pneg %p94
      $region30: #{up_forward.7} parent=27 // pred_check_branch
        %242 = sbr.rel (%p240) target = $region32
      $region31: #{up_forward.7} parent=27 // pred_region
        _
      $region32: #{up_forward.7} parent=27 // pred_fallthru
        _
    $region28: #{up_forward.7} parent=5 // pred_fallthru
      _
    %p243 = scmp.le.s32.totalorder 2, %s8
    // Predicated region
    $region33: #{up_forward.7} parent=5 // pred_check
      %p244 = pneg %p243
    $region34: #{up_forward.7} parent=5 // pred_check_branch
      %246 = sbr.rel (%p244) target = $region36
    $region35: #{up_forward.7} parent=5 // pred_region
      %s247 = ssub.s32 %s8, 2
      // Predicated region
      $region37: #{up_forward.7} parent=35 // pred_check
        %p248 = pneg %p100
      $region38: #{up_forward.7} parent=35 // pred_check_branch
        %250 = sbr.rel (%p248) target = $region40
      $region39: #{up_forward.7} parent=35 // pred_region
        %p251 = scmp.lt.s32.totalorder %s19, 1
        %s252 = scalar_select %p251, %s19, 1
        %p253 = scmp.lt.s32.totalorder %s20, 0
        %s254 = scalar_select %p253, %s20, 0
        %s255 = smul.addr %s252, 4
        %s256 = sadd.s32 %s254, %s255
        %s257 = smul.addr %s256, 4
        %s258 = scalar_lea.vmem %s2, %s257
      $region40: #{up_forward.7} parent=35 // pred_fallthru
        _
    $region36: #{up_forward.7} parent=5 // pred_fallthru
      _
  $region6: #{up_forward.7} parent=0 // loop_footer
    %s12 = sadd.s32 1, %s8
  $region7: #{up_forward.7} parent=0 // loop_footer_branch
    %7 = sbr.rel target = $region3
  $region8: #{up_forward.7} parent=0 // loop_exit
    _

// kernel: up_forward.8
$region0: #{up_forward.8}
  #allocation0 [shape = 'u32[]', space=smem, size = 0x4, offset = 0x4, fixed_abs, tag = 'smem constant byte address 0x4 - core index']
  #allocation1 [shape = 'u32[72,128]{1,0:T(1,128)}', space=vmem, size = 0x9000, scoped, tag = 'internal scratch']
  #allocation2 [shape = 'f32[512,128]{1,0:T(8,128)}', space=vmem, size = 0x40000, scoped, tag = 'scratch operand']
  %s0 = inlined_call_operand.vmem [shape: bf16[4,18,32,24], index: 0, kind: input, shape index: {}]
  %s1 = inlined_call_operand.vmem [shape: bf16[3,24,128], index: 1, kind: input, shape index: {}]
  %s2 = inlined_call_operand.vmem [shape: f32[1,128], index: 2, kind: input, shape index: {}]
  %s3 = inlined_call_operand.vmem [shape: f32[1,128], index: 3, kind: input, shape index: {}]
  %s4 = inlined_call_operand.vmem [shape: bf16[2048,128], index: 4, kind: output, shape index: {}]
  %s5 = sld [smem:[#allocation0]]
  $region49: #{up_forward.8} parent=0
    _
  %s7 = ssub.s32 1, %s5
  %s8 = scalar_select 0, %s7, %s5
  loop: start=0, step=1, limit=6
  $region2: #{up_forward.8} parent=0 // loop_pre_header
    _
  $region3: #{up_forward.8} parent=0 // loop_header
    %s10 = sphi 0, %s14
    %p11 = scmp.ge.s32.totalorder %s10, 6
    %s20 = sphi 0, %s22
    %s23 = sphi 0, %s20
    %s24 = sphi 0, %s23
    %s40 = sphi 0, %s24
    %s44 = sphi 0, %s44
    %s46 = sphi 0, %s44
    %s47 = sphi 0, %s46
    %s61 = sphi 0, %s47
    %s65 = sphi 0, %s65
    %s67 = sphi 0, %s65
    %s68 = sphi 0, %s67
    %s82 = sphi 0, %s68
    %s86 = sphi 0, %s86
    %s88 = sphi 0, %s86
    %s89 = sphi 0, %s88
    %s103 = sphi 0, %s89
    %s109 = sphi 0, %s111
    %s112 = sphi 0, %s109
    %s113 = sphi 0, %s112
    %s129 = sphi 0, %s113
  $region4: #{up_forward.8} parent=0 // loop_header_branch
    %13 = sbr.rel (%p11) target = $region8
  $region5: #{up_forward.8} parent=0 // loop_body
    %s15 = ssub.s32 %s10, 1
    %s16 = ssub.s32 %s10, 2
    %s17 = sadd.s32 %s10, 1
    %s18 = ssub.s32 %s10, %s17
    %p19 = scmp.eq.s32.totalorder %s18, 0
    %s21 = sadd.s32 %s20, 1
    %s22 = scalar_select %p19, %s20, %s21
    %p25 = pneg %p19
    %p26 = scmp.eq.s32.totalorder %s10, 3
    %p27 = por %p25, %p26
    %p28 = scmp.ne.s32.totalorder %s20, %s23
    %p29 = scmp.eq.s32.totalorder %s10, 0
    %p30 = por %p28, %p29
    %p31 = scmp.ne.s32.totalorder %s20, %s23
    %p32 = scmp.eq.s32.totalorder %s15, 3
    %p33 = por %p31, %p32
    %p34 = scmp.ne.s32.totalorder %s23, %s24
    %p35 = scmp.eq.s32.totalorder %s15, 0
    %p36 = por %p34, %p35
    %p37 = scmp.ne.s32.totalorder %s23, %s24
    %p38 = scmp.eq.s32.totalorder %s16, 3
    %p39 = por %p37, %p38
    %p41 = scmp.ne.s32.totalorder %s24, %s40
    %p42 = scmp.eq.s32.totalorder %s16, 0
    %p43 = por %p41, %p42
    %s45 = sadd.s32 %s44, 1
    %p48 = scmp.eq.s32.totalorder %s10, 3
    %p49 = scmp.ne.s32.totalorder %s44, %s46
    %p50 = scmp.eq.s32.totalorder %s10, 0
    %p51 = por %p49, %p50
    %p52 = scmp.ne.s32.totalorder %s44, %s46
    %p53 = scmp.eq.s32.totalorder %s15, 3
    %p54 = por %p52, %p53
    %p55 = scmp.ne.s32.totalorder %s46, %s47
    %p56 = scmp.eq.s32.totalorder %s15, 0
    %p57 = por %p55, %p56
    %p58 = scmp.ne.s32.totalorder %s46, %s47
    %p59 = scmp.eq.s32.totalorder %s16, 3
    %p60 = por %p58, %p59
    %p62 = scmp.ne.s32.totalorder %s47, %s61
    %p63 = scmp.eq.s32.totalorder %s16, 0
    %p64 = por %p62, %p63
    %s66 = sadd.s32 %s65, 1
    %p69 = scmp.eq.s32.totalorder %s10, 3
    %p70 = scmp.ne.s32.totalorder %s65, %s67
    %p71 = scmp.eq.s32.totalorder %s10, 0
    %p72 = por %p70, %p71
    %p73 = scmp.ne.s32.totalorder %s65, %s67
    %p74 = scmp.eq.s32.totalorder %s15, 3
    %p75 = por %p73, %p74
    %p76 = scmp.ne.s32.totalorder %s67, %s68
    %p77 = scmp.eq.s32.totalorder %s15, 0
    %p78 = por %p76, %p77
    %p79 = scmp.ne.s32.totalorder %s67, %s68
    %p80 = scmp.eq.s32.totalorder %s16, 3
    %p81 = por %p79, %p80
    %p83 = scmp.ne.s32.totalorder %s68, %s82
    %p84 = scmp.eq.s32.totalorder %s16, 0
    %p85 = por %p83, %p84
    %s87 = sadd.s32 %s86, 1
    %p90 = scmp.eq.s32.totalorder %s10, 3
    %p91 = scmp.ne.s32.totalorder %s86, %s88
    %p92 = scmp.eq.s32.totalorder %s10, 0
    %p93 = por %p91, %p92
    %p94 = scmp.ne.s32.totalorder %s86, %s88
    %p95 = scmp.eq.s32.totalorder %s15, 3
    %p96 = por %p94, %p95
    %p97 = scmp.ne.s32.totalorder %s88, %s89
    %p98 = scmp.eq.s32.totalorder %s15, 0
    %p99 = por %p97, %p98
    %p100 = scmp.ne.s32.totalorder %s88, %s89
    %p101 = scmp.eq.s32.totalorder %s16, 3
    %p102 = por %p100, %p101
    %p104 = scmp.ne.s32.totalorder %s89, %s103
    %p105 = scmp.eq.s32.totalorder %s16, 0
    %p106 = por %p104, %p105
    %s107 = ssub.s32 %s10, %s17
    %p108 = scmp.eq.s32.totalorder %s107, 0
    %s110 = sadd.s32 %s109, 1
    %s111 = scalar_select %p108, %s109, %s110
    %p114 = pneg %p108
    %p115 = scmp.eq.s32.totalorder %s10, 3
    %p116 = por %p114, %p115
    %p117 = scmp.ne.s32.totalorder %s109, %s112
    %p118 = scmp.eq.s32.totalorder %s10, 0
    %p119 = por %p117, %p118
    %p120 = scmp.ne.s32.totalorder %s109, %s112
    %p121 = scmp.eq.s32.totalorder %s15, 3
    %p122 = por %p120, %p121
    %p123 = scmp.ne.s32.totalorder %s112, %s113
    %p124 = scmp.eq.s32.totalorder %s15, 0
    %p125 = por %p123, %p124
    %p126 = scmp.ne.s32.totalorder %s112, %s113
    %p127 = scmp.eq.s32.totalorder %s16, 3
    %p128 = por %p126, %p127
    %p130 = scmp.ne.s32.totalorder %s113, %s129
    %p131 = scmp.eq.s32.totalorder %s16, 0
    %p132 = por %p130, %p131
    %p133 = scmp.le.s32.totalorder 1, %s10
    %p134 = scmp.lt.s32.totalorder %s10, 5
    %p135 = pnand %p133, %p134
    %p136 = pneg %p135
    // Predicated region
    $region9: #{up_forward.8} parent=5 // pred_check
      _
    $region10: #{up_forward.8} parent=5 // pred_check_branch
      %138 = sbr.rel (%p135) target = $region12
    $region11: #{up_forward.8} parent=5 // pred_region
      %s139 = ssub.s32 %s10, 1
      // Predicated region
      $region13: #{up_forward.8} parent=11 // pred_check
        %p140 = pneg %p57
      $region14: #{up_forward.8} parent=11 // pred_check_branch
        %142 = sbr.rel (%p140) target = $region16
      $region15: #{up_forward.8} parent=11 // pred_region
        _
      $region16: #{up_forward.8} parent=11 // pred_fallthru
        _
      // Predicated region
      $region17: #{up_forward.8} parent=11 // pred_check
        %p143 = pneg %p78
      $region18: #{up_forward.8} parent=11 // pred_check_branch
        %145 = sbr.rel (%p143) target = $region20
      $region19: #{up_forward.8} parent=11 // pred_region
        _
      $region20: #{up_forward.8} parent=11 // pred_fallthru
        _
      // Predicated region
      $region21: #{up_forward.8} parent=11 // pred_check
        %p146 = pneg %p99
      $region22: #{up_forward.8} parent=11 // pred_check_branch
        %148 = sbr.rel (%p146) target = $region24
      $region23: #{up_forward.8} parent=11 // pred_region
        _
      $region24: #{up_forward.8} parent=11 // pred_fallthru
        _
    $region12: #{up_forward.8} parent=5 // pred_fallthru
      _
    %p149 = scmp.lt.s32.totalorder %s10, 4
    // Predicated region
    $region25: #{up_forward.8} parent=5 // pred_check
      %p150 = pneg %p149
    $region26: #{up_forward.8} parent=5 // pred_check_branch
      %152 = sbr.rel (%p150) target = $region28
    $region27: #{up_forward.8} parent=5 // pred_region
      // Predicated region
      $region29: #{up_forward.8} parent=27 // pred_check
        %p153 = pneg %p30
      $region30: #{up_forward.8} parent=27 // pred_check_branch
        %155 = sbr.rel (%p153) target = $region32
      $region31: #{up_forward.8} parent=27 // pred_region
        %p156 = scmp.lt.s32.totalorder %s10, 3
        %s157 = scalar_select %p156, %s10, 3
        %s158 = smul.addr %s157, 72
        %s159 = smul.addr %s158, 4
        %s160 = scalar_lea.vmem %s0, %s159
      $region32: #{up_forward.8} parent=27 // pred_fallthru
        _
    $region28: #{up_forward.8} parent=5 // pred_fallthru
      _
    %p161 = scmp.le.s32.totalorder 1, %s10
    %p162 = scmp.lt.s32.totalorder %s10, 5
    %p163 = pnand %p161, %p162
    %p164 = pneg %p163
    // Predicated region
    $region33: #{up_forward.8} parent=5 // pred_check
      _
    $region34: #{up_forward.8} parent=5 // pred_check_branch
      %166 = sbr.rel (%p163) target = $region36
    $region35: #{up_forward.8} parent=5 // pred_region
      %s167 = ssub.s32 %s10, 1
      %p168 = scmp.lt.s32.totalorder %s15, 3
      %s169 = scalar_select %p168, %s15, 3
      %s170 = smul.addr %s169, 72
      %s171 = smul.addr %s170, 4
      %s172 = scalar_lea.vmem %s0, %s171
      %p173 = pneg %p36
      %p174 = pneg %p33
      %p175 = pneg %p57
      %p176 = pneg %p54
      %p177 = pneg %p78
      %p178 = pneg %p75
      %p179 = pneg %p99
      %p180 = pneg %p96
      %p181 = pneg %p125
      %p182 = pneg %p122
      %s183 = smul.u32 64, %s15
      %p184 = scmp.lt.s32.totalorder %s183, 255
      %s185 = scalar_select %p184, %s183, 255
      %s186 = smul.addr %s185, 4
      %s187 = scalar_lea.vmem %s4, %s186
      %p188 = scmp.lt.s32.totalorder %s15, 3
      %s189 = scalar_select %p188, %s15, 3
      %s190 = smul.addr %s189, 72
      %s191 = smul.addr %s190, 4
      %s192 = scalar_lea.vmem %s0, %s191
      %s193 = smul.u32 64, %s15
      %p194 = scmp.lt.s32.totalorder %s193, 255
      %s195 = scalar_select %p194, %s193, 255
      %s196 = smul.addr %s195, 4
      %s197 = scalar_lea.vmem %s4, %s196
      %s198 = smul.u32 64, %s15
      %v200 = vld [vmem:[%s192] sm:$0xf]
      %v201 = vld [vmem:[%s192 + $0x4] sm:$0xf]
      %v202 = vld [vmem:[%s192 + $0x8] sm:$0xf]
      %v203 = vld [vmem:[%s192 + $0xc] sm:$0xf]
      %v204 = vld [vmem:[%s192 + $0x10] sm:$0xf]
      %v205 = vld [vmem:[%s192 + $0x14] sm:$0xf]
      %v206 = vld [vmem:[%s192 + $0x18] sm:$0xf]
      %v207 = vld [vmem:[%s192 + $0x1c] sm:$0xf]
      %v208 = vld [vmem:[%s192 + $0x20] sm:$0xf]
      %v209 = vld [vmem:[%s192 + $0x24] sm:$0xf]
      %v210 = vld [vmem:[%s192 + $0x28] sm:$0xf]
      %v211 = vld [vmem:[%s192 + $0x2c] sm:$0xf]
      %v212 = vld [vmem:[%s192 + $0x30] sm:$0xf]
      %v213 = vld [vmem:[%s192 + $0x34] sm:$0xf]
      %v214 = vld [vmem:[%s192 + $0x38] sm:$0xf]
      %v215 = vld [vmem:[%s192 + $0x3c] sm:$0xf]
      %v216 = vld [vmem:[%s192 + $0x40] sm:$0xf]
      %v217 = vld [vmem:[%s192 + $0x44] sm:$0xf]
      %v218 = vld [vmem:[%s192 + $0x48] sm:$0xf]
      %v219 = vld [vmem:[%s192 + $0x4c] sm:$0xf]
      %v220 = vld [vmem:[%s192 + $0x50] sm:$0xf]
      %v221 = vld [vmem:[%s192 + $0x54] sm:$0xf]
      %v222 = vld [vmem:[%s192 + $0x58] sm:$0xf]
      %v223 = vld [vmem:[%s192 + $0x5c] sm:$0xf]
      %v224 = vld [vmem:[%s192 + $0x60] sm:$0xf]
      %v225 = vld [vmem:[%s192 + $0x64] sm:$0xf]
      %v226 = vld [vmem:[%s192 + $0x68] sm:$0xf]
      %v227 = vld [vmem:[%s192 + $0x6c] sm:$0xf]
      %v228 = vld [vmem:[%s192 + $0x70] sm:$0xf]
      %v229 = vld [vmem:[%s192 + $0x74] sm:$0xf]
      %v230 = vld [vmem:[%s192 + $0x78] sm:$0xf]
      %v231 = vld [vmem:[%s192 + $0x7c] sm:$0xf]
      %v232 = vld [vmem:[%s192 + $0x80] sm:$0xf]
      %v233 = vld [vmem:[%s192 + $0x84] sm:$0xf]
      %v234 = vld [vmem:[%s192 + $0x88] sm:$0xf]
      %v235 = vld [vmem:[%s192 + $0x8c] sm:$0xf]
      %v236 = vld [vmem:[%s192 + $0x90] sm:$0xf]
      %v237 = vld [vmem:[%s192 + $0x94] sm:$0xf]
      %v238 = vld [vmem:[%s192 + $0x98] sm:$0xf]
      %v239 = vld [vmem:[%s192 + $0x9c] sm:$0xf]
      %v240 = vld [vmem:[%s192 + $0xa0] sm:$0xf]
      %v241 = vld [vmem:[%s192 + $0xa4] sm:$0xf]
      %v242 = vld [vmem:[%s192 + $0xa8] sm:$0xf]
      %v243 = vld [vmem:[%s192 + $0xac] sm:$0xf]
      %v244 = vld [vmem:[%s192 + $0xb0] sm:$0xf]
      %v245 = vld [vmem:[%s192 + $0xb4] sm:$0xf]
      %v246 = vld [vmem:[%s192 + $0xb8] sm:$0xf]
      %v247 = vld [vmem:[%s192 + $0xbc] sm:$0xf]
      %v248 = vld [vmem:[%s192 + $0xc0] sm:$0xf]
      %v249 = vld [vmem:[%s192 + $0xc4] sm:$0xf]
      %v250 = vld [vmem:[%s192 + $0xc8] sm:$0xf]
      %v251 = vld [vmem:[%s192 + $0xcc] sm:$0xf]
      %v252 = vld [vmem:[%s192 + $0xd0] sm:$0xf]
      %v253 = vld [vmem:[%s192 + $0xd4] sm:$0xf]
      %v254 = vld [vmem:[%s192 + $0xd8] sm:$0xf]
      %v255 = vld [vmem:[%s192 + $0xdc] sm:$0xf]
      %v256 = vld [vmem:[%s192 + $0xe0] sm:$0xf]
      %v257 = vld [vmem:[%s192 + $0xe4] sm:$0xf]
      %v258 = vld [vmem:[%s192 + $0xe8] sm:$0xf]
      %v259 = vld [vmem:[%s192 + $0xec] sm:$0xf]
      %v260 = vld [vmem:[%s192 + $0xf0] sm:$0xf]
      %v261 = vld [vmem:[%s192 + $0xf4] sm:$0xf]
      %v262 = vld [vmem:[%s192 + $0xf8] sm:$0xf]
      %v263 = vld [vmem:[%s192 + $0xfc] sm:$0xf]
      %v264 = vld [vmem:[%s1] sm:$0xf]
      %v265 = vld [vmem:[%s1 + $0x4] sm:$0xf]
      %v266 = vld [vmem:[%s1 + $0x8] sm:$0xf]
      %v331 = vunpack.c.l.b16 %v200
      %v332 = vunpack.c.l.b16 %v201
      %v333 = vunpack.c.l.b16 %v202
      %v334 = vunpack.c.l.b16 %v203
      %v335 = vunpack.c.l.b16 %v204
      %v336 = vunpack.c.l.b16 %v205
      %v337 = vunpack.c.l.b16 %v206
      %v338 = vunpack.c.l.b16 %v207
      %v339 = vunpack.c.l.b16 %v208
      %v340 = vunpack.c.l.b16 %v209
      %v341 = vunpack.c.l.b16 %v210
      %v342 = vunpack.c.l.b16 %v211
      %v343 = vunpack.c.l.b16 %v212
      %v344 = vunpack.c.l.b16 %v213
      %v345 = vunpack.c.l.b16 %v214
      %v346 = vunpack.c.l.b16 %v215
      %v347 = vunpack.c.l.b16 %v216
      %v348 = vunpack.c.l.b16 %v217
      %v349 = vunpack.c.l.b16 %v218
      %v350 = vunpack.c.l.b16 %v219
      %v351 = vunpack.c.l.b16 %v220
      %v352 = vunpack.c.l.b16 %v221
      %v353 = vunpack.c.l.b16 %v222
      %v354 = vunpack.c.l.b16 %v223
      %v355 = vunpack.c.l.b16 %v224
      %v356 = vunpack.c.l.b16 %v225
      %v357 = vunpack.c.l.b16 %v226
      %v358 = vunpack.c.l.b16 %v227
      %v359 = vunpack.c.l.b16 %v228
      %v360 = vunpack.c.l.b16 %v229
      %v361 = vunpack.c.l.b16 %v230
      %v362 = vunpack.c.l.b16 %v231
      %v363 = vunpack.c.l.b16 %v232
      %v364 = vunpack.c.l.b16 %v233
      %v365 = vunpack.c.l.b16 %v234
      %v366 = vunpack.c.l.b16 %v235
      %v367 = vunpack.c.l.b16 %v236
      %v368 = vunpack.c.l.b16 %v237
      %v369 = vunpack.c.l.b16 %v238
      %v370 = vunpack.c.l.b16 %v239
      %v371 = vunpack.c.l.b16 %v240
      %v372 = vunpack.c.l.b16 %v241
      %v373 = vunpack.c.l.b16 %v242
      %v374 = vunpack.c.l.b16 %v243
      %v375 = vunpack.c.l.b16 %v244
      %v376 = vunpack.c.l.b16 %v245
      %v377 = vunpack.c.l.b16 %v246
      %v378 = vunpack.c.l.b16 %v247
      %v379 = vunpack.c.l.b16 %v248
      %v380 = vunpack.c.l.b16 %v249
      %v381 = vunpack.c.l.b16 %v250
      %v382 = vunpack.c.l.b16 %v251
      %v383 = vunpack.c.l.b16 %v252
      %v384 = vunpack.c.l.b16 %v253
      %v385 = vunpack.c.l.b16 %v254
      %v386 = vunpack.c.l.b16 %v255
      %v387 = vunpack.c.l.b16 %v256
      %v388 = vunpack.c.l.b16 %v257
      %v389 = vunpack.c.l.b16 %v258
      %v390 = vunpack.c.l.b16 %v259
      %v391 = vunpack.c.l.b16 %v260
      %v392 = vunpack.c.l.b16 %v261
      %v393 = vunpack.c.l.b16 %v262
      %v394 = vunpack.c.l.b16 %v263
      %v395 = vpack.c.b16 %v332, %v331
      %v396 = vpack.c.b16 %v334, %v333
      %v397 = vpack.c.b16 %v336, %v335
      %v398 = vpack.c.b16 %v338, %v337
      %v399 = vpack.c.b16 %v340, %v339
      %v400 = vpack.c.b16 %v342, %v341
      %v401 = vpack.c.b16 %v344, %v343
      %v402 = vpack.c.b16 %v346, %v345
      %v403 = vpack.c.b16 %v348, %v347
      %v404 = vpack.c.b16 %v350, %v349
      %v405 = vpack.c.b16 %v352, %v351
      %v406 = vpack.c.b16 %v354, %v353
      %v407 = vpack.c.b16 %v356, %v355
      %v408 = vpack.c.b16 %v358, %v357
      %v409 = vpack.c.b16 %v360, %v359
      %v410 = vpack.c.b16 %v362, %v361
      %v411 = vpack.c.b16 %v364, %v363
      %v412 = vpack.c.b16 %v366, %v365
      %v413 = vpack.c.b16 %v368, %v367
      %v414 = vpack.c.b16 %v370, %v369
      %v415 = vpack.c.b16 %v372, %v371
      %v416 = vpack.c.b16 %v374, %v373
      %v417 = vpack.c.b16 %v376, %v375
      %v418 = vpack.c.b16 %v378, %v377
      %v419 = vpack.c.b16 %v380, %v379
      %v420 = vpack.c.b16 %v382, %v381
      %v421 = vpack.c.b16 %v384, %v383
      %v422 = vpack.c.b16 %v386, %v385
      %v423 = vpack.c.b16 %v388, %v387
      %v424 = vpack.c.b16 %v390, %v389
      %v425 = vpack.c.b16 %v392, %v391
      %v426 = vpack.c.b16 %v394, %v393
      %v430 = vunpack.c.l.b16 %v264
      %v431 = vunpack.c.l.b16 %v265
      %v432 = vunpack.c.l.b16 %v266
      %v433 = vpack.c.b16 %v431, %v430
      %v434 = vpack.c.b16 %v432, %v432
      %vm436 = vcmask 195584
      %v438 = vsel %vm436, %v395, 0
      %v441 = vsel %vm436, %v396, 0
      %v444 = vsel %vm436, %v397, 0
      %v447 = vsel %vm436, %v398, 0
      %v450 = vsel %vm436, %v399, 0
      %v453 = vsel %vm436, %v400, 0
      %v456 = vsel %vm436, %v401, 0
      %v459 = vsel %vm436, %v402, 0
      %v462 = vsel %vm436, %v403, 0
      %v465 = vsel %vm436, %v404, 0
      %v468 = vsel %vm436, %v405, 0
      %v471 = vsel %vm436, %v406, 0
      %v474 = vsel %vm436, %v407, 0
      %v477 = vsel %vm436, %v408, 0
      %v480 = vsel %vm436, %v409, 0
      %v483 = vsel %vm436, %v410, 0
      %v486 = vsel %vm436, %v411, 0
      %v489 = vsel %vm436, %v412, 0
      %v492 = vsel %vm436, %v413, 0
      %v495 = vsel %vm436, %v414, 0
      %v498 = vsel %vm436, %v415, 0
      %v501 = vsel %vm436, %v416, 0
      %v504 = vsel %vm436, %v417, 0
      %v507 = vsel %vm436, %v418, 0
      %v510 = vsel %vm436, %v419, 0
      %v513 = vsel %vm436, %v420, 0
      %v516 = vsel %vm436, %v421, 0
      %v519 = vsel %vm436, %v422, 0
      %v522 = vsel %vm436, %v423, 0
      %v525 = vsel %vm436, %v424, 0
      %v528 = vsel %vm436, %v425, 0
      %v531 = vsel %vm436, %v426, 0
      %vm533 = vcmask 1043456
      %v535 = vsel %vm533, %v434, 0
      %537 = vmatpush.bf16.msra.mxu0 0
      %538 = vmatpush.bf16.msra.mxu0 0
      %539 = vmatpush.bf16.msra.mxu0 0
      %540 = vmatpush.bf16.msra.mxu0 0
      %541 = vmatpush.bf16.msra.mxu0 0
      %542 = vmatpush.bf16.msra.mxu0 0
      %543 = vmatpush.bf16.msra.mxu0 %v535
      %544 = vmatpush.bf16.msra.mxu0 %v433
      %545 = vmatmul.bf16.gmra.mxu0 %v438
      %v546 = vpop.f32.mrf.mxu0
      %v547 = vadd.f32 0.0, %v546
      %v548 = vpop.f32.mrf.mxu0
      %v549 = vadd.f32 0.0, %v548
      %550 = vmatmul.bf16.gmra.mxu0 %v441
      %v551 = vpop.f32.mrf.mxu0
      %v552 = vadd.f32 0.0, %v551
      %v553 = vpop.f32.mrf.mxu0
      %v554 = vadd.f32 0.0, %v553
      %555 = vmatmul.bf16.gmra.mxu0 %v444
      %v556 = vpop.f32.mrf.mxu0
      %v557 = vadd.f32 0.0, %v556
      %v558 = vpop.f32.mrf.mxu0
      %v559 = vadd.f32 0.0, %v558
      %560 = vmatmul.bf16.gmra.mxu0 %v447
      %v561 = vpop.f32.mrf.mxu0
      %v562 = vadd.f32 0.0, %v561
      %v563 = vpop.f32.mrf.mxu0
      %v564 = vadd.f32 0.0, %v563
      %565 = vmatmul.bf16.gmra.mxu0 %v450
      %v566 = vpop.f32.mrf.mxu0
      %v567 = vadd.f32 0.0, %v566
      %v568 = vpop.f32.mrf.mxu0
      %v569 = vadd.f32 0.0, %v568
      %570 = vmatmul.bf16.gmra.mxu0 %v453
      %v571 = vpop.f32.mrf.mxu0
      %v572 = vadd.f32 0.0, %v571
      %v573 = vpop.f32.mrf.mxu0
      %v574 = vadd.f32 0.0, %v573
      %575 = vmatmul.bf16.gmra.mxu0 %v456
      %v576 = vpop.f32.mrf.mxu0
      %v577 = vadd.f32 0.0, %v576
      %v578 = vpop.f32.mrf.mxu0
      %v579 = vadd.f32 0.0, %v578
      %580 = vmatmul.bf16.gmra.mxu0 %v459
      %v581 = vpop.f32.mrf.mxu0
      %v582 = vadd.f32 0.0, %v581
      %v583 = vpop.f32.mrf.mxu0
      %v584 = vadd.f32 0.0, %v583
      %585 = vmatmul.bf16.gmra.mxu0 %v462
      %v586 = vpop.f32.mrf.mxu0
      %v587 = vadd.f32 0.0, %v586
      %v588 = vpop.f32.mrf.mxu0
      %v589 = vadd.f32 0.0, %v588
      %590 = vmatmul.bf16.gmra.mxu0 %v465
      %v591 = vpop.f32.mrf.mxu0
      %v592 = vadd.f32 0.0, %v591
      %v593 = vpop.f32.mrf.mxu0
      %v594 = vadd.f32 0.0, %v593
      %595 = vmatmul.bf16.gmra.mxu0 %v468
      %v596 = vpop.f32.mrf.mxu0
      %v597 = vadd.f32 0.0, %v596
      %v598 = vpop.f32.mrf.mxu0
      %v599 = vadd.f32 0.0, %v598
      %600 = vmatmul.bf16.gmra.mxu0 %v471
      %v601 = vpop.f32.mrf.mxu0
      %v602 = vadd.f32 0.0, %v601
      %v603 = vpop.f32.mrf.mxu0
      %v604 = vadd.f32 0.0, %v603
      %605 = vmatmul.bf16.gmra.mxu0 %v474
      %v606 = vpop.f32.mrf.mxu0
      %v607 = vadd.f32 0.0, %v606
      %v608 = vpop.f32.mrf.mxu0
      %v609 = vadd.f32 0.0, %v608
      %610 = vmatmul.bf16.gmra.mxu0 %v477
      %v611 = vpop.f32.mrf.mxu0
      %v612 = vadd.f32 0.0, %v611
      %v613 = vpop.f32.mrf.mxu0
      %v614 = vadd.f32 0.0, %v613
      %615 = vmatmul.bf16.gmra.mxu0 %v480
      %v616 = vpop.f32.mrf.mxu0
      %v617 = vadd.f32 0.0, %v616
      %v618 = vpop.f32.mrf.mxu0
      %v619 = vadd.f32 0.0, %v618
      %620 = vmatmul.bf16.gmra.mxu0 %v483
      %v621 = vpop.f32.mrf.mxu0
      %v622 = vadd.f32 0.0, %v621
      %v623 = vpop.f32.mrf.mxu0
      %v624 = vadd.f32 0.0, %v623
      %625 = vmatmul.bf16.gmra.mxu0 %v486
      %v626 = vpop.f32.mrf.mxu0
      %v627 = vadd.f32 0.0, %v626
      %v628 = vpop.f32.mrf.mxu0
      %v629 = vadd.f32 0.0, %v628
      %630 = vmatmul.bf16.gmra.mxu0 %v489
      %v631 = vpop.f32.mrf.mxu0
      %v632 = vadd.f32 0.0, %v631
      %v633 = vpop.f32.mrf.mxu0
      %v634 = vadd.f32 0.0, %v633
      %635 = vmatmul.bf16.gmra.mxu0 %v492
      %v636 = vpop.f32.mrf.mxu0
      %v637 = vadd.f32 0.0, %v636
      %v638 = vpop.f32.mrf.mxu0
      %v639 = vadd.f32 0.0, %v638
      %640 = vmatmul.bf16.gmra.mxu0 %v495
      %v641 = vpop.f32.mrf.mxu0
      %v642 = vadd.f32 0.0, %v641
      %v643 = vpop.f32.mrf.mxu0
      %v644 = vadd.f32 0.0, %v643
      %645 = vmatmul.bf16.gmra.mxu0 %v498
      %v646 = vpop.f32.mrf.mxu0
      %v647 = vadd.f32 0.0, %v646
      %v648 = vpop.f32.mrf.mxu0
      %v649 = vadd.f32 0.0, %v648
      %650 = vmatmul.bf16.gmra.mxu0 %v501
      %v651 = vpop.f32.mrf.mxu0
      %v652 = vadd.f32 0.0, %v651
      %v653 = vpop.f32.mrf.mxu0
      %v654 = vadd.f32 0.0, %v653
      %655 = vmatmul.bf16.gmra.mxu0 %v504
      %v656 = vpop.f32.mrf.mxu0
      %v657 = vadd.f32 0.0, %v656
      %v658 = vpop.f32.mrf.mxu0
      %v659 = vadd.f32 0.0, %v658
      %660 = vmatmul.bf16.gmra.mxu0 %v507
      %v661 = vpop.f32.mrf.mxu0
      %v662 = vadd.f32 0.0, %v661
      %v663 = vpop.f32.mrf.mxu0
      %v664 = vadd.f32 0.0, %v663
      %665 = vmatmul.bf16.gmra.mxu0 %v510
      %v666 = vpop.f32.mrf.mxu0
      %v667 = vadd.f32 0.0, %v666
      %v668 = vpop.f32.mrf.mxu0
      %v669 = vadd.f32 0.0, %v668
      %670 = vmatmul.bf16.gmra.mxu0 %v513
      %v671 = vpop.f32.mrf.mxu0
      %v672 = vadd.f32 0.0, %v671
      %v673 = vpop.f32.mrf.mxu0
      %v674 = vadd.f32 0.0, %v673
      %675 = vmatmul.bf16.gmra.mxu0 %v516
      %v676 = vpop.f32.mrf.mxu0
      %v677 = vadd.f32 0.0, %v676
      %v678 = vpop.f32.mrf.mxu0
      %v679 = vadd.f32 0.0, %v678
      %680 = vmatmul.bf16.gmra.mxu0 %v519
      %v681 = vpop.f32.mrf.mxu0
      %v682 = vadd.f32 0.0, %v681
      %v683 = vpop.f32.mrf.mxu0
      %v684 = vadd.f32 0.0, %v683
      %685 = vmatmul.bf16.gmra.mxu0 %v522
      %v686 = vpop.f32.mrf.mxu0
      %v687 = vadd.f32 0.0, %v686
      %v688 = vpop.f32.mrf.mxu0
      %v689 = vadd.f32 0.0, %v688
      %690 = vmatmul.bf16.gmra.mxu0 %v525
      %v691 = vpop.f32.mrf.mxu0
      %v692 = vadd.f32 0.0, %v691
      %v693 = vpop.f32.mrf.mxu0
      %v694 = vadd.f32 0.0, %v693
      %695 = vmatmul.bf16.gmra.mxu0 %v528
      %v696 = vpop.f32.mrf.mxu0
      %v697 = vadd.f32 0.0, %v696
      %v698 = vpop.f32.mrf.mxu0
      %v699 = vadd.f32 0.0, %v698
      %700 = vmatmul.bf16.gmra.mxu0 %v531
      %v701 = vpop.f32.mrf.mxu0
      %v702 = vadd.f32 0.0, %v701
      %v703 = vpop.f32.mrf.mxu0
      %v704 = vadd.f32 0.0, %v703
      %705 = vdwg.mxu0
      %706 = vst [vmem:[#allocation2] sm:$0xff] %v547
      %707 = vst [vmem:[#allocation2 + $0x8] sm:$0xff] %v549
      %708 = vst [vmem:[#allocation2 + $0x10] sm:$0xff] %v552
      %709 = vst [vmem:[#allocation2 + $0x18] sm:$0xff] %v554
      %710 = vst [vmem:[#allocation2 + $0x20] sm:$0xff] %v557
      %711 = vst [vmem:[#allocation2 + $0x28] sm:$0xff] %v559
      %712 = vst [vmem:[#allocation2 + $0x30] sm:$0xff] %v562
      %713 = vst [vmem:[#allocation2 + $0x38] sm:$0xff] %v564
      %714 = vst [vmem:[#allocation2 + $0x40] sm:$0xff] %v567
      %715 = vst [vmem:[#allocation2 + $0x48] sm:$0xff] %v569
      %716 = vst [vmem:[#allocation2 + $0x50] sm:$0xff] %v572
      %717 = vst [vmem:[#allocation2 + $0x58] sm:$0xff] %v574
      %718 = vst [vmem:[#allocation2 + $0x60] sm:$0xff] %v577
      %719 = vst [vmem:[#allocation2 + $0x68] sm:$0xff] %v579
      %720 = vst [vmem:[#allocation2 + $0x70] sm:$0xff] %v582
      %721 = vst [vmem:[#allocation2 + $0x78] sm:$0xff] %v584
      %722 = vst [vmem:[#allocation2 + $0x80] sm:$0xff] %v587
      %723 = vst [vmem:[#allocation2 + $0x88] sm:$0xff] %v589
      %724 = vst [vmem:[#allocation2 + $0x90] sm:$0xff] %v592
      %725 = vst [vmem:[#allocation2 + $0x98] sm:$0xff] %v594
      %726 = vst [vmem:[#allocation2 + $0xa0] sm:$0xff] %v597
      %727 = vst [vmem:[#allocation2 + $0xa8] sm:$0xff] %v599
      %728 = vst [vmem:[#allocation2 + $0xb0] sm:$0xff] %v602
      %729 = vst [vmem:[#allocation2 + $0xb8] sm:$0xff] %v604
      %730 = vst [vmem:[#allocation2 + $0xc0] sm:$0xff] %v607
      %731 = vst [vmem:[#allocation2 + $0xc8] sm:$0xff] %v609
      %732 = vst [vmem:[#allocation2 + $0xd0] sm:$0xff] %v612
      %733 = vst [vmem:[#allocation2 + $0xd8] sm:$0xff] %v614
      %734 = vst [vmem:[#allocation2 + $0xe0] sm:$0xff] %v617
      %735 = vst [vmem:[#allocation2 + $0xe8] sm:$0xff] %v619
      %736 = vst [vmem:[#allocation2 + $0xf0] sm:$0xff] %v622
      %737 = vst [vmem:[#allocation2 + $0xf8] sm:$0xff] %v624
      %738 = vst [vmem:[#allocation2 + $0x100] sm:$0xff] %v627
      %739 = vst [vmem:[#allocation2 + $0x108] sm:$0xff] %v629
      %740 = vst [vmem:[#allocation2 + $0x110] sm:$0xff] %v632
      %741 = vst [vmem:[#allocation2 + $0x118] sm:$0xff] %v634
      %742 = vst [vmem:[#allocation2 + $0x120] sm:$0xff] %v637
      %743 = vst [vmem:[#allocation2 + $0x128] sm:$0xff] %v639
      %744 = vst [vmem:[#allocation2 + $0x130] sm:$0xff] %v642
      %745 = vst [vmem:[#allocation2 + $0x138] sm:$0xff] %v644
      %746 = vst [vmem:[#allocation2 + $0x140] sm:$0xff] %v647
      %747 = vst [vmem:[#allocation2 + $0x148] sm:$0xff] %v649
      %748 = vst [vmem:[#allocation2 + $0x150] sm:$0xff] %v652
      %749 = vst [vmem:[#allocation2 + $0x158] sm:$0xff] %v654
      %750 = vst [vmem:[#allocation2 + $0x160] sm:$0xff] %v657
      %751 = vst [vmem:[#allocation2 + $0x168] sm:$0xff] %v659
      %752 = vst [vmem:[#allocation2 + $0x170] sm:$0xff] %v662
      %753 = vst [vmem:[#allocation2 + $0x178] sm:$0xff] %v664
      %754 = vst [vmem:[#allocation2 + $0x180] sm:$0xff] %v667
      %755 = vst [vmem:[#allocation2 + $0x188] sm:$0xff] %v669
      %756 = vst [vmem:[#allocation2 + $0x190] sm:$0xff] %v672
      %757 = vst [vmem:[#allocation2 + $0x198] sm:$0xff] %v674
      %758 = vst [vmem:[#allocation2 + $0x1a0] sm:$0xff] %v677
      %759 = vst [vmem:[#allocation2 + $0x1a8] sm:$0xff] %v679
      %760 = vst [vmem:[#allocation2 + $0x1b0] sm:$0xff] %v682
      %761 = vst [vmem:[#allocation2 + $0x1b8] sm:$0xff] %v684
      %762 = vst [vmem:[#allocation2 + $0x1c0] sm:$0xff] %v687
      %763 = vst [vmem:[#allocation2 + $0x1c8] sm:$0xff] %v689
      %764 = vst [vmem:[#allocation2 + $0x1d0] sm:$0xff] %v692
      %765 = vst [vmem:[#allocation2 + $0x1d8] sm:$0xff] %v694
      %766 = vst [vmem:[#allocation2 + $0x1e0] sm:$0xff] %v697
      %767 = vst [vmem:[#allocation2 + $0x1e8] sm:$0xff] %v699
      %768 = vst [vmem:[#allocation2 + $0x1f0] sm:$0xff] %v702
      %769 = vst [vmem:[#allocation2 + $0x1f8] sm:$0xff] %v704
      %s770 = scalar_lea.vmem %s192, 16
      %v771 = vld [vmem:[%s770] sm:$0xf]
      %v772 = vld [vmem:[%s770 + $0x4] sm:$0xf]
      %v773 = vld [vmem:[%s770 + $0x8] sm:$0xf]
      %v774 = vld [vmem:[%s770 + $0xc] sm:$0xf]
      %v775 = vld [vmem:[%s770 + $0x10] sm:$0xf]
      %v776 = vld [vmem:[%s770 + $0x14] sm:$0xf]
      %v777 = vld [vmem:[%s770 + $0x18] sm:$0xf]
      %v778 = vld [vmem:[%s770 + $0x1c] sm:$0xf]
      %v779 = vld [vmem:[%s770 + $0x20] sm:$0xf]
      %v780 = vld [vmem:[%s770 + $0x24] sm:$0xf]
      %v781 = vld [vmem:[%s770 + $0x28] sm:$0xf]
      %v782 = vld [vmem:[%s770 + $0x2c] sm:$0xf]
      %v783 = vld [vmem:[%s770 + $0x30] sm:$0xf]
      %v784 = vld [vmem:[%s770 + $0x34] sm:$0xf]
      %v785 = vld [vmem:[%s770 + $0x38] sm:$0xf]
      %v786 = vld [vmem:[%s770 + $0x3c] sm:$0xf]
      %v787 = vld [vmem:[%s770 + $0x40] sm:$0xf]
      %v788 = vld [vmem:[%s770 + $0x44] sm:$0xf]
      %v789 = vld [vmem:[%s770 + $0x48] sm:$0xf]
      %v790 = vld [vmem:[%s770 + $0x4c] sm:$0xf]
      %v791 = vld [vmem:[%s770 + $0x50] sm:$0xf]
      %v792 = vld [vmem:[%s770 + $0x54] sm:$0xf]
      %v793 = vld [vmem:[%s770 + $0x58] sm:$0xf]
      %v794 = vld [vmem:[%s770 + $0x5c] sm:$0xf]
      %v795 = vld [vmem:[%s770 + $0x60] sm:$0xf]
      %v796 = vld [vmem:[%s770 + $0x64] sm:$0xf]
      %v797 = vld [vmem:[%s770 + $0x68] sm:$0xf]
      %v798 = vld [vmem:[%s770 + $0x6c] sm:$0xf]
      %v799 = vld [vmem:[%s770 + $0x70] sm:$0xf]
      %v800 = vld [vmem:[%s770 + $0x74] sm:$0xf]
      %v801 = vld [vmem:[%s770 + $0x78] sm:$0xf]
      %v802 = vld [vmem:[%s770 + $0x7c] sm:$0xf]
      %v803 = vld [vmem:[%s770 + $0x80] sm:$0xf]
      %v804 = vld [vmem:[%s770 + $0x84] sm:$0xf]
      %v805 = vld [vmem:[%s770 + $0x88] sm:$0xf]
      %v806 = vld [vmem:[%s770 + $0x8c] sm:$0xf]
      %v807 = vld [vmem:[%s770 + $0x90] sm:$0xf]
      %v808 = vld [vmem:[%s770 + $0x94] sm:$0xf]
      %v809 = vld [vmem:[%s770 + $0x98] sm:$0xf]
      %v810 = vld [vmem:[%s770 + $0x9c] sm:$0xf]
      %v811 = vld [vmem:[%s770 + $0xa0] sm:$0xf]
      %v812 = vld [vmem:[%s770 + $0xa4] sm:$0xf]
      %v813 = vld [vmem:[%s770 + $0xa8] sm:$0xf]
      %v814 = vld [vmem:[%s770 + $0xac] sm:$0xf]
      %v815 = vld [vmem:[%s770 + $0xb0] sm:$0xf]
      %v816 = vld [vmem:[%s770 + $0xb4] sm:$0xf]
      %v817 = vld [vmem:[%s770 + $0xb8] sm:$0xf]
      %v818 = vld [vmem:[%s770 + $0xbc] sm:$0xf]
      %v819 = vld [vmem:[%s770 + $0xc0] sm:$0xf]
      %v820 = vld [vmem:[%s770 + $0xc4] sm:$0xf]
      %v821 = vld [vmem:[%s770 + $0xc8] sm:$0xf]
      %v822 = vld [vmem:[%s770 + $0xcc] sm:$0xf]
      %v823 = vld [vmem:[%s770 + $0xd0] sm:$0xf]
      %v824 = vld [vmem:[%s770 + $0xd4] sm:$0xf]
      %v825 = vld [vmem:[%s770 + $0xd8] sm:$0xf]
      %v826 = vld [vmem:[%s770 + $0xdc] sm:$0xf]
      %v827 = vld [vmem:[%s770 + $0xe0] sm:$0xf]
      %v828 = vld [vmem:[%s770 + $0xe4] sm:$0xf]
      %v829 = vld [vmem:[%s770 + $0xe8] sm:$0xf]
      %v830 = vld [vmem:[%s770 + $0xec] sm:$0xf]
      %v831 = vld [vmem:[%s770 + $0xf0] sm:$0xf]
      %v832 = vld [vmem:[%s770 + $0xf4] sm:$0xf]
      %v833 = vld [vmem:[%s770 + $0xf8] sm:$0xf]
      %v834 = vld [vmem:[%s770 + $0xfc] sm:$0xf]
      %s835 = scalar_lea.vmem %s1, 12
      %v836 = vld [vmem:[%s835] sm:$0xf]
      %v837 = vld [vmem:[%s835 + $0x4] sm:$0xf]
      %v838 = vld [vmem:[%s835 + $0x8] sm:$0xf]
      %v903 = vunpack.c.l.b16 %v771
      %v904 = vunpack.c.l.b16 %v772
      %v905 = vunpack.c.l.b16 %v773
      %v906 = vunpack.c.l.b16 %v774
      %v907 = vunpack.c.l.b16 %v775
      %v908 = vunpack.c.l.b16 %v776
      %v909 = vunpack.c.l.b16 %v777
      %v910 = vunpack.c.l.b16 %v778
      %v911 = vunpack.c.l.b16 %v779
      %v912 = vunpack.c.l.b16 %v780
      %v913 = vunpack.c.l.b16 %v781
      %v914 = vunpack.c.l.b16 %v782
      %v915 = vunpack.c.l.b16 %v783
      %v916 = vunpack.c.l.b16 %v784
      %v917 = vunpack.c.l.b16 %v785
      %v918 = vunpack.c.l.b16 %v786
      %v919 = vunpack.c.l.b16 %v787
      %v920 = vunpack.c.l.b16 %v788
      %v921 = vunpack.c.l.b16 %v789
      %v922 = vunpack.c.l.b16 %v790
      %v923 = vunpack.c.l.b16 %v791
      %v924 = vunpack.c.l.b16 %v792
      %v925 = vunpack.c.l.b16 %v793
      %v926 = vunpack.c.l.b16 %v794
      %v927 = vunpack.c.l.b16 %v795
      %v928 = vunpack.c.l.b16 %v796
      %v929 = vunpack.c.l.b16 %v797
      %v930 = vunpack.c.l.b16 %v798
      %v931 = vunpack.c.l.b16 %v799
      %v932 = vunpack.c.l.b16 %v800
      %v933 = vunpack.c.l.b16 %v801
      %v934 = vunpack.c.l.b16 %v802
      %v935 = vunpack.c.l.b16 %v803
      %v936 = vunpack.c.l.b16 %v804
      %v937 = vunpack.c.l.b16 %v805
      %v938 = vunpack.c.l.b16 %v806
      %v939 = vunpack.c.l.b16 %v807
      %v940 = vunpack.c.l.b16 %v808
      %v941 = vunpack.c.l.b16 %v809
      %v942 = vunpack.c.l.b16 %v810
      %v943 = vunpack.c.l.b16 %v811
      %v944 = vunpack.c.l.b16 %v812
      %v945 = vunpack.c.l.b16 %v813
      %v946 = vunpack.c.l.b16 %v814
      %v947 = vunpack.c.l.b16 %v815
      %v948 = vunpack.c.l.b16 %v816
      %v949 = vunpack.c.l.b16 %v817
      %v950 = vunpack.c.l.b16 %v818
      %v951 = vunpack.c.l.b16 %v819
      %v952 = vunpack.c.l.b16 %v820
      %v953 = vunpack.c.l.b16 %v821
      %v954 = vunpack.c.l.b16 %v822
      %v955 = vunpack.c.l.b16 %v823
      %v956 = vunpack.c.l.b16 %v824
      %v957 = vunpack.c.l.b16 %v825
      %v958 = vunpack.c.l.b16 %v826
      %v959 = vunpack.c.l.b16 %v827
      %v960 = vunpack.c.l.b16 %v828
      %v961 = vunpack.c.l.b16 %v829
      %v962 = vunpack.c.l.b16 %v830
      %v963 = vunpack.c.l.b16 %v831
      %v964 = vunpack.c.l.b16 %v832
      %v965 = vunpack.c.l.b16 %v833
      %v966 = vunpack.c.l.b16 %v834
      %v967 = vpack.c.b16 %v904, %v903
      %v968 = vpack.c.b16 %v906, %v905
      %v969 = vpack.c.b16 %v908, %v907
      %v970 = vpack.c.b16 %v910, %v909
      %v971 = vpack.c.b16 %v912, %v911
      %v972 = vpack.c.b16 %v914, %v913
      %v973 = vpack.c.b16 %v916, %v915
      %v974 = vpack.c.b16 %v918, %v917
      %v975 = vpack.c.b16 %v920, %v919
      %v976 = vpack.c.b16 %v922, %v921
      %v977 = vpack.c.b16 %v924, %v923
      %v978 = vpack.c.b16 %v926, %v925
      %v979 = vpack.c.b16 %v928, %v927
      %v980 = vpack.c.b16 %v930, %v929
      %v981 = vpack.c.b16 %v932, %v931
      %v982 = vpack.c.b16 %v934, %v933
      %v983 = vpack.c.b16 %v936, %v935
      %v984 = vpack.c.b16 %v938, %v937
      %v985 = vpack.c.b16 %v940, %v939
      %v986 = vpack.c.b16 %v942, %v941
      %v987 = vpack.c.b16 %v944, %v943
      %v988 = vpack.c.b16 %v946, %v945
      %v989 = vpack.c.b16 %v948, %v947
      %v990 = vpack.c.b16 %v950, %v949
      %v991 = vpack.c.b16 %v952, %v951
      %v992 = vpack.c.b16 %v954, %v953
      %v993 = vpack.c.b16 %v956, %v955
      %v994 = vpack.c.b16 %v958, %v957
      %v995 = vpack.c.b16 %v960, %v959
      %v996 = vpack.c.b16 %v962, %v961
      %v997 = vpack.c.b16 %v964, %v963
      %v998 = vpack.c.b16 %v966, %v965
      %v1002 = vunpack.c.l.b16 %v836
      %v1003 = vunpack.c.l.b16 %v837
      %v1004 = vunpack.c.l.b16 %v838
      %v1005 = vpack.c.b16 %v1003, %v1002
      %v1006 = vpack.c.b16 %v1004, %v1004
      %v1009 = vsel %vm436, %v967, 0
      %v1012 = vsel %vm436, %v968, 0
      %v1015 = vsel %vm436, %v969, 0
      %v1018 = vsel %vm436, %v970, 0
      %v1021 = vsel %vm436, %v971, 0
      %v1024 = vsel %vm436, %v972, 0
      %v1027 = vsel %vm436, %v973, 0
      %v1030 = vsel %vm436, %v974, 0
      %v1033 = vsel %vm436, %v975, 0
      %v1036 = vsel %vm436, %v976, 0
      %v1039 = vsel %vm436, %v977, 0
      %v1042 = vsel %vm436, %v978, 0
      %v1045 = vsel %vm436, %v979, 0
      %v1048 = vsel %vm436, %v980, 0
      %v1051 = vsel %vm436, %v981, 0
      %v1054 = vsel %vm436, %v982, 0
      %v1057 = vsel %vm436, %v983, 0
      %v1060 = vsel %vm436, %v984, 0
      %v1063 = vsel %vm436, %v985, 0
      %v1066 = vsel %vm436, %v986, 0
      %v1069 = vsel %vm436, %v987, 0
      %v1072 = vsel %vm436, %v988, 0
      %v1075 = vsel %vm436, %v989, 0
      %v1078 = vsel %vm436, %v990, 0
      %v1081 = vsel %vm436, %v991, 0
      %v1084 = vsel %vm436, %v992, 0
      %v1087 = vsel %vm436, %v993, 0
      %v1090 = vsel %vm436, %v994, 0
      %v1093 = vsel %vm436, %v995, 0
      %v1096 = vsel %vm436, %v996, 0
      %v1099 = vsel %vm436, %v997, 0
      %v1102 = vsel %vm436, %v998, 0
      %v1105 = vsel %vm533, %v1006, 0
      %1107 = vmatpush.bf16.msra.mxu0 0
      %1108 = vmatpush.bf16.msra.mxu0 0
      %1109 = vmatpush.bf16.msra.mxu0 0
      %1110 = vmatpush.bf16.msra.mxu0 0
      %1111 = vmatpush.bf16.msra.mxu0 0
      %1112 = vmatpush.bf16.msra.mxu0 0
      %1113 = vmatpush.bf16.msra.mxu0 %v1105
      %1114 = vmatpush.bf16.msra.mxu0 %v1005
      %1115 = vmatmul.bf16.gmra.mxu0 %v1009
      %v1116 = vpop.f32.mrf.mxu0
      %v1117 = vadd.f32 0.0, %v1116
      %v1118 = vpop.f32.mrf.mxu0
      %v1119 = vadd.f32 0.0, %v1118
      %1120 = vmatmul.bf16.gmra.mxu0 %v1012
      %v1121 = vpop.f32.mrf.mxu0
      %v1122 = vadd.f32 0.0, %v1121
      %v1123 = vpop.f32.mrf.mxu0
      %v1124 = vadd.f32 0.0, %v1123
      %1125 = vmatmul.bf16.gmra.mxu0 %v1015
      %v1126 = vpop.f32.mrf.mxu0
      %v1127 = vadd.f32 0.0, %v1126
      %v1128 = vpop.f32.mrf.mxu0
      %v1129 = vadd.f32 0.0, %v1128
      %1130 = vmatmul.bf16.gmra.mxu0 %v1018
      %v1131 = vpop.f32.mrf.mxu0
      %v1132 = vadd.f32 0.0, %v1131
      %v1133 = vpop.f32.mrf.mxu0
      %v1134 = vadd.f32 0.0, %v1133
      %1135 = vmatmul.bf16.gmra.mxu0 %v1021
      %v1136 = vpop.f32.mrf.mxu0
      %v1137 = vadd.f32 0.0, %v1136
      %v1138 = vpop.f32.mrf.mxu0
      %v1139 = vadd.f32 0.0, %v1138
      %1140 = vmatmul.bf16.gmra.mxu0 %v1024
      %v1141 = vpop.f32.mrf.mxu0
      %v1142 = vadd.f32 0.0, %v1141
      %v1143 = vpop.f32.mrf.mxu0
      %v1144 = vadd.f32 0.0, %v1143
      %1145 = vmatmul.bf16.gmra.mxu0 %v1027
      %v1146 = vpop.f32.mrf.mxu0
      %v1147 = vadd.f32 0.0, %v1146
      %v1148 = vpop.f32.mrf.mxu0
      %v1149 = vadd.f32 0.0, %v1148
      %1150 = vmatmul.bf16.gmra.mxu0 %v1030
      %v1151 = vpop.f32.mrf.mxu0
      %v1152 = vadd.f32 0.0, %v1151
      %v1153 = vpop.f32.mrf.mxu0
      %v1154 = vadd.f32 0.0, %v1153
      %1155 = vmatmul.bf16.gmra.mxu0 %v1033
      %v1156 = vpop.f32.mrf.mxu0
      %v1157 = vadd.f32 0.0, %v1156
      %v1158 = vpop.f32.mrf.mxu0
      %v1159 = vadd.f32 0.0, %v1158
      %1160 = vmatmul.bf16.gmra.mxu0 %v1036
      %v1161 = vpop.f32.mrf.mxu0
      %v1162 = vadd.f32 0.0, %v1161
      %v1163 = vpop.f32.mrf.mxu0
      %v1164 = vadd.f32 0.0, %v1163
      %1165 = vmatmul.bf16.gmra.mxu0 %v1039
      %v1166 = vpop.f32.mrf.mxu0
      %v1167 = vadd.f32 0.0, %v1166
      %v1168 = vpop.f32.mrf.mxu0
      %v1169 = vadd.f32 0.0, %v1168
      %1170 = vmatmul.bf16.gmra.mxu0 %v1042
      %v1171 = vpop.f32.mrf.mxu0
      %v1172 = vadd.f32 0.0, %v1171
      %v1173 = vpop.f32.mrf.mxu0
      %v1174 = vadd.f32 0.0, %v1173
      %1175 = vmatmul.bf16.gmra.mxu0 %v1045
      %v1176 = vpop.f32.mrf.mxu0
      %v1177 = vadd.f32 0.0, %v1176
      %v1178 = vpop.f32.mrf.mxu0
      %v1179 = vadd.f32 0.0, %v1178
      %1180 = vmatmul.bf16.gmra.mxu0 %v1048
      %v1181 = vpop.f32.mrf.mxu0
      %v1182 = vadd.f32 0.0, %v1181
      %v1183 = vpop.f32.mrf.mxu0
      %v1184 = vadd.f32 0.0, %v1183
      %1185 = vmatmul.bf16.gmra.mxu0 %v1051
      %v1186 = vpop.f32.mrf.mxu0
      %v1187 = vadd.f32 0.0, %v1186
      %v1188 = vpop.f32.mrf.mxu0
      %v1189 = vadd.f32 0.0, %v1188
      %1190 = vmatmul.bf16.gmra.mxu0 %v1054
      %v1191 = vpop.f32.mrf.mxu0
      %v1192 = vadd.f32 0.0, %v1191
      %v1193 = vpop.f32.mrf.mxu0
      %v1194 = vadd.f32 0.0, %v1193
      %1195 = vmatmul.bf16.gmra.mxu0 %v1057
      %v1196 = vpop.f32.mrf.mxu0
      %v1197 = vadd.f32 0.0, %v1196
      %v1198 = vpop.f32.mrf.mxu0
      %v1199 = vadd.f32 0.0, %v1198
      %1200 = vmatmul.bf16.gmra.mxu0 %v1060
      %v1201 = vpop.f32.mrf.mxu0
      %v1202 = vadd.f32 0.0, %v1201
      %v1203 = vpop.f32.mrf.mxu0
      %v1204 = vadd.f32 0.0, %v1203
      %1205 = vmatmul.bf16.gmra.mxu0 %v1063
      %v1206 = vpop.f32.mrf.mxu0
      %v1207 = vadd.f32 0.0, %v1206
      %v1208 = vpop.f32.mrf.mxu0
      %v1209 = vadd.f32 0.0, %v1208
      %1210 = vmatmul.bf16.gmra.mxu0 %v1066
      %v1211 = vpop.f32.mrf.mxu0
      %v1212 = vadd.f32 0.0, %v1211
      %v1213 = vpop.f32.mrf.mxu0
      %v1214 = vadd.f32 0.0, %v1213
      %1215 = vmatmul.bf16.gmra.mxu0 %v1069
      %v1216 = vpop.f32.mrf.mxu0
      %v1217 = vadd.f32 0.0, %v1216
      %v1218 = vpop.f32.mrf.mxu0
      %v1219 = vadd.f32 0.0, %v1218
      %1220 = vmatmul.bf16.gmra.mxu0 %v1072
      %v1221 = vpop.f32.mrf.mxu0
      %v1222 = vadd.f32 0.0, %v1221
      %v1223 = vpop.f32.mrf.mxu0
      %v1224 = vadd.f32 0.0, %v1223
      %1225 = vmatmul.bf16.gmra.mxu0 %v1075
      %v1226 = vpop.f32.mrf.mxu0
      %v1227 = vadd.f32 0.0, %v1226
      %v1228 = vpop.f32.mrf.mxu0
      %v1229 = vadd.f32 0.0, %v1228
      %1230 = vmatmul.bf16.gmra.mxu0 %v1078
      %v1231 = vpop.f32.mrf.mxu0
      %v1232 = vadd.f32 0.0, %v1231
      %v1233 = vpop.f32.mrf.mxu0
      %v1234 = vadd.f32 0.0, %v1233
      %1235 = vmatmul.bf16.gmra.mxu0 %v1081
      %v1236 = vpop.f32.mrf.mxu0
      %v1237 = vadd.f32 0.0, %v1236
      %v1238 = vpop.f32.mrf.mxu0
      %v1239 = vadd.f32 0.0, %v1238
      %1240 = vmatmul.bf16.gmra.mxu0 %v1084
      %v1241 = vpop.f32.mrf.mxu0
      %v1242 = vadd.f32 0.0, %v1241
      %v1243 = vpop.f32.mrf.mxu0
      %v1244 = vadd.f32 0.0, %v1243
      %1245 = vmatmul.bf16.gmra.mxu0 %v1087
      %v1246 = vpop.f32.mrf.mxu0
      %v1247 = vadd.f32 0.0, %v1246
      %v1248 = vpop.f32.mrf.mxu0
      %v1249 = vadd.f32 0.0, %v1248
      %1250 = vmatmul.bf16.gmra.mxu0 %v1090
      %v1251 = vpop.f32.mrf.mxu0
      %v1252 = vadd.f32 0.0, %v1251
      %v1253 = vpop.f32.mrf.mxu0
      %v1254 = vadd.f32 0.0, %v1253
      %1255 = vmatmul.bf16.gmra.mxu0 %v1093
      %v1256 = vpop.f32.mrf.mxu0
      %v1257 = vadd.f32 0.0, %v1256
      %v1258 = vpop.f32.mrf.mxu0
      %v1259 = vadd.f32 0.0, %v1258
      %1260 = vmatmul.bf16.gmra.mxu0 %v1096
      %v1261 = vpop.f32.mrf.mxu0
      %v1262 = vadd.f32 0.0, %v1261
      %v1263 = vpop.f32.mrf.mxu0
      %v1264 = vadd.f32 0.0, %v1263
      %1265 = vmatmul.bf16.gmra.mxu0 %v1099
      %v1266 = vpop.f32.mrf.mxu0
      %v1267 = vadd.f32 0.0, %v1266
      %v1268 = vpop.f32.mrf.mxu0
      %v1269 = vadd.f32 0.0, %v1268
      %1270 = vmatmul.bf16.gmra.mxu0 %v1102
      %v1271 = vpop.f32.mrf.mxu0
      %v1272 = vadd.f32 0.0, %v1271
      %v1273 = vpop.f32.mrf.mxu0
      %v1274 = vadd.f32 0.0, %v1273
      %1275 = vdwg.mxu0
      %v1276 = vld [vmem:[#allocation2] sm:$0xff]
      %v1277 = vld [vmem:[#allocation2 + $0x8] sm:$0xff]
      %v1278 = vld [vmem:[#allocation2 + $0x10] sm:$0xff]
      %v1279 = vld [vmem:[#allocation2 + $0x18] sm:$0xff]
      %v1280 = vld [vmem:[#allocation2 + $0x20] sm:$0xff]
      %v1281 = vld [vmem:[#allocation2 + $0x28] sm:$0xff]
      %v1282 = vld [vmem:[#allocation2 + $0x30] sm:$0xff]
      %v1283 = vld [vmem:[#allocation2 + $0x38] sm:$0xff]
      %v1284 = vld [vmem:[#allocation2 + $0x40] sm:$0xff]
      %v1285 = vld [vmem:[#allocation2 + $0x48] sm:$0xff]
      %v1286 = vld [vmem:[#allocation2 + $0x50] sm:$0xff]
      %v1287 = vld [vmem:[#allocation2 + $0x58] sm:$0xff]
      %v1288 = vld [vmem:[#allocation2 + $0x60] sm:$0xff]
      %v1289 = vld [vmem:[#allocation2 + $0x68] sm:$0xff]
      %v1290 = vld [vmem:[#allocation2 + $0x70] sm:$0xff]
      %v1291 = vld [vmem:[#allocation2 + $0x78] sm:$0xff]
      %v1292 = vld [vmem:[#allocation2 + $0x80] sm:$0xff]
      %v1293 = vld [vmem:[#allocation2 + $0x88] sm:$0xff]
      %v1294 = vld [vmem:[#allocation2 + $0x90] sm:$0xff]
      %v1295 = vld [vmem:[#allocation2 + $0x98] sm:$0xff]
      %v1296 = vld [vmem:[#allocation2 + $0xa0] sm:$0xff]
      %v1297 = vld [vmem:[#allocation2 + $0xa8] sm:$0xff]
      %v1298 = vld [vmem:[#allocation2 + $0xb0] sm:$0xff]
      %v1299 = vld [vmem:[#allocation2 + $0xb8] sm:$0xff]
      %v1300 = vld [vmem:[#allocation2 + $0xc0] sm:$0xff]
      %v1301 = vld [vmem:[#allocation2 + $0xc8] sm:$0xff]
      %v1302 = vld [vmem:[#allocation2 + $0xd0] sm:$0xff]
      %v1303 = vld [vmem:[#allocation2 + $0xd8] sm:$0xff]
      %v1304 = vld [vmem:[#allocation2 + $0xe0] sm:$0xff]
      %v1305 = vld [vmem:[#allocation2 + $0xe8] sm:$0xff]
      %v1306 = vld [vmem:[#allocation2 + $0xf0] sm:$0xff]
      %v1307 = vld [vmem:[#allocation2 + $0xf8] sm:$0xff]
      %v1308 = vld [vmem:[#allocation2 + $0x100] sm:$0xff]
      %v1309 = vld [vmem:[#allocation2 + $0x108] sm:$0xff]
      %v1310 = vld [vmem:[#allocation2 + $0x110] sm:$0xff]
      %v1311 = vld [vmem:[#allocation2 + $0x118] sm:$0xff]
      %v1312 = vld [vmem:[#allocation2 + $0x120] sm:$0xff]
      %v1313 = vld [vmem:[#allocation2 + $0x128] sm:$0xff]
      %v1314 = vld [vmem:[#allocation2 + $0x130] sm:$0xff]
      %v1315 = vld [vmem:[#allocation2 + $0x138] sm:$0xff]
      %v1316 = vld [vmem:[#allocation2 + $0x140] sm:$0xff]
      %v1317 = vld [vmem:[#allocation2 + $0x148] sm:$0xff]
      %v1318 = vld [vmem:[#allocation2 + $0x150] sm:$0xff]
      %v1319 = vld [vmem:[#allocation2 + $0x158] sm:$0xff]
      %v1320 = vld [vmem:[#allocation2 + $0x160] sm:$0xff]
      %v1321 = vld [vmem:[#allocation2 + $0x168] sm:$0xff]
      %v1322 = vld [vmem:[#allocation2 + $0x170] sm:$0xff]
      %v1323 = vld [vmem:[#allocation2 + $0x178] sm:$0xff]
      %v1324 = vld [vmem:[#allocation2 + $0x180] sm:$0xff]
      %v1325 = vld [vmem:[#allocation2 + $0x188] sm:$0xff]
      %v1326 = vld [vmem:[#allocation2 + $0x190] sm:$0xff]
      %v1327 = vld [vmem:[#allocation2 + $0x198] sm:$0xff]
      %v1328 = vld [vmem:[#allocation2 + $0x1a0] sm:$0xff]
      %v1329 = vld [vmem:[#allocation2 + $0x1a8] sm:$0xff]
      %v1330 = vld [vmem:[#allocation2 + $0x1b0] sm:$0xff]
      %v1331 = vld [vmem:[#allocation2 + $0x1b8] sm:$0xff]
      %v1332 = vld [vmem:[#allocation2 + $0x1c0] sm:$0xff]
      %v1333 = vld [vmem:[#allocation2 + $0x1c8] sm:$0xff]
      %v1334 = vld [vmem:[#allocation2 + $0x1d0] sm:$0xff]
      %v1335 = vld [vmem:[#allocation2 + $0x1d8] sm:$0xff]
      %v1336 = vld [vmem:[#allocation2 + $0x1e0] sm:$0xff]
      %v1337 = vld [vmem:[#allocation2 + $0x1e8] sm:$0xff]
      %v1338 = vld [vmem:[#allocation2 + $0x1f0] sm:$0xff]
      %v1339 = vld [vmem:[#allocation2 + $0x1f8] sm:$0xff]
      %v1340 = vadd.f32 %v1276, %v1117
      %v1341 = vadd.f32 %v1277, %v1119
      %v1342 = vadd.f32 %v1278, %v1122
      %v1343 = vadd.f32 %v1279, %v1124
      %v1344 = vadd.f32 %v1280, %v1127
      %v1345 = vadd.f32 %v1281, %v1129
      %v1346 = vadd.f32 %v1282, %v1132
      %v1347 = vadd.f32 %v1283, %v1134
      %v1348 = vadd.f32 %v1284, %v1137
      %v1349 = vadd.f32 %v1285, %v1139
      %v1350 = vadd.f32 %v1286, %v1142
      %v1351 = vadd.f32 %v1287, %v1144
      %v1352 = vadd.f32 %v1288, %v1147
      %v1353 = vadd.f32 %v1289, %v1149
      %v1354 = vadd.f32 %v1290, %v1152
      %v1355 = vadd.f32 %v1291, %v1154
      %v1356 = vadd.f32 %v1292, %v1157
      %v1357 = vadd.f32 %v1293, %v1159
      %v1358 = vadd.f32 %v1294, %v1162
      %v1359 = vadd.f32 %v1295, %v1164
      %v1360 = vadd.f32 %v1296, %v1167
      %v1361 = vadd.f32 %v1297, %v1169
      %v1362 = vadd.f32 %v1298, %v1172
      %v1363 = vadd.f32 %v1299, %v1174
      %v1364 = vadd.f32 %v1300, %v1177
      %v1365 = vadd.f32 %v1301, %v1179
      %v1366 = vadd.f32 %v1302, %v1182
      %v1367 = vadd.f32 %v1303, %v1184
      %v1368 = vadd.f32 %v1304, %v1187
      %v1369 = vadd.f32 %v1305, %v1189
      %v1370 = vadd.f32 %v1306, %v1192
      %v1371 = vadd.f32 %v1307, %v1194
      %v1372 = vadd.f32 %v1308, %v1197
      %v1373 = vadd.f32 %v1309, %v1199
      %v1374 = vadd.f32 %v1310, %v1202
      %v1375 = vadd.f32 %v1311, %v1204
      %v1376 = vadd.f32 %v1312, %v1207
      %v1377 = vadd.f32 %v1313, %v1209
      %v1378 = vadd.f32 %v1314, %v1212
      %v1379 = vadd.f32 %v1315, %v1214
      %v1380 = vadd.f32 %v1316, %v1217
      %v1381 = vadd.f32 %v1317, %v1219
      %v1382 = vadd.f32 %v1318, %v1222
      %v1383 = vadd.f32 %v1319, %v1224
      %v1384 = vadd.f32 %v1320, %v1227
      %v1385 = vadd.f32 %v1321, %v1229
      %v1386 = vadd.f32 %v1322, %v1232
      %v1387 = vadd.f32 %v1323, %v1234
      %v1388 = vadd.f32 %v1324, %v1237
      %v1389 = vadd.f32 %v1325, %v1239
      %v1390 = vadd.f32 %v1326, %v1242
      %v1391 = vadd.f32 %v1327, %v1244
      %v1392 = vadd.f32 %v1328, %v1247
      %v1393 = vadd.f32 %v1329, %v1249
      %v1394 = vadd.f32 %v1330, %v1252
      %v1395 = vadd.f32 %v1331, %v1254
      %v1396 = vadd.f32 %v1332, %v1257
      %v1397 = vadd.f32 %v1333, %v1259
      %v1398 = vadd.f32 %v1334, %v1262
      %v1399 = vadd.f32 %v1335, %v1264
      %v1400 = vadd.f32 %v1336, %v1267
      %v1401 = vadd.f32 %v1337, %v1269
      %v1402 = vadd.f32 %v1338, %v1272
      %v1403 = vadd.f32 %v1339, %v1274
      %1404 = vst [vmem:[#allocation2] sm:$0xff] %v1340
      %1405 = vst [vmem:[#allocation2 + $0x8] sm:$0xff] %v1341
      %1406 = vst [vmem:[#allocation2 + $0x10] sm:$0xff] %v1342
      %1407 = vst [vmem:[#allocation2 + $0x18] sm:$0xff] %v1343
      %1408 = vst [vmem:[#allocation2 + $0x20] sm:$0xff] %v1344
      %1409 = vst [vmem:[#allocation2 + $0x28] sm:$0xff] %v1345
      %1410 = vst [vmem:[#allocation2 + $0x30] sm:$0xff] %v1346
      %1411 = vst [vmem:[#allocation2 + $0x38] sm:$0xff] %v1347
      %1412 = vst [vmem:[#allocation2 + $0x40] sm:$0xff] %v1348
      %1413 = vst [vmem:[#allocation2 + $0x48] sm:$0xff] %v1349
      %1414 = vst [vmem:[#allocation2 + $0x50] sm:$0xff] %v1350
      %1415 = vst [vmem:[#allocation2 + $0x58] sm:$0xff] %v1351
      %1416 = vst [vmem:[#allocation2 + $0x60] sm:$0xff] %v1352
      %1417 = vst [vmem:[#allocation2 + $0x68] sm:$0xff] %v1353
      %1418 = vst [vmem:[#allocation2 + $0x70] sm:$0xff] %v1354
      %1419 = vst [vmem:[#allocation2 + $0x78] sm:$0xff] %v1355
      %1420 = vst [vmem:[#allocation2 + $0x80] sm:$0xff] %v1356
      %1421 = vst [vmem:[#allocation2 + $0x88] sm:$0xff] %v1357
      %1422 = vst [vmem:[#allocation2 + $0x90] sm:$0xff] %v1358
      %1423 = vst [vmem:[#allocation2 + $0x98] sm:$0xff] %v1359
      %1424 = vst [vmem:[#allocation2 + $0xa0] sm:$0xff] %v1360
      %1425 = vst [vmem:[#allocation2 + $0xa8] sm:$0xff] %v1361
      %1426 = vst [vmem:[#allocation2 + $0xb0] sm:$0xff] %v1362
      %1427 = vst [vmem:[#allocation2 + $0xb8] sm:$0xff] %v1363
      %1428 = vst [vmem:[#allocation2 + $0xc0] sm:$0xff] %v1364
      %1429 = vst [vmem:[#allocation2 + $0xc8] sm:$0xff] %v1365
      %1430 = vst [vmem:[#allocation2 + $0xd0] sm:$0xff] %v1366
      %1431 = vst [vmem:[#allocation2 + $0xd8] sm:$0xff] %v1367
      %1432 = vst [vmem:[#allocation2 + $0xe0] sm:$0xff] %v1368
      %1433 = vst [vmem:[#allocation2 + $0xe8] sm:$0xff] %v1369
      %1434 = vst [vmem:[#allocation2 + $0xf0] sm:$0xff] %v1370
      %1435 = vst [vmem:[#allocation2 + $0xf8] sm:$0xff] %v1371
      %1436 = vst [vmem:[#allocation2 + $0x100] sm:$0xff] %v1372
      %1437 = vst [vmem:[#allocation2 + $0x108] sm:$0xff] %v1373
      %1438 = vst [vmem:[#allocation2 + $0x110] sm:$0xff] %v1374
      %1439 = vst [vmem:[#allocation2 + $0x118] sm:$0xff] %v1375
      %1440 = vst [vmem:[#allocation2 + $0x120] sm:$0xff] %v1376
      %1441 = vst [vmem:[#allocation2 + $0x128] sm:$0xff] %v1377
      %1442 = vst [vmem:[#allocation2 + $0x130] sm:$0xff] %v1378
      %1443 = vst [vmem:[#allocation2 + $0x138] sm:$0xff] %v1379
      %1444 = vst [vmem:[#allocation2 + $0x140] sm:$0xff] %v1380
      %1445 = vst [vmem:[#allocation2 + $0x148] sm:$0xff] %v1381
      %1446 = vst [vmem:[#allocation2 + $0x150] sm:$0xff] %v1382
      %1447 = vst [vmem:[#allocation2 + $0x158] sm:$0xff] %v1383
      %1448 = vst [vmem:[#allocation2 + $0x160] sm:$0xff] %v1384
      %1449 = vst [vmem:[#allocation2 + $0x168] sm:$0xff] %v1385
      %1450 = vst [vmem:[#allocation2 + $0x170] sm:$0xff] %v1386
      %1451 = vst [vmem:[#allocation2 + $0x178] sm:$0xff] %v1387
      %1452 = vst [vmem:[#allocation2 + $0x180] sm:$0xff] %v1388
      %1453 = vst [vmem:[#allocation2 + $0x188] sm:$0xff] %v1389
      %1454 = vst [vmem:[#allocation2 + $0x190] sm:$0xff] %v1390
      %1455 = vst [vmem:[#allocation2 + $0x198] sm:$0xff] %v1391
      %1456 = vst [vmem:[#allocation2 + $0x1a0] sm:$0xff] %v1392
      %1457 = vst [vmem:[#allocation2 + $0x1a8] sm:$0xff] %v1393
      %1458 = vst [vmem:[#allocation2 + $0x1b0] sm:$0xff] %v1394
      %1459 = vst [vmem:[#allocation2 + $0x1b8] sm:$0xff] %v1395
      %1460 = vst [vmem:[#allocation2 + $0x1c0] sm:$0xff] %v1396
      %1461 = vst [vmem:[#allocation2 + $0x1c8] sm:$0xff] %v1397
      %1462 = vst [vmem:[#allocation2 + $0x1d0] sm:$0xff] %v1398
      %1463 = vst [vmem:[#allocation2 + $0x1d8] sm:$0xff] %v1399
      %1464 = vst [vmem:[#allocation2 + $0x1e0] sm:$0xff] %v1400
      %1465 = vst [vmem:[#allocation2 + $0x1e8] sm:$0xff] %v1401
      %1466 = vst [vmem:[#allocation2 + $0x1f0] sm:$0xff] %v1402
      %1467 = vst [vmem:[#allocation2 + $0x1f8] sm:$0xff] %v1403
      %s1468 = scalar_lea.vmem %s192, 32
      %v1469 = vld [vmem:[%s1468] sm:$0xf]
      %v1470 = vld [vmem:[%s1468 + $0x4] sm:$0xf]
      %v1471 = vld [vmem:[%s1468 + $0x8] sm:$0xf]
      %v1472 = vld [vmem:[%s1468 + $0xc] sm:$0xf]
      %v1473 = vld [vmem:[%s1468 + $0x10] sm:$0xf]
      %v1474 = vld [vmem:[%s1468 + $0x14] sm:$0xf]
      %v1475 = vld [vmem:[%s1468 + $0x18] sm:$0xf]
      %v1476 = vld [vmem:[%s1468 + $0x1c] sm:$0xf]
      %v1477 = vld [vmem:[%s1468 + $0x20] sm:$0xf]
      %v1478 = vld [vmem:[%s1468 + $0x24] sm:$0xf]
      %v1479 = vld [vmem:[%s1468 + $0x28] sm:$0xf]
      %v1480 = vld [vmem:[%s1468 + $0x2c] sm:$0xf]
      %v1481 = vld [vmem:[%s1468 + $0x30] sm:$0xf]
      %v1482 = vld [vmem:[%s1468 + $0x34] sm:$0xf]
      %v1483 = vld [vmem:[%s1468 + $0x38] sm:$0xf]
      %v1484 = vld [vmem:[%s1468 + $0x3c] sm:$0xf]
      %v1485 = vld [vmem:[%s1468 + $0x40] sm:$0xf]
      %v1486 = vld [vmem:[%s1468 + $0x44] sm:$0xf]
      %v1487 = vld [vmem:[%s1468 + $0x48] sm:$0xf]
      %v1488 = vld [vmem:[%s1468 + $0x4c] sm:$0xf]
      %v1489 = vld [vmem:[%s1468 + $0x50] sm:$0xf]
      %v1490 = vld [vmem:[%s1468 + $0x54] sm:$0xf]
      %v1491 = vld [vmem:[%s1468 + $0x58] sm:$0xf]
      %v1492 = vld [vmem:[%s1468 + $0x5c] sm:$0xf]
      %v1493 = vld [vmem:[%s1468 + $0x60] sm:$0xf]
      %v1494 = vld [vmem:[%s1468 + $0x64] sm:$0xf]
      %v1495 = vld [vmem:[%s1468 + $0x68] sm:$0xf]
      %v1496 = vld [vmem:[%s1468 + $0x6c] sm:$0xf]
      %v1497 = vld [vmem:[%s1468 + $0x70] sm:$0xf]
      %v1498 = vld [vmem:[%s1468 + $0x74] sm:$0xf]
      %v1499 = vld [vmem:[%s1468 + $0x78] sm:$0xf]
      %v1500 = vld [vmem:[%s1468 + $0x7c] sm:$0xf]
      %v1501 = vld [vmem:[%s1468 + $0x80] sm:$0xf]
      %v1502 = vld [vmem:[%s1468 + $0x84] sm:$0xf]
      %v1503 = vld [vmem:[%s1468 + $0x88] sm:$0xf]
      %v1504 = vld [vmem:[%s1468 + $0x8c] sm:$0xf]
      %v1505 = vld [vmem:[%s1468 + $0x90] sm:$0xf]
      %v1506 = vld [vmem:[%s1468 + $0x94] sm:$0xf]
      %v1507 = vld [vmem:[%s1468 + $0x98] sm:$0xf]
      %v1508 = vld [vmem:[%s1468 + $0x9c] sm:$0xf]
      %v1509 = vld [vmem:[%s1468 + $0xa0] sm:$0xf]
      %v1510 = vld [vmem:[%s1468 + $0xa4] sm:$0xf]
      %v1511 = vld [vmem:[%s1468 + $0xa8] sm:$0xf]
      %v1512 = vld [vmem:[%s1468 + $0xac] sm:$0xf]
      %v1513 = vld [vmem:[%s1468 + $0xb0] sm:$0xf]
      %v1514 = vld [vmem:[%s1468 + $0xb4] sm:$0xf]
      %v1515 = vld [vmem:[%s1468 + $0xb8] sm:$0xf]
      %v1516 = vld [vmem:[%s1468 + $0xbc] sm:$0xf]
      %v1517 = vld [vmem:[%s1468 + $0xc0] sm:$0xf]
      %v1518 = vld [vmem:[%s1468 + $0xc4] sm:$0xf]
      %v1519 = vld [vmem:[%s1468 + $0xc8] sm:$0xf]
      %v1520 = vld [vmem:[%s1468 + $0xcc] sm:$0xf]
      %v1521 = vld [vmem:[%s1468 + $0xd0] sm:$0xf]
      %v1522 = vld [vmem:[%s1468 + $0xd4] sm:$0xf]
      %v1523 = vld [vmem:[%s1468 + $0xd8] sm:$0xf]
      %v1524 = vld [vmem:[%s1468 + $0xdc] sm:$0xf]
      %v1525 = vld [vmem:[%s1468 + $0xe0] sm:$0xf]
      %v1526 = vld [vmem:[%s1468 + $0xe4] sm:$0xf]
      %v1527 = vld [vmem:[%s1468 + $0xe8] sm:$0xf]
      %v1528 = vld [vmem:[%s1468 + $0xec] sm:$0xf]
      %v1529 = vld [vmem:[%s1468 + $0xf0] sm:$0xf]
      %v1530 = vld [vmem:[%s1468 + $0xf4] sm:$0xf]
      %v1531 = vld [vmem:[%s1468 + $0xf8] sm:$0xf]
      %v1532 = vld [vmem:[%s1468 + $0xfc] sm:$0xf]
      %s1533 = scalar_lea.vmem %s1, 24
      %v1534 = vld [vmem:[%s1533] sm:$0xf]
      %v1535 = vld [vmem:[%s1533 + $0x4] sm:$0xf]
      %v1536 = vld [vmem:[%s1533 + $0x8] sm:$0xf]
      %v1601 = vunpack.c.l.b16 %v1469
      %v1602 = vunpack.c.l.b16 %v1470
      %v1603 = vunpack.c.l.b16 %v1471
      %v1604 = vunpack.c.l.b16 %v1472
      %v1605 = vunpack.c.l.b16 %v1473
      %v1606 = vunpack.c.l.b16 %v1474
      %v1607 = vunpack.c.l.b16 %v1475
      %v1608 = vunpack.c.l.b16 %v1476
      %v1609 = vunpack.c.l.b16 %v1477
      %v1610 = vunpack.c.l.b16 %v1478
      %v1611 = vunpack.c.l.b16 %v1479
      %v1612 = vunpack.c.l.b16 %v1480
      %v1613 = vunpack.c.l.b16 %v1481
      %v1614 = vunpack.c.l.b16 %v1482
      %v1615 = vunpack.c.l.b16 %v1483
      %v1616 = vunpack.c.l.b16 %v1484
      %v1617 = vunpack.c.l.b16 %v1485
      %v1618 = vunpack.c.l.b16 %v1486
      %v1619 = vunpack.c.l.b16 %v1487
      %v1620 = vunpack.c.l.b16 %v1488
      %v1621 = vunpack.c.l.b16 %v1489
      %v1622 = vunpack.c.l.b16 %v1490
      %v1623 = vunpack.c.l.b16 %v1491
      %v1624 = vunpack.c.l.b16 %v1492
      %v1625 = vunpack.c.l.b16 %v1493
      %v1626 = vunpack.c.l.b16 %v1494
      %v1627 = vunpack.c.l.b16 %v1495
      %v1628 = vunpack.c.l.b16 %v1496
      %v1629 = vunpack.c.l.b16 %v1497
      %v1630 = vunpack.c.l.b16 %v1498
      %v1631 = vunpack.c.l.b16 %v1499
      %v1632 = vunpack.c.l.b16 %v1500
      %v1633 = vunpack.c.l.b16 %v1501
      %v1634 = vunpack.c.l.b16 %v1502
      %v1635 = vunpack.c.l.b16 %v1503
      %v1636 = vunpack.c.l.b16 %v1504
      %v1637 = vunpack.c.l.b16 %v1505
      %v1638 = vunpack.c.l.b16 %v1506
      %v1639 = vunpack.c.l.b16 %v1507
      %v1640 = vunpack.c.l.b16 %v1508
      %v1641 = vunpack.c.l.b16 %v1509
      %v1642 = vunpack.c.l.b16 %v1510
      %v1643 = vunpack.c.l.b16 %v1511
      %v1644 = vunpack.c.l.b16 %v1512
      %v1645 = vunpack.c.l.b16 %v1513
      %v1646 = vunpack.c.l.b16 %v1514
      %v1647 = vunpack.c.l.b16 %v1515
      %v1648 = vunpack.c.l.b16 %v1516
      %v1649 = vunpack.c.l.b16 %v1517
      %v1650 = vunpack.c.l.b16 %v1518
      %v1651 = vunpack.c.l.b16 %v1519
      %v1652 = vunpack.c.l.b16 %v1520
      %v1653 = vunpack.c.l.b16 %v1521
      %v1654 = vunpack.c.l.b16 %v1522
      %v1655 = vunpack.c.l.b16 %v1523
      %v1656 = vunpack.c.l.b16 %v1524
      %v1657 = vunpack.c.l.b16 %v1525
      %v1658 = vunpack.c.l.b16 %v1526
      %v1659 = vunpack.c.l.b16 %v1527
      %v1660 = vunpack.c.l.b16 %v1528
      %v1661 = vunpack.c.l.b16 %v1529
      %v1662 = vunpack.c.l.b16 %v1530
      %v1663 = vunpack.c.l.b16 %v1531
      %v1664 = vunpack.c.l.b16 %v1532
      %v1665 = vpack.c.b16 %v1602, %v1601
      %v1666 = vpack.c.b16 %v1604, %v1603
      %v1667 = vpack.c.b16 %v1606, %v1605
      %v1668 = vpack.c.b16 %v1608, %v1607
      %v1669 = vpack.c.b16 %v1610, %v1609
      %v1670 = vpack.c.b16 %v1612, %v1611
      %v1671 = vpack.c.b16 %v1614, %v1613
      %v1672 = vpack.c.b16 %v1616, %v1615
      %v1673 = vpack.c.b16 %v1618, %v1617
      %v1674 = vpack.c.b16 %v1620, %v1619
      %v1675 = vpack.c.b16 %v1622, %v1621
      %v1676 = vpack.c.b16 %v1624, %v1623
      %v1677 = vpack.c.b16 %v1626, %v1625
      %v1678 = vpack.c.b16 %v1628, %v1627
      %v1679 = vpack.c.b16 %v1630, %v1629
      %v1680 = vpack.c.b16 %v1632, %v1631
      %v1681 = vpack.c.b16 %v1634, %v1633
      %v1682 = vpack.c.b16 %v1636, %v1635
      %v1683 = vpack.c.b16 %v1638, %v1637
      %v1684 = vpack.c.b16 %v1640, %v1639
      %v1685 = vpack.c.b16 %v1642, %v1641
      %v1686 = vpack.c.b16 %v1644, %v1643
      %v1687 = vpack.c.b16 %v1646, %v1645
      %v1688 = vpack.c.b16 %v1648, %v1647
      %v1689 = vpack.c.b16 %v1650, %v1649
      %v1690 = vpack.c.b16 %v1652, %v1651
      %v1691 = vpack.c.b16 %v1654, %v1653
      %v1692 = vpack.c.b16 %v1656, %v1655
      %v1693 = vpack.c.b16 %v1658, %v1657
      %v1694 = vpack.c.b16 %v1660, %v1659
      %v1695 = vpack.c.b16 %v1662, %v1661
      %v1696 = vpack.c.b16 %v1664, %v1663
      %v1700 = vunpack.c.l.b16 %v1534
      %v1701 = vunpack.c.l.b16 %v1535
      %v1702 = vunpack.c.l.b16 %v1536
      %v1703 = vpack.c.b16 %v1701, %v1700
      %v1704 = vpack.c.b16 %v1702, %v1702
      %v1707 = vsel %vm436, %v1665, 0
      %v1710 = vsel %vm436, %v1666, 0
      %v1713 = vsel %vm436, %v1667, 0
      %v1716 = vsel %vm436, %v1668, 0
      %v1719 = vsel %vm436, %v1669, 0
      %v1722 = vsel %vm436, %v1670, 0
      %v1725 = vsel %vm436, %v1671, 0
      %v1728 = vsel %vm436, %v1672, 0
      %v1731 = vsel %vm436, %v1673, 0
      %v1734 = vsel %vm436, %v1674, 0
      %v1737 = vsel %vm436, %v1675, 0
      %v1740 = vsel %vm436, %v1676, 0
      %v1743 = vsel %vm436, %v1677, 0
      %v1746 = vsel %vm436, %v1678, 0
      %v1749 = vsel %vm436, %v1679, 0
      %v1752 = vsel %vm436, %v1680, 0
      %v1755 = vsel %vm436, %v1681, 0
      %v1758 = vsel %vm436, %v1682, 0
      %v1761 = vsel %vm436, %v1683, 0
      %v1764 = vsel %vm436, %v1684, 0
      %v1767 = vsel %vm436, %v1685, 0
      %v1770 = vsel %vm436, %v1686, 0
      %v1773 = vsel %vm436, %v1687, 0
      %v1776 = vsel %vm436, %v1688, 0
      %v1779 = vsel %vm436, %v1689, 0
      %v1782 = vsel %vm436, %v1690, 0
      %v1785 = vsel %vm436, %v1691, 0
      %v1788 = vsel %vm436, %v1692, 0
      %v1791 = vsel %vm436, %v1693, 0
      %v1794 = vsel %vm436, %v1694, 0
      %v1797 = vsel %vm436, %v1695, 0
      %v1800 = vsel %vm436, %v1696, 0
      %v1803 = vsel %vm533, %v1704, 0
      %1805 = vmatpush.bf16.msra.mxu0 0
      %1806 = vmatpush.bf16.msra.mxu0 0
      %1807 = vmatpush.bf16.msra.mxu0 0
      %1808 = vmatpush.bf16.msra.mxu0 0
      %1809 = vmatpush.bf16.msra.mxu0 0
      %1810 = vmatpush.bf16.msra.mxu0 0
      %1811 = vmatpush.bf16.msra.mxu0 %v1803
      %1812 = vmatpush.bf16.msra.mxu0 %v1703
      %1813 = vmatmul.bf16.gmra.mxu0 %v1707
      %v1814 = vpop.f32.mrf.mxu0
      %v1815 = vadd.f32 0.0, %v1814
      %v1816 = vpop.f32.mrf.mxu0
      %v1817 = vadd.f32 0.0, %v1816
      %1818 = vmatmul.bf16.gmra.mxu0 %v1710
      %v1819 = vpop.f32.mrf.mxu0
      %v1820 = vadd.f32 0.0, %v1819
      %v1821 = vpop.f32.mrf.mxu0
      %v1822 = vadd.f32 0.0, %v1821
      %1823 = vmatmul.bf16.gmra.mxu0 %v1713
      %v1824 = vpop.f32.mrf.mxu0
      %v1825 = vadd.f32 0.0, %v1824
      %v1826 = vpop.f32.mrf.mxu0
      %v1827 = vadd.f32 0.0, %v1826
      %1828 = vmatmul.bf16.gmra.mxu0 %v1716
      %v1829 = vpop.f32.mrf.mxu0
      %v1830 = vadd.f32 0.0, %v1829
      %v1831 = vpop.f32.mrf.mxu0
      %v1832 = vadd.f32 0.0, %v1831
      %1833 = vmatmul.bf16.gmra.mxu0 %v1719
      %v1834 = vpop.f32.mrf.mxu0
      %v1835 = vadd.f32 0.0, %v1834
      %v1836 = vpop.f32.mrf.mxu0
      %v1837 = vadd.f32 0.0, %v1836
      %1838 = vmatmul.bf16.gmra.mxu0 %v1722
      %v1839 = vpop.f32.mrf.mxu0
      %v1840 = vadd.f32 0.0, %v1839
      %v1841 = vpop.f32.mrf.mxu0
      %v1842 = vadd.f32 0.0, %v1841
      %1843 = vmatmul.bf16.gmra.mxu0 %v1725
      %v1844 = vpop.f32.mrf.mxu0
      %v1845 = vadd.f32 0.0, %v1844
      %v1846 = vpop.f32.mrf.mxu0
      %v1847 = vadd.f32 0.0, %v1846
      %1848 = vmatmul.bf16.gmra.mxu0 %v1728
      %v1849 = vpop.f32.mrf.mxu0
      %v1850 = vadd.f32 0.0, %v1849
      %v1851 = vpop.f32.mrf.mxu0
      %v1852 = vadd.f32 0.0, %v1851
      %1853 = vmatmul.bf16.gmra.mxu0 %v1731
      %v1854 = vpop.f32.mrf.mxu0
      %v1855 = vadd.f32 0.0, %v1854
      %v1856 = vpop.f32.mrf.mxu0
      %v1857 = vadd.f32 0.0, %v1856
      %1858 = vmatmul.bf16.gmra.mxu0 %v1734
      %v1859 = vpop.f32.mrf.mxu0
      %v1860 = vadd.f32 0.0, %v1859
      %v1861 = vpop.f32.mrf.mxu0
      %v1862 = vadd.f32 0.0, %v1861
      %1863 = vmatmul.bf16.gmra.mxu0 %v1737
      %v1864 = vpop.f32.mrf.mxu0
      %v1865 = vadd.f32 0.0, %v1864
      %v1866 = vpop.f32.mrf.mxu0
      %v1867 = vadd.f32 0.0, %v1866
      %1868 = vmatmul.bf16.gmra.mxu0 %v1740
      %v1869 = vpop.f32.mrf.mxu0
      %v1870 = vadd.f32 0.0, %v1869
      %v1871 = vpop.f32.mrf.mxu0
      %v1872 = vadd.f32 0.0, %v1871
      %1873 = vmatmul.bf16.gmra.mxu0 %v1743
      %v1874 = vpop.f32.mrf.mxu0
      %v1875 = vadd.f32 0.0, %v1874
      %v1876 = vpop.f32.mrf.mxu0
      %v1877 = vadd.f32 0.0, %v1876
      %1878 = vmatmul.bf16.gmra.mxu0 %v1746
      %v1879 = vpop.f32.mrf.mxu0
      %v1880 = vadd.f32 0.0, %v1879
      %v1881 = vpop.f32.mrf.mxu0
      %v1882 = vadd.f32 0.0, %v1881
      %1883 = vmatmul.bf16.gmra.mxu0 %v1749
      %v1884 = vpop.f32.mrf.mxu0
      %v1885 = vadd.f32 0.0, %v1884
      %v1886 = vpop.f32.mrf.mxu0
      %v1887 = vadd.f32 0.0, %v1886
      %1888 = vmatmul.bf16.gmra.mxu0 %v1752
      %v1889 = vpop.f32.mrf.mxu0
      %v1890 = vadd.f32 0.0, %v1889
      %v1891 = vpop.f32.mrf.mxu0
      %v1892 = vadd.f32 0.0, %v1891
      %1893 = vmatmul.bf16.gmra.mxu0 %v1755
      %v1894 = vpop.f32.mrf.mxu0
      %v1895 = vadd.f32 0.0, %v1894
      %v1896 = vpop.f32.mrf.mxu0
      %v1897 = vadd.f32 0.0, %v1896
      %1898 = vmatmul.bf16.gmra.mxu0 %v1758
      %v1899 = vpop.f32.mrf.mxu0
      %v1900 = vadd.f32 0.0, %v1899
      %v1901 = vpop.f32.mrf.mxu0
      %v1902 = vadd.f32 0.0, %v1901
      %1903 = vmatmul.bf16.gmra.mxu0 %v1761
      %v1904 = vpop.f32.mrf.mxu0
      %v1905 = vadd.f32 0.0, %v1904
      %v1906 = vpop.f32.mrf.mxu0
      %v1907 = vadd.f32 0.0, %v1906
      %1908 = vmatmul.bf16.gmra.mxu0 %v1764
      %v1909 = vpop.f32.mrf.mxu0
      %v1910 = vadd.f32 0.0, %v1909
      %v1911 = vpop.f32.mrf.mxu0
      %v1912 = vadd.f32 0.0, %v1911
      %1913 = vmatmul.bf16.gmra.mxu0 %v1767
      %v1914 = vpop.f32.mrf.mxu0
      %v1915 = vadd.f32 0.0, %v1914
      %v1916 = vpop.f32.mrf.mxu0
      %v1917 = vadd.f32 0.0, %v1916
      %1918 = vmatmul.bf16.gmra.mxu0 %v1770
      %v1919 = vpop.f32.mrf.mxu0
      %v1920 = vadd.f32 0.0, %v1919
      %v1921 = vpop.f32.mrf.mxu0
      %v1922 = vadd.f32 0.0, %v1921
      %1923 = vmatmul.bf16.gmra.mxu0 %v1773
      %v1924 = vpop.f32.mrf.mxu0
      %v1925 = vadd.f32 0.0, %v1924
      %v1926 = vpop.f32.mrf.mxu0
      %v1927 = vadd.f32 0.0, %v1926
      %1928 = vmatmul.bf16.gmra.mxu0 %v1776
      %v1929 = vpop.f32.mrf.mxu0
      %v1930 = vadd.f32 0.0, %v1929
      %v1931 = vpop.f32.mrf.mxu0
      %v1932 = vadd.f32 0.0, %v1931
      %1933 = vmatmul.bf16.gmra.mxu0 %v1779
      %v1934 = vpop.f32.mrf.mxu0
      %v1935 = vadd.f32 0.0, %v1934
      %v1936 = vpop.f32.mrf.mxu0
      %v1937 = vadd.f32 0.0, %v1936
      %1938 = vmatmul.bf16.gmra.mxu0 %v1782
      %v1939 = vpop.f32.mrf.mxu0
      %v1940 = vadd.f32 0.0, %v1939
      %v1941 = vpop.f32.mrf.mxu0
      %v1942 = vadd.f32 0.0, %v1941
      %1943 = vmatmul.bf16.gmra.mxu0 %v1785
      %v1944 = vpop.f32.mrf.mxu0
      %v1945 = vadd.f32 0.0, %v1944
      %v1946 = vpop.f32.mrf.mxu0
      %v1947 = vadd.f32 0.0, %v1946
      %1948 = vmatmul.bf16.gmra.mxu0 %v1788
      %v1949 = vpop.f32.mrf.mxu0
      %v1950 = vadd.f32 0.0, %v1949
      %v1951 = vpop.f32.mrf.mxu0
      %v1952 = vadd.f32 0.0, %v1951
      %1953 = vmatmul.bf16.gmra.mxu0 %v1791
      %v1954 = vpop.f32.mrf.mxu0
      %v1955 = vadd.f32 0.0, %v1954
      %v1956 = vpop.f32.mrf.mxu0
      %v1957 = vadd.f32 0.0, %v1956
      %1958 = vmatmul.bf16.gmra.mxu0 %v1794
      %v1959 = vpop.f32.mrf.mxu0
      %v1960 = vadd.f32 0.0, %v1959
      %v1961 = vpop.f32.mrf.mxu0
      %v1962 = vadd.f32 0.0, %v1961
      %1963 = vmatmul.bf16.gmra.mxu0 %v1797
      %v1964 = vpop.f32.mrf.mxu0
      %v1965 = vadd.f32 0.0, %v1964
      %v1966 = vpop.f32.mrf.mxu0
      %v1967 = vadd.f32 0.0, %v1966
      %1968 = vmatmul.bf16.gmra.mxu0 %v1800
      %v1969 = vpop.f32.mrf.mxu0
      %v1970 = vadd.f32 0.0, %v1969
      %v1971 = vpop.f32.mrf.mxu0
      %v1972 = vadd.f32 0.0, %v1971
      %1973 = vdwg.mxu0
      %v1974 = vld [vmem:[#allocation2] sm:$0xff]
      %v1975 = vld [vmem:[#allocation2 + $0x8] sm:$0xff]
      %v1976 = vld [vmem:[#allocation2 + $0x10] sm:$0xff]
      %v1977 = vld [vmem:[#allocation2 + $0x18] sm:$0xff]
      %v1978 = vld [vmem:[#allocation2 + $0x20] sm:$0xff]
      %v1979 = vld [vmem:[#allocation2 + $0x28] sm:$0xff]
      %v1980 = vld [vmem:[#allocation2 + $0x30] sm:$0xff]
      %v1981 = vld [vmem:[#allocation2 + $0x38] sm:$0xff]
      %v1982 = vld [vmem:[#allocation2 + $0x40] sm:$0xff]
      %v1983 = vld [vmem:[#allocation2 + $0x48] sm:$0xff]
      %v1984 = vld [vmem:[#allocation2 + $0x50] sm:$0xff]
      %v1985 = vld [vmem:[#allocation2 + $0x58] sm:$0xff]
      %v1986 = vld [vmem:[#allocation2 + $0x60] sm:$0xff]
      %v1987 = vld [vmem:[#allocation2 + $0x68] sm:$0xff]
      %v1988 = vld [vmem:[#allocation2 + $0x70] sm:$0xff]
      %v1989 = vld [vmem:[#allocation2 + $0x78] sm:$0xff]
      %v1990 = vld [vmem:[#allocation2 + $0x80] sm:$0xff]
      %v1991 = vld [vmem:[#allocation2 + $0x88] sm:$0xff]
      %v1992 = vld [vmem:[#allocation2 + $0x90] sm:$0xff]
      %v1993 = vld [vmem:[#allocation2 + $0x98] sm:$0xff]
      %v1994 = vld [vmem:[#allocation2 + $0xa0] sm:$0xff]
      %v1995 = vld [vmem:[#allocation2 + $0xa8] sm:$0xff]
      %v1996 = vld [vmem:[#allocation2 + $0xb0] sm:$0xff]
      %v1997 = vld [vmem:[#allocation2 + $0xb8] sm:$0xff]
      %v1998 = vld [vmem:[#allocation2 + $0xc0] sm:$0xff]
      %v1999 = vld [vmem:[#allocation2 + $0xc8] sm:$0xff]
      %v2000 = vld [vmem:[#allocation2 + $0xd0] sm:$0xff]
      %v2001 = vld [vmem:[#allocation2 + $0xd8] sm:$0xff]
      %v2002 = vld [vmem:[#allocation2 + $0xe0] sm:$0xff]
      %v2003 = vld [vmem:[#allocation2 + $0xe8] sm:$0xff]
      %v2004 = vld [vmem:[#allocation2 + $0xf0] sm:$0xff]
      %v2005 = vld [vmem:[#allocation2 + $0xf8] sm:$0xff]
      %v2006 = vld [vmem:[#allocation2 + $0x100] sm:$0xff]
      %v2007 = vld [vmem:[#allocation2 + $0x108] sm:$0xff]
      %v2008 = vld [vmem:[#allocation2 + $0x110] sm:$0xff]
      %v2009 = vld [vmem:[#allocation2 + $0x118] sm:$0xff]
      %v2010 = vld [vmem:[#allocation2 + $0x120] sm:$0xff]
      %v2011 = vld [vmem:[#allocation2 + $0x128] sm:$0xff]
      %v2012 = vld [vmem:[#allocation2 + $0x130] sm:$0xff]
      %v2013 = vld [vmem:[#allocation2 + $0x138] sm:$0xff]
      %v2014 = vld [vmem:[#allocation2 + $0x140] sm:$0xff]
      %v2015 = vld [vmem:[#allocation2 + $0x148] sm:$0xff]
      %v2016 = vld [vmem:[#allocation2 + $0x150] sm:$0xff]
      %v2017 = vld [vmem:[#allocation2 + $0x158] sm:$0xff]
      %v2018 = vld [vmem:[#allocation2 + $0x160] sm:$0xff]
      %v2019 = vld [vmem:[#allocation2 + $0x168] sm:$0xff]
      %v2020 = vld [vmem:[#allocation2 + $0x170] sm:$0xff]
      %v2021 = vld [vmem:[#allocation2 + $0x178] sm:$0xff]
      %v2022 = vld [vmem:[#allocation2 + $0x180] sm:$0xff]
      %v2023 = vld [vmem:[#allocation2 + $0x188] sm:$0xff]
      %v2024 = vld [vmem:[#allocation2 + $0x190] sm:$0xff]
      %v2025 = vld [vmem:[#allocation2 + $0x198] sm:$0xff]
      %v2026 = vld [vmem:[#allocation2 + $0x1a0] sm:$0xff]
      %v2027 = vld [vmem:[#allocation2 + $0x1a8] sm:$0xff]
      %v2028 = vld [vmem:[#allocation2 + $0x1b0] sm:$0xff]
      %v2029 = vld [vmem:[#allocation2 + $0x1b8] sm:$0xff]
      %v2030 = vld [vmem:[#allocation2 + $0x1c0] sm:$0xff]
      %v2031 = vld [vmem:[#allocation2 + $0x1c8] sm:$0xff]
      %v2032 = vld [vmem:[#allocation2 + $0x1d0] sm:$0xff]
      %v2033 = vld [vmem:[#allocation2 + $0x1d8] sm:$0xff]
      %v2034 = vld [vmem:[#allocation2 + $0x1e0] sm:$0xff]
      %v2035 = vld [vmem:[#allocation2 + $0x1e8] sm:$0xff]
      %v2036 = vld [vmem:[#allocation2 + $0x1f0] sm:$0xff]
      %v2037 = vld [vmem:[#allocation2 + $0x1f8] sm:$0xff]
      %v2038 = vadd.f32 %v1974, %v1815
      %v2039 = vadd.f32 %v1975, %v1817
      %v2040 = vadd.f32 %v1976, %v1820
      %v2041 = vadd.f32 %v1977, %v1822
      %v2042 = vadd.f32 %v1978, %v1825
      %v2043 = vadd.f32 %v1979, %v1827
      %v2044 = vadd.f32 %v1980, %v1830
      %v2045 = vadd.f32 %v1981, %v1832
      %v2046 = vadd.f32 %v1982, %v1835
      %v2047 = vadd.f32 %v1983, %v1837
      %v2048 = vadd.f32 %v1984, %v1840
      %v2049 = vadd.f32 %v1985, %v1842
      %v2050 = vadd.f32 %v1986, %v1845
      %v2051 = vadd.f32 %v1987, %v1847
      %v2052 = vadd.f32 %v1988, %v1850
      %v2053 = vadd.f32 %v1989, %v1852
      %v2054 = vadd.f32 %v1990, %v1855
      %v2055 = vadd.f32 %v1991, %v1857
      %v2056 = vadd.f32 %v1992, %v1860
      %v2057 = vadd.f32 %v1993, %v1862
      %v2058 = vadd.f32 %v1994, %v1865
      %v2059 = vadd.f32 %v1995, %v1867
      %v2060 = vadd.f32 %v1996, %v1870
      %v2061 = vadd.f32 %v1997, %v1872
      %v2062 = vadd.f32 %v1998, %v1875
      %v2063 = vadd.f32 %v1999, %v1877
      %v2064 = vadd.f32 %v2000, %v1880
      %v2065 = vadd.f32 %v2001, %v1882
      %v2066 = vadd.f32 %v2002, %v1885
      %v2067 = vadd.f32 %v2003, %v1887
      %v2068 = vadd.f32 %v2004, %v1890
      %v2069 = vadd.f32 %v2005, %v1892
      %v2070 = vadd.f32 %v2006, %v1895
      %v2071 = vadd.f32 %v2007, %v1897
      %v2072 = vadd.f32 %v2008, %v1900
      %v2073 = vadd.f32 %v2009, %v1902
      %v2074 = vadd.f32 %v2010, %v1905
      %v2075 = vadd.f32 %v2011, %v1907
      %v2076 = vadd.f32 %v2012, %v1910
      %v2077 = vadd.f32 %v2013, %v1912
      %v2078 = vadd.f32 %v2014, %v1915
      %v2079 = vadd.f32 %v2015, %v1917
      %v2080 = vadd.f32 %v2016, %v1920
      %v2081 = vadd.f32 %v2017, %v1922
      %v2082 = vadd.f32 %v2018, %v1925
      %v2083 = vadd.f32 %v2019, %v1927
      %v2084 = vadd.f32 %v2020, %v1930
      %v2085 = vadd.f32 %v2021, %v1932
      %v2086 = vadd.f32 %v2022, %v1935
      %v2087 = vadd.f32 %v2023, %v1937
      %v2088 = vadd.f32 %v2024, %v1940
      %v2089 = vadd.f32 %v2025, %v1942
      %v2090 = vadd.f32 %v2026, %v1945
      %v2091 = vadd.f32 %v2027, %v1947
      %v2092 = vadd.f32 %v2028, %v1950
      %v2093 = vadd.f32 %v2029, %v1952
      %v2094 = vadd.f32 %v2030, %v1955
      %v2095 = vadd.f32 %v2031, %v1957
      %v2096 = vadd.f32 %v2032, %v1960
      %v2097 = vadd.f32 %v2033, %v1962
      %v2098 = vadd.f32 %v2034, %v1965
      %v2099 = vadd.f32 %v2035, %v1967
      %v2100 = vadd.f32 %v2036, %v1970
      %v2101 = vadd.f32 %v2037, %v1972
      %2102 = vst [vmem:[#allocation2] sm:$0xff] %v2038
      %2103 = vst [vmem:[#allocation2 + $0x8] sm:$0xff] %v2039
      %2104 = vst [vmem:[#allocation2 + $0x10] sm:$0xff] %v2040
      %2105 = vst [vmem:[#allocation2 + $0x18] sm:$0xff] %v2041
      %2106 = vst [vmem:[#allocation2 + $0x20] sm:$0xff] %v2042
      %2107 = vst [vmem:[#allocation2 + $0x28] sm:$0xff] %v2043
      %2108 = vst [vmem:[#allocation2 + $0x30] sm:$0xff] %v2044
      %2109 = vst [vmem:[#allocation2 + $0x38] sm:$0xff] %v2045
      %2110 = vst [vmem:[#allocation2 + $0x40] sm:$0xff] %v2046
      %2111 = vst [vmem:[#allocation2 + $0x48] sm:$0xff] %v2047
      %2112 = vst [vmem:[#allocation2 + $0x50] sm:$0xff] %v2048
      %2113 = vst [vmem:[#allocation2 + $0x58] sm:$0xff] %v2049
      %2114 = vst [vmem:[#allocation2 + $0x60] sm:$0xff] %v2050
      %2115 = vst [vmem:[#allocation2 + $0x68] sm:$0xff] %v2051
      %2116 = vst [vmem:[#allocation2 + $0x70] sm:$0xff] %v2052
      %2117 = vst [vmem:[#allocation2 + $0x78] sm:$0xff] %v2053
      %2118 = vst [vmem:[#allocation2 + $0x80] sm:$0xff] %v2054
      %2119 = vst [vmem:[#allocation2 + $0x88] sm:$0xff] %v2055
      %2120 = vst [vmem:[#allocation2 + $0x90] sm:$0xff] %v2056
      %2121 = vst [vmem:[#allocation2 + $0x98] sm:$0xff] %v2057
      %2122 = vst [vmem:[#allocation2 + $0xa0] sm:$0xff] %v2058
      %2123 = vst [vmem:[#allocation2 + $0xa8] sm:$0xff] %v2059
      %2124 = vst [vmem:[#allocation2 + $0xb0] sm:$0xff] %v2060
      %2125 = vst [vmem:[#allocation2 + $0xb8] sm:$0xff] %v2061
      %2126 = vst [vmem:[#allocation2 + $0xc0] sm:$0xff] %v2062
      %2127 = vst [vmem:[#allocation2 + $0xc8] sm:$0xff] %v2063
      %2128 = vst [vmem:[#allocation2 + $0xd0] sm:$0xff] %v2064
      %2129 = vst [vmem:[#allocation2 + $0xd8] sm:$0xff] %v2065
      %2130 = vst [vmem:[#allocation2 + $0xe0] sm:$0xff] %v2066
      %2131 = vst [vmem:[#allocation2 + $0xe8] sm:$0xff] %v2067
      %2132 = vst [vmem:[#allocation2 + $0xf0] sm:$0xff] %v2068
      %2133 = vst [vmem:[#allocation2 + $0xf8] sm:$0xff] %v2069
      %2134 = vst [vmem:[#allocation2 + $0x100] sm:$0xff] %v2070
      %2135 = vst [vmem:[#allocation2 + $0x108] sm:$0xff] %v2071
      %2136 = vst [vmem:[#allocation2 + $0x110] sm:$0xff] %v2072
      %2137 = vst [vmem:[#allocation2 + $0x118] sm:$0xff] %v2073
      %2138 = vst [vmem:[#allocation2 + $0x120] sm:$0xff] %v2074
      %2139 = vst [vmem:[#allocation2 + $0x128] sm:$0xff] %v2075
      %2140 = vst [vmem:[#allocation2 + $0x130] sm:$0xff] %v2076
      %2141 = vst [vmem:[#allocation2 + $0x138] sm:$0xff] %v2077
      %2142 = vst [vmem:[#allocation2 + $0x140] sm:$0xff] %v2078
      %2143 = vst [vmem:[#allocation2 + $0x148] sm:$0xff] %v2079
      %2144 = vst [vmem:[#allocation2 + $0x150] sm:$0xff] %v2080
      %2145 = vst [vmem:[#allocation2 + $0x158] sm:$0xff] %v2081
      %2146 = vst [vmem:[#allocation2 + $0x160] sm:$0xff] %v2082
      %2147 = vst [vmem:[#allocation2 + $0x168] sm:$0xff] %v2083
      %2148 = vst [vmem:[#allocation2 + $0x170] sm:$0xff] %v2084
      %2149 = vst [vmem:[#allocation2 + $0x178] sm:$0xff] %v2085
      %2150 = vst [vmem:[#allocation2 + $0x180] sm:$0xff] %v2086
      %2151 = vst [vmem:[#allocation2 + $0x188] sm:$0xff] %v2087
      %2152 = vst [vmem:[#allocation2 + $0x190] sm:$0xff] %v2088
      %2153 = vst [vmem:[#allocation2 + $0x198] sm:$0xff] %v2089
      %2154 = vst [vmem:[#allocation2 + $0x1a0] sm:$0xff] %v2090
      %2155 = vst [vmem:[#allocation2 + $0x1a8] sm:$0xff] %v2091
      %2156 = vst [vmem:[#allocation2 + $0x1b0] sm:$0xff] %v2092
      %2157 = vst [vmem:[#allocation2 + $0x1b8] sm:$0xff] %v2093
      %2158 = vst [vmem:[#allocation2 + $0x1c0] sm:$0xff] %v2094
      %2159 = vst [vmem:[#allocation2 + $0x1c8] sm:$0xff] %v2095
      %2160 = vst [vmem:[#allocation2 + $0x1d0] sm:$0xff] %v2096
      %2161 = vst [vmem:[#allocation2 + $0x1d8] sm:$0xff] %v2097
      %2162 = vst [vmem:[#allocation2 + $0x1e0] sm:$0xff] %v2098
      %2163 = vst [vmem:[#allocation2 + $0x1e8] sm:$0xff] %v2099
      %2164 = vst [vmem:[#allocation2 + $0x1f0] sm:$0xff] %v2100
      %2165 = vst [vmem:[#allocation2 + $0x1f8] sm:$0xff] %v2101
      %v2166 = vld [vmem:[#allocation2] sm:$0xff]
      %v2167 = vld [vmem:[#allocation2 + $0x8] sm:$0xff]
      %v2168 = vld [vmem:[#allocation2 + $0x10] sm:$0xff]
      %v2169 = vld [vmem:[#allocation2 + $0x18] sm:$0xff]
      %v2170 = vld [vmem:[#allocation2 + $0x20] sm:$0xff]
      %v2171 = vld [vmem:[#allocation2 + $0x28] sm:$0xff]
      %v2172 = vld [vmem:[#allocation2 + $0x30] sm:$0xff]
      %v2173 = vld [vmem:[#allocation2 + $0x38] sm:$0xff]
      %v2174 = vld [vmem:[#allocation2 + $0x40] sm:$0xff]
      %v2175 = vld [vmem:[#allocation2 + $0x48] sm:$0xff]
      %v2176 = vld [vmem:[#allocation2 + $0x50] sm:$0xff]
      %v2177 = vld [vmem:[#allocation2 + $0x58] sm:$0xff]
      %v2178 = vld [vmem:[#allocation2 + $0x60] sm:$0xff]
      %v2179 = vld [vmem:[#allocation2 + $0x68] sm:$0xff]
      %v2180 = vld [vmem:[#allocation2 + $0x70] sm:$0xff]
      %v2181 = vld [vmem:[#allocation2 + $0x78] sm:$0xff]
      %v2182 = vld [vmem:[#allocation2 + $0x80] sm:$0xff]
      %v2183 = vld [vmem:[#allocation2 + $0x88] sm:$0xff]
      %v2184 = vld [vmem:[#allocation2 + $0x90] sm:$0xff]
      %v2185 = vld [vmem:[#allocation2 + $0x98] sm:$0xff]
      %v2186 = vld [vmem:[#allocation2 + $0xa0] sm:$0xff]
      %v2187 = vld [vmem:[#allocation2 + $0xa8] sm:$0xff]
      %v2188 = vld [vmem:[#allocation2 + $0xb0] sm:$0xff]
      %v2189 = vld [vmem:[#allocation2 + $0xb8] sm:$0xff]
      %v2190 = vld [vmem:[#allocation2 + $0xc0] sm:$0xff]
      %v2191 = vld [vmem:[#allocation2 + $0xc8] sm:$0xff]
      %v2192 = vld [vmem:[#allocation2 + $0xd0] sm:$0xff]
      %v2193 = vld [vmem:[#allocation2 + $0xd8] sm:$0xff]
      %v2194 = vld [vmem:[#allocation2 + $0xe0] sm:$0xff]
      %v2195 = vld [vmem:[#allocation2 + $0xe8] sm:$0xff]
      %v2196 = vld [vmem:[#allocation2 + $0xf0] sm:$0xff]
      %v2197 = vld [vmem:[#allocation2 + $0xf8] sm:$0xff]
      %v2198 = vld [vmem:[#allocation2 + $0x100] sm:$0xff]
      %v2199 = vld [vmem:[#allocation2 + $0x108] sm:$0xff]
      %v2200 = vld [vmem:[#allocation2 + $0x110] sm:$0xff]
      %v2201 = vld [vmem:[#allocation2 + $0x118] sm:$0xff]
      %v2202 = vld [vmem:[#allocation2 + $0x120] sm:$0xff]
      %v2203 = vld [vmem:[#allocation2 + $0x128] sm:$0xff]
      %v2204 = vld [vmem:[#allocation2 + $0x130] sm:$0xff]
      %v2205 = vld [vmem:[#allocation2 + $0x138] sm:$0xff]
      %v2206 = vld [vmem:[#allocation2 + $0x140] sm:$0xff]
      %v2207 = vld [vmem:[#allocation2 + $0x148] sm:$0xff]
      %v2208 = vld [vmem:[#allocation2 + $0x150] sm:$0xff]
      %v2209 = vld [vmem:[#allocation2 + $0x158] sm:$0xff]
      %v2210 = vld [vmem:[#allocation2 + $0x160] sm:$0xff]
      %v2211 = vld [vmem:[#allocation2 + $0x168] sm:$0xff]
      %v2212 = vld [vmem:[#allocation2 + $0x170] sm:$0xff]
      %v2213 = vld [vmem:[#allocation2 + $0x178] sm:$0xff]
      %v2214 = vld [vmem:[#allocation2 + $0x180] sm:$0xff]
      %v2215 = vld [vmem:[#allocation2 + $0x188] sm:$0xff]
      %v2216 = vld [vmem:[#allocation2 + $0x190] sm:$0xff]
      %v2217 = vld [vmem:[#allocation2 + $0x198] sm:$0xff]
      %v2218 = vld [vmem:[#allocation2 + $0x1a0] sm:$0xff]
      %v2219 = vld [vmem:[#allocation2 + $0x1a8] sm:$0xff]
      %v2220 = vld [vmem:[#allocation2 + $0x1b0] sm:$0xff]
      %v2221 = vld [vmem:[#allocation2 + $0x1b8] sm:$0xff]
      %v2222 = vld [vmem:[#allocation2 + $0x1c0] sm:$0xff]
      %v2223 = vld [vmem:[#allocation2 + $0x1c8] sm:$0xff]
      %v2224 = vld [vmem:[#allocation2 + $0x1d0] sm:$0xff]
      %v2225 = vld [vmem:[#allocation2 + $0x1d8] sm:$0xff]
      %v2226 = vld [vmem:[#allocation2 + $0x1e0] sm:$0xff]
      %v2227 = vld [vmem:[#allocation2 + $0x1e8] sm:$0xff]
      %v2228 = vld [vmem:[#allocation2 + $0x1f0] sm:$0xff]
      %v2229 = vld [vmem:[#allocation2 + $0x1f8] sm:$0xff]
      %v2230 = vld [vmem:[%s2] sm:$0x1]
      %v2232 = vperm.slane %v2230, 0
      %v2234 = vmul.f32 %v2166, %v2232
      %v2235 = vmul.f32 %v2167, %v2232
      %v2236 = vmul.f32 %v2168, %v2232
      %v2237 = vmul.f32 %v2169, %v2232
      %v2238 = vmul.f32 %v2170, %v2232
      %v2239 = vmul.f32 %v2171, %v2232
      %v2240 = vmul.f32 %v2172, %v2232
      %v2241 = vmul.f32 %v2173, %v2232
      %v2242 = vmul.f32 %v2174, %v2232
      %v2243 = vmul.f32 %v2175, %v2232
      %v2244 = vmul.f32 %v2176, %v2232
      %v2245 = vmul.f32 %v2177, %v2232
      %v2246 = vmul.f32 %v2178, %v2232
      %v2247 = vmul.f32 %v2179, %v2232
      %v2248 = vmul.f32 %v2180, %v2232
      %v2249 = vmul.f32 %v2181, %v2232
      %v2250 = vmul.f32 %v2182, %v2232
      %v2251 = vmul.f32 %v2183, %v2232
      %v2252 = vmul.f32 %v2184, %v2232
      %v2253 = vmul.f32 %v2185, %v2232
      %v2254 = vmul.f32 %v2186, %v2232
      %v2255 = vmul.f32 %v2187, %v2232
      %v2256 = vmul.f32 %v2188, %v2232
      %v2257 = vmul.f32 %v2189, %v2232
      %v2258 = vmul.f32 %v2190, %v2232
      %v2259 = vmul.f32 %v2191, %v2232
      %v2260 = vmul.f32 %v2192, %v2232
      %v2261 = vmul.f32 %v2193, %v2232
      %v2262 = vmul.f32 %v2194, %v2232
      %v2263 = vmul.f32 %v2195, %v2232
      %v2264 = vmul.f32 %v2196, %v2232
      %v2265 = vmul.f32 %v2197, %v2232
      %v2266 = vmul.f32 %v2198, %v2232
      %v2267 = vmul.f32 %v2199, %v2232
      %v2268 = vmul.f32 %v2200, %v2232
      %v2269 = vmul.f32 %v2201, %v2232
      %v2270 = vmul.f32 %v2202, %v2232
      %v2271 = vmul.f32 %v2203, %v2232
      %v2272 = vmul.f32 %v2204, %v2232
      %v2273 = vmul.f32 %v2205, %v2232
      %v2274 = vmul.f32 %v2206, %v2232
      %v2275 = vmul.f32 %v2207, %v2232
      %v2276 = vmul.f32 %v2208, %v2232
      %v2277 = vmul.f32 %v2209, %v2232
      %v2278 = vmul.f32 %v2210, %v2232
      %v2279 = vmul.f32 %v2211, %v2232
      %v2280 = vmul.f32 %v2212, %v2232
      %v2281 = vmul.f32 %v2213, %v2232
      %v2282 = vmul.f32 %v2214, %v2232
      %v2283 = vmul.f32 %v2215, %v2232
      %v2284 = vmul.f32 %v2216, %v2232
      %v2285 = vmul.f32 %v2217, %v2232
      %v2286 = vmul.f32 %v2218, %v2232
      %v2287 = vmul.f32 %v2219, %v2232
      %v2288 = vmul.f32 %v2220, %v2232
      %v2289 = vmul.f32 %v2221, %v2232
      %v2290 = vmul.f32 %v2222, %v2232
      %v2291 = vmul.f32 %v2223, %v2232
      %v2292 = vmul.f32 %v2224, %v2232
      %v2293 = vmul.f32 %v2225, %v2232
      %v2294 = vmul.f32 %v2226, %v2232
      %v2295 = vmul.f32 %v2227, %v2232
      %v2296 = vmul.f32 %v2228, %v2232
      %v2297 = vmul.f32 %v2229, %v2232
      %v2298 = vld [vmem:[%s3] sm:$0x1]
      %v2300 = vperm.slane %v2298, 0
      %v2302 = vadd.f32 %v2234, %v2300
      %v2303 = vadd.f32 %v2235, %v2300
      %v2304 = vadd.f32 %v2236, %v2300
      %v2305 = vadd.f32 %v2237, %v2300
      %v2306 = vadd.f32 %v2238, %v2300
      %v2307 = vadd.f32 %v2239, %v2300
      %v2308 = vadd.f32 %v2240, %v2300
      %v2309 = vadd.f32 %v2241, %v2300
      %v2310 = vadd.f32 %v2242, %v2300
      %v2311 = vadd.f32 %v2243, %v2300
      %v2312 = vadd.f32 %v2244, %v2300
      %v2313 = vadd.f32 %v2245, %v2300
      %v2314 = vadd.f32 %v2246, %v2300
      %v2315 = vadd.f32 %v2247, %v2300
      %v2316 = vadd.f32 %v2248, %v2300
      %v2317 = vadd.f32 %v2249, %v2300
      %v2318 = vadd.f32 %v2250, %v2300
      %v2319 = vadd.f32 %v2251, %v2300
      %v2320 = vadd.f32 %v2252, %v2300
      %v2321 = vadd.f32 %v2253, %v2300
      %v2322 = vadd.f32 %v2254, %v2300
      %v2323 = vadd.f32 %v2255, %v2300
      %v2324 = vadd.f32 %v2256, %v2300
      %v2325 = vadd.f32 %v2257, %v2300
      %v2326 = vadd.f32 %v2258, %v2300
      %v2327 = vadd.f32 %v2259, %v2300
      %v2328 = vadd.f32 %v2260, %v2300
      %v2329 = vadd.f32 %v2261, %v2300
      %v2330 = vadd.f32 %v2262, %v2300
      %v2331 = vadd.f32 %v2263, %v2300
      %v2332 = vadd.f32 %v2264, %v2300
      %v2333 = vadd.f32 %v2265, %v2300
      %v2334 = vadd.f32 %v2266, %v2300
      %v2335 = vadd.f32 %v2267, %v2300
      %v2336 = vadd.f32 %v2268, %v2300
      %v2337 = vadd.f32 %v2269, %v2300
      %v2338 = vadd.f32 %v2270, %v2300
      %v2339 = vadd.f32 %v2271, %v2300
      %v2340 = vadd.f32 %v2272, %v2300
      %v2341 = vadd.f32 %v2273, %v2300
      %v2342 = vadd.f32 %v2274, %v2300
      %v2343 = vadd.f32 %v2275, %v2300
      %v2344 = vadd.f32 %v2276, %v2300
      %v2345 = vadd.f32 %v2277, %v2300
      %v2346 = vadd.f32 %v2278, %v2300
      %v2347 = vadd.f32 %v2279, %v2300
      %v2348 = vadd.f32 %v2280, %v2300
      %v2349 = vadd.f32 %v2281, %v2300
      %v2350 = vadd.f32 %v2282, %v2300
      %v2351 = vadd.f32 %v2283, %v2300
      %v2352 = vadd.f32 %v2284, %v2300
      %v2353 = vadd.f32 %v2285, %v2300
      %v2354 = vadd.f32 %v2286, %v2300
      %v2355 = vadd.f32 %v2287, %v2300
      %v2356 = vadd.f32 %v2288, %v2300
      %v2357 = vadd.f32 %v2289, %v2300
      %v2358 = vadd.f32 %v2290, %v2300
      %v2359 = vadd.f32 %v2291, %v2300
      %v2360 = vadd.f32 %v2292, %v2300
      %v2361 = vadd.f32 %v2293, %v2300
      %v2362 = vadd.f32 %v2294, %v2300
      %v2363 = vadd.f32 %v2295, %v2300
      %v2364 = vadd.f32 %v2296, %v2300
      %v2365 = vadd.f32 %v2297, %v2300
      %v2366 = vmax.f32 %v2302, 0.0
      %v2367 = vmax.f32 %v2303, 0.0
      %v2368 = vmax.f32 %v2304, 0.0
      %v2369 = vmax.f32 %v2305, 0.0
      %v2370 = vmax.f32 %v2306, 0.0
      %v2371 = vmax.f32 %v2307, 0.0
      %v2372 = vmax.f32 %v2308, 0.0
      %v2373 = vmax.f32 %v2309, 0.0
      %v2374 = vmax.f32 %v2310, 0.0
      %v2375 = vmax.f32 %v2311, 0.0
      %v2376 = vmax.f32 %v2312, 0.0
      %v2377 = vmax.f32 %v2313, 0.0
      %v2378 = vmax.f32 %v2314, 0.0
      %v2379 = vmax.f32 %v2315, 0.0
      %v2380 = vmax.f32 %v2316, 0.0
      %v2381 = vmax.f32 %v2317, 0.0
      %v2382 = vmax.f32 %v2318, 0.0
      %v2383 = vmax.f32 %v2319, 0.0
      %v2384 = vmax.f32 %v2320, 0.0
      %v2385 = vmax.f32 %v2321, 0.0
      %v2386 = vmax.f32 %v2322, 0.0
      %v2387 = vmax.f32 %v2323, 0.0
      %v2388 = vmax.f32 %v2324, 0.0
      %v2389 = vmax.f32 %v2325, 0.0
      %v2390 = vmax.f32 %v2326, 0.0
      %v2391 = vmax.f32 %v2327, 0.0
      %v2392 = vmax.f32 %v2328, 0.0
      %v2393 = vmax.f32 %v2329, 0.0
      %v2394 = vmax.f32 %v2330, 0.0
      %v2395 = vmax.f32 %v2331, 0.0
      %v2396 = vmax.f32 %v2332, 0.0
      %v2397 = vmax.f32 %v2333, 0.0
      %v2398 = vmax.f32 %v2334, 0.0
      %v2399 = vmax.f32 %v2335, 0.0
      %v2400 = vmax.f32 %v2336, 0.0
      %v2401 = vmax.f32 %v2337, 0.0
      %v2402 = vmax.f32 %v2338, 0.0
      %v2403 = vmax.f32 %v2339, 0.0
      %v2404 = vmax.f32 %v2340, 0.0
      %v2405 = vmax.f32 %v2341, 0.0
      %v2406 = vmax.f32 %v2342, 0.0
      %v2407 = vmax.f32 %v2343, 0.0
      %v2408 = vmax.f32 %v2344, 0.0
      %v2409 = vmax.f32 %v2345, 0.0
      %v2410 = vmax.f32 %v2346, 0.0
      %v2411 = vmax.f32 %v2347, 0.0
      %v2412 = vmax.f32 %v2348, 0.0
      %v2413 = vmax.f32 %v2349, 0.0
      %v2414 = vmax.f32 %v2350, 0.0
      %v2415 = vmax.f32 %v2351, 0.0
      %v2416 = vmax.f32 %v2352, 0.0
      %v2417 = vmax.f32 %v2353, 0.0
      %v2418 = vmax.f32 %v2354, 0.0
      %v2419 = vmax.f32 %v2355, 0.0
      %v2420 = vmax.f32 %v2356, 0.0
      %v2421 = vmax.f32 %v2357, 0.0
      %v2422 = vmax.f32 %v2358, 0.0
      %v2423 = vmax.f32 %v2359, 0.0
      %v2424 = vmax.f32 %v2360, 0.0
      %v2425 = vmax.f32 %v2361, 0.0
      %v2426 = vmax.f32 %v2362, 0.0
      %v2427 = vmax.f32 %v2363, 0.0
      %v2428 = vmax.f32 %v2364, 0.0
      %v2429 = vmax.f32 %v2365, 0.0
      %v2430 = vpack.c.bf16 %v2366, %v2366
      %v2431 = vpack.c.bf16 %v2367, %v2367
      %v2432 = vpack.c.bf16 %v2368, %v2368
      %v2433 = vpack.c.bf16 %v2369, %v2369
      %v2434 = vpack.c.bf16 %v2370, %v2370
      %v2435 = vpack.c.bf16 %v2371, %v2371
      %v2436 = vpack.c.bf16 %v2372, %v2372
      %v2437 = vpack.c.bf16 %v2373, %v2373
      %v2438 = vpack.c.bf16 %v2374, %v2374
      %v2439 = vpack.c.bf16 %v2375, %v2375
      %v2440 = vpack.c.bf16 %v2376, %v2376
      %v2441 = vpack.c.bf16 %v2377, %v2377
      %v2442 = vpack.c.bf16 %v2378, %v2378
      %v2443 = vpack.c.bf16 %v2379, %v2379
      %v2444 = vpack.c.bf16 %v2380, %v2380
      %v2445 = vpack.c.bf16 %v2381, %v2381
      %v2446 = vpack.c.bf16 %v2382, %v2382
      %v2447 = vpack.c.bf16 %v2383, %v2383
      %v2448 = vpack.c.bf16 %v2384, %v2384
      %v2449 = vpack.c.bf16 %v2385, %v2385
      %v2450 = vpack.c.bf16 %v2386, %v2386
      %v2451 = vpack.c.bf16 %v2387, %v2387
      %v2452 = vpack.c.bf16 %v2388, %v2388
      %v2453 = vpack.c.bf16 %v2389, %v2389
      %v2454 = vpack.c.bf16 %v2390, %v2390
      %v2455 = vpack.c.bf16 %v2391, %v2391
      %v2456 = vpack.c.bf16 %v2392, %v2392
      %v2457 = vpack.c.bf16 %v2393, %v2393
      %v2458 = vpack.c.bf16 %v2394, %v2394
      %v2459 = vpack.c.bf16 %v2395, %v2395
      %v2460 = vpack.c.bf16 %v2396, %v2396
      %v2461 = vpack.c.bf16 %v2397, %v2397
      %v2462 = vpack.c.bf16 %v2398, %v2398
      %v2463 = vpack.c.bf16 %v2399, %v2399
      %v2464 = vpack.c.bf16 %v2400, %v2400
      %v2465 = vpack.c.bf16 %v2401, %v2401
      %v2466 = vpack.c.bf16 %v2402, %v2402
      %v2467 = vpack.c.bf16 %v2403, %v2403
      %v2468 = vpack.c.bf16 %v2404, %v2404
      %v2469 = vpack.c.bf16 %v2405, %v2405
      %v2470 = vpack.c.bf16 %v2406, %v2406
      %v2471 = vpack.c.bf16 %v2407, %v2407
      %v2472 = vpack.c.bf16 %v2408, %v2408
      %v2473 = vpack.c.bf16 %v2409, %v2409
      %v2474 = vpack.c.bf16 %v2410, %v2410
      %v2475 = vpack.c.bf16 %v2411, %v2411
      %v2476 = vpack.c.bf16 %v2412, %v2412
      %v2477 = vpack.c.bf16 %v2413, %v2413
      %v2478 = vpack.c.bf16 %v2414, %v2414
      %v2479 = vpack.c.bf16 %v2415, %v2415
      %v2480 = vpack.c.bf16 %v2416, %v2416
      %v2481 = vpack.c.bf16 %v2417, %v2417
      %v2482 = vpack.c.bf16 %v2418, %v2418
      %v2483 = vpack.c.bf16 %v2419, %v2419
      %v2484 = vpack.c.bf16 %v2420, %v2420
      %v2485 = vpack.c.bf16 %v2421, %v2421
      %v2486 = vpack.c.bf16 %v2422, %v2422
      %v2487 = vpack.c.bf16 %v2423, %v2423
      %v2488 = vpack.c.bf16 %v2424, %v2424
      %v2489 = vpack.c.bf16 %v2425, %v2425
      %v2490 = vpack.c.bf16 %v2426, %v2426
      %v2491 = vpack.c.bf16 %v2427, %v2427
      %v2492 = vpack.c.bf16 %v2428, %v2428
      %v2493 = vpack.c.bf16 %v2429, %v2429
      %2494 = vst [vmem:[%s197] sm:$0xf] %v2430
      %2495 = vst [vmem:[%s197 + $0x4] sm:$0xf] %v2431
      %2496 = vst [vmem:[%s197 + $0x8] sm:$0xf] %v2432
      %2497 = vst [vmem:[%s197 + $0xc] sm:$0xf] %v2433
      %2498 = vst [vmem:[%s197 + $0x10] sm:$0xf] %v2434
      %2499 = vst [vmem:[%s197 + $0x14] sm:$0xf] %v2435
      %2500 = vst [vmem:[%s197 + $0x18] sm:$0xf] %v2436
      %2501 = vst [vmem:[%s197 + $0x1c] sm:$0xf] %v2437
      %2502 = vst [vmem:[%s197 + $0x20] sm:$0xf] %v2438
      %2503 = vst [vmem:[%s197 + $0x24] sm:$0xf] %v2439
      %2504 = vst [vmem:[%s197 + $0x28] sm:$0xf] %v2440
      %2505 = vst [vmem:[%s197 + $0x2c] sm:$0xf] %v2441
      %2506 = vst [vmem:[%s197 + $0x30] sm:$0xf] %v2442
      %2507 = vst [vmem:[%s197 + $0x34] sm:$0xf] %v2443
      %2508 = vst [vmem:[%s197 + $0x38] sm:$0xf] %v2444
      %2509 = vst [vmem:[%s197 + $0x3c] sm:$0xf] %v2445
      %2510 = vst [vmem:[%s197 + $0x40] sm:$0xf] %v2446
      %2511 = vst [vmem:[%s197 + $0x44] sm:$0xf] %v2447
      %2512 = vst [vmem:[%s197 + $0x48] sm:$0xf] %v2448
      %2513 = vst [vmem:[%s197 + $0x4c] sm:$0xf] %v2449
      %2514 = vst [vmem:[%s197 + $0x50] sm:$0xf] %v2450
      %2515 = vst [vmem:[%s197 + $0x54] sm:$0xf] %v2451
      %2516 = vst [vmem:[%s197 + $0x58] sm:$0xf] %v2452
      %2517 = vst [vmem:[%s197 + $0x5c] sm:$0xf] %v2453
      %2518 = vst [vmem:[%s197 + $0x60] sm:$0xf] %v2454
      %2519 = vst [vmem:[%s197 + $0x64] sm:$0xf] %v2455
      %2520 = vst [vmem:[%s197 + $0x68] sm:$0xf] %v2456
      %2521 = vst [vmem:[%s197 + $0x6c] sm:$0xf] %v2457
      %2522 = vst [vmem:[%s197 + $0x70] sm:$0xf] %v2458
      %2523 = vst [vmem:[%s197 + $0x74] sm:$0xf] %v2459
      %2524 = vst [vmem:[%s197 + $0x78] sm:$0xf] %v2460
      %2525 = vst [vmem:[%s197 + $0x7c] sm:$0xf] %v2461
      %2526 = vst [vmem:[%s197 + $0x80] sm:$0xf] %v2462
      %2527 = vst [vmem:[%s197 + $0x84] sm:$0xf] %v2463
      %2528 = vst [vmem:[%s197 + $0x88] sm:$0xf] %v2464
      %2529 = vst [vmem:[%s197 + $0x8c] sm:$0xf] %v2465
      %2530 = vst [vmem:[%s197 + $0x90] sm:$0xf] %v2466
      %2531 = vst [vmem:[%s197 + $0x94] sm:$0xf] %v2467
      %2532 = vst [vmem:[%s197 + $0x98] sm:$0xf] %v2468
      %2533 = vst [vmem:[%s197 + $0x9c] sm:$0xf] %v2469
      %2534 = vst [vmem:[%s197 + $0xa0] sm:$0xf] %v2470
      %2535 = vst [vmem:[%s197 + $0xa4] sm:$0xf] %v2471
      %2536 = vst [vmem:[%s197 + $0xa8] sm:$0xf] %v2472
      %2537 = vst [vmem:[%s197 + $0xac] sm:$0xf] %v2473
      %2538 = vst [vmem:[%s197 + $0xb0] sm:$0xf] %v2474
      %2539 = vst [vmem:[%s197 + $0xb4] sm:$0xf] %v2475
      %2540 = vst [vmem:[%s197 + $0xb8] sm:$0xf] %v2476
      %2541 = vst [vmem:[%s197 + $0xbc] sm:$0xf] %v2477
      %2542 = vst [vmem:[%s197 + $0xc0] sm:$0xf] %v2478
      %2543 = vst [vmem:[%s197 + $0xc4] sm:$0xf] %v2479
      %2544 = vst [vmem:[%s197 + $0xc8] sm:$0xf] %v2480
      %2545 = vst [vmem:[%s197 + $0xcc] sm:$0xf] %v2481
      %2546 = vst [vmem:[%s197 + $0xd0] sm:$0xf] %v2482
      %2547 = vst [vmem:[%s197 + $0xd4] sm:$0xf] %v2483
      %2548 = vst [vmem:[%s197 + $0xd8] sm:$0xf] %v2484
      %2549 = vst [vmem:[%s197 + $0xdc] sm:$0xf] %v2485
      %2550 = vst [vmem:[%s197 + $0xe0] sm:$0xf] %v2486
      %2551 = vst [vmem:[%s197 + $0xe4] sm:$0xf] %v2487
      %2552 = vst [vmem:[%s197 + $0xe8] sm:$0xf] %v2488
      %2553 = vst [vmem:[%s197 + $0xec] sm:$0xf] %v2489
      %2554 = vst [vmem:[%s197 + $0xf0] sm:$0xf] %v2490
      %2555 = vst [vmem:[%s197 + $0xf4] sm:$0xf] %v2491
      %2556 = vst [vmem:[%s197 + $0xf8] sm:$0xf] %v2492
      %2557 = vst [vmem:[%s197 + $0xfc] sm:$0xf] %v2493
      %s2558 = smul.u32 64, %s15
      %p2559 = scmp.lt.s32.totalorder %s2558, 255
      %s2560 = scalar_select %p2559, %s2558, 255
      %s2561 = smul.addr %s2560, 4
      %s2562 = scalar_lea.vmem %s4, %s2561
      // Predicated region
      $region37: #{up_forward.8} parent=35 // pred_check
        %p2563 = pneg %p122
      $region38: #{up_forward.8} parent=35 // pred_check_branch
        %2565 = sbr.rel (%p2563) target = $region40
      $region39: #{up_forward.8} parent=35 // pred_region
        %s2566 = smul.u32 64, %s15
      $region40: #{up_forward.8} parent=35 // pred_fallthru
        _
    $region36: #{up_forward.8} parent=5 // pred_fallthru
      _
    %p2567 = scmp.le.s32.totalorder 2, %s10
    // Predicated region
    $region41: #{up_forward.8} parent=5 // pred_check
      %p2568 = pneg %p2567
    $region42: #{up_forward.8} parent=5 // pred_check_branch
      %2570 = sbr.rel (%p2568) target = $region44
    $region43: #{up_forward.8} parent=5 // pred_region
      %s2571 = ssub.s32 %s10, 2
      // Predicated region
      $region45: #{up_forward.8} parent=43 // pred_check
        %p2572 = pneg %p128
      $region46: #{up_forward.8} parent=43 // pred_check_branch
        %2574 = sbr.rel (%p2572) target = $region48
      $region47: #{up_forward.8} parent=43 // pred_region
        %s2575 = smul.u32 64, %s16
        %p2576 = scmp.lt.s32.totalorder %s2575, 255
        %s2577 = scalar_select %p2576, %s2575, 255
        %s2578 = smul.addr %s2577, 4
        %s2579 = scalar_lea.vmem %s4, %s2578
      $region48: #{up_forward.8} parent=43 // pred_fallthru
        _
    $region44: #{up_forward.8} parent=5 // pred_fallthru
      _
  $region6: #{up_forward.8} parent=0 // loop_footer
    %s14 = sadd.s32 1, %s10
  $region7: #{up_forward.8} parent=0 // loop_footer_branch
    %9 = sbr.rel target = $region3
  $region8: #{up_forward.8} parent=0 // loop_exit
    _

// kernel: up_forward.9
$region0: #{up_forward.9}
  #allocation0 [shape = 'u32[]', space=smem, size = 0x4, offset = 0x4, fixed_abs, tag = 'smem constant byte address 0x4 - core index']
  #allocation1 [shape = 'u32[72,128]{1,0:T(1,128)}', space=vmem, size = 0x9000, scoped, tag = 'internal scratch']
  #allocation2 [shape = 'f32[512,128]{1,0:T(8,128)}', space=vmem, size = 0x40000, scoped, tag = 'scratch operand']
  %s0 = inlined_call_operand.vmem [shape: bf16[4,18,32,12], index: 0, kind: input, shape index: {}]
  %s1 = inlined_call_operand.vmem [shape: bf16[3,12,128], index: 1, kind: input, shape index: {}]
  %s2 = inlined_call_operand.vmem [shape: f32[1,128], index: 2, kind: input, shape index: {}]
  %s3 = inlined_call_operand.vmem [shape: f32[1,128], index: 3, kind: input, shape index: {}]
  %s4 = inlined_call_operand.vmem [shape: bf16[2048,128], index: 4, kind: output, shape index: {}]
  %s5 = sld [smem:[#allocation0]]
  $region49: #{up_forward.9} parent=0
    _
  %s7 = ssub.s32 1, %s5
  %s8 = scalar_select 0, %s7, %s5
  loop: start=0, step=1, limit=6
  $region2: #{up_forward.9} parent=0 // loop_pre_header
    _
  $region3: #{up_forward.9} parent=0 // loop_header
    %s10 = sphi 0, %s14
    %p11 = scmp.ge.s32.totalorder %s10, 6
    %s20 = sphi 0, %s22
    %s23 = sphi 0, %s20
    %s24 = sphi 0, %s23
    %s40 = sphi 0, %s24
    %s44 = sphi 0, %s44
    %s46 = sphi 0, %s44
    %s47 = sphi 0, %s46
    %s61 = sphi 0, %s47
    %s65 = sphi 0, %s65
    %s67 = sphi 0, %s65
    %s68 = sphi 0, %s67
    %s82 = sphi 0, %s68
    %s86 = sphi 0, %s86
    %s88 = sphi 0, %s86
    %s89 = sphi 0, %s88
    %s103 = sphi 0, %s89
    %s109 = sphi 0, %s111
    %s112 = sphi 0, %s109
    %s113 = sphi 0, %s112
    %s129 = sphi 0, %s113
  $region4: #{up_forward.9} parent=0 // loop_header_branch
    %13 = sbr.rel (%p11) target = $region8
  $region5: #{up_forward.9} parent=0 // loop_body
    %s15 = ssub.s32 %s10, 1
    %s16 = ssub.s32 %s10, 2
    %s17 = sadd.s32 %s10, 1
    %s18 = ssub.s32 %s10, %s17
    %p19 = scmp.eq.s32.totalorder %s18, 0
    %s21 = sadd.s32 %s20, 1
    %s22 = scalar_select %p19, %s20, %s21
    %p25 = pneg %p19
    %p26 = scmp.eq.s32.totalorder %s10, 3
    %p27 = por %p25, %p26
    %p28 = scmp.ne.s32.totalorder %s20, %s23
    %p29 = scmp.eq.s32.totalorder %s10, 0
    %p30 = por %p28, %p29
    %p31 = scmp.ne.s32.totalorder %s20, %s23
    %p32 = scmp.eq.s32.totalorder %s15, 3
    %p33 = por %p31, %p32
    %p34 = scmp.ne.s32.totalorder %s23, %s24
    %p35 = scmp.eq.s32.totalorder %s15, 0
    %p36 = por %p34, %p35
    %p37 = scmp.ne.s32.totalorder %s23, %s24
    %p38 = scmp.eq.s32.totalorder %s16, 3
    %p39 = por %p37, %p38
    %p41 = scmp.ne.s32.totalorder %s24, %s40
    %p42 = scmp.eq.s32.totalorder %s16, 0
    %p43 = por %p41, %p42
    %s45 = sadd.s32 %s44, 1
    %p48 = scmp.eq.s32.totalorder %s10, 3
    %p49 = scmp.ne.s32.totalorder %s44, %s46
    %p50 = scmp.eq.s32.totalorder %s10, 0
    %p51 = por %p49, %p50
    %p52 = scmp.ne.s32.totalorder %s44, %s46
    %p53 = scmp.eq.s32.totalorder %s15, 3
    %p54 = por %p52, %p53
    %p55 = scmp.ne.s32.totalorder %s46, %s47
    %p56 = scmp.eq.s32.totalorder %s15, 0
    %p57 = por %p55, %p56
    %p58 = scmp.ne.s32.totalorder %s46, %s47
    %p59 = scmp.eq.s32.totalorder %s16, 3
    %p60 = por %p58, %p59
    %p62 = scmp.ne.s32.totalorder %s47, %s61
    %p63 = scmp.eq.s32.totalorder %s16, 0
    %p64 = por %p62, %p63
    %s66 = sadd.s32 %s65, 1
    %p69 = scmp.eq.s32.totalorder %s10, 3
    %p70 = scmp.ne.s32.totalorder %s65, %s67
    %p71 = scmp.eq.s32.totalorder %s10, 0
    %p72 = por %p70, %p71
    %p73 = scmp.ne.s32.totalorder %s65, %s67
    %p74 = scmp.eq.s32.totalorder %s15, 3
    %p75 = por %p73, %p74
    %p76 = scmp.ne.s32.totalorder %s67, %s68
    %p77 = scmp.eq.s32.totalorder %s15, 0
    %p78 = por %p76, %p77
    %p79 = scmp.ne.s32.totalorder %s67, %s68
    %p80 = scmp.eq.s32.totalorder %s16, 3
    %p81 = por %p79, %p80
    %p83 = scmp.ne.s32.totalorder %s68, %s82
    %p84 = scmp.eq.s32.totalorder %s16, 0
    %p85 = por %p83, %p84
    %s87 = sadd.s32 %s86, 1
    %p90 = scmp.eq.s32.totalorder %s10, 3
    %p91 = scmp.ne.s32.totalorder %s86, %s88
    %p92 = scmp.eq.s32.totalorder %s10, 0
    %p93 = por %p91, %p92
    %p94 = scmp.ne.s32.totalorder %s86, %s88
    %p95 = scmp.eq.s32.totalorder %s15, 3
    %p96 = por %p94, %p95
    %p97 = scmp.ne.s32.totalorder %s88, %s89
    %p98 = scmp.eq.s32.totalorder %s15, 0
    %p99 = por %p97, %p98
    %p100 = scmp.ne.s32.totalorder %s88, %s89
    %p101 = scmp.eq.s32.totalorder %s16, 3
    %p102 = por %p100, %p101
    %p104 = scmp.ne.s32.totalorder %s89, %s103
    %p105 = scmp.eq.s32.totalorder %s16, 0
    %p106 = por %p104, %p105
    %s107 = ssub.s32 %s10, %s17
    %p108 = scmp.eq.s32.totalorder %s107, 0
    %s110 = sadd.s32 %s109, 1
    %s111 = scalar_select %p108, %s109, %s110
    %p114 = pneg %p108
    %p115 = scmp.eq.s32.totalorder %s10, 3
    %p116 = por %p114, %p115
    %p117 = scmp.ne.s32.totalorder %s109, %s112
    %p118 = scmp.eq.s32.totalorder %s10, 0
    %p119 = por %p117, %p118
    %p120 = scmp.ne.s32.totalorder %s109, %s112
    %p121 = scmp.eq.s32.totalorder %s15, 3
    %p122 = por %p120, %p121
    %p123 = scmp.ne.s32.totalorder %s112, %s113
    %p124 = scmp.eq.s32.totalorder %s15, 0
    %p125 = por %p123, %p124
    %p126 = scmp.ne.s32.totalorder %s112, %s113
    %p127 = scmp.eq.s32.totalorder %s16, 3
    %p128 = por %p126, %p127
    %p130 = scmp.ne.s32.totalorder %s113, %s129
    %p131 = scmp.eq.s32.totalorder %s16, 0
    %p132 = por %p130, %p131
    %p133 = scmp.le.s32.totalorder 1, %s10
    %p134 = scmp.lt.s32.totalorder %s10, 5
    %p135 = pnand %p133, %p134
    %p136 = pneg %p135
    // Predicated region
    $region9: #{up_forward.9} parent=5 // pred_check
      _
    $region10: #{up_forward.9} parent=5 // pred_check_branch
      %138 = sbr.rel (%p135) target = $region12
    $region11: #{up_forward.9} parent=5 // pred_region
      %s139 = ssub.s32 %s10, 1
      // Predicated region
      $region13: #{up_forward.9} parent=11 // pred_check
        %p140 = pneg %p57
      $region14: #{up_forward.9} parent=11 // pred_check_branch
        %142 = sbr.rel (%p140) target = $region16
      $region15: #{up_forward.9} parent=11 // pred_region
        _
      $region16: #{up_forward.9} parent=11 // pred_fallthru
        _
      // Predicated region
      $region17: #{up_forward.9} parent=11 // pred_check
        %p143 = pneg %p78
      $region18: #{up_forward.9} parent=11 // pred_check_branch
        %145 = sbr.rel (%p143) target = $region20
      $region19: #{up_forward.9} parent=11 // pred_region
        _
      $region20: #{up_forward.9} parent=11 // pred_fallthru
        _
      // Predicated region
      $region21: #{up_forward.9} parent=11 // pred_check
        %p146 = pneg %p99
      $region22: #{up_forward.9} parent=11 // pred_check_branch
        %148 = sbr.rel (%p146) target = $region24
      $region23: #{up_forward.9} parent=11 // pred_region
        _
      $region24: #{up_forward.9} parent=11 // pred_fallthru
        _
    $region12: #{up_forward.9} parent=5 // pred_fallthru
      _
    %p149 = scmp.lt.s32.totalorder %s10, 4
    // Predicated region
    $region25: #{up_forward.9} parent=5 // pred_check
      %p150 = pneg %p149
    $region26: #{up_forward.9} parent=5 // pred_check_branch
      %152 = sbr.rel (%p150) target = $region28
    $region27: #{up_forward.9} parent=5 // pred_region
      // Predicated region
      $region29: #{up_forward.9} parent=27 // pred_check
        %p153 = pneg %p30
      $region30: #{up_forward.9} parent=27 // pred_check_branch
        %155 = sbr.rel (%p153) target = $region32
      $region31: #{up_forward.9} parent=27 // pred_region
        %p156 = scmp.lt.s32.totalorder %s10, 3
        %s157 = scalar_select %p156, %s10, 3
        %s158 = smul.addr %s157, 72
        %s159 = smul.addr %s158, 4
        %s160 = scalar_lea.vmem %s0, %s159
      $region32: #{up_forward.9} parent=27 // pred_fallthru
        _
    $region28: #{up_forward.9} parent=5 // pred_fallthru
      _
    %p161 = scmp.le.s32.totalorder 1, %s10
    %p162 = scmp.lt.s32.totalorder %s10, 5
    %p163 = pnand %p161, %p162
    %p164 = pneg %p163
    // Predicated region
    $region33: #{up_forward.9} parent=5 // pred_check
      _
    $region34: #{up_forward.9} parent=5 // pred_check_branch
      %166 = sbr.rel (%p163) target = $region36
    $region35: #{up_forward.9} parent=5 // pred_region
      %s167 = ssub.s32 %s10, 1
      %p168 = scmp.lt.s32.totalorder %s15, 3
      %s169 = scalar_select %p168, %s15, 3
      %s170 = smul.addr %s169, 72
      %s171 = smul.addr %s170, 4
      %s172 = scalar_lea.vmem %s0, %s171
      %p173 = pneg %p36
      %p174 = pneg %p33
      %p175 = pneg %p57
      %p176 = pneg %p54
      %p177 = pneg %p78
      %p178 = pneg %p75
      %p179 = pneg %p99
      %p180 = pneg %p96
      %p181 = pneg %p125
      %p182 = pneg %p122
      %s183 = smul.u32 64, %s15
      %p184 = scmp.lt.s32.totalorder %s183, 255
      %s185 = scalar_select %p184, %s183, 255
      %s186 = smul.addr %s185, 4
      %s187 = scalar_lea.vmem %s4, %s186
      %p188 = scmp.lt.s32.totalorder %s15, 3
      %s189 = scalar_select %p188, %s15, 3
      %s190 = smul.addr %s189, 72
      %s191 = smul.addr %s190, 4
      %s192 = scalar_lea.vmem %s0, %s191
      %s193 = smul.u32 64, %s15
      %p194 = scmp.lt.s32.totalorder %s193, 255
      %s195 = scalar_select %p194, %s193, 255
      %s196 = smul.addr %s195, 4
      %s197 = scalar_lea.vmem %s4, %s196
      %s198 = smul.u32 64, %s15
      %v200 = vld [vmem:[%s192] sm:$0xf]
      %v201 = vld [vmem:[%s192 + $0x4] sm:$0xf]
      %v202 = vld [vmem:[%s192 + $0x8] sm:$0xf]
      %v203 = vld [vmem:[%s192 + $0xc] sm:$0xf]
      %v204 = vld [vmem:[%s192 + $0x10] sm:$0xf]
      %v205 = vld [vmem:[%s192 + $0x14] sm:$0xf]
      %v206 = vld [vmem:[%s192 + $0x18] sm:$0xf]
      %v207 = vld [vmem:[%s192 + $0x1c] sm:$0xf]
      %v208 = vld [vmem:[%s192 + $0x20] sm:$0xf]
      %v209 = vld [vmem:[%s192 + $0x24] sm:$0xf]
      %v210 = vld [vmem:[%s192 + $0x28] sm:$0xf]
      %v211 = vld [vmem:[%s192 + $0x2c] sm:$0xf]
      %v212 = vld [vmem:[%s192 + $0x30] sm:$0xf]
      %v213 = vld [vmem:[%s192 + $0x34] sm:$0xf]
      %v214 = vld [vmem:[%s192 + $0x38] sm:$0xf]
      %v215 = vld [vmem:[%s192 + $0x3c] sm:$0xf]
      %v216 = vld [vmem:[%s192 + $0x40] sm:$0xf]
      %v217 = vld [vmem:[%s192 + $0x44] sm:$0xf]
      %v218 = vld [vmem:[%s192 + $0x48] sm:$0xf]
      %v219 = vld [vmem:[%s192 + $0x4c] sm:$0xf]
      %v220 = vld [vmem:[%s192 + $0x50] sm:$0xf]
      %v221 = vld [vmem:[%s192 + $0x54] sm:$0xf]
      %v222 = vld [vmem:[%s192 + $0x58] sm:$0xf]
      %v223 = vld [vmem:[%s192 + $0x5c] sm:$0xf]
      %v224 = vld [vmem:[%s192 + $0x60] sm:$0xf]
      %v225 = vld [vmem:[%s192 + $0x64] sm:$0xf]
      %v226 = vld [vmem:[%s192 + $0x68] sm:$0xf]
      %v227 = vld [vmem:[%s192 + $0x6c] sm:$0xf]
      %v228 = vld [vmem:[%s192 + $0x70] sm:$0xf]
      %v229 = vld [vmem:[%s192 + $0x74] sm:$0xf]
      %v230 = vld [vmem:[%s192 + $0x78] sm:$0xf]
      %v231 = vld [vmem:[%s192 + $0x7c] sm:$0xf]
      %v232 = vld [vmem:[%s192 + $0x80] sm:$0xf]
      %v233 = vld [vmem:[%s192 + $0x84] sm:$0xf]
      %v234 = vld [vmem:[%s192 + $0x88] sm:$0xf]
      %v235 = vld [vmem:[%s192 + $0x8c] sm:$0xf]
      %v236 = vld [vmem:[%s192 + $0x90] sm:$0xf]
      %v237 = vld [vmem:[%s192 + $0x94] sm:$0xf]
      %v238 = vld [vmem:[%s192 + $0x98] sm:$0xf]
      %v239 = vld [vmem:[%s192 + $0x9c] sm:$0xf]
      %v240 = vld [vmem:[%s192 + $0xa0] sm:$0xf]
      %v241 = vld [vmem:[%s192 + $0xa4] sm:$0xf]
      %v242 = vld [vmem:[%s192 + $0xa8] sm:$0xf]
      %v243 = vld [vmem:[%s192 + $0xac] sm:$0xf]
      %v244 = vld [vmem:[%s192 + $0xb0] sm:$0xf]
      %v245 = vld [vmem:[%s192 + $0xb4] sm:$0xf]
      %v246 = vld [vmem:[%s192 + $0xb8] sm:$0xf]
      %v247 = vld [vmem:[%s192 + $0xbc] sm:$0xf]
      %v248 = vld [vmem:[%s192 + $0xc0] sm:$0xf]
      %v249 = vld [vmem:[%s192 + $0xc4] sm:$0xf]
      %v250 = vld [vmem:[%s192 + $0xc8] sm:$0xf]
      %v251 = vld [vmem:[%s192 + $0xcc] sm:$0xf]
      %v252 = vld [vmem:[%s192 + $0xd0] sm:$0xf]
      %v253 = vld [vmem:[%s192 + $0xd4] sm:$0xf]
      %v254 = vld [vmem:[%s192 + $0xd8] sm:$0xf]
      %v255 = vld [vmem:[%s192 + $0xdc] sm:$0xf]
      %v256 = vld [vmem:[%s192 + $0xe0] sm:$0xf]
      %v257 = vld [vmem:[%s192 + $0xe4] sm:$0xf]
      %v258 = vld [vmem:[%s192 + $0xe8] sm:$0xf]
      %v259 = vld [vmem:[%s192 + $0xec] sm:$0xf]
      %v260 = vld [vmem:[%s192 + $0xf0] sm:$0xf]
      %v261 = vld [vmem:[%s192 + $0xf4] sm:$0xf]
      %v262 = vld [vmem:[%s192 + $0xf8] sm:$0xf]
      %v263 = vld [vmem:[%s192 + $0xfc] sm:$0xf]
      %v264 = vld [vmem:[%s1] sm:$0xf]
      %v265 = vld [vmem:[%s1 + $0x4] sm:$0x3]
      %v330 = vunpack.c.l.b16 %v200
      %v331 = vunpack.c.l.b16 %v201
      %v332 = vunpack.c.l.b16 %v202
      %v333 = vunpack.c.l.b16 %v203
      %v334 = vunpack.c.l.b16 %v204
      %v335 = vunpack.c.l.b16 %v205
      %v336 = vunpack.c.l.b16 %v206
      %v337 = vunpack.c.l.b16 %v207
      %v338 = vunpack.c.l.b16 %v208
      %v339 = vunpack.c.l.b16 %v209
      %v340 = vunpack.c.l.b16 %v210
      %v341 = vunpack.c.l.b16 %v211
      %v342 = vunpack.c.l.b16 %v212
      %v343 = vunpack.c.l.b16 %v213
      %v344 = vunpack.c.l.b16 %v214
      %v345 = vunpack.c.l.b16 %v215
      %v346 = vunpack.c.l.b16 %v216
      %v347 = vunpack.c.l.b16 %v217
      %v348 = vunpack.c.l.b16 %v218
      %v349 = vunpack.c.l.b16 %v219
      %v350 = vunpack.c.l.b16 %v220
      %v351 = vunpack.c.l.b16 %v221
      %v352 = vunpack.c.l.b16 %v222
      %v353 = vunpack.c.l.b16 %v223
      %v354 = vunpack.c.l.b16 %v224
      %v355 = vunpack.c.l.b16 %v225
      %v356 = vunpack.c.l.b16 %v226
      %v357 = vunpack.c.l.b16 %v227
      %v358 = vunpack.c.l.b16 %v228
      %v359 = vunpack.c.l.b16 %v229
      %v360 = vunpack.c.l.b16 %v230
      %v361 = vunpack.c.l.b16 %v231
      %v362 = vunpack.c.l.b16 %v232
      %v363 = vunpack.c.l.b16 %v233
      %v364 = vunpack.c.l.b16 %v234
      %v365 = vunpack.c.l.b16 %v235
      %v366 = vunpack.c.l.b16 %v236
      %v367 = vunpack.c.l.b16 %v237
      %v368 = vunpack.c.l.b16 %v238
      %v369 = vunpack.c.l.b16 %v239
      %v370 = vunpack.c.l.b16 %v240
      %v371 = vunpack.c.l.b16 %v241
      %v372 = vunpack.c.l.b16 %v242
      %v373 = vunpack.c.l.b16 %v243
      %v374 = vunpack.c.l.b16 %v244
      %v375 = vunpack.c.l.b16 %v245
      %v376 = vunpack.c.l.b16 %v246
      %v377 = vunpack.c.l.b16 %v247
      %v378 = vunpack.c.l.b16 %v248
      %v379 = vunpack.c.l.b16 %v249
      %v380 = vunpack.c.l.b16 %v250
      %v381 = vunpack.c.l.b16 %v251
      %v382 = vunpack.c.l.b16 %v252
      %v383 = vunpack.c.l.b16 %v253
      %v384 = vunpack.c.l.b16 %v254
      %v385 = vunpack.c.l.b16 %v255
      %v386 = vunpack.c.l.b16 %v256
      %v387 = vunpack.c.l.b16 %v257
      %v388 = vunpack.c.l.b16 %v258
      %v389 = vunpack.c.l.b16 %v259
      %v390 = vunpack.c.l.b16 %v260
      %v391 = vunpack.c.l.b16 %v261
      %v392 = vunpack.c.l.b16 %v262
      %v393 = vunpack.c.l.b16 %v263
      %v394 = vpack.c.b16 %v331, %v330
      %v395 = vpack.c.b16 %v333, %v332
      %v396 = vpack.c.b16 %v335, %v334
      %v397 = vpack.c.b16 %v337, %v336
      %v398 = vpack.c.b16 %v339, %v338
      %v399 = vpack.c.b16 %v341, %v340
      %v400 = vpack.c.b16 %v343, %v342
      %v401 = vpack.c.b16 %v345, %v344
      %v402 = vpack.c.b16 %v347, %v346
      %v403 = vpack.c.b16 %v349, %v348
      %v404 = vpack.c.b16 %v351, %v350
      %v405 = vpack.c.b16 %v353, %v352
      %v406 = vpack.c.b16 %v355, %v354
      %v407 = vpack.c.b16 %v357, %v356
      %v408 = vpack.c.b16 %v359, %v358
      %v409 = vpack.c.b16 %v361, %v360
      %v410 = vpack.c.b16 %v363, %v362
      %v411 = vpack.c.b16 %v365, %v364
      %v412 = vpack.c.b16 %v367, %v366
      %v413 = vpack.c.b16 %v369, %v368
      %v414 = vpack.c.b16 %v371, %v370
      %v415 = vpack.c.b16 %v373, %v372
      %v416 = vpack.c.b16 %v375, %v374
      %v417 = vpack.c.b16 %v377, %v376
      %v418 = vpack.c.b16 %v379, %v378
      %v419 = vpack.c.b16 %v381, %v380
      %v420 = vpack.c.b16 %v383, %v382
      %v421 = vpack.c.b16 %v385, %v384
      %v422 = vpack.c.b16 %v387, %v386
      %v423 = vpack.c.b16 %v389, %v388
      %v424 = vpack.c.b16 %v391, %v390
      %v425 = vpack.c.b16 %v393, %v392
      %v428 = vunpack.c.l.b16 %v264
      %v429 = vunpack.c.l.b16 %v265
      %v430 = vpack.c.b16 %v429, %v428
      %vm431 = vcmask 97280
      %v433 = vsel %vm431, %v394, 0
      %v436 = vsel %vm431, %v395, 0
      %v439 = vsel %vm431, %v396, 0
      %v442 = vsel %vm431, %v397, 0
      %v445 = vsel %vm431, %v398, 0
      %v448 = vsel %vm431, %v399, 0
      %v451 = vsel %vm431, %v400, 0
      %v454 = vsel %vm431, %v401, 0
      %v457 = vsel %vm431, %v402, 0
      %v460 = vsel %vm431, %v403, 0
      %v463 = vsel %vm431, %v404, 0
      %v466 = vsel %vm431, %v405, 0
      %v469 = vsel %vm431, %v406, 0
      %v472 = vsel %vm431, %v407, 0
      %v475 = vsel %vm431, %v408, 0
      %v478 = vsel %vm431, %v409, 0
      %v481 = vsel %vm431, %v410, 0
      %v484 = vsel %vm431, %v411, 0
      %v487 = vsel %vm431, %v412, 0
      %v490 = vsel %vm431, %v413, 0
      %v493 = vsel %vm431, %v414, 0
      %v496 = vsel %vm431, %v415, 0
      %v499 = vsel %vm431, %v416, 0
      %v502 = vsel %vm431, %v417, 0
      %v505 = vsel %vm431, %v418, 0
      %v508 = vsel %vm431, %v419, 0
      %v511 = vsel %vm431, %v420, 0
      %v514 = vsel %vm431, %v421, 0
      %v517 = vsel %vm431, %v422, 0
      %v520 = vsel %vm431, %v423, 0
      %v523 = vsel %vm431, %v424, 0
      %v526 = vsel %vm431, %v425, 0
      %vm528 = vcmask 1045504
      %v530 = vsel %vm528, %v430, 0
      %532 = vmatpush.bf16.msra.mxu0 0
      %533 = vmatpush.bf16.msra.mxu0 0
      %534 = vmatpush.bf16.msra.mxu0 0
      %535 = vmatpush.bf16.msra.mxu0 0
      %536 = vmatpush.bf16.msra.mxu0 0
      %537 = vmatpush.bf16.msra.mxu0 0
      %538 = vmatpush.bf16.msra.mxu0 0
      %539 = vmatpush.bf16.msra.mxu0 %v530
      %540 = vmatmul.bf16.gmra.mxu0 %v433
      %v541 = vpop.f32.mrf.mxu0
      %v542 = vadd.f32 0.0, %v541
      %v543 = vpop.f32.mrf.mxu0
      %v544 = vadd.f32 0.0, %v543
      %545 = vmatmul.bf16.gmra.mxu0 %v436
      %v546 = vpop.f32.mrf.mxu0
      %v547 = vadd.f32 0.0, %v546
      %v548 = vpop.f32.mrf.mxu0
      %v549 = vadd.f32 0.0, %v548
      %550 = vmatmul.bf16.gmra.mxu0 %v439
      %v551 = vpop.f32.mrf.mxu0
      %v552 = vadd.f32 0.0, %v551
      %v553 = vpop.f32.mrf.mxu0
      %v554 = vadd.f32 0.0, %v553
      %555 = vmatmul.bf16.gmra.mxu0 %v442
      %v556 = vpop.f32.mrf.mxu0
      %v557 = vadd.f32 0.0, %v556
      %v558 = vpop.f32.mrf.mxu0
      %v559 = vadd.f32 0.0, %v558
      %560 = vmatmul.bf16.gmra.mxu0 %v445
      %v561 = vpop.f32.mrf.mxu0
      %v562 = vadd.f32 0.0, %v561
      %v563 = vpop.f32.mrf.mxu0
      %v564 = vadd.f32 0.0, %v563
      %565 = vmatmul.bf16.gmra.mxu0 %v448
      %v566 = vpop.f32.mrf.mxu0
      %v567 = vadd.f32 0.0, %v566
      %v568 = vpop.f32.mrf.mxu0
      %v569 = vadd.f32 0.0, %v568
      %570 = vmatmul.bf16.gmra.mxu0 %v451
      %v571 = vpop.f32.mrf.mxu0
      %v572 = vadd.f32 0.0, %v571
      %v573 = vpop.f32.mrf.mxu0
      %v574 = vadd.f32 0.0, %v573
      %575 = vmatmul.bf16.gmra.mxu0 %v454
      %v576 = vpop.f32.mrf.mxu0
      %v577 = vadd.f32 0.0, %v576
      %v578 = vpop.f32.mrf.mxu0
      %v579 = vadd.f32 0.0, %v578
      %580 = vmatmul.bf16.gmra.mxu0 %v457
      %v581 = vpop.f32.mrf.mxu0
      %v582 = vadd.f32 0.0, %v581
      %v583 = vpop.f32.mrf.mxu0
      %v584 = vadd.f32 0.0, %v583
      %585 = vmatmul.bf16.gmra.mxu0 %v460
      %v586 = vpop.f32.mrf.mxu0
      %v587 = vadd.f32 0.0, %v586
      %v588 = vpop.f32.mrf.mxu0
      %v589 = vadd.f32 0.0, %v588
      %590 = vmatmul.bf16.gmra.mxu0 %v463
      %v591 = vpop.f32.mrf.mxu0
      %v592 = vadd.f32 0.0, %v591
      %v593 = vpop.f32.mrf.mxu0
      %v594 = vadd.f32 0.0, %v593
      %595 = vmatmul.bf16.gmra.mxu0 %v466
      %v596 = vpop.f32.mrf.mxu0
      %v597 = vadd.f32 0.0, %v596
      %v598 = vpop.f32.mrf.mxu0
      %v599 = vadd.f32 0.0, %v598
      %600 = vmatmul.bf16.gmra.mxu0 %v469
      %v601 = vpop.f32.mrf.mxu0
      %v602 = vadd.f32 0.0, %v601
      %v603 = vpop.f32.mrf.mxu0
      %v604 = vadd.f32 0.0, %v603
      %605 = vmatmul.bf16.gmra.mxu0 %v472
      %v606 = vpop.f32.mrf.mxu0
      %v607 = vadd.f32 0.0, %v606
      %v608 = vpop.f32.mrf.mxu0
      %v609 = vadd.f32 0.0, %v608
      %610 = vmatmul.bf16.gmra.mxu0 %v475
      %v611 = vpop.f32.mrf.mxu0
      %v612 = vadd.f32 0.0, %v611
      %v613 = vpop.f32.mrf.mxu0
      %v614 = vadd.f32 0.0, %v613
      %615 = vmatmul.bf16.gmra.mxu0 %v478
      %v616 = vpop.f32.mrf.mxu0
      %v617 = vadd.f32 0.0, %v616
      %v618 = vpop.f32.mrf.mxu0
      %v619 = vadd.f32 0.0, %v618
      %620 = vmatmul.bf16.gmra.mxu0 %v481
      %v621 = vpop.f32.mrf.mxu0
      %v622 = vadd.f32 0.0, %v621
      %v623 = vpop.f32.mrf.mxu0
      %v624 = vadd.f32 0.0, %v623
      %625 = vmatmul.bf16.gmra.mxu0 %v484
      %v626 = vpop.f32.mrf.mxu0
      %v627 = vadd.f32 0.0, %v626
      %v628 = vpop.f32.mrf.mxu0
      %v629 = vadd.f32 0.0, %v628
      %630 = vmatmul.bf16.gmra.mxu0 %v487
      %v631 = vpop.f32.mrf.mxu0
      %v632 = vadd.f32 0.0, %v631
      %v633 = vpop.f32.mrf.mxu0
      %v634 = vadd.f32 0.0, %v633
      %635 = vmatmul.bf16.gmra.mxu0 %v490
      %v636 = vpop.f32.mrf.mxu0
      %v637 = vadd.f32 0.0, %v636
      %v638 = vpop.f32.mrf.mxu0
      %v639 = vadd.f32 0.0, %v638
      %640 = vmatmul.bf16.gmra.mxu0 %v493
      %v641 = vpop.f32.mrf.mxu0
      %v642 = vadd.f32 0.0, %v641
      %v643 = vpop.f32.mrf.mxu0
      %v644 = vadd.f32 0.0, %v643
      %645 = vmatmul.bf16.gmra.mxu0 %v496
      %v646 = vpop.f32.mrf.mxu0
      %v647 = vadd.f32 0.0, %v646
      %v648 = vpop.f32.mrf.mxu0
      %v649 = vadd.f32 0.0, %v648
      %650 = vmatmul.bf16.gmra.mxu0 %v499
      %v651 = vpop.f32.mrf.mxu0
      %v652 = vadd.f32 0.0, %v651
      %v653 = vpop.f32.mrf.mxu0
      %v654 = vadd.f32 0.0, %v653
      %655 = vmatmul.bf16.gmra.mxu0 %v502
      %v656 = vpop.f32.mrf.mxu0
      %v657 = vadd.f32 0.0, %v656
      %v658 = vpop.f32.mrf.mxu0
      %v659 = vadd.f32 0.0, %v658
      %660 = vmatmul.bf16.gmra.mxu0 %v505
      %v661 = vpop.f32.mrf.mxu0
      %v662 = vadd.f32 0.0, %v661
      %v663 = vpop.f32.mrf.mxu0
      %v664 = vadd.f32 0.0, %v663
      %665 = vmatmul.bf16.gmra.mxu0 %v508
      %v666 = vpop.f32.mrf.mxu0
      %v667 = vadd.f32 0.0, %v666
      %v668 = vpop.f32.mrf.mxu0
      %v669 = vadd.f32 0.0, %v668
      %670 = vmatmul.bf16.gmra.mxu0 %v511
      %v671 = vpop.f32.mrf.mxu0
      %v672 = vadd.f32 0.0, %v671
      %v673 = vpop.f32.mrf.mxu0
      %v674 = vadd.f32 0.0, %v673
      %675 = vmatmul.bf16.gmra.mxu0 %v514
      %v676 = vpop.f32.mrf.mxu0
      %v677 = vadd.f32 0.0, %v676
      %v678 = vpop.f32.mrf.mxu0
      %v679 = vadd.f32 0.0, %v678
      %680 = vmatmul.bf16.gmra.mxu0 %v517
      %v681 = vpop.f32.mrf.mxu0
      %v682 = vadd.f32 0.0, %v681
      %v683 = vpop.f32.mrf.mxu0
      %v684 = vadd.f32 0.0, %v683
      %685 = vmatmul.bf16.gmra.mxu0 %v520
      %v686 = vpop.f32.mrf.mxu0
      %v687 = vadd.f32 0.0, %v686
      %v688 = vpop.f32.mrf.mxu0
      %v689 = vadd.f32 0.0, %v688
      %690 = vmatmul.bf16.gmra.mxu0 %v523
      %v691 = vpop.f32.mrf.mxu0
      %v692 = vadd.f32 0.0, %v691
      %v693 = vpop.f32.mrf.mxu0
      %v694 = vadd.f32 0.0, %v693
      %695 = vmatmul.bf16.gmra.mxu0 %v526
      %v696 = vpop.f32.mrf.mxu0
      %v697 = vadd.f32 0.0, %v696
      %v698 = vpop.f32.mrf.mxu0
      %v699 = vadd.f32 0.0, %v698
      %700 = vdwg.mxu0
      %701 = vst [vmem:[#allocation2] sm:$0xff] %v542
      %702 = vst [vmem:[#allocation2 + $0x8] sm:$0xff] %v544
      %703 = vst [vmem:[#allocation2 + $0x10] sm:$0xff] %v547
      %704 = vst [vmem:[#allocation2 + $0x18] sm:$0xff] %v549
      %705 = vst [vmem:[#allocation2 + $0x20] sm:$0xff] %v552
      %706 = vst [vmem:[#allocation2 + $0x28] sm:$0xff] %v554
      %707 = vst [vmem:[#allocation2 + $0x30] sm:$0xff] %v557
      %708 = vst [vmem:[#allocation2 + $0x38] sm:$0xff] %v559
      %709 = vst [vmem:[#allocation2 + $0x40] sm:$0xff] %v562
      %710 = vst [vmem:[#allocation2 + $0x48] sm:$0xff] %v564
      %711 = vst [vmem:[#allocation2 + $0x50] sm:$0xff] %v567
      %712 = vst [vmem:[#allocation2 + $0x58] sm:$0xff] %v569
      %713 = vst [vmem:[#allocation2 + $0x60] sm:$0xff] %v572
      %714 = vst [vmem:[#allocation2 + $0x68] sm:$0xff] %v574
      %715 = vst [vmem:[#allocation2 + $0x70] sm:$0xff] %v577
      %716 = vst [vmem:[#allocation2 + $0x78] sm:$0xff] %v579
      %717 = vst [vmem:[#allocation2 + $0x80] sm:$0xff] %v582
      %718 = vst [vmem:[#allocation2 + $0x88] sm:$0xff] %v584
      %719 = vst [vmem:[#allocation2 + $0x90] sm:$0xff] %v587
      %720 = vst [vmem:[#allocation2 + $0x98] sm:$0xff] %v589
      %721 = vst [vmem:[#allocation2 + $0xa0] sm:$0xff] %v592
      %722 = vst [vmem:[#allocation2 + $0xa8] sm:$0xff] %v594
      %723 = vst [vmem:[#allocation2 + $0xb0] sm:$0xff] %v597
      %724 = vst [vmem:[#allocation2 + $0xb8] sm:$0xff] %v599
      %725 = vst [vmem:[#allocation2 + $0xc0] sm:$0xff] %v602
      %726 = vst [vmem:[#allocation2 + $0xc8] sm:$0xff] %v604
      %727 = vst [vmem:[#allocation2 + $0xd0] sm:$0xff] %v607
      %728 = vst [vmem:[#allocation2 + $0xd8] sm:$0xff] %v609
      %729 = vst [vmem:[#allocation2 + $0xe0] sm:$0xff] %v612
      %730 = vst [vmem:[#allocation2 + $0xe8] sm:$0xff] %v614
      %731 = vst [vmem:[#allocation2 + $0xf0] sm:$0xff] %v617
      %732 = vst [vmem:[#allocation2 + $0xf8] sm:$0xff] %v619
      %733 = vst [vmem:[#allocation2 + $0x100] sm:$0xff] %v622
      %734 = vst [vmem:[#allocation2 + $0x108] sm:$0xff] %v624
      %735 = vst [vmem:[#allocation2 + $0x110] sm:$0xff] %v627
      %736 = vst [vmem:[#allocation2 + $0x118] sm:$0xff] %v629
      %737 = vst [vmem:[#allocation2 + $0x120] sm:$0xff] %v632
      %738 = vst [vmem:[#allocation2 + $0x128] sm:$0xff] %v634
      %739 = vst [vmem:[#allocation2 + $0x130] sm:$0xff] %v637
      %740 = vst [vmem:[#allocation2 + $0x138] sm:$0xff] %v639
      %741 = vst [vmem:[#allocation2 + $0x140] sm:$0xff] %v642
      %742 = vst [vmem:[#allocation2 + $0x148] sm:$0xff] %v644
      %743 = vst [vmem:[#allocation2 + $0x150] sm:$0xff] %v647
      %744 = vst [vmem:[#allocation2 + $0x158] sm:$0xff] %v649
      %745 = vst [vmem:[#allocation2 + $0x160] sm:$0xff] %v652
      %746 = vst [vmem:[#allocation2 + $0x168] sm:$0xff] %v654
      %747 = vst [vmem:[#allocation2 + $0x170] sm:$0xff] %v657
      %748 = vst [vmem:[#allocation2 + $0x178] sm:$0xff] %v659
      %749 = vst [vmem:[#allocation2 + $0x180] sm:$0xff] %v662
      %750 = vst [vmem:[#allocation2 + $0x188] sm:$0xff] %v664
      %751 = vst [vmem:[#allocation2 + $0x190] sm:$0xff] %v667
      %752 = vst [vmem:[#allocation2 + $0x198] sm:$0xff] %v669
      %753 = vst [vmem:[#allocation2 + $0x1a0] sm:$0xff] %v672
      %754 = vst [vmem:[#allocation2 + $0x1a8] sm:$0xff] %v674
      %755 = vst [vmem:[#allocation2 + $0x1b0] sm:$0xff] %v677
      %756 = vst [vmem:[#allocation2 + $0x1b8] sm:$0xff] %v679
      %757 = vst [vmem:[#allocation2 + $0x1c0] sm:$0xff] %v682
      %758 = vst [vmem:[#allocation2 + $0x1c8] sm:$0xff] %v684
      %759 = vst [vmem:[#allocation2 + $0x1d0] sm:$0xff] %v687
      %760 = vst [vmem:[#allocation2 + $0x1d8] sm:$0xff] %v689
      %761 = vst [vmem:[#allocation2 + $0x1e0] sm:$0xff] %v692
      %762 = vst [vmem:[#allocation2 + $0x1e8] sm:$0xff] %v694
      %763 = vst [vmem:[#allocation2 + $0x1f0] sm:$0xff] %v697
      %764 = vst [vmem:[#allocation2 + $0x1f8] sm:$0xff] %v699
      %s765 = scalar_lea.vmem %s192, 16
      %v766 = vld [vmem:[%s765] sm:$0xf]
      %v767 = vld [vmem:[%s765 + $0x4] sm:$0xf]
      %v768 = vld [vmem:[%s765 + $0x8] sm:$0xf]
      %v769 = vld [vmem:[%s765 + $0xc] sm:$0xf]
      %v770 = vld [vmem:[%s765 + $0x10] sm:$0xf]
      %v771 = vld [vmem:[%s765 + $0x14] sm:$0xf]
      %v772 = vld [vmem:[%s765 + $0x18] sm:$0xf]
      %v773 = vld [vmem:[%s765 + $0x1c] sm:$0xf]
      %v774 = vld [vmem:[%s765 + $0x20] sm:$0xf]
      %v775 = vld [vmem:[%s765 + $0x24] sm:$0xf]
      %v776 = vld [vmem:[%s765 + $0x28] sm:$0xf]
      %v777 = vld [vmem:[%s765 + $0x2c] sm:$0xf]
      %v778 = vld [vmem:[%s765 + $0x30] sm:$0xf]
      %v779 = vld [vmem:[%s765 + $0x34] sm:$0xf]
      %v780 = vld [vmem:[%s765 + $0x38] sm:$0xf]
      %v781 = vld [vmem:[%s765 + $0x3c] sm:$0xf]
      %v782 = vld [vmem:[%s765 + $0x40] sm:$0xf]
      %v783 = vld [vmem:[%s765 + $0x44] sm:$0xf]
      %v784 = vld [vmem:[%s765 + $0x48] sm:$0xf]
      %v785 = vld [vmem:[%s765 + $0x4c] sm:$0xf]
      %v786 = vld [vmem:[%s765 + $0x50] sm:$0xf]
      %v787 = vld [vmem:[%s765 + $0x54] sm:$0xf]
      %v788 = vld [vmem:[%s765 + $0x58] sm:$0xf]
      %v789 = vld [vmem:[%s765 + $0x5c] sm:$0xf]
      %v790 = vld [vmem:[%s765 + $0x60] sm:$0xf]
      %v791 = vld [vmem:[%s765 + $0x64] sm:$0xf]
      %v792 = vld [vmem:[%s765 + $0x68] sm:$0xf]
      %v793 = vld [vmem:[%s765 + $0x6c] sm:$0xf]
      %v794 = vld [vmem:[%s765 + $0x70] sm:$0xf]
      %v795 = vld [vmem:[%s765 + $0x74] sm:$0xf]
      %v796 = vld [vmem:[%s765 + $0x78] sm:$0xf]
      %v797 = vld [vmem:[%s765 + $0x7c] sm:$0xf]
      %v798 = vld [vmem:[%s765 + $0x80] sm:$0xf]
      %v799 = vld [vmem:[%s765 + $0x84] sm:$0xf]
      %v800 = vld [vmem:[%s765 + $0x88] sm:$0xf]
      %v801 = vld [vmem:[%s765 + $0x8c] sm:$0xf]
      %v802 = vld [vmem:[%s765 + $0x90] sm:$0xf]
      %v803 = vld [vmem:[%s765 + $0x94] sm:$0xf]
      %v804 = vld [vmem:[%s765 + $0x98] sm:$0xf]
      %v805 = vld [vmem:[%s765 + $0x9c] sm:$0xf]
      %v806 = vld [vmem:[%s765 + $0xa0] sm:$0xf]
      %v807 = vld [vmem:[%s765 + $0xa4] sm:$0xf]
      %v808 = vld [vmem:[%s765 + $0xa8] sm:$0xf]
      %v809 = vld [vmem:[%s765 + $0xac] sm:$0xf]
      %v810 = vld [vmem:[%s765 + $0xb0] sm:$0xf]
      %v811 = vld [vmem:[%s765 + $0xb4] sm:$0xf]
      %v812 = vld [vmem:[%s765 + $0xb8] sm:$0xf]
      %v813 = vld [vmem:[%s765 + $0xbc] sm:$0xf]
      %v814 = vld [vmem:[%s765 + $0xc0] sm:$0xf]
      %v815 = vld [vmem:[%s765 + $0xc4] sm:$0xf]
      %v816 = vld [vmem:[%s765 + $0xc8] sm:$0xf]
      %v817 = vld [vmem:[%s765 + $0xcc] sm:$0xf]
      %v818 = vld [vmem:[%s765 + $0xd0] sm:$0xf]
      %v819 = vld [vmem:[%s765 + $0xd4] sm:$0xf]
      %v820 = vld [vmem:[%s765 + $0xd8] sm:$0xf]
      %v821 = vld [vmem:[%s765 + $0xdc] sm:$0xf]
      %v822 = vld [vmem:[%s765 + $0xe0] sm:$0xf]
      %v823 = vld [vmem:[%s765 + $0xe4] sm:$0xf]
      %v824 = vld [vmem:[%s765 + $0xe8] sm:$0xf]
      %v825 = vld [vmem:[%s765 + $0xec] sm:$0xf]
      %v826 = vld [vmem:[%s765 + $0xf0] sm:$0xf]
      %v827 = vld [vmem:[%s765 + $0xf4] sm:$0xf]
      %v828 = vld [vmem:[%s765 + $0xf8] sm:$0xf]
      %v829 = vld [vmem:[%s765 + $0xfc] sm:$0xf]
      %s830 = scalar_lea.vmem %s1, 8
      %v831 = vld [vmem:[%s830] sm:$0xf]
      %v832 = vld [vmem:[%s830 + $0x4] sm:$0x3]
      %v897 = vunpack.c.l.b16 %v766
      %v898 = vunpack.c.l.b16 %v767
      %v899 = vunpack.c.l.b16 %v768
      %v900 = vunpack.c.l.b16 %v769
      %v901 = vunpack.c.l.b16 %v770
      %v902 = vunpack.c.l.b16 %v771
      %v903 = vunpack.c.l.b16 %v772
      %v904 = vunpack.c.l.b16 %v773
      %v905 = vunpack.c.l.b16 %v774
      %v906 = vunpack.c.l.b16 %v775
      %v907 = vunpack.c.l.b16 %v776
      %v908 = vunpack.c.l.b16 %v777
      %v909 = vunpack.c.l.b16 %v778
      %v910 = vunpack.c.l.b16 %v779
      %v911 = vunpack.c.l.b16 %v780
      %v912 = vunpack.c.l.b16 %v781
      %v913 = vunpack.c.l.b16 %v782
      %v914 = vunpack.c.l.b16 %v783
      %v915 = vunpack.c.l.b16 %v784
      %v916 = vunpack.c.l.b16 %v785
      %v917 = vunpack.c.l.b16 %v786
      %v918 = vunpack.c.l.b16 %v787
      %v919 = vunpack.c.l.b16 %v788
      %v920 = vunpack.c.l.b16 %v789
      %v921 = vunpack.c.l.b16 %v790
      %v922 = vunpack.c.l.b16 %v791
      %v923 = vunpack.c.l.b16 %v792
      %v924 = vunpack.c.l.b16 %v793
      %v925 = vunpack.c.l.b16 %v794
      %v926 = vunpack.c.l.b16 %v795
      %v927 = vunpack.c.l.b16 %v796
      %v928 = vunpack.c.l.b16 %v797
      %v929 = vunpack.c.l.b16 %v798
      %v930 = vunpack.c.l.b16 %v799
      %v931 = vunpack.c.l.b16 %v800
      %v932 = vunpack.c.l.b16 %v801
      %v933 = vunpack.c.l.b16 %v802
      %v934 = vunpack.c.l.b16 %v803
      %v935 = vunpack.c.l.b16 %v804
      %v936 = vunpack.c.l.b16 %v805
      %v937 = vunpack.c.l.b16 %v806
      %v938 = vunpack.c.l.b16 %v807
      %v939 = vunpack.c.l.b16 %v808
      %v940 = vunpack.c.l.b16 %v809
      %v941 = vunpack.c.l.b16 %v810
      %v942 = vunpack.c.l.b16 %v811
      %v943 = vunpack.c.l.b16 %v812
      %v944 = vunpack.c.l.b16 %v813
      %v945 = vunpack.c.l.b16 %v814
      %v946 = vunpack.c.l.b16 %v815
      %v947 = vunpack.c.l.b16 %v816
      %v948 = vunpack.c.l.b16 %v817
      %v949 = vunpack.c.l.b16 %v818
      %v950 = vunpack.c.l.b16 %v819
      %v951 = vunpack.c.l.b16 %v820
      %v952 = vunpack.c.l.b16 %v821
      %v953 = vunpack.c.l.b16 %v822
      %v954 = vunpack.c.l.b16 %v823
      %v955 = vunpack.c.l.b16 %v824
      %v956 = vunpack.c.l.b16 %v825
      %v957 = vunpack.c.l.b16 %v826
      %v958 = vunpack.c.l.b16 %v827
      %v959 = vunpack.c.l.b16 %v828
      %v960 = vunpack.c.l.b16 %v829
      %v961 = vpack.c.b16 %v898, %v897
      %v962 = vpack.c.b16 %v900, %v899
      %v963 = vpack.c.b16 %v902, %v901
      %v964 = vpack.c.b16 %v904, %v903
      %v965 = vpack.c.b16 %v906, %v905
      %v966 = vpack.c.b16 %v908, %v907
      %v967 = vpack.c.b16 %v910, %v909
      %v968 = vpack.c.b16 %v912, %v911
      %v969 = vpack.c.b16 %v914, %v913
      %v970 = vpack.c.b16 %v916, %v915
      %v971 = vpack.c.b16 %v918, %v917
      %v972 = vpack.c.b16 %v920, %v919
      %v973 = vpack.c.b16 %v922, %v921
      %v974 = vpack.c.b16 %v924, %v923
      %v975 = vpack.c.b16 %v926, %v925
      %v976 = vpack.c.b16 %v928, %v927
      %v977 = vpack.c.b16 %v930, %v929
      %v978 = vpack.c.b16 %v932, %v931
      %v979 = vpack.c.b16 %v934, %v933
      %v980 = vpack.c.b16 %v936, %v935
      %v981 = vpack.c.b16 %v938, %v937
      %v982 = vpack.c.b16 %v940, %v939
      %v983 = vpack.c.b16 %v942, %v941
      %v984 = vpack.c.b16 %v944, %v943
      %v985 = vpack.c.b16 %v946, %v945
      %v986 = vpack.c.b16 %v948, %v947
      %v987 = vpack.c.b16 %v950, %v949
      %v988 = vpack.c.b16 %v952, %v951
      %v989 = vpack.c.b16 %v954, %v953
      %v990 = vpack.c.b16 %v956, %v955
      %v991 = vpack.c.b16 %v958, %v957
      %v992 = vpack.c.b16 %v960, %v959
      %v995 = vunpack.c.l.b16 %v831
      %v996 = vunpack.c.l.b16 %v832
      %v997 = vpack.c.b16 %v996, %v995
      %v999 = vsel %vm431, %v961, 0
      %v1002 = vsel %vm431, %v962, 0
      %v1005 = vsel %vm431, %v963, 0
      %v1008 = vsel %vm431, %v964, 0
      %v1011 = vsel %vm431, %v965, 0
      %v1014 = vsel %vm431, %v966, 0
      %v1017 = vsel %vm431, %v967, 0
      %v1020 = vsel %vm431, %v968, 0
      %v1023 = vsel %vm431, %v969, 0
      %v1026 = vsel %vm431, %v970, 0
      %v1029 = vsel %vm431, %v971, 0
      %v1032 = vsel %vm431, %v972, 0
      %v1035 = vsel %vm431, %v973, 0
      %v1038 = vsel %vm431, %v974, 0
      %v1041 = vsel %vm431, %v975, 0
      %v1044 = vsel %vm431, %v976, 0
      %v1047 = vsel %vm431, %v977, 0
      %v1050 = vsel %vm431, %v978, 0
      %v1053 = vsel %vm431, %v979, 0
      %v1056 = vsel %vm431, %v980, 0
      %v1059 = vsel %vm431, %v981, 0
      %v1062 = vsel %vm431, %v982, 0
      %v1065 = vsel %vm431, %v983, 0
      %v1068 = vsel %vm431, %v984, 0
      %v1071 = vsel %vm431, %v985, 0
      %v1074 = vsel %vm431, %v986, 0
      %v1077 = vsel %vm431, %v987, 0
      %v1080 = vsel %vm431, %v988, 0
      %v1083 = vsel %vm431, %v989, 0
      %v1086 = vsel %vm431, %v990, 0
      %v1089 = vsel %vm431, %v991, 0
      %v1092 = vsel %vm431, %v992, 0
      %v1095 = vsel %vm528, %v997, 0
      %1097 = vmatpush.bf16.msra.mxu0 0
      %1098 = vmatpush.bf16.msra.mxu0 0
      %1099 = vmatpush.bf16.msra.mxu0 0
      %1100 = vmatpush.bf16.msra.mxu0 0
      %1101 = vmatpush.bf16.msra.mxu0 0
      %1102 = vmatpush.bf16.msra.mxu0 0
      %1103 = vmatpush.bf16.msra.mxu0 0
      %1104 = vmatpush.bf16.msra.mxu0 %v1095
      %1105 = vmatmul.bf16.gmra.mxu0 %v999
      %v1106 = vpop.f32.mrf.mxu0
      %v1107 = vadd.f32 0.0, %v1106
      %v1108 = vpop.f32.mrf.mxu0
      %v1109 = vadd.f32 0.0, %v1108
      %1110 = vmatmul.bf16.gmra.mxu0 %v1002
      %v1111 = vpop.f32.mrf.mxu0
      %v1112 = vadd.f32 0.0, %v1111
      %v1113 = vpop.f32.mrf.mxu0
      %v1114 = vadd.f32 0.0, %v1113
      %1115 = vmatmul.bf16.gmra.mxu0 %v1005
      %v1116 = vpop.f32.mrf.mxu0
      %v1117 = vadd.f32 0.0, %v1116
      %v1118 = vpop.f32.mrf.mxu0
      %v1119 = vadd.f32 0.0, %v1118
      %1120 = vmatmul.bf16.gmra.mxu0 %v1008
      %v1121 = vpop.f32.mrf.mxu0
      %v1122 = vadd.f32 0.0, %v1121
      %v1123 = vpop.f32.mrf.mxu0
      %v1124 = vadd.f32 0.0, %v1123
      %1125 = vmatmul.bf16.gmra.mxu0 %v1011
      %v1126 = vpop.f32.mrf.mxu0
      %v1127 = vadd.f32 0.0, %v1126
      %v1128 = vpop.f32.mrf.mxu0
      %v1129 = vadd.f32 0.0, %v1128
      %1130 = vmatmul.bf16.gmra.mxu0 %v1014
      %v1131 = vpop.f32.mrf.mxu0
      %v1132 = vadd.f32 0.0, %v1131
      %v1133 = vpop.f32.mrf.mxu0
      %v1134 = vadd.f32 0.0, %v1133
      %1135 = vmatmul.bf16.gmra.mxu0 %v1017
      %v1136 = vpop.f32.mrf.mxu0
      %v1137 = vadd.f32 0.0, %v1136
      %v1138 = vpop.f32.mrf.mxu0
      %v1139 = vadd.f32 0.0, %v1138
      %1140 = vmatmul.bf16.gmra.mxu0 %v1020
      %v1141 = vpop.f32.mrf.mxu0
      %v1142 = vadd.f32 0.0, %v1141
      %v1143 = vpop.f32.mrf.mxu0
      %v1144 = vadd.f32 0.0, %v1143
      %1145 = vmatmul.bf16.gmra.mxu0 %v1023
      %v1146 = vpop.f32.mrf.mxu0
      %v1147 = vadd.f32 0.0, %v1146
      %v1148 = vpop.f32.mrf.mxu0
      %v1149 = vadd.f32 0.0, %v1148
      %1150 = vmatmul.bf16.gmra.mxu0 %v1026
      %v1151 = vpop.f32.mrf.mxu0
      %v1152 = vadd.f32 0.0, %v1151
      %v1153 = vpop.f32.mrf.mxu0
      %v1154 = vadd.f32 0.0, %v1153
      %1155 = vmatmul.bf16.gmra.mxu0 %v1029
      %v1156 = vpop.f32.mrf.mxu0
      %v1157 = vadd.f32 0.0, %v1156
      %v1158 = vpop.f32.mrf.mxu0
      %v1159 = vadd.f32 0.0, %v1158
      %1160 = vmatmul.bf16.gmra.mxu0 %v1032
      %v1161 = vpop.f32.mrf.mxu0
      %v1162 = vadd.f32 0.0, %v1161
      %v1163 = vpop.f32.mrf.mxu0
      %v1164 = vadd.f32 0.0, %v1163
      %1165 = vmatmul.bf16.gmra.mxu0 %v1035
      %v1166 = vpop.f32.mrf.mxu0
      %v1167 = vadd.f32 0.0, %v1166
      %v1168 = vpop.f32.mrf.mxu0
      %v1169 = vadd.f32 0.0, %v1168
      %1170 = vmatmul.bf16.gmra.mxu0 %v1038
      %v1171 = vpop.f32.mrf.mxu0
      %v1172 = vadd.f32 0.0, %v1171
      %v1173 = vpop.f32.mrf.mxu0
      %v1174 = vadd.f32 0.0, %v1173
      %1175 = vmatmul.bf16.gmra.mxu0 %v1041
      %v1176 = vpop.f32.mrf.mxu0
      %v1177 = vadd.f32 0.0, %v1176
      %v1178 = vpop.f32.mrf.mxu0
      %v1179 = vadd.f32 0.0, %v1178
      %1180 = vmatmul.bf16.gmra.mxu0 %v1044
      %v1181 = vpop.f32.mrf.mxu0
      %v1182 = vadd.f32 0.0, %v1181
      %v1183 = vpop.f32.mrf.mxu0
      %v1184 = vadd.f32 0.0, %v1183
      %1185 = vmatmul.bf16.gmra.mxu0 %v1047
      %v1186 = vpop.f32.mrf.mxu0
      %v1187 = vadd.f32 0.0, %v1186
      %v1188 = vpop.f32.mrf.mxu0
      %v1189 = vadd.f32 0.0, %v1188
      %1190 = vmatmul.bf16.gmra.mxu0 %v1050
      %v1191 = vpop.f32.mrf.mxu0
      %v1192 = vadd.f32 0.0, %v1191
      %v1193 = vpop.f32.mrf.mxu0
      %v1194 = vadd.f32 0.0, %v1193
      %1195 = vmatmul.bf16.gmra.mxu0 %v1053
      %v1196 = vpop.f32.mrf.mxu0
      %v1197 = vadd.f32 0.0, %v1196
      %v1198 = vpop.f32.mrf.mxu0
      %v1199 = vadd.f32 0.0, %v1198
      %1200 = vmatmul.bf16.gmra.mxu0 %v1056
      %v1201 = vpop.f32.mrf.mxu0
      %v1202 = vadd.f32 0.0, %v1201
      %v1203 = vpop.f32.mrf.mxu0
      %v1204 = vadd.f32 0.0, %v1203
      %1205 = vmatmul.bf16.gmra.mxu0 %v1059
      %v1206 = vpop.f32.mrf.mxu0
      %v1207 = vadd.f32 0.0, %v1206
      %v1208 = vpop.f32.mrf.mxu0
      %v1209 = vadd.f32 0.0, %v1208
      %1210 = vmatmul.bf16.gmra.mxu0 %v1062
      %v1211 = vpop.f32.mrf.mxu0
      %v1212 = vadd.f32 0.0, %v1211
      %v1213 = vpop.f32.mrf.mxu0
      %v1214 = vadd.f32 0.0, %v1213
      %1215 = vmatmul.bf16.gmra.mxu0 %v1065
      %v1216 = vpop.f32.mrf.mxu0
      %v1217 = vadd.f32 0.0, %v1216
      %v1218 = vpop.f32.mrf.mxu0
      %v1219 = vadd.f32 0.0, %v1218
      %1220 = vmatmul.bf16.gmra.mxu0 %v1068
      %v1221 = vpop.f32.mrf.mxu0
      %v1222 = vadd.f32 0.0, %v1221
      %v1223 = vpop.f32.mrf.mxu0
      %v1224 = vadd.f32 0.0, %v1223
      %1225 = vmatmul.bf16.gmra.mxu0 %v1071
      %v1226 = vpop.f32.mrf.mxu0
      %v1227 = vadd.f32 0.0, %v1226
      %v1228 = vpop.f32.mrf.mxu0
      %v1229 = vadd.f32 0.0, %v1228
      %1230 = vmatmul.bf16.gmra.mxu0 %v1074
      %v1231 = vpop.f32.mrf.mxu0
      %v1232 = vadd.f32 0.0, %v1231
      %v1233 = vpop.f32.mrf.mxu0
      %v1234 = vadd.f32 0.0, %v1233
      %1235 = vmatmul.bf16.gmra.mxu0 %v1077
      %v1236 = vpop.f32.mrf.mxu0
      %v1237 = vadd.f32 0.0, %v1236
      %v1238 = vpop.f32.mrf.mxu0
      %v1239 = vadd.f32 0.0, %v1238
      %1240 = vmatmul.bf16.gmra.mxu0 %v1080
      %v1241 = vpop.f32.mrf.mxu0
      %v1242 = vadd.f32 0.0, %v1241
      %v1243 = vpop.f32.mrf.mxu0
      %v1244 = vadd.f32 0.0, %v1243
      %1245 = vmatmul.bf16.gmra.mxu0 %v1083
      %v1246 = vpop.f32.mrf.mxu0
      %v1247 = vadd.f32 0.0, %v1246
      %v1248 = vpop.f32.mrf.mxu0
      %v1249 = vadd.f32 0.0, %v1248
      %1250 = vmatmul.bf16.gmra.mxu0 %v1086
      %v1251 = vpop.f32.mrf.mxu0
      %v1252 = vadd.f32 0.0, %v1251
      %v1253 = vpop.f32.mrf.mxu0
      %v1254 = vadd.f32 0.0, %v1253
      %1255 = vmatmul.bf16.gmra.mxu0 %v1089
      %v1256 = vpop.f32.mrf.mxu0
      %v1257 = vadd.f32 0.0, %v1256
      %v1258 = vpop.f32.mrf.mxu0
      %v1259 = vadd.f32 0.0, %v1258
      %1260 = vmatmul.bf16.gmra.mxu0 %v1092
      %v1261 = vpop.f32.mrf.mxu0
      %v1262 = vadd.f32 0.0, %v1261
      %v1263 = vpop.f32.mrf.mxu0
      %v1264 = vadd.f32 0.0, %v1263
      %1265 = vdwg.mxu0
      %v1266 = vld [vmem:[#allocation2] sm:$0xff]
      %v1267 = vld [vmem:[#allocation2 + $0x8] sm:$0xff]
      %v1268 = vld [vmem:[#allocation2 + $0x10] sm:$0xff]
      %v1269 = vld [vmem:[#allocation2 + $0x18] sm:$0xff]
      %v1270 = vld [vmem:[#allocation2 + $0x20] sm:$0xff]
      %v1271 = vld [vmem:[#allocation2 + $0x28] sm:$0xff]
      %v1272 = vld [vmem:[#allocation2 + $0x30] sm:$0xff]
      %v1273 = vld [vmem:[#allocation2 + $0x38] sm:$0xff]
      %v1274 = vld [vmem:[#allocation2 + $0x40] sm:$0xff]
      %v1275 = vld [vmem:[#allocation2 + $0x48] sm:$0xff]
      %v1276 = vld [vmem:[#allocation2 + $0x50] sm:$0xff]
      %v1277 = vld [vmem:[#allocation2 + $0x58] sm:$0xff]
      %v1278 = vld [vmem:[#allocation2 + $0x60] sm:$0xff]
      %v1279 = vld [vmem:[#allocation2 + $0x68] sm:$0xff]
      %v1280 = vld [vmem:[#allocation2 + $0x70] sm:$0xff]
      %v1281 = vld [vmem:[#allocation2 + $0x78] sm:$0xff]
      %v1282 = vld [vmem:[#allocation2 + $0x80] sm:$0xff]
      %v1283 = vld [vmem:[#allocation2 + $0x88] sm:$0xff]
      %v1284 = vld [vmem:[#allocation2 + $0x90] sm:$0xff]
      %v1285 = vld [vmem:[#allocation2 + $0x98] sm:$0xff]
      %v1286 = vld [vmem:[#allocation2 + $0xa0] sm:$0xff]
      %v1287 = vld [vmem:[#allocation2 + $0xa8] sm:$0xff]
      %v1288 = vld [vmem:[#allocation2 + $0xb0] sm:$0xff]
      %v1289 = vld [vmem:[#allocation2 + $0xb8] sm:$0xff]
      %v1290 = vld [vmem:[#allocation2 + $0xc0] sm:$0xff]
      %v1291 = vld [vmem:[#allocation2 + $0xc8] sm:$0xff]
      %v1292 = vld [vmem:[#allocation2 + $0xd0] sm:$0xff]
      %v1293 = vld [vmem:[#allocation2 + $0xd8] sm:$0xff]
      %v1294 = vld [vmem:[#allocation2 + $0xe0] sm:$0xff]
      %v1295 = vld [vmem:[#allocation2 + $0xe8] sm:$0xff]
      %v1296 = vld [vmem:[#allocation2 + $0xf0] sm:$0xff]
      %v1297 = vld [vmem:[#allocation2 + $0xf8] sm:$0xff]
      %v1298 = vld [vmem:[#allocation2 + $0x100] sm:$0xff]
      %v1299 = vld [vmem:[#allocation2 + $0x108] sm:$0xff]
      %v1300 = vld [vmem:[#allocation2 + $0x110] sm:$0xff]
      %v1301 = vld [vmem:[#allocation2 + $0x118] sm:$0xff]
      %v1302 = vld [vmem:[#allocation2 + $0x120] sm:$0xff]
      %v1303 = vld [vmem:[#allocation2 + $0x128] sm:$0xff]
      %v1304 = vld [vmem:[#allocation2 + $0x130] sm:$0xff]
      %v1305 = vld [vmem:[#allocation2 + $0x138] sm:$0xff]
      %v1306 = vld [vmem:[#allocation2 + $0x140] sm:$0xff]
      %v1307 = vld [vmem:[#allocation2 + $0x148] sm:$0xff]
      %v1308 = vld [vmem:[#allocation2 + $0x150] sm:$0xff]
      %v1309 = vld [vmem:[#allocation2 + $0x158] sm:$0xff]
      %v1310 = vld [vmem:[#allocation2 + $0x160] sm:$0xff]
      %v1311 = vld [vmem:[#allocation2 + $0x168] sm:$0xff]
      %v1312 = vld [vmem:[#allocation2 + $0x170] sm:$0xff]
      %v1313 = vld [vmem:[#allocation2 + $0x178] sm:$0xff]
      %v1314 = vld [vmem:[#allocation2 + $0x180] sm:$0xff]
      %v1315 = vld [vmem:[#allocation2 + $0x188] sm:$0xff]
      %v1316 = vld [vmem:[#allocation2 + $0x190] sm:$0xff]
      %v1317 = vld [vmem:[#allocation2 + $0x198] sm:$0xff]
      %v1318 = vld [vmem:[#allocation2 + $0x1a0] sm:$0xff]
      %v1319 = vld [vmem:[#allocation2 + $0x1a8] sm:$0xff]
      %v1320 = vld [vmem:[#allocation2 + $0x1b0] sm:$0xff]
      %v1321 = vld [vmem:[#allocation2 + $0x1b8] sm:$0xff]
      %v1322 = vld [vmem:[#allocation2 + $0x1c0] sm:$0xff]
      %v1323 = vld [vmem:[#allocation2 + $0x1c8] sm:$0xff]
      %v1324 = vld [vmem:[#allocation2 + $0x1d0] sm:$0xff]
      %v1325 = vld [vmem:[#allocation2 + $0x1d8] sm:$0xff]
      %v1326 = vld [vmem:[#allocation2 + $0x1e0] sm:$0xff]
      %v1327 = vld [vmem:[#allocation2 + $0x1e8] sm:$0xff]
      %v1328 = vld [vmem:[#allocation2 + $0x1f0] sm:$0xff]
      %v1329 = vld [vmem:[#allocation2 + $0x1f8] sm:$0xff]
      %v1330 = vadd.f32 %v1266, %v1107
      %v1331 = vadd.f32 %v1267, %v1109
      %v1332 = vadd.f32 %v1268, %v1112
      %v1333 = vadd.f32 %v1269, %v1114
      %v1334 = vadd.f32 %v1270, %v1117
      %v1335 = vadd.f32 %v1271, %v1119
      %v1336 = vadd.f32 %v1272, %v1122
      %v1337 = vadd.f32 %v1273, %v1124
      %v1338 = vadd.f32 %v1274, %v1127
      %v1339 = vadd.f32 %v1275, %v1129
      %v1340 = vadd.f32 %v1276, %v1132
      %v1341 = vadd.f32 %v1277, %v1134
      %v1342 = vadd.f32 %v1278, %v1137
      %v1343 = vadd.f32 %v1279, %v1139
      %v1344 = vadd.f32 %v1280, %v1142
      %v1345 = vadd.f32 %v1281, %v1144
      %v1346 = vadd.f32 %v1282, %v1147
      %v1347 = vadd.f32 %v1283, %v1149
      %v1348 = vadd.f32 %v1284, %v1152
      %v1349 = vadd.f32 %v1285, %v1154
      %v1350 = vadd.f32 %v1286, %v1157
      %v1351 = vadd.f32 %v1287, %v1159
      %v1352 = vadd.f32 %v1288, %v1162
      %v1353 = vadd.f32 %v1289, %v1164
      %v1354 = vadd.f32 %v1290, %v1167
      %v1355 = vadd.f32 %v1291, %v1169
      %v1356 = vadd.f32 %v1292, %v1172
      %v1357 = vadd.f32 %v1293, %v1174
      %v1358 = vadd.f32 %v1294, %v1177
      %v1359 = vadd.f32 %v1295, %v1179
      %v1360 = vadd.f32 %v1296, %v1182
      %v1361 = vadd.f32 %v1297, %v1184
      %v1362 = vadd.f32 %v1298, %v1187
      %v1363 = vadd.f32 %v1299, %v1189
      %v1364 = vadd.f32 %v1300, %v1192
      %v1365 = vadd.f32 %v1301, %v1194
      %v1366 = vadd.f32 %v1302, %v1197
      %v1367 = vadd.f32 %v1303, %v1199
      %v1368 = vadd.f32 %v1304, %v1202
      %v1369 = vadd.f32 %v1305, %v1204
      %v1370 = vadd.f32 %v1306, %v1207
      %v1371 = vadd.f32 %v1307, %v1209
      %v1372 = vadd.f32 %v1308, %v1212
      %v1373 = vadd.f32 %v1309, %v1214
      %v1374 = vadd.f32 %v1310, %v1217
      %v1375 = vadd.f32 %v1311, %v1219
      %v1376 = vadd.f32 %v1312, %v1222
      %v1377 = vadd.f32 %v1313, %v1224
      %v1378 = vadd.f32 %v1314, %v1227
      %v1379 = vadd.f32 %v1315, %v1229
      %v1380 = vadd.f32 %v1316, %v1232
      %v1381 = vadd.f32 %v1317, %v1234
      %v1382 = vadd.f32 %v1318, %v1237
      %v1383 = vadd.f32 %v1319, %v1239
      %v1384 = vadd.f32 %v1320, %v1242
      %v1385 = vadd.f32 %v1321, %v1244
      %v1386 = vadd.f32 %v1322, %v1247
      %v1387 = vadd.f32 %v1323, %v1249
      %v1388 = vadd.f32 %v1324, %v1252
      %v1389 = vadd.f32 %v1325, %v1254
      %v1390 = vadd.f32 %v1326, %v1257
      %v1391 = vadd.f32 %v1327, %v1259
      %v1392 = vadd.f32 %v1328, %v1262
      %v1393 = vadd.f32 %v1329, %v1264
      %1394 = vst [vmem:[#allocation2] sm:$0xff] %v1330
      %1395 = vst [vmem:[#allocation2 + $0x8] sm:$0xff] %v1331
      %1396 = vst [vmem:[#allocation2 + $0x10] sm:$0xff] %v1332
      %1397 = vst [vmem:[#allocation2 + $0x18] sm:$0xff] %v1333
      %1398 = vst [vmem:[#allocation2 + $0x20] sm:$0xff] %v1334
      %1399 = vst [vmem:[#allocation2 + $0x28] sm:$0xff] %v1335
      %1400 = vst [vmem:[#allocation2 + $0x30] sm:$0xff] %v1336
      %1401 = vst [vmem:[#allocation2 + $0x38] sm:$0xff] %v1337
      %1402 = vst [vmem:[#allocation2 + $0x40] sm:$0xff] %v1338
      %1403 = vst [vmem:[#allocation2 + $0x48] sm:$0xff] %v1339
      %1404 = vst [vmem:[#allocation2 + $0x50] sm:$0xff] %v1340
      %1405 = vst [vmem:[#allocation2 + $0x58] sm:$0xff] %v1341
      %1406 = vst [vmem:[#allocation2 + $0x60] sm:$0xff] %v1342
      %1407 = vst [vmem:[#allocation2 + $0x68] sm:$0xff] %v1343
      %1408 = vst [vmem:[#allocation2 + $0x70] sm:$0xff] %v1344
      %1409 = vst [vmem:[#allocation2 + $0x78] sm:$0xff] %v1345
      %1410 = vst [vmem:[#allocation2 + $0x80] sm:$0xff] %v1346
      %1411 = vst [vmem:[#allocation2 + $0x88] sm:$0xff] %v1347
      %1412 = vst [vmem:[#allocation2 + $0x90] sm:$0xff] %v1348
      %1413 = vst [vmem:[#allocation2 + $0x98] sm:$0xff] %v1349
      %1414 = vst [vmem:[#allocation2 + $0xa0] sm:$0xff] %v1350
      %1415 = vst [vmem:[#allocation2 + $0xa8] sm:$0xff] %v1351
      %1416 = vst [vmem:[#allocation2 + $0xb0] sm:$0xff] %v1352
      %1417 = vst [vmem:[#allocation2 + $0xb8] sm:$0xff] %v1353
      %1418 = vst [vmem:[#allocation2 + $0xc0] sm:$0xff] %v1354
      %1419 = vst [vmem:[#allocation2 + $0xc8] sm:$0xff] %v1355
      %1420 = vst [vmem:[#allocation2 + $0xd0] sm:$0xff] %v1356
      %1421 = vst [vmem:[#allocation2 + $0xd8] sm:$0xff] %v1357
      %1422 = vst [vmem:[#allocation2 + $0xe0] sm:$0xff] %v1358
      %1423 = vst [vmem:[#allocation2 + $0xe8] sm:$0xff] %v1359
      %1424 = vst [vmem:[#allocation2 + $0xf0] sm:$0xff] %v1360
      %1425 = vst [vmem:[#allocation2 + $0xf8] sm:$0xff] %v1361
      %1426 = vst [vmem:[#allocation2 + $0x100] sm:$0xff] %v1362
      %1427 = vst [vmem:[#allocation2 + $0x108] sm:$0xff] %v1363
      %1428 = vst [vmem:[#allocation2 + $0x110] sm:$0xff] %v1364
      %1429 = vst [vmem:[#allocation2 + $0x118] sm:$0xff] %v1365
      %1430 = vst [vmem:[#allocation2 + $0x120] sm:$0xff] %v1366
      %1431 = vst [vmem:[#allocation2 + $0x128] sm:$0xff] %v1367
      %1432 = vst [vmem:[#allocation2 + $0x130] sm:$0xff] %v1368
      %1433 = vst [vmem:[#allocation2 + $0x138] sm:$0xff] %v1369
      %1434 = vst [vmem:[#allocation2 + $0x140] sm:$0xff] %v1370
      %1435 = vst [vmem:[#allocation2 + $0x148] sm:$0xff] %v1371
      %1436 = vst [vmem:[#allocation2 + $0x150] sm:$0xff] %v1372
      %1437 = vst [vmem:[#allocation2 + $0x158] sm:$0xff] %v1373
      %1438 = vst [vmem:[#allocation2 + $0x160] sm:$0xff] %v1374
      %1439 = vst [vmem:[#allocation2 + $0x168] sm:$0xff] %v1375
      %1440 = vst [vmem:[#allocation2 + $0x170] sm:$0xff] %v1376
      %1441 = vst [vmem:[#allocation2 + $0x178] sm:$0xff] %v1377
      %1442 = vst [vmem:[#allocation2 + $0x180] sm:$0xff] %v1378
      %1443 = vst [vmem:[#allocation2 + $0x188] sm:$0xff] %v1379
      %1444 = vst [vmem:[#allocation2 + $0x190] sm:$0xff] %v1380
      %1445 = vst [vmem:[#allocation2 + $0x198] sm:$0xff] %v1381
      %1446 = vst [vmem:[#allocation2 + $0x1a0] sm:$0xff] %v1382
      %1447 = vst [vmem:[#allocation2 + $0x1a8] sm:$0xff] %v1383
      %1448 = vst [vmem:[#allocation2 + $0x1b0] sm:$0xff] %v1384
      %1449 = vst [vmem:[#allocation2 + $0x1b8] sm:$0xff] %v1385
      %1450 = vst [vmem:[#allocation2 + $0x1c0] sm:$0xff] %v1386
      %1451 = vst [vmem:[#allocation2 + $0x1c8] sm:$0xff] %v1387
      %1452 = vst [vmem:[#allocation2 + $0x1d0] sm:$0xff] %v1388
      %1453 = vst [vmem:[#allocation2 + $0x1d8] sm:$0xff] %v1389
      %1454 = vst [vmem:[#allocation2 + $0x1e0] sm:$0xff] %v1390
      %1455 = vst [vmem:[#allocation2 + $0x1e8] sm:$0xff] %v1391
      %1456 = vst [vmem:[#allocation2 + $0x1f0] sm:$0xff] %v1392
      %1457 = vst [vmem:[#allocation2 + $0x1f8] sm:$0xff] %v1393
      %s1458 = scalar_lea.vmem %s192, 32
      %v1459 = vld [vmem:[%s1458] sm:$0xf]
      %v1460 = vld [vmem:[%s1458 + $0x4] sm:$0xf]
      %v1461 = vld [vmem:[%s1458 + $0x8] sm:$0xf]
      %v1462 = vld [vmem:[%s1458 + $0xc] sm:$0xf]
      %v1463 = vld [vmem:[%s1458 + $0x10] sm:$0xf]
      %v1464 = vld [vmem:[%s1458 + $0x14] sm:$0xf]
      %v1465 = vld [vmem:[%s1458 + $0x18] sm:$0xf]
      %v1466 = vld [vmem:[%s1458 + $0x1c] sm:$0xf]
      %v1467 = vld [vmem:[%s1458 + $0x20] sm:$0xf]
      %v1468 = vld [vmem:[%s1458 + $0x24] sm:$0xf]
      %v1469 = vld [vmem:[%s1458 + $0x28] sm:$0xf]
      %v1470 = vld [vmem:[%s1458 + $0x2c] sm:$0xf]
      %v1471 = vld [vmem:[%s1458 + $0x30] sm:$0xf]
      %v1472 = vld [vmem:[%s1458 + $0x34] sm:$0xf]
      %v1473 = vld [vmem:[%s1458 + $0x38] sm:$0xf]
      %v1474 = vld [vmem:[%s1458 + $0x3c] sm:$0xf]
      %v1475 = vld [vmem:[%s1458 + $0x40] sm:$0xf]
      %v1476 = vld [vmem:[%s1458 + $0x44] sm:$0xf]
      %v1477 = vld [vmem:[%s1458 + $0x48] sm:$0xf]
      %v1478 = vld [vmem:[%s1458 + $0x4c] sm:$0xf]
      %v1479 = vld [vmem:[%s1458 + $0x50] sm:$0xf]
      %v1480 = vld [vmem:[%s1458 + $0x54] sm:$0xf]
      %v1481 = vld [vmem:[%s1458 + $0x58] sm:$0xf]
      %v1482 = vld [vmem:[%s1458 + $0x5c] sm:$0xf]
      %v1483 = vld [vmem:[%s1458 + $0x60] sm:$0xf]
      %v1484 = vld [vmem:[%s1458 + $0x64] sm:$0xf]
      %v1485 = vld [vmem:[%s1458 + $0x68] sm:$0xf]
      %v1486 = vld [vmem:[%s1458 + $0x6c] sm:$0xf]
      %v1487 = vld [vmem:[%s1458 + $0x70] sm:$0xf]
      %v1488 = vld [vmem:[%s1458 + $0x74] sm:$0xf]
      %v1489 = vld [vmem:[%s1458 + $0x78] sm:$0xf]
      %v1490 = vld [vmem:[%s1458 + $0x7c] sm:$0xf]
      %v1491 = vld [vmem:[%s1458 + $0x80] sm:$0xf]
      %v1492 = vld [vmem:[%s1458 + $0x84] sm:$0xf]
      %v1493 = vld [vmem:[%s1458 + $0x88] sm:$0xf]
      %v1494 = vld [vmem:[%s1458 + $0x8c] sm:$0xf]
      %v1495 = vld [vmem:[%s1458 + $0x90] sm:$0xf]
      %v1496 = vld [vmem:[%s1458 + $0x94] sm:$0xf]
      %v1497 = vld [vmem:[%s1458 + $0x98] sm:$0xf]
      %v1498 = vld [vmem:[%s1458 + $0x9c] sm:$0xf]
      %v1499 = vld [vmem:[%s1458 + $0xa0] sm:$0xf]
      %v1500 = vld [vmem:[%s1458 + $0xa4] sm:$0xf]
      %v1501 = vld [vmem:[%s1458 + $0xa8] sm:$0xf]
      %v1502 = vld [vmem:[%s1458 + $0xac] sm:$0xf]
      %v1503 = vld [vmem:[%s1458 + $0xb0] sm:$0xf]
      %v1504 = vld [vmem:[%s1458 + $0xb4] sm:$0xf]
      %v1505 = vld [vmem:[%s1458 + $0xb8] sm:$0xf]
      %v1506 = vld [vmem:[%s1458 + $0xbc] sm:$0xf]
      %v1507 = vld [vmem:[%s1458 + $0xc0] sm:$0xf]
      %v1508 = vld [vmem:[%s1458 + $0xc4] sm:$0xf]
      %v1509 = vld [vmem:[%s1458 + $0xc8] sm:$0xf]
      %v1510 = vld [vmem:[%s1458 + $0xcc] sm:$0xf]
      %v1511 = vld [vmem:[%s1458 + $0xd0] sm:$0xf]
      %v1512 = vld [vmem:[%s1458 + $0xd4] sm:$0xf]
      %v1513 = vld [vmem:[%s1458 + $0xd8] sm:$0xf]
      %v1514 = vld [vmem:[%s1458 + $0xdc] sm:$0xf]
      %v1515 = vld [vmem:[%s1458 + $0xe0] sm:$0xf]
      %v1516 = vld [vmem:[%s1458 + $0xe4] sm:$0xf]
      %v1517 = vld [vmem:[%s1458 + $0xe8] sm:$0xf]
      %v1518 = vld [vmem:[%s1458 + $0xec] sm:$0xf]
      %v1519 = vld [vmem:[%s1458 + $0xf0] sm:$0xf]
      %v1520 = vld [vmem:[%s1458 + $0xf4] sm:$0xf]
      %v1521 = vld [vmem:[%s1458 + $0xf8] sm:$0xf]
      %v1522 = vld [vmem:[%s1458 + $0xfc] sm:$0xf]
      %s1523 = scalar_lea.vmem %s1, 16
      %v1524 = vld [vmem:[%s1523] sm:$0xf]
      %v1525 = vld [vmem:[%s1523 + $0x4] sm:$0x3]
      %v1590 = vunpack.c.l.b16 %v1459
      %v1591 = vunpack.c.l.b16 %v1460
      %v1592 = vunpack.c.l.b16 %v1461
      %v1593 = vunpack.c.l.b16 %v1462
      %v1594 = vunpack.c.l.b16 %v1463
      %v1595 = vunpack.c.l.b16 %v1464
      %v1596 = vunpack.c.l.b16 %v1465
      %v1597 = vunpack.c.l.b16 %v1466
      %v1598 = vunpack.c.l.b16 %v1467
      %v1599 = vunpack.c.l.b16 %v1468
      %v1600 = vunpack.c.l.b16 %v1469
      %v1601 = vunpack.c.l.b16 %v1470
      %v1602 = vunpack.c.l.b16 %v1471
      %v1603 = vunpack.c.l.b16 %v1472
      %v1604 = vunpack.c.l.b16 %v1473
      %v1605 = vunpack.c.l.b16 %v1474
      %v1606 = vunpack.c.l.b16 %v1475
      %v1607 = vunpack.c.l.b16 %v1476
      %v1608 = vunpack.c.l.b16 %v1477
      %v1609 = vunpack.c.l.b16 %v1478
      %v1610 = vunpack.c.l.b16 %v1479
      %v1611 = vunpack.c.l.b16 %v1480
      %v1612 = vunpack.c.l.b16 %v1481
      %v1613 = vunpack.c.l.b16 %v1482
      %v1614 = vunpack.c.l.b16 %v1483
      %v1615 = vunpack.c.l.b16 %v1484
      %v1616 = vunpack.c.l.b16 %v1485
      %v1617 = vunpack.c.l.b16 %v1486
      %v1618 = vunpack.c.l.b16 %v1487
      %v1619 = vunpack.c.l.b16 %v1488
      %v1620 = vunpack.c.l.b16 %v1489
      %v1621 = vunpack.c.l.b16 %v1490
      %v1622 = vunpack.c.l.b16 %v1491
      %v1623 = vunpack.c.l.b16 %v1492
      %v1624 = vunpack.c.l.b16 %v1493
      %v1625 = vunpack.c.l.b16 %v1494
      %v1626 = vunpack.c.l.b16 %v1495
      %v1627 = vunpack.c.l.b16 %v1496
      %v1628 = vunpack.c.l.b16 %v1497
      %v1629 = vunpack.c.l.b16 %v1498
      %v1630 = vunpack.c.l.b16 %v1499
      %v1631 = vunpack.c.l.b16 %v1500
      %v1632 = vunpack.c.l.b16 %v1501
      %v1633 = vunpack.c.l.b16 %v1502
      %v1634 = vunpack.c.l.b16 %v1503
      %v1635 = vunpack.c.l.b16 %v1504
      %v1636 = vunpack.c.l.b16 %v1505
      %v1637 = vunpack.c.l.b16 %v1506
      %v1638 = vunpack.c.l.b16 %v1507
      %v1639 = vunpack.c.l.b16 %v1508
      %v1640 = vunpack.c.l.b16 %v1509
      %v1641 = vunpack.c.l.b16 %v1510
      %v1642 = vunpack.c.l.b16 %v1511
      %v1643 = vunpack.c.l.b16 %v1512
      %v1644 = vunpack.c.l.b16 %v1513
      %v1645 = vunpack.c.l.b16 %v1514
      %v1646 = vunpack.c.l.b16 %v1515
      %v1647 = vunpack.c.l.b16 %v1516
      %v1648 = vunpack.c.l.b16 %v1517
      %v1649 = vunpack.c.l.b16 %v1518
      %v1650 = vunpack.c.l.b16 %v1519
      %v1651 = vunpack.c.l.b16 %v1520
      %v1652 = vunpack.c.l.b16 %v1521
      %v1653 = vunpack.c.l.b16 %v1522
      %v1654 = vpack.c.b16 %v1591, %v1590
      %v1655 = vpack.c.b16 %v1593, %v1592
      %v1656 = vpack.c.b16 %v1595, %v1594
      %v1657 = vpack.c.b16 %v1597, %v1596
      %v1658 = vpack.c.b16 %v1599, %v1598
      %v1659 = vpack.c.b16 %v1601, %v1600
      %v1660 = vpack.c.b16 %v1603, %v1602
      %v1661 = vpack.c.b16 %v1605, %v1604
      %v1662 = vpack.c.b16 %v1607, %v1606
      %v1663 = vpack.c.b16 %v1609, %v1608
      %v1664 = vpack.c.b16 %v1611, %v1610
      %v1665 = vpack.c.b16 %v1613, %v1612
      %v1666 = vpack.c.b16 %v1615, %v1614
      %v1667 = vpack.c.b16 %v1617, %v1616
      %v1668 = vpack.c.b16 %v1619, %v1618
      %v1669 = vpack.c.b16 %v1621, %v1620
      %v1670 = vpack.c.b16 %v1623, %v1622
      %v1671 = vpack.c.b16 %v1625, %v1624
      %v1672 = vpack.c.b16 %v1627, %v1626
      %v1673 = vpack.c.b16 %v1629, %v1628
      %v1674 = vpack.c.b16 %v1631, %v1630
      %v1675 = vpack.c.b16 %v1633, %v1632
      %v1676 = vpack.c.b16 %v1635, %v1634
      %v1677 = vpack.c.b16 %v1637, %v1636
      %v1678 = vpack.c.b16 %v1639, %v1638
      %v1679 = vpack.c.b16 %v1641, %v1640
      %v1680 = vpack.c.b16 %v1643, %v1642
      %v1681 = vpack.c.b16 %v1645, %v1644
      %v1682 = vpack.c.b16 %v1647, %v1646
      %v1683 = vpack.c.b16 %v1649, %v1648
      %v1684 = vpack.c.b16 %v1651, %v1650
      %v1685 = vpack.c.b16 %v1653, %v1652
      %v1688 = vunpack.c.l.b16 %v1524
      %v1689 = vunpack.c.l.b16 %v1525
      %v1690 = vpack.c.b16 %v1689, %v1688
      %v1692 = vsel %vm431, %v1654, 0
      %v1695 = vsel %vm431, %v1655, 0
      %v1698 = vsel %vm431, %v1656, 0
      %v1701 = vsel %vm431, %v1657, 0
      %v1704 = vsel %vm431, %v1658, 0
      %v1707 = vsel %vm431, %v1659, 0
      %v1710 = vsel %vm431, %v1660, 0
      %v1713 = vsel %vm431, %v1661, 0
      %v1716 = vsel %vm431, %v1662, 0
      %v1719 = vsel %vm431, %v1663, 0
      %v1722 = vsel %vm431, %v1664, 0
      %v1725 = vsel %vm431, %v1665, 0
      %v1728 = vsel %vm431, %v1666, 0
      %v1731 = vsel %vm431, %v1667, 0
      %v1734 = vsel %vm431, %v1668, 0
      %v1737 = vsel %vm431, %v1669, 0
      %v1740 = vsel %vm431, %v1670, 0
      %v1743 = vsel %vm431, %v1671, 0
      %v1746 = vsel %vm431, %v1672, 0
      %v1749 = vsel %vm431, %v1673, 0
      %v1752 = vsel %vm431, %v1674, 0
      %v1755 = vsel %vm431, %v1675, 0
      %v1758 = vsel %vm431, %v1676, 0
      %v1761 = vsel %vm431, %v1677, 0
      %v1764 = vsel %vm431, %v1678, 0
      %v1767 = vsel %vm431, %v1679, 0
      %v1770 = vsel %vm431, %v1680, 0
      %v1773 = vsel %vm431, %v1681, 0
      %v1776 = vsel %vm431, %v1682, 0
      %v1779 = vsel %vm431, %v1683, 0
      %v1782 = vsel %vm431, %v1684, 0
      %v1785 = vsel %vm431, %v1685, 0
      %v1788 = vsel %vm528, %v1690, 0
      %1790 = vmatpush.bf16.msra.mxu0 0
      %1791 = vmatpush.bf16.msra.mxu0 0
      %1792 = vmatpush.bf16.msra.mxu0 0
      %1793 = vmatpush.bf16.msra.mxu0 0
      %1794 = vmatpush.bf16.msra.mxu0 0
      %1795 = vmatpush.bf16.msra.mxu0 0
      %1796 = vmatpush.bf16.msra.mxu0 0
      %1797 = vmatpush.bf16.msra.mxu0 %v1788
      %1798 = vmatmul.bf16.gmra.mxu0 %v1692
      %v1799 = vpop.f32.mrf.mxu0
      %v1800 = vadd.f32 0.0, %v1799
      %v1801 = vpop.f32.mrf.mxu0
      %v1802 = vadd.f32 0.0, %v1801
      %1803 = vmatmul.bf16.gmra.mxu0 %v1695
      %v1804 = vpop.f32.mrf.mxu0
      %v1805 = vadd.f32 0.0, %v1804
      %v1806 = vpop.f32.mrf.mxu0
      %v1807 = vadd.f32 0.0, %v1806
      %1808 = vmatmul.bf16.gmra.mxu0 %v1698
      %v1809 = vpop.f32.mrf.mxu0
      %v1810 = vadd.f32 0.0, %v1809
      %v1811 = vpop.f32.mrf.mxu0
      %v1812 = vadd.f32 0.0, %v1811
      %1813 = vmatmul.bf16.gmra.mxu0 %v1701
      %v1814 = vpop.f32.mrf.mxu0
      %v1815 = vadd.f32 0.0, %v1814
      %v1816 = vpop.f32.mrf.mxu0
      %v1817 = vadd.f32 0.0, %v1816
      %1818 = vmatmul.bf16.gmra.mxu0 %v1704
      %v1819 = vpop.f32.mrf.mxu0
      %v1820 = vadd.f32 0.0, %v1819
      %v1821 = vpop.f32.mrf.mxu0
      %v1822 = vadd.f32 0.0, %v1821
      %1823 = vmatmul.bf16.gmra.mxu0 %v1707
      %v1824 = vpop.f32.mrf.mxu0
      %v1825 = vadd.f32 0.0, %v1824
      %v1826 = vpop.f32.mrf.mxu0
      %v1827 = vadd.f32 0.0, %v1826
      %1828 = vmatmul.bf16.gmra.mxu0 %v1710
      %v1829 = vpop.f32.mrf.mxu0
      %v1830 = vadd.f32 0.0, %v1829
      %v1831 = vpop.f32.mrf.mxu0
      %v1832 = vadd.f32 0.0, %v1831
      %1833 = vmatmul.bf16.gmra.mxu0 %v1713
      %v1834 = vpop.f32.mrf.mxu0
      %v1835 = vadd.f32 0.0, %v1834
      %v1836 = vpop.f32.mrf.mxu0
      %v1837 = vadd.f32 0.0, %v1836
      %1838 = vmatmul.bf16.gmra.mxu0 %v1716
      %v1839 = vpop.f32.mrf.mxu0
      %v1840 = vadd.f32 0.0, %v1839
      %v1841 = vpop.f32.mrf.mxu0
      %v1842 = vadd.f32 0.0, %v1841
      %1843 = vmatmul.bf16.gmra.mxu0 %v1719
      %v1844 = vpop.f32.mrf.mxu0
      %v1845 = vadd.f32 0.0, %v1844
      %v1846 = vpop.f32.mrf.mxu0
      %v1847 = vadd.f32 0.0, %v1846
      %1848 = vmatmul.bf16.gmra.mxu0 %v1722
      %v1849 = vpop.f32.mrf.mxu0
      %v1850 = vadd.f32 0.0, %v1849
      %v1851 = vpop.f32.mrf.mxu0
      %v1852 = vadd.f32 0.0, %v1851
      %1853 = vmatmul.bf16.gmra.mxu0 %v1725
      %v1854 = vpop.f32.mrf.mxu0
      %v1855 = vadd.f32 0.0, %v1854
      %v1856 = vpop.f32.mrf.mxu0
      %v1857 = vadd.f32 0.0, %v1856
      %1858 = vmatmul.bf16.gmra.mxu0 %v1728
      %v1859 = vpop.f32.mrf.mxu0
      %v1860 = vadd.f32 0.0, %v1859
      %v1861 = vpop.f32.mrf.mxu0
      %v1862 = vadd.f32 0.0, %v1861
      %1863 = vmatmul.bf16.gmra.mxu0 %v1731
      %v1864 = vpop.f32.mrf.mxu0
      %v1865 = vadd.f32 0.0, %v1864
      %v1866 = vpop.f32.mrf.mxu0
      %v1867 = vadd.f32 0.0, %v1866
      %1868 = vmatmul.bf16.gmra.mxu0 %v1734
      %v1869 = vpop.f32.mrf.mxu0
      %v1870 = vadd.f32 0.0, %v1869
      %v1871 = vpop.f32.mrf.mxu0
      %v1872 = vadd.f32 0.0, %v1871
      %1873 = vmatmul.bf16.gmra.mxu0 %v1737
      %v1874 = vpop.f32.mrf.mxu0
      %v1875 = vadd.f32 0.0, %v1874
      %v1876 = vpop.f32.mrf.mxu0
      %v1877 = vadd.f32 0.0, %v1876
      %1878 = vmatmul.bf16.gmra.mxu0 %v1740
      %v1879 = vpop.f32.mrf.mxu0
      %v1880 = vadd.f32 0.0, %v1879
      %v1881 = vpop.f32.mrf.mxu0
      %v1882 = vadd.f32 0.0, %v1881
      %1883 = vmatmul.bf16.gmra.mxu0 %v1743
      %v1884 = vpop.f32.mrf.mxu0
      %v1885 = vadd.f32 0.0, %v1884
      %v1886 = vpop.f32.mrf.mxu0
      %v1887 = vadd.f32 0.0, %v1886
      %1888 = vmatmul.bf16.gmra.mxu0 %v1746
      %v1889 = vpop.f32.mrf.mxu0
      %v1890 = vadd.f32 0.0, %v1889
      %v1891 = vpop.f32.mrf.mxu0
      %v1892 = vadd.f32 0.0, %v1891
      %1893 = vmatmul.bf16.gmra.mxu0 %v1749
      %v1894 = vpop.f32.mrf.mxu0
      %v1895 = vadd.f32 0.0, %v1894
      %v1896 = vpop.f32.mrf.mxu0
      %v1897 = vadd.f32 0.0, %v1896
      %1898 = vmatmul.bf16.gmra.mxu0 %v1752
      %v1899 = vpop.f32.mrf.mxu0
      %v1900 = vadd.f32 0.0, %v1899
      %v1901 = vpop.f32.mrf.mxu0
      %v1902 = vadd.f32 0.0, %v1901
      %1903 = vmatmul.bf16.gmra.mxu0 %v1755
      %v1904 = vpop.f32.mrf.mxu0
      %v1905 = vadd.f32 0.0, %v1904
      %v1906 = vpop.f32.mrf.mxu0
      %v1907 = vadd.f32 0.0, %v1906
      %1908 = vmatmul.bf16.gmra.mxu0 %v1758
      %v1909 = vpop.f32.mrf.mxu0
      %v1910 = vadd.f32 0.0, %v1909
      %v1911 = vpop.f32.mrf.mxu0
      %v1912 = vadd.f32 0.0, %v1911
      %1913 = vmatmul.bf16.gmra.mxu0 %v1761
      %v1914 = vpop.f32.mrf.mxu0
      %v1915 = vadd.f32 0.0, %v1914
      %v1916 = vpop.f32.mrf.mxu0
      %v1917 = vadd.f32 0.0, %v1916
      %1918 = vmatmul.bf16.gmra.mxu0 %v1764
      %v1919 = vpop.f32.mrf.mxu0
      %v1920 = vadd.f32 0.0, %v1919
      %v1921 = vpop.f32.mrf.mxu0
      %v1922 = vadd.f32 0.0, %v1921
      %1923 = vmatmul.bf16.gmra.mxu0 %v1767
      %v1924 = vpop.f32.mrf.mxu0
      %v1925 = vadd.f32 0.0, %v1924
      %v1926 = vpop.f32.mrf.mxu0
      %v1927 = vadd.f32 0.0, %v1926
      %1928 = vmatmul.bf16.gmra.mxu0 %v1770
      %v1929 = vpop.f32.mrf.mxu0
      %v1930 = vadd.f32 0.0, %v1929
      %v1931 = vpop.f32.mrf.mxu0
      %v1932 = vadd.f32 0.0, %v1931
      %1933 = vmatmul.bf16.gmra.mxu0 %v1773
      %v1934 = vpop.f32.mrf.mxu0
      %v1935 = vadd.f32 0.0, %v1934
      %v1936 = vpop.f32.mrf.mxu0
      %v1937 = vadd.f32 0.0, %v1936
      %1938 = vmatmul.bf16.gmra.mxu0 %v1776
      %v1939 = vpop.f32.mrf.mxu0
      %v1940 = vadd.f32 0.0, %v1939
      %v1941 = vpop.f32.mrf.mxu0
      %v1942 = vadd.f32 0.0, %v1941
      %1943 = vmatmul.bf16.gmra.mxu0 %v1779
      %v1944 = vpop.f32.mrf.mxu0
      %v1945 = vadd.f32 0.0, %v1944
      %v1946 = vpop.f32.mrf.mxu0
      %v1947 = vadd.f32 0.0, %v1946
      %1948 = vmatmul.bf16.gmra.mxu0 %v1782
      %v1949 = vpop.f32.mrf.mxu0
      %v1950 = vadd.f32 0.0, %v1949
      %v1951 = vpop.f32.mrf.mxu0
      %v1952 = vadd.f32 0.0, %v1951
      %1953 = vmatmul.bf16.gmra.mxu0 %v1785
      %v1954 = vpop.f32.mrf.mxu0
      %v1955 = vadd.f32 0.0, %v1954
      %v1956 = vpop.f32.mrf.mxu0
      %v1957 = vadd.f32 0.0, %v1956
      %1958 = vdwg.mxu0
      %v1959 = vld [vmem:[#allocation2] sm:$0xff]
      %v1960 = vld [vmem:[#allocation2 + $0x8] sm:$0xff]
      %v1961 = vld [vmem:[#allocation2 + $0x10] sm:$0xff]
      %v1962 = vld [vmem:[#allocation2 + $0x18] sm:$0xff]
      %v1963 = vld [vmem:[#allocation2 + $0x20] sm:$0xff]
      %v1964 = vld [vmem:[#allocation2 + $0x28] sm:$0xff]
      %v1965 = vld [vmem:[#allocation2 + $0x30] sm:$0xff]
      %v1966 = vld [vmem:[#allocation2 + $0x38] sm:$0xff]
      %v1967 = vld [vmem:[#allocation2 + $0x40] sm:$0xff]
      %v1968 = vld [vmem:[#allocation2 + $0x48] sm:$0xff]
      %v1969 = vld [vmem:[#allocation2 + $0x50] sm:$0xff]
      %v1970 = vld [vmem:[#allocation2 + $0x58] sm:$0xff]
      %v1971 = vld [vmem:[#allocation2 + $0x60] sm:$0xff]
      %v1972 = vld [vmem:[#allocation2 + $0x68] sm:$0xff]
      %v1973 = vld [vmem:[#allocation2 + $0x70] sm:$0xff]
      %v1974 = vld [vmem:[#allocation2 + $0x78] sm:$0xff]
      %v1975 = vld [vmem:[#allocation2 + $0x80] sm:$0xff]
      %v1976 = vld [vmem:[#allocation2 + $0x88] sm:$0xff]
      %v1977 = vld [vmem:[#allocation2 + $0x90] sm:$0xff]
      %v1978 = vld [vmem:[#allocation2 + $0x98] sm:$0xff]
      %v1979 = vld [vmem:[#allocation2 + $0xa0] sm:$0xff]
      %v1980 = vld [vmem:[#allocation2 + $0xa8] sm:$0xff]
      %v1981 = vld [vmem:[#allocation2 + $0xb0] sm:$0xff]
      %v1982 = vld [vmem:[#allocation2 + $0xb8] sm:$0xff]
      %v1983 = vld [vmem:[#allocation2 + $0xc0] sm:$0xff]
      %v1984 = vld [vmem:[#allocation2 + $0xc8] sm:$0xff]
      %v1985 = vld [vmem:[#allocation2 + $0xd0] sm:$0xff]
      %v1986 = vld [vmem:[#allocation2 + $0xd8] sm:$0xff]
      %v1987 = vld [vmem:[#allocation2 + $0xe0] sm:$0xff]
      %v1988 = vld [vmem:[#allocation2 + $0xe8] sm:$0xff]
      %v1989 = vld [vmem:[#allocation2 + $0xf0] sm:$0xff]
      %v1990 = vld [vmem:[#allocation2 + $0xf8] sm:$0xff]
      %v1991 = vld [vmem:[#allocation2 + $0x100] sm:$0xff]
      %v1992 = vld [vmem:[#allocation2 + $0x108] sm:$0xff]
      %v1993 = vld [vmem:[#allocation2 + $0x110] sm:$0xff]
      %v1994 = vld [vmem:[#allocation2 + $0x118] sm:$0xff]
      %v1995 = vld [vmem:[#allocation2 + $0x120] sm:$0xff]
      %v1996 = vld [vmem:[#allocation2 + $0x128] sm:$0xff]
      %v1997 = vld [vmem:[#allocation2 + $0x130] sm:$0xff]
      %v1998 = vld [vmem:[#allocation2 + $0x138] sm:$0xff]
      %v1999 = vld [vmem:[#allocation2 + $0x140] sm:$0xff]
      %v2000 = vld [vmem:[#allocation2 + $0x148] sm:$0xff]
      %v2001 = vld [vmem:[#allocation2 + $0x150] sm:$0xff]
      %v2002 = vld [vmem:[#allocation2 + $0x158] sm:$0xff]
      %v2003 = vld [vmem:[#allocation2 + $0x160] sm:$0xff]
      %v2004 = vld [vmem:[#allocation2 + $0x168] sm:$0xff]
      %v2005 = vld [vmem:[#allocation2 + $0x170] sm:$0xff]
      %v2006 = vld [vmem:[#allocation2 + $0x178] sm:$0xff]
      %v2007 = vld [vmem:[#allocation2 + $0x180] sm:$0xff]
      %v2008 = vld [vmem:[#allocation2 + $0x188] sm:$0xff]
      %v2009 = vld [vmem:[#allocation2 + $0x190] sm:$0xff]
      %v2010 = vld [vmem:[#allocation2 + $0x198] sm:$0xff]
      %v2011 = vld [vmem:[#allocation2 + $0x1a0] sm:$0xff]
      %v2012 = vld [vmem:[#allocation2 + $0x1a8] sm:$0xff]
      %v2013 = vld [vmem:[#allocation2 + $0x1b0] sm:$0xff]
      %v2014 = vld [vmem:[#allocation2 + $0x1b8] sm:$0xff]
      %v2015 = vld [vmem:[#allocation2 + $0x1c0] sm:$0xff]
      %v2016 = vld [vmem:[#allocation2 + $0x1c8] sm:$0xff]
      %v2017 = vld [vmem:[#allocation2 + $0x1d0] sm:$0xff]
      %v2018 = vld [vmem:[#allocation2 + $0x1d8] sm:$0xff]
      %v2019 = vld [vmem:[#allocation2 + $0x1e0] sm:$0xff]
      %v2020 = vld [vmem:[#allocation2 + $0x1e8] sm:$0xff]
      %v2021 = vld [vmem:[#allocation2 + $0x1f0] sm:$0xff]
      %v2022 = vld [vmem:[#allocation2 + $0x1f8] sm:$0xff]
      %v2023 = vadd.f32 %v1959, %v1800
      %v2024 = vadd.f32 %v1960, %v1802
      %v2025 = vadd.f32 %v1961, %v1805
      %v2026 = vadd.f32 %v1962, %v1807
      %v2027 = vadd.f32 %v1963, %v1810
      %v2028 = vadd.f32 %v1964, %v1812
      %v2029 = vadd.f32 %v1965, %v1815
      %v2030 = vadd.f32 %v1966, %v1817
      %v2031 = vadd.f32 %v1967, %v1820
      %v2032 = vadd.f32 %v1968, %v1822
      %v2033 = vadd.f32 %v1969, %v1825
      %v2034 = vadd.f32 %v1970, %v1827
      %v2035 = vadd.f32 %v1971, %v1830
      %v2036 = vadd.f32 %v1972, %v1832
      %v2037 = vadd.f32 %v1973, %v1835
      %v2038 = vadd.f32 %v1974, %v1837
      %v2039 = vadd.f32 %v1975, %v1840
      %v2040 = vadd.f32 %v1976, %v1842
      %v2041 = vadd.f32 %v1977, %v1845
      %v2042 = vadd.f32 %v1978, %v1847
      %v2043 = vadd.f32 %v1979, %v1850
      %v2044 = vadd.f32 %v1980, %v1852
      %v2045 = vadd.f32 %v1981, %v1855
      %v2046 = vadd.f32 %v1982, %v1857
      %v2047 = vadd.f32 %v1983, %v1860
      %v2048 = vadd.f32 %v1984, %v1862
      %v2049 = vadd.f32 %v1985, %v1865
      %v2050 = vadd.f32 %v1986, %v1867
      %v2051 = vadd.f32 %v1987, %v1870
      %v2052 = vadd.f32 %v1988, %v1872
      %v2053 = vadd.f32 %v1989, %v1875
      %v2054 = vadd.f32 %v1990, %v1877
      %v2055 = vadd.f32 %v1991, %v1880
      %v2056 = vadd.f32 %v1992, %v1882
      %v2057 = vadd.f32 %v1993, %v1885
      %v2058 = vadd.f32 %v1994, %v1887
      %v2059 = vadd.f32 %v1995, %v1890
      %v2060 = vadd.f32 %v1996, %v1892
      %v2061 = vadd.f32 %v1997, %v1895
      %v2062 = vadd.f32 %v1998, %v1897
      %v2063 = vadd.f32 %v1999, %v1900
      %v2064 = vadd.f32 %v2000, %v1902
      %v2065 = vadd.f32 %v2001, %v1905
      %v2066 = vadd.f32 %v2002, %v1907
      %v2067 = vadd.f32 %v2003, %v1910
      %v2068 = vadd.f32 %v2004, %v1912
      %v2069 = vadd.f32 %v2005, %v1915
      %v2070 = vadd.f32 %v2006, %v1917
      %v2071 = vadd.f32 %v2007, %v1920
      %v2072 = vadd.f32 %v2008, %v1922
      %v2073 = vadd.f32 %v2009, %v1925
      %v2074 = vadd.f32 %v2010, %v1927
      %v2075 = vadd.f32 %v2011, %v1930
      %v2076 = vadd.f32 %v2012, %v1932
      %v2077 = vadd.f32 %v2013, %v1935
      %v2078 = vadd.f32 %v2014, %v1937
      %v2079 = vadd.f32 %v2015, %v1940
      %v2080 = vadd.f32 %v2016, %v1942
      %v2081 = vadd.f32 %v2017, %v1945
      %v2082 = vadd.f32 %v2018, %v1947
      %v2083 = vadd.f32 %v2019, %v1950
      %v2084 = vadd.f32 %v2020, %v1952
      %v2085 = vadd.f32 %v2021, %v1955
      %v2086 = vadd.f32 %v2022, %v1957
      %2087 = vst [vmem:[#allocation2] sm:$0xff] %v2023
      %2088 = vst [vmem:[#allocation2 + $0x8] sm:$0xff] %v2024
      %2089 = vst [vmem:[#allocation2 + $0x10] sm:$0xff] %v2025
      %2090 = vst [vmem:[#allocation2 + $0x18] sm:$0xff] %v2026
      %2091 = vst [vmem:[#allocation2 + $0x20] sm:$0xff] %v2027
      %2092 = vst [vmem:[#allocation2 + $0x28] sm:$0xff] %v2028
      %2093 = vst [vmem:[#allocation2 + $0x30] sm:$0xff] %v2029
      %2094 = vst [vmem:[#allocation2 + $0x38] sm:$0xff] %v2030
      %2095 = vst [vmem:[#allocation2 + $0x40] sm:$0xff] %v2031
      %2096 = vst [vmem:[#allocation2 + $0x48] sm:$0xff] %v2032
      %2097 = vst [vmem:[#allocation2 + $0x50] sm:$0xff] %v2033
      %2098 = vst [vmem:[#allocation2 + $0x58] sm:$0xff] %v2034
      %2099 = vst [vmem:[#allocation2 + $0x60] sm:$0xff] %v2035
      %2100 = vst [vmem:[#allocation2 + $0x68] sm:$0xff] %v2036
      %2101 = vst [vmem:[#allocation2 + $0x70] sm:$0xff] %v2037
      %2102 = vst [vmem:[#allocation2 + $0x78] sm:$0xff] %v2038
      %2103 = vst [vmem:[#allocation2 + $0x80] sm:$0xff] %v2039
      %2104 = vst [vmem:[#allocation2 + $0x88] sm:$0xff] %v2040
      %2105 = vst [vmem:[#allocation2 + $0x90] sm:$0xff] %v2041
      %2106 = vst [vmem:[#allocation2 + $0x98] sm:$0xff] %v2042
      %2107 = vst [vmem:[#allocation2 + $0xa0] sm:$0xff] %v2043
      %2108 = vst [vmem:[#allocation2 + $0xa8] sm:$0xff] %v2044
      %2109 = vst [vmem:[#allocation2 + $0xb0] sm:$0xff] %v2045
      %2110 = vst [vmem:[#allocation2 + $0xb8] sm:$0xff] %v2046
      %2111 = vst [vmem:[#allocation2 + $0xc0] sm:$0xff] %v2047
      %2112 = vst [vmem:[#allocation2 + $0xc8] sm:$0xff] %v2048
      %2113 = vst [vmem:[#allocation2 + $0xd0] sm:$0xff] %v2049
      %2114 = vst [vmem:[#allocation2 + $0xd8] sm:$0xff] %v2050
      %2115 = vst [vmem:[#allocation2 + $0xe0] sm:$0xff] %v2051
      %2116 = vst [vmem:[#allocation2 + $0xe8] sm:$0xff] %v2052
      %2117 = vst [vmem:[#allocation2 + $0xf0] sm:$0xff] %v2053
      %2118 = vst [vmem:[#allocation2 + $0xf8] sm:$0xff] %v2054
      %2119 = vst [vmem:[#allocation2 + $0x100] sm:$0xff] %v2055
      %2120 = vst [vmem:[#allocation2 + $0x108] sm:$0xff] %v2056
      %2121 = vst [vmem:[#allocation2 + $0x110] sm:$0xff] %v2057
      %2122 = vst [vmem:[#allocation2 + $0x118] sm:$0xff] %v2058
      %2123 = vst [vmem:[#allocation2 + $0x120] sm:$0xff] %v2059
      %2124 = vst [vmem:[#allocation2 + $0x128] sm:$0xff] %v2060
      %2125 = vst [vmem:[#allocation2 + $0x130] sm:$0xff] %v2061
      %2126 = vst [vmem:[#allocation2 + $0x138] sm:$0xff] %v2062
      %2127 = vst [vmem:[#allocation2 + $0x140] sm:$0xff] %v2063
      %2128 = vst [vmem:[#allocation2 + $0x148] sm:$0xff] %v2064
      %2129 = vst [vmem:[#allocation2 + $0x150] sm:$0xff] %v2065
      %2130 = vst [vmem:[#allocation2 + $0x158] sm:$0xff] %v2066
      %2131 = vst [vmem:[#allocation2 + $0x160] sm:$0xff] %v2067
      %2132 = vst [vmem:[#allocation2 + $0x168] sm:$0xff] %v2068
      %2133 = vst [vmem:[#allocation2 + $0x170] sm:$0xff] %v2069
      %2134 = vst [vmem:[#allocation2 + $0x178] sm:$0xff] %v2070
      %2135 = vst [vmem:[#allocation2 + $0x180] sm:$0xff] %v2071
      %2136 = vst [vmem:[#allocation2 + $0x188] sm:$0xff] %v2072
      %2137 = vst [vmem:[#allocation2 + $0x190] sm:$0xff] %v2073
      %2138 = vst [vmem:[#allocation2 + $0x198] sm:$0xff] %v2074
      %2139 = vst [vmem:[#allocation2 + $0x1a0] sm:$0xff] %v2075
      %2140 = vst [vmem:[#allocation2 + $0x1a8] sm:$0xff] %v2076
      %2141 = vst [vmem:[#allocation2 + $0x1b0] sm:$0xff] %v2077
      %2142 = vst [vmem:[#allocation2 + $0x1b8] sm:$0xff] %v2078
      %2143 = vst [vmem:[#allocation2 + $0x1c0] sm:$0xff] %v2079
      %2144 = vst [vmem:[#allocation2 + $0x1c8] sm:$0xff] %v2080
      %2145 = vst [vmem:[#allocation2 + $0x1d0] sm:$0xff] %v2081
      %2146 = vst [vmem:[#allocation2 + $0x1d8] sm:$0xff] %v2082
      %2147 = vst [vmem:[#allocation2 + $0x1e0] sm:$0xff] %v2083
      %2148 = vst [vmem:[#allocation2 + $0x1e8] sm:$0xff] %v2084
      %2149 = vst [vmem:[#allocation2 + $0x1f0] sm:$0xff] %v2085
      %2150 = vst [vmem:[#allocation2 + $0x1f8] sm:$0xff] %v2086
      %v2151 = vld [vmem:[#allocation2] sm:$0xff]
      %v2152 = vld [vmem:[#allocation2 + $0x8] sm:$0xff]
      %v2153 = vld [vmem:[#allocation2 + $0x10] sm:$0xff]
      %v2154 = vld [vmem:[#allocation2 + $0x18] sm:$0xff]
      %v2155 = vld [vmem:[#allocation2 + $0x20] sm:$0xff]
      %v2156 = vld [vmem:[#allocation2 + $0x28] sm:$0xff]
      %v2157 = vld [vmem:[#allocation2 + $0x30] sm:$0xff]
      %v2158 = vld [vmem:[#allocation2 + $0x38] sm:$0xff]
      %v2159 = vld [vmem:[#allocation2 + $0x40] sm:$0xff]
      %v2160 = vld [vmem:[#allocation2 + $0x48] sm:$0xff]
      %v2161 = vld [vmem:[#allocation2 + $0x50] sm:$0xff]
      %v2162 = vld [vmem:[#allocation2 + $0x58] sm:$0xff]
      %v2163 = vld [vmem:[#allocation2 + $0x60] sm:$0xff]
      %v2164 = vld [vmem:[#allocation2 + $0x68] sm:$0xff]
      %v2165 = vld [vmem:[#allocation2 + $0x70] sm:$0xff]
      %v2166 = vld [vmem:[#allocation2 + $0x78] sm:$0xff]
      %v2167 = vld [vmem:[#allocation2 + $0x80] sm:$0xff]
      %v2168 = vld [vmem:[#allocation2 + $0x88] sm:$0xff]
      %v2169 = vld [vmem:[#allocation2 + $0x90] sm:$0xff]
      %v2170 = vld [vmem:[#allocation2 + $0x98] sm:$0xff]
      %v2171 = vld [vmem:[#allocation2 + $0xa0] sm:$0xff]
      %v2172 = vld [vmem:[#allocation2 + $0xa8] sm:$0xff]
      %v2173 = vld [vmem:[#allocation2 + $0xb0] sm:$0xff]
      %v2174 = vld [vmem:[#allocation2 + $0xb8] sm:$0xff]
      %v2175 = vld [vmem:[#allocation2 + $0xc0] sm:$0xff]
      %v2176 = vld [vmem:[#allocation2 + $0xc8] sm:$0xff]
      %v2177 = vld [vmem:[#allocation2 + $0xd0] sm:$0xff]
      %v2178 = vld [vmem:[#allocation2 + $0xd8] sm:$0xff]
      %v2179 = vld [vmem:[#allocation2 + $0xe0] sm:$0xff]
      %v2180 = vld [vmem:[#allocation2 + $0xe8] sm:$0xff]
      %v2181 = vld [vmem:[#allocation2 + $0xf0] sm:$0xff]
      %v2182 = vld [vmem:[#allocation2 + $0xf8] sm:$0xff]
      %v2183 = vld [vmem:[#allocation2 + $0x100] sm:$0xff]
      %v2184 = vld [vmem:[#allocation2 + $0x108] sm:$0xff]
      %v2185 = vld [vmem:[#allocation2 + $0x110] sm:$0xff]
      %v2186 = vld [vmem:[#allocation2 + $0x118] sm:$0xff]
      %v2187 = vld [vmem:[#allocation2 + $0x120] sm:$0xff]
      %v2188 = vld [vmem:[#allocation2 + $0x128] sm:$0xff]
      %v2189 = vld [vmem:[#allocation2 + $0x130] sm:$0xff]
      %v2190 = vld [vmem:[#allocation2 + $0x138] sm:$0xff]
      %v2191 = vld [vmem:[#allocation2 + $0x140] sm:$0xff]
      %v2192 = vld [vmem:[#allocation2 + $0x148] sm:$0xff]
      %v2193 = vld [vmem:[#allocation2 + $0x150] sm:$0xff]
      %v2194 = vld [vmem:[#allocation2 + $0x158] sm:$0xff]
      %v2195 = vld [vmem:[#allocation2 + $0x160] sm:$0xff]
      %v2196 = vld [vmem:[#allocation2 + $0x168] sm:$0xff]
      %v2197 = vld [vmem:[#allocation2 + $0x170] sm:$0xff]
      %v2198 = vld [vmem:[#allocation2 + $0x178] sm:$0xff]
      %v2199 = vld [vmem:[#allocation2 + $0x180] sm:$0xff]
      %v2200 = vld [vmem:[#allocation2 + $0x188] sm:$0xff]
      %v2201 = vld [vmem:[#allocation2 + $0x190] sm:$0xff]
      %v2202 = vld [vmem:[#allocation2 + $0x198] sm:$0xff]
      %v2203 = vld [vmem:[#allocation2 + $0x1a0] sm:$0xff]
      %v2204 = vld [vmem:[#allocation2 + $0x1a8] sm:$0xff]
      %v2205 = vld [vmem:[#allocation2 + $0x1b0] sm:$0xff]
      %v2206 = vld [vmem:[#allocation2 + $0x1b8] sm:$0xff]
      %v2207 = vld [vmem:[#allocation2 + $0x1c0] sm:$0xff]
      %v2208 = vld [vmem:[#allocation2 + $0x1c8] sm:$0xff]
      %v2209 = vld [vmem:[#allocation2 + $0x1d0] sm:$0xff]
      %v2210 = vld [vmem:[#allocation2 + $0x1d8] sm:$0xff]
      %v2211 = vld [vmem:[#allocation2 + $0x1e0] sm:$0xff]
      %v2212 = vld [vmem:[#allocation2 + $0x1e8] sm:$0xff]
      %v2213 = vld [vmem:[#allocation2 + $0x1f0] sm:$0xff]
      %v2214 = vld [vmem:[#allocation2 + $0x1f8] sm:$0xff]
      %v2215 = vld [vmem:[%s2] sm:$0x1]
      %v2217 = vperm.slane %v2215, 0
      %v2219 = vmul.f32 %v2151, %v2217
      %v2220 = vmul.f32 %v2152, %v2217
      %v2221 = vmul.f32 %v2153, %v2217
      %v2222 = vmul.f32 %v2154, %v2217
      %v2223 = vmul.f32 %v2155, %v2217
      %v2224 = vmul.f32 %v2156, %v2217
      %v2225 = vmul.f32 %v2157, %v2217
      %v2226 = vmul.f32 %v2158, %v2217
      %v2227 = vmul.f32 %v2159, %v2217
      %v2228 = vmul.f32 %v2160, %v2217
      %v2229 = vmul.f32 %v2161, %v2217
      %v2230 = vmul.f32 %v2162, %v2217
      %v2231 = vmul.f32 %v2163, %v2217
      %v2232 = vmul.f32 %v2164, %v2217
      %v2233 = vmul.f32 %v2165, %v2217
      %v2234 = vmul.f32 %v2166, %v2217
      %v2235 = vmul.f32 %v2167, %v2217
      %v2236 = vmul.f32 %v2168, %v2217
      %v2237 = vmul.f32 %v2169, %v2217
      %v2238 = vmul.f32 %v2170, %v2217
      %v2239 = vmul.f32 %v2171, %v2217
      %v2240 = vmul.f32 %v2172, %v2217
      %v2241 = vmul.f32 %v2173, %v2217
      %v2242 = vmul.f32 %v2174, %v2217
      %v2243 = vmul.f32 %v2175, %v2217
      %v2244 = vmul.f32 %v2176, %v2217
      %v2245 = vmul.f32 %v2177, %v2217
      %v2246 = vmul.f32 %v2178, %v2217
      %v2247 = vmul.f32 %v2179, %v2217
      %v2248 = vmul.f32 %v2180, %v2217
      %v2249 = vmul.f32 %v2181, %v2217
      %v2250 = vmul.f32 %v2182, %v2217
      %v2251 = vmul.f32 %v2183, %v2217
      %v2252 = vmul.f32 %v2184, %v2217
      %v2253 = vmul.f32 %v2185, %v2217
      %v2254 = vmul.f32 %v2186, %v2217
      %v2255 = vmul.f32 %v2187, %v2217
      %v2256 = vmul.f32 %v2188, %v2217
      %v2257 = vmul.f32 %v2189, %v2217
      %v2258 = vmul.f32 %v2190, %v2217
      %v2259 = vmul.f32 %v2191, %v2217
      %v2260 = vmul.f32 %v2192, %v2217
      %v2261 = vmul.f32 %v2193, %v2217
      %v2262 = vmul.f32 %v2194, %v2217
      %v2263 = vmul.f32 %v2195, %v2217
      %v2264 = vmul.f32 %v2196, %v2217
      %v2265 = vmul.f32 %v2197, %v2217
      %v2266 = vmul.f32 %v2198, %v2217
      %v2267 = vmul.f32 %v2199, %v2217
      %v2268 = vmul.f32 %v2200, %v2217
      %v2269 = vmul.f32 %v2201, %v2217
      %v2270 = vmul.f32 %v2202, %v2217
      %v2271 = vmul.f32 %v2203, %v2217
      %v2272 = vmul.f32 %v2204, %v2217
      %v2273 = vmul.f32 %v2205, %v2217
      %v2274 = vmul.f32 %v2206, %v2217
      %v2275 = vmul.f32 %v2207, %v2217
      %v2276 = vmul.f32 %v2208, %v2217
      %v2277 = vmul.f32 %v2209, %v2217
      %v2278 = vmul.f32 %v2210, %v2217
      %v2279 = vmul.f32 %v2211, %v2217
      %v2280 = vmul.f32 %v2212, %v2217
      %v2281 = vmul.f32 %v2213, %v2217
      %v2282 = vmul.f32 %v2214, %v2217
      %v2283 = vld [vmem:[%s3] sm:$0x1]
      %v2285 = vperm.slane %v2283, 0
      %v2287 = vadd.f32 %v2219, %v2285
      %v2288 = vadd.f32 %v2220, %v2285
      %v2289 = vadd.f32 %v2221, %v2285
      %v2290 = vadd.f32 %v2222, %v2285
      %v2291 = vadd.f32 %v2223, %v2285
      %v2292 = vadd.f32 %v2224, %v2285
      %v2293 = vadd.f32 %v2225, %v2285
      %v2294 = vadd.f32 %v2226, %v2285
      %v2295 = vadd.f32 %v2227, %v2285
      %v2296 = vadd.f32 %v2228, %v2285
      %v2297 = vadd.f32 %v2229, %v2285
      %v2298 = vadd.f32 %v2230, %v2285
      %v2299 = vadd.f32 %v2231, %v2285
      %v2300 = vadd.f32 %v2232, %v2285
      %v2301 = vadd.f32 %v2233, %v2285
      %v2302 = vadd.f32 %v2234, %v2285
      %v2303 = vadd.f32 %v2235, %v2285
      %v2304 = vadd.f32 %v2236, %v2285
      %v2305 = vadd.f32 %v2237, %v2285
      %v2306 = vadd.f32 %v2238, %v2285
      %v2307 = vadd.f32 %v2239, %v2285
      %v2308 = vadd.f32 %v2240, %v2285
      %v2309 = vadd.f32 %v2241, %v2285
      %v2310 = vadd.f32 %v2242, %v2285
      %v2311 = vadd.f32 %v2243, %v2285
      %v2312 = vadd.f32 %v2244, %v2285
      %v2313 = vadd.f32 %v2245, %v2285
      %v2314 = vadd.f32 %v2246, %v2285
      %v2315 = vadd.f32 %v2247, %v2285
      %v2316 = vadd.f32 %v2248, %v2285
      %v2317 = vadd.f32 %v2249, %v2285
      %v2318 = vadd.f32 %v2250, %v2285
      %v2319 = vadd.f32 %v2251, %v2285
      %v2320 = vadd.f32 %v2252, %v2285
      %v2321 = vadd.f32 %v2253, %v2285
      %v2322 = vadd.f32 %v2254, %v2285
      %v2323 = vadd.f32 %v2255, %v2285
      %v2324 = vadd.f32 %v2256, %v2285
      %v2325 = vadd.f32 %v2257, %v2285
      %v2326 = vadd.f32 %v2258, %v2285
      %v2327 = vadd.f32 %v2259, %v2285
      %v2328 = vadd.f32 %v2260, %v2285
      %v2329 = vadd.f32 %v2261, %v2285
      %v2330 = vadd.f32 %v2262, %v2285
      %v2331 = vadd.f32 %v2263, %v2285
      %v2332 = vadd.f32 %v2264, %v2285
      %v2333 = vadd.f32 %v2265, %v2285
      %v2334 = vadd.f32 %v2266, %v2285
      %v2335 = vadd.f32 %v2267, %v2285
      %v2336 = vadd.f32 %v2268, %v2285
      %v2337 = vadd.f32 %v2269, %v2285
      %v2338 = vadd.f32 %v2270, %v2285
      %v2339 = vadd.f32 %v2271, %v2285
      %v2340 = vadd.f32 %v2272, %v2285
      %v2341 = vadd.f32 %v2273, %v2285
      %v2342 = vadd.f32 %v2274, %v2285
      %v2343 = vadd.f32 %v2275, %v2285
      %v2344 = vadd.f32 %v2276, %v2285
      %v2345 = vadd.f32 %v2277, %v2285
      %v2346 = vadd.f32 %v2278, %v2285
      %v2347 = vadd.f32 %v2279, %v2285
      %v2348 = vadd.f32 %v2280, %v2285
      %v2349 = vadd.f32 %v2281, %v2285
      %v2350 = vadd.f32 %v2282, %v2285
      %v2351 = vmax.f32 %v2287, 0.0
      %v2352 = vmax.f32 %v2288, 0.0
      %v2353 = vmax.f32 %v2289, 0.0
      %v2354 = vmax.f32 %v2290, 0.0
      %v2355 = vmax.f32 %v2291, 0.0
      %v2356 = vmax.f32 %v2292, 0.0
      %v2357 = vmax.f32 %v2293, 0.0
      %v2358 = vmax.f32 %v2294, 0.0
      %v2359 = vmax.f32 %v2295, 0.0
      %v2360 = vmax.f32 %v2296, 0.0
      %v2361 = vmax.f32 %v2297, 0.0
      %v2362 = vmax.f32 %v2298, 0.0
      %v2363 = vmax.f32 %v2299, 0.0
      %v2364 = vmax.f32 %v2300, 0.0
      %v2365 = vmax.f32 %v2301, 0.0
      %v2366 = vmax.f32 %v2302, 0.0
      %v2367 = vmax.f32 %v2303, 0.0
      %v2368 = vmax.f32 %v2304, 0.0
      %v2369 = vmax.f32 %v2305, 0.0
      %v2370 = vmax.f32 %v2306, 0.0
      %v2371 = vmax.f32 %v2307, 0.0
      %v2372 = vmax.f32 %v2308, 0.0
      %v2373 = vmax.f32 %v2309, 0.0
      %v2374 = vmax.f32 %v2310, 0.0
      %v2375 = vmax.f32 %v2311, 0.0
      %v2376 = vmax.f32 %v2312, 0.0
      %v2377 = vmax.f32 %v2313, 0.0
      %v2378 = vmax.f32 %v2314, 0.0
      %v2379 = vmax.f32 %v2315, 0.0
      %v2380 = vmax.f32 %v2316, 0.0
      %v2381 = vmax.f32 %v2317, 0.0
      %v2382 = vmax.f32 %v2318, 0.0
      %v2383 = vmax.f32 %v2319, 0.0
      %v2384 = vmax.f32 %v2320, 0.0
      %v2385 = vmax.f32 %v2321, 0.0
      %v2386 = vmax.f32 %v2322, 0.0
      %v2387 = vmax.f32 %v2323, 0.0
      %v2388 = vmax.f32 %v2324, 0.0
      %v2389 = vmax.f32 %v2325, 0.0
      %v2390 = vmax.f32 %v2326, 0.0
      %v2391 = vmax.f32 %v2327, 0.0
      %v2392 = vmax.f32 %v2328, 0.0
      %v2393 = vmax.f32 %v2329, 0.0
      %v2394 = vmax.f32 %v2330, 0.0
      %v2395 = vmax.f32 %v2331, 0.0
      %v2396 = vmax.f32 %v2332, 0.0
      %v2397 = vmax.f32 %v2333, 0.0
      %v2398 = vmax.f32 %v2334, 0.0
      %v2399 = vmax.f32 %v2335, 0.0
      %v2400 = vmax.f32 %v2336, 0.0
      %v2401 = vmax.f32 %v2337, 0.0
      %v2402 = vmax.f32 %v2338, 0.0
      %v2403 = vmax.f32 %v2339, 0.0
      %v2404 = vmax.f32 %v2340, 0.0
      %v2405 = vmax.f32 %v2341, 0.0
      %v2406 = vmax.f32 %v2342, 0.0
      %v2407 = vmax.f32 %v2343, 0.0
      %v2408 = vmax.f32 %v2344, 0.0
      %v2409 = vmax.f32 %v2345, 0.0
      %v2410 = vmax.f32 %v2346, 0.0
      %v2411 = vmax.f32 %v2347, 0.0
      %v2412 = vmax.f32 %v2348, 0.0
      %v2413 = vmax.f32 %v2349, 0.0
      %v2414 = vmax.f32 %v2350, 0.0
      %v2415 = vpack.c.bf16 %v2351, %v2351
      %v2416 = vpack.c.bf16 %v2352, %v2352
      %v2417 = vpack.c.bf16 %v2353, %v2353
      %v2418 = vpack.c.bf16 %v2354, %v2354
      %v2419 = vpack.c.bf16 %v2355, %v2355
      %v2420 = vpack.c.bf16 %v2356, %v2356
      %v2421 = vpack.c.bf16 %v2357, %v2357
      %v2422 = vpack.c.bf16 %v2358, %v2358
      %v2423 = vpack.c.bf16 %v2359, %v2359
      %v2424 = vpack.c.bf16 %v2360, %v2360
      %v2425 = vpack.c.bf16 %v2361, %v2361
      %v2426 = vpack.c.bf16 %v2362, %v2362
      %v2427 = vpack.c.bf16 %v2363, %v2363
      %v2428 = vpack.c.bf16 %v2364, %v2364
      %v2429 = vpack.c.bf16 %v2365, %v2365
      %v2430 = vpack.c.bf16 %v2366, %v2366
      %v2431 = vpack.c.bf16 %v2367, %v2367
      %v2432 = vpack.c.bf16 %v2368, %v2368
      %v2433 = vpack.c.bf16 %v2369, %v2369
      %v2434 = vpack.c.bf16 %v2370, %v2370
      %v2435 = vpack.c.bf16 %v2371, %v2371
      %v2436 = vpack.c.bf16 %v2372, %v2372
      %v2437 = vpack.c.bf16 %v2373, %v2373
      %v2438 = vpack.c.bf16 %v2374, %v2374
      %v2439 = vpack.c.bf16 %v2375, %v2375
      %v2440 = vpack.c.bf16 %v2376, %v2376
      %v2441 = vpack.c.bf16 %v2377, %v2377
      %v2442 = vpack.c.bf16 %v2378, %v2378
      %v2443 = vpack.c.bf16 %v2379, %v2379
      %v2444 = vpack.c.bf16 %v2380, %v2380
      %v2445 = vpack.c.bf16 %v2381, %v2381
      %v2446 = vpack.c.bf16 %v2382, %v2382
      %v2447 = vpack.c.bf16 %v2383, %v2383
      %v2448 = vpack.c.bf16 %v2384, %v2384
      %v2449 = vpack.c.bf16 %v2385, %v2385
      %v2450 = vpack.c.bf16 %v2386, %v2386
      %v2451 = vpack.c.bf16 %v2387, %v2387
      %v2452 = vpack.c.bf16 %v2388, %v2388
      %v2453 = vpack.c.bf16 %v2389, %v2389
      %v2454 = vpack.c.bf16 %v2390, %v2390
      %v2455 = vpack.c.bf16 %v2391, %v2391
      %v2456 = vpack.c.bf16 %v2392, %v2392
      %v2457 = vpack.c.bf16 %v2393, %v2393
      %v2458 = vpack.c.bf16 %v2394, %v2394
      %v2459 = vpack.c.bf16 %v2395, %v2395
      %v2460 = vpack.c.bf16 %v2396, %v2396
      %v2461 = vpack.c.bf16 %v2397, %v2397
      %v2462 = vpack.c.bf16 %v2398, %v2398
      %v2463 = vpack.c.bf16 %v2399, %v2399
      %v2464 = vpack.c.bf16 %v2400, %v2400
      %v2465 = vpack.c.bf16 %v2401, %v2401
      %v2466 = vpack.c.bf16 %v2402, %v2402
      %v2467 = vpack.c.bf16 %v2403, %v2403
      %v2468 = vpack.c.bf16 %v2404, %v2404
      %v2469 = vpack.c.bf16 %v2405, %v2405
      %v2470 = vpack.c.bf16 %v2406, %v2406
      %v2471 = vpack.c.bf16 %v2407, %v2407
      %v2472 = vpack.c.bf16 %v2408, %v2408
      %v2473 = vpack.c.bf16 %v2409, %v2409
      %v2474 = vpack.c.bf16 %v2410, %v2410
      %v2475 = vpack.c.bf16 %v2411, %v2411
      %v2476 = vpack.c.bf16 %v2412, %v2412
      %v2477 = vpack.c.bf16 %v2413, %v2413
      %v2478 = vpack.c.bf16 %v2414, %v2414
      %2479 = vst [vmem:[%s197] sm:$0xf] %v2415
      %2480 = vst [vmem:[%s197 + $0x4] sm:$0xf] %v2416
      %2481 = vst [vmem:[%s197 + $0x8] sm:$0xf] %v2417
      %2482 = vst [vmem:[%s197 + $0xc] sm:$0xf] %v2418
      %2483 = vst [vmem:[%s197 + $0x10] sm:$0xf] %v2419
      %2484 = vst [vmem:[%s197 + $0x14] sm:$0xf] %v2420
      %2485 = vst [vmem:[%s197 + $0x18] sm:$0xf] %v2421
      %2486 = vst [vmem:[%s197 + $0x1c] sm:$0xf] %v2422
      %2487 = vst [vmem:[%s197 + $0x20] sm:$0xf] %v2423
      %2488 = vst [vmem:[%s197 + $0x24] sm:$0xf] %v2424
      %2489 = vst [vmem:[%s197 + $0x28] sm:$0xf] %v2425
      %2490 = vst [vmem:[%s197 + $0x2c] sm:$0xf] %v2426
      %2491 = vst [vmem:[%s197 + $0x30] sm:$0xf] %v2427
      %2492 = vst [vmem:[%s197 + $0x34] sm:$0xf] %v2428
      %2493 = vst [vmem:[%s197 + $0x38] sm:$0xf] %v2429
      %2494 = vst [vmem:[%s197 + $0x3c] sm:$0xf] %v2430
      %2495 = vst [vmem:[%s197 + $0x40] sm:$0xf] %v2431
      %2496 = vst [vmem:[%s197 + $0x44] sm:$0xf] %v2432
      %2497 = vst [vmem:[%s197 + $0x48] sm:$0xf] %v2433
      %2498 = vst [vmem:[%s197 + $0x4c] sm:$0xf] %v2434
      %2499 = vst [vmem:[%s197 + $0x50] sm:$0xf] %v2435
      %2500 = vst [vmem:[%s197 + $0x54] sm:$0xf] %v2436
      %2501 = vst [vmem:[%s197 + $0x58] sm:$0xf] %v2437
      %2502 = vst [vmem:[%s197 + $0x5c] sm:$0xf] %v2438
      %2503 = vst [vmem:[%s197 + $0x60] sm:$0xf] %v2439
      %2504 = vst [vmem:[%s197 + $0x64] sm:$0xf] %v2440
      %2505 = vst [vmem:[%s197 + $0x68] sm:$0xf] %v2441
      %2506 = vst [vmem:[%s197 + $0x6c] sm:$0xf] %v2442
      %2507 = vst [vmem:[%s197 + $0x70] sm:$0xf] %v2443
      %2508 = vst [vmem:[%s197 + $0x74] sm:$0xf] %v2444
      %2509 = vst [vmem:[%s197 + $0x78] sm:$0xf] %v2445
      %2510 = vst [vmem:[%s197 + $0x7c] sm:$0xf] %v2446
      %2511 = vst [vmem:[%s197 + $0x80] sm:$0xf] %v2447
      %2512 = vst [vmem:[%s197 + $0x84] sm:$0xf] %v2448
      %2513 = vst [vmem:[%s197 + $0x88] sm:$0xf] %v2449
      %2514 = vst [vmem:[%s197 + $0x8c] sm:$0xf] %v2450
      %2515 = vst [vmem:[%s197 + $0x90] sm:$0xf] %v2451
      %2516 = vst [vmem:[%s197 + $0x94] sm:$0xf] %v2452
      %2517 = vst [vmem:[%s197 + $0x98] sm:$0xf] %v2453
      %2518 = vst [vmem:[%s197 + $0x9c] sm:$0xf] %v2454
      %2519 = vst [vmem:[%s197 + $0xa0] sm:$0xf] %v2455
      %2520 = vst [vmem:[%s197 + $0xa4] sm:$0xf] %v2456
      %2521 = vst [vmem:[%s197 + $0xa8] sm:$0xf] %v2457
      %2522 = vst [vmem:[%s197 + $0xac] sm:$0xf] %v2458
      %2523 = vst [vmem:[%s197 + $0xb0] sm:$0xf] %v2459
      %2524 = vst [vmem:[%s197 + $0xb4] sm:$0xf] %v2460
      %2525 = vst [vmem:[%s197 + $0xb8] sm:$0xf] %v2461
      %2526 = vst [vmem:[%s197 + $0xbc] sm:$0xf] %v2462
      %2527 = vst [vmem:[%s197 + $0xc0] sm:$0xf] %v2463
      %2528 = vst [vmem:[%s197 + $0xc4] sm:$0xf] %v2464
      %2529 = vst [vmem:[%s197 + $0xc8] sm:$0xf] %v2465
      %2530 = vst [vmem:[%s197 + $0xcc] sm:$0xf] %v2466
      %2531 = vst [vmem:[%s197 + $0xd0] sm:$0xf] %v2467
      %2532 = vst [vmem:[%s197 + $0xd4] sm:$0xf] %v2468
      %2533 = vst [vmem:[%s197 + $0xd8] sm:$0xf] %v2469
      %2534 = vst [vmem:[%s197 + $0xdc] sm:$0xf] %v2470
      %2535 = vst [vmem:[%s197 + $0xe0] sm:$0xf] %v2471
      %2536 = vst [vmem:[%s197 + $0xe4] sm:$0xf] %v2472
      %2537 = vst [vmem:[%s197 + $0xe8] sm:$0xf] %v2473
      %2538 = vst [vmem:[%s197 + $0xec] sm:$0xf] %v2474
      %2539 = vst [vmem:[%s197 + $0xf0] sm:$0xf] %v2475
      %2540 = vst [vmem:[%s197 + $0xf4] sm:$0xf] %v2476
      %2541 = vst [vmem:[%s197 + $0xf8] sm:$0xf] %v2477
      %2542 = vst [vmem:[%s197 + $0xfc] sm:$0xf] %v2478
      %s2543 = smul.u32 64, %s15
      %p2544 = scmp.lt.s32.totalorder %s2543, 255
      %s2545 = scalar_select %p2544, %s2543, 255
      %s2546 = smul.addr %s2545, 4
      %s2547 = scalar_lea.vmem %s4, %s2546
      // Predicated region
      $region37: #{up_forward.9} parent=35 // pred_check
        %p2548 = pneg %p122
      $region38: #{up_forward.9} parent=35 // pred_check_branch
        %2550 = sbr.rel (%p2548) target = $region40
      $region39: #{up_forward.9} parent=35 // pred_region
        %s2551 = smul.u32 64, %s15
      $region40: #{up_forward.9} parent=35 // pred_fallthru
        _
    $region36: #{up_forward.9} parent=5 // pred_fallthru
      _
    %p2552 = scmp.le.s32.totalorder 2, %s10
    // Predicated region
    $region41: #{up_forward.9} parent=5 // pred_check
      %p2553 = pneg %p2552
    $region42: #{up_forward.9} parent=5 // pred_check_branch
      %2555 = sbr.rel (%p2553) target = $region44
    $region43: #{up_forward.9} parent=5 // pred_region
      %s2556 = ssub.s32 %s10, 2
      // Predicated region
      $region45: #{up_forward.9} parent=43 // pred_check
        %p2557 = pneg %p128
      $region46: #{up_forward.9} parent=43 // pred_check_branch
        %2559 = sbr.rel (%p2557) target = $region48
      $region47: #{up_forward.9} parent=43 // pred_region
        %s2560 = smul.u32 64, %s16
        %p2561 = scmp.lt.s32.totalorder %s2560, 255
        %s2562 = scalar_select %p2561, %s2560, 255
        %s2563 = smul.addr %s2562, 4
        %s2564 = scalar_lea.vmem %s4, %s2563
      $region48: #{up_forward.9} parent=43 // pred_fallthru
        _
    $region44: #{up_forward.9} parent=5 // pred_fallthru
      _
  $region6: #{up_forward.9} parent=0 // loop_footer
    %s14 = sadd.s32 1, %s10
  $region7: #{up_forward.9} parent=0 // loop_footer_branch
    %9 = sbr.rel target = $region3
  $region8: #{up_forward.9} parent=0 // loop_exit
    _

</llo_original>
